<compile_context>
chip_gen: v5e
topology: v5e:2x2
jax: 0.10.0
libtpu: 0.0.40
codegen_flags: <defaults>
</compile_context>

<pallas_src>
import functools

import jax
import jax.numpy as jnp
from jax import lax
from jax.experimental import pallas as pl
from jax.experimental.pallas import tpu as pltpu


def _round_up(x, m):
    return (x + m - 1) // m * m


def _pick_strip(h, max_rows=32):
    """Largest divisor of h that is <= max_rows (full image if it fits)."""
    if h <= max_rows:
        return h
    for cand in range(max_rows, 0, -1):
        if h % cand == 0:
            return cand
    return h  # explicit fallback: one giant strip


# ----------------------------- Pallas kernel --------------------------------

def _basic_block_kernel(x_ref, w1_ref, s1_ref, b1_ref, w2_ref, s2_ref, b2_ref,
                        out_ref, mid_ref, *, th, h, w, mc, c):
    """One (image, row-strip) step of the fused BasicBlock.

    x_ref   : (H+4, WP, Cp) f32  zero-padded input (2-px spatial halo, columns
                                 padded to WP >= MC+2, channels to Cp); resident
                                 in VMEM across row strips.
    w*_ref  : (3, 3*Cp, Cp) bf16 per-dy weights, 3 dx taps folded into K.
    s*,b*   : (1, Cp) f32        folded BatchNorm scale / bias.
    out_ref : (TH, W, C)         narrow NHWC output strip (true channels only).
    mid_ref : (TH+2, MC, Cp) f32 conv1+bn1+relu activation incl. the 1-px halo
                                 ring conv2 needs (zeroed outside true HxW).
    """
    cp = w1_ref.shape[2]
    rows1 = th + 2
    s = pl.program_id(1)
    r0 = pl.multiple_of(s * th, th)              # first output row of strip

    xs = x_ref[pl.ds(r0, th + 4), :, :]          # (th+4, WP, Cp) f32

    # ---------------- conv1 + bn1 + relu -> mid_ref (scratch) ----------------
    # Hoist the 3 dx column shifts (the only sublane relayouts) out of the dy
    # loop and fold them into the contraction dim: 3 matmuls, K = 3*Cp.
    xsh = [xs[:, dx:dx + mc, :] for dx in range(3)]          # f32 shifts
    xcat = jnp.concatenate(xsh, axis=-1)                     # (th+4, mc, 3*Cp)

    acc1 = jnp.zeros((rows1 * mc, cp), jnp.float32)
    for dy in range(3):
        patch = xcat[dy:dy + rows1].reshape(rows1 * mc, 3 * cp)  # tile-aligned
        acc1 = acc1 + jnp.dot(patch.astype(jnp.bfloat16), w1_ref[dy],
                              preferred_element_type=jnp.float32)
    mid = jnp.maximum(acc1 * s1_ref[0] + b1_ref[0], 0.0).reshape(rows1, mc, cp)

    # Zero mid positions outside the true HxW image (conv2 'same' padding).
    row_idx = lax.broadcasted_iota(jnp.int32, (rows1, 1, 1), 0) + (r0 - 1)
    col_idx = lax.broadcasted_iota(jnp.int32, (1, mc, 1), 1) - 1
    valid = (row_idx >= 0) & (row_idx < h) & (col_idx >= 0) & (col_idx < w)
    mid_ref[...] = jnp.where(valid, mid, 0.0)

    # ---------------- conv2 + bn2 + residual + relu -> out -------------------
    msh = [mid_ref[:, dx:dx + w, :] for dx in range(3)]      # f32 shifts
    mcat = jnp.concatenate(msh, axis=-1)                     # (th+2, w, 3*Cp)

    acc2 = jnp.zeros((th * w, cp), jnp.float32)
    for dy in range(3):
        patch = mcat[dy:dy + th].reshape(th * w, 3 * cp)
        acc2 = acc2 + jnp.dot(patch.astype(jnp.bfloat16), w2_ref[dy],
                              preferred_element_type=jnp.float32)
    out = acc2 * s2_ref[0] + b2_ref[0]
    residual = xsh[2][2:2 + th, :w, :].reshape(th * w, cp)   # identity, f32
    out = jnp.maximum(out + residual, 0.0).reshape(th, w, cp)
    out_ref[...] = out[:, :, :c].astype(out_ref.dtype)


# ------------------------------ JAX wrapper ----------------------------------

def basic_block_forward(x_nchw, params, eps=1e-5, max_strip_rows=32,
                        vmem_limit_bytes=48 * 1024 * 1024):
    """BasicBlock forward (stride=1, downsample=None). Input/output NCHW."""
    n, c, h, w = x_nchw.shape
    cp = _round_up(c, 128)                 # lane-dense channel axis
    mc = _round_up(w + 2, 8)               # tile-aligned intermediate columns
    wp = _round_up(mc + 2, 8)              # padded input columns (>= mc + 2)
    th = _pick_strip(h, max_strip_rows)    # explicit strip-size choice

    # NCHW -> NHWC at the module boundary; single pad: 2-px spatial halo,
    # extra zero columns up to WP, zero channel pad to Cp.
    x = jnp.transpose(x_nchw, (0, 2, 3, 1)).astype(jnp.float32)
    x_p = jnp.pad(x, ((0, 0), (2, 2), (2, wp - w - 2), (0, cp - c)))

    def prep_w(w_oihw):
        wt = jnp.transpose(w_oihw, (2, 3, 1, 0))              # (3,3,Cin,Cout)
        wt = jnp.pad(wt, ((0, 0), (0, 0), (0, cp - c), (0, cp - c)))
        # Fold the 3 dx taps into K; lane order matches the patch concat.
        return wt.reshape(3, 3 * cp, cp).astype(jnp.bfloat16)

    def fold_bn(g, b, m, v):
        scale = g / jnp.sqrt(v + eps)
        bias = b - m * scale
        scale = jnp.pad(scale, (0, cp - c)).reshape(1, cp).astype(jnp.float32)
        bias = jnp.pad(bias, (0, cp - c)).reshape(1, cp).astype(jnp.float32)
        return scale, bias

    w1 = prep_w(params["conv1_w"])
    w2 = prep_w(params["conv2_w"])
    s1, b1 = fold_bn(params["bn1_gamma"], params["bn1_beta"],
                     params["bn1_mean"], params["bn1_var"])
    s2, b2 = fold_bn(params["bn2_gamma"], params["bn2_beta"],
                     params["bn2_mean"], params["bn2_var"])

    kernel = functools.partial(_basic_block_kernel, th=th, h=h, w=w, mc=mc, c=c)
    const3 = lambda i, s: (0, 0, 0)
    const2 = lambda i, s: (0, 0)

    def build_call(single_buffer):
        extra = {}
        if single_buffer and hasattr(pl, "Buffered"):
            extra = dict(pipeline_mode=pl.Buffered(1))   # constant-index operands
        w_spec = pl.BlockSpec((3, 3 * cp, cp), const3, **extra)
        v_spec = pl.BlockSpec((1, cp), const2, **extra)
        return pl.pallas_call(
            kernel,
            out_shape=jax.ShapeDtypeStruct((n, h, w, c), x.dtype),
            grid=(n, h // th),
            in_specs=[
                # Whole padded image per n; the block index ignores the strip
                # axis so the buffer stays resident across strips (no re-DMA).
                pl.BlockSpec((None, h + 4, wp, cp), lambda i, s: (i, 0, 0, 0)),
                w_spec, v_spec, v_spec, w_spec, v_spec, v_spec,
            ],
            # Narrow (true-channel) NHWC output: no padded-channel HBM
            # writeback and no post-kernel slice pass.
            out_specs=pl.BlockSpec((None, th, w, c), lambda i, s: (i, s, 0, 0)),
            scratch_shapes=[pltpu.VMEM((th + 2, mc, cp), jnp.float32)],
            compiler_params=pltpu.CompilerParams(
                dimension_semantics=("parallel", "parallel"),
                vmem_limit_bytes=vmem_limit_bytes),
        )

    args = (x_p, w1, s1, b1, w2, s2, b2)
    try:
        out = build_call(True)(*args)      # single-buffered resident weights
    except Exception:
        out = build_call(False)(*args)     # fallback: default double-buffering
    return jnp.transpose(out, (0, 3, 1, 2))       # NHWC -> NCHW


# ------------------------------- reference -----------------------------------

def _reference(x_nchw, params, eps=1e-5):
    def conv(x, wgt):  # NCHW, OIHW
        return jax.lax.conv_general_dilated(
            x, wgt, window_strides=(1, 1), padding=((1, 1), (1, 1)),
            dimension_numbers=("NCHW", "OIHW", "NCHW"))

    def bn(x, g, b, m, v):
        g, b, m, v = (t.reshape(1, -1, 1, 1) for t in (g, b, m, v))
        return (x - m) / jnp.sqrt(v + eps) * g + b

    out = conv(x_nchw, params["conv1_w"])
    out = bn(out, params["bn1_gamma"], params["bn1_beta"],
             params["bn1_mean"], params["bn1_var"])
    out = jnp.maximum(out, 0.0)
    out = conv(out, params["conv2_w"])
    out = bn(out, params["bn2_gamma"], params["bn2_beta"],
             params["bn2_mean"], params["bn2_var"])
    out = out + x_nchw
    return jnp.maximum(out, 0.0)


# ---------------------------------- main --------------------------------------

if __name__ == "__main__":
    N, C, H, W = 2, 8, 16, 16   # inplanes == planes == 8 (downsample=None)
    planes = C

    key = jax.random.PRNGKey(0)
    ks = jax.random.split(key, 11)
    x = jax.random.normal(ks[0], (N, C, H, W), jnp.float32)

    params = {
        "conv1_w": jax.random.normal(ks[1], (planes, C, 3, 3), jnp.float32) * 0.1,
        "conv2_w": jax.random.normal(ks[2], (planes, planes, 3, 3), jnp.float32) * 0.1,
        "bn1_gamma": 1.0 + 0.1 * jax.random.normal(ks[3], (planes,), jnp.float32),
        "bn1_beta": 0.1 * jax.random.normal(ks[4], (planes,), jnp.float32),
        "bn1_mean": 0.1 * jax.random.normal(ks[5], (planes,), jnp.float32),
        "bn1_var": 1.0 + 0.1 * jax.random.uniform(ks[6], (planes,), jnp.float32),
        "bn2_gamma": 1.0 + 0.1 * jax.random.normal(ks[7], (planes,), jnp.float32),
        "bn2_beta": 0.1 * jax.random.normal(ks[8], (planes,), jnp.float32),
        "bn2_mean": 0.1 * jax.random.normal(ks[9], (planes,), jnp.float32),
        "bn2_var": 1.0 + 0.1 * jax.random.uniform(ks[10], (planes,), jnp.float32),
    }

    out = basic_block_forward(x, params)
    jax.block_until_ready(out)

    ref = _reference(x, params)
    assert out.shape == (N, C, H, W)
    max_err = float(jnp.abs(out - ref).max())
    # Tolerance loosened vs the f32 reference because matmul operands are bf16.
    assert jnp.allclose(out, ref, atol=5e-2, rtol=5e-2), max_err

    print("KERNEL_OK")
</pallas_src>

<mosaic_0001>
module attributes {stable_mosaic.version = 11 : i64} {
  func.func @_basic_block_kernel(%arg0: i32, %arg1: i32, %arg2: memref<1x20x32x128xf32, #tpu.memory_space<vmem>>, %arg3: memref<3x384x128xbf16, #tpu.memory_space<vmem>>, %arg4: memref<1x128xf32, #tpu.memory_space<vmem>>, %arg5: memref<1x128xf32, #tpu.memory_space<vmem>>, %arg6: memref<3x384x128xbf16, #tpu.memory_space<vmem>>, %arg7: memref<1x128xf32, #tpu.memory_space<vmem>>, %arg8: memref<1x128xf32, #tpu.memory_space<vmem>>, %arg9: memref<1x16x16x8xf32, #tpu.memory_space<vmem>>, %arg10: memref<18x24x128xf32, #tpu.memory_space<vmem>>) attributes {dimension_semantics = [#tpu.dimension_semantics<parallel>, #tpu.dimension_semantics<parallel>], iteration_bounds = array<i64: 2, 1>, scalar_prefetch = 0 : i64, scratch_operands = 1 : i64, tpu.core_type = #tpu.core_type<tc>, window_params = [{transform_indices = @transform_0, window_bounds = array<i64: 1, 20, 32, 128>}, {pipeline_mode = #tpu.pipeline_mode<synchronous>, transform_indices = @transform_1, window_bounds = array<i64: 3, 384, 128>}, {pipeline_mode = #tpu.pipeline_mode<synchronous>, transform_indices = @transform_2, window_bounds = array<i64: 1, 128>}, {pipeline_mode = #tpu.pipeline_mode<synchronous>, transform_indices = @transform_3, window_bounds = array<i64: 1, 128>}, {pipeline_mode = #tpu.pipeline_mode<synchronous>, transform_indices = @transform_4, window_bounds = array<i64: 3, 384, 128>}, {pipeline_mode = #tpu.pipeline_mode<synchronous>, transform_indices = @transform_5, window_bounds = array<i64: 1, 128>}, {pipeline_mode = #tpu.pipeline_mode<synchronous>, transform_indices = @transform_6, window_bounds = array<i64: 1, 128>}, {transform_indices = @transform_7, window_bounds = array<i64: 1, 16, 16, 8>}]} {
    %c16_i32 = arith.constant 16 : i32
    %0 = arith.muli %arg1, %c16_i32 : i32
    %1 = tpu.assume_multiple %0, 16 : i32
    %c0 = arith.constant 0 : index
    %2 = arith.index_cast %1 : i32 to index
    %c0_0 = arith.constant 0 : index
    %c0_1 = arith.constant 0 : index
    %3 = vector.load %arg2[%c0, %2, %c0_0, %c0_1] : memref<1x20x32x128xf32, #tpu.memory_space<vmem>>, vector<1x20x32x128xf32>
    %4 = vector.shape_cast %3 : vector<1x20x32x128xf32> to vector<20x32x128xf32>
    %5 = vector.extract_strided_slice %4 {offsets = [0, 0, 0], sizes = [20, 24, 128], strides = [1, 1, 1]} : vector<20x32x128xf32> to vector<20x24x128xf32>
    %6 = vector.extract_strided_slice %4 {offsets = [0, 1, 0], sizes = [20, 24, 128], strides = [1, 1, 1]} : vector<20x32x128xf32> to vector<20x24x128xf32>
    %7 = vector.extract_strided_slice %4 {offsets = [0, 2, 0], sizes = [20, 24, 128], strides = [1, 1, 1]} : vector<20x32x128xf32> to vector<20x24x128xf32>
    %8 = tpu.concatenate %5, %6, %7 in 2 : vector<20x24x128xf32>, vector<20x24x128xf32>, vector<20x24x128xf32> -> vector<20x24x384xf32>
    %cst = arith.constant 0.000000e+00 : f32
    %9 = vector.broadcast %cst : f32 to vector<432x128xf32>
    %10 = vector.extract_strided_slice %8 {offsets = [0, 0, 0], sizes = [18, 24, 384], strides = [1, 1, 1]} : vector<20x24x384xf32> to vector<18x24x384xf32>
    %11 = vector.shape_cast %10 : vector<18x24x384xf32> to vector<432x384xf32>
    %12 = arith.truncf %11 : vector<432x384xf32> to vector<432x384xbf16>
    %c0_2 = arith.constant 0 : index
    %c0_3 = arith.constant 0 : index
    %c0_4 = arith.constant 0 : index
    %13 = vector.load %arg3[%c0_2, %c0_3, %c0_4] : memref<3x384x128xbf16, #tpu.memory_space<vmem>>, vector<1x384x128xbf16>
    %14 = vector.shape_cast %13 : vector<1x384x128xbf16> to vector<384x128xbf16>
    %cst_5 = arith.constant dense<0.000000e+00> : vector<432x128xf32>
    %15 = tpu.matmul %12, %14, %cst_5 {dimension_numbers = #tpu.dot_dimension_numbers<[1], [0], [0], [1], [0, 0, 1, 1], [], []>} : vector<432x384xbf16>, vector<384x128xbf16>, vector<432x128xf32> -> vector<432x128xf32>
    %16 = arith.addf %9, %15 : vector<432x128xf32>
    %17 = vector.extract_strided_slice %8 {offsets = [1, 0, 0], sizes = [18, 24, 384], strides = [1, 1, 1]} : vector<20x24x384xf32> to vector<18x24x384xf32>
    %18 = vector.shape_cast %17 : vector<18x24x384xf32> to vector<432x384xf32>
    %19 = arith.truncf %18 : vector<432x384xf32> to vector<432x384xbf16>
    %c1 = arith.constant 1 : index
    %c0_6 = arith.constant 0 : index
    %c0_7 = arith.constant 0 : index
    %20 = vector.load %arg3[%c1, %c0_6, %c0_7] : memref<3x384x128xbf16, #tpu.memory_space<vmem>>, vector<1x384x128xbf16>
    %21 = vector.shape_cast %20 : vector<1x384x128xbf16> to vector<384x128xbf16>
    %cst_8 = arith.constant dense<0.000000e+00> : vector<432x128xf32>
    %22 = tpu.matmul %19, %21, %cst_8 {dimension_numbers = #tpu.dot_dimension_numbers<[1], [0], [0], [1], [0, 0, 1, 1], [], []>} : vector<432x384xbf16>, vector<384x128xbf16>, vector<432x128xf32> -> vector<432x128xf32>
    %23 = arith.addf %16, %22 : vector<432x128xf32>
    %24 = vector.extract_strided_slice %8 {offsets = [2, 0, 0], sizes = [18, 24, 384], strides = [1, 1, 1]} : vector<20x24x384xf32> to vector<18x24x384xf32>
    %25 = vector.shape_cast %24 : vector<18x24x384xf32> to vector<432x384xf32>
    %26 = arith.truncf %25 : vector<432x384xf32> to vector<432x384xbf16>
    %c2 = arith.constant 2 : index
    %c0_9 = arith.constant 0 : index
    %c0_10 = arith.constant 0 : index
    %27 = vector.load %arg3[%c2, %c0_9, %c0_10] : memref<3x384x128xbf16, #tpu.memory_space<vmem>>, vector<1x384x128xbf16>
    %28 = vector.shape_cast %27 : vector<1x384x128xbf16> to vector<384x128xbf16>
    %cst_11 = arith.constant dense<0.000000e+00> : vector<432x128xf32>
    %29 = tpu.matmul %26, %28, %cst_11 {dimension_numbers = #tpu.dot_dimension_numbers<[1], [0], [0], [1], [0, 0, 1, 1], [], []>} : vector<432x384xbf16>, vector<384x128xbf16>, vector<432x128xf32> -> vector<432x128xf32>
    %30 = arith.addf %23, %29 : vector<432x128xf32>
    %c0_12 = arith.constant 0 : index
    %c0_13 = arith.constant 0 : index
    %31 = vector.load %arg4[%c0_12, %c0_13] : memref<1x128xf32, #tpu.memory_space<vmem>>, vector<1x128xf32>
    %32 = vector.shape_cast %31 : vector<1x128xf32> to vector<128xf32>
    %33 = vector.shape_cast %32 : vector<128xf32> to vector<1x128xf32>
    %34 = vector.broadcast %33 : vector<1x128xf32> to vector<432x128xf32>
    %35 = arith.mulf %30, %34 : vector<432x128xf32>
    %c0_14 = arith.constant 0 : index
    %c0_15 = arith.constant 0 : index
    %36 = vector.load %arg5[%c0_14, %c0_15] : memref<1x128xf32, #tpu.memory_space<vmem>>, vector<1x128xf32>
    %37 = vector.shape_cast %36 : vector<1x128xf32> to vector<128xf32>
    %38 = vector.shape_cast %37 : vector<128xf32> to vector<1x128xf32>
    %39 = vector.broadcast %38 : vector<1x128xf32> to vector<432x128xf32>
    %40 = arith.addf %35, %39 : vector<432x128xf32>
    %cst_16 = arith.constant 0.000000e+00 : f32
    %41 = vector.broadcast %cst_16 : f32 to vector<432x128xf32>
    %42 = arith.maximumf %40, %41 : vector<432x128xf32>
    %43 = vector.shape_cast %42 : vector<432x128xf32> to vector<18x24x128xf32>
    %44 = tpu.iota {dimensions = array<i32: 0>} : vector<18x1x1xi32>
    %c1_i32 = arith.constant 1 : i32
    %45 = arith.subi %1, %c1_i32 : i32
    %46 = vector.broadcast %45 : i32 to vector<18x1x1xi32>
    %47 = arith.addi %44, %46 : vector<18x1x1xi32>
    %48 = tpu.iota {dimensions = array<i32: 1>} : vector<1x24x1xi32>
    %c1_i32_17 = arith.constant 1 : i32
    %49 = vector.broadcast %c1_i32_17 : i32 to vector<1x24x1xi32>
    %50 = arith.subi %48, %49 : vector<1x24x1xi32>
    %c0_i32 = arith.constant 0 : i32
    %51 = vector.broadcast %c0_i32 : i32 to vector<18x1x1xi32>
    %52 = arith.cmpi sge, %47, %51 : vector<18x1x1xi32>
    %c16_i32_18 = arith.constant 16 : i32
    %53 = vector.broadcast %c16_i32_18 : i32 to vector<18x1x1xi32>
    %54 = arith.cmpi slt, %47, %53 : vector<18x1x1xi32>
    %55 = arith.andi %52, %54 : vector<18x1x1xi1>
    %c0_i32_19 = arith.constant 0 : i32
    %56 = vector.broadcast %c0_i32_19 : i32 to vector<1x24x1xi32>
    %57 = arith.cmpi sge, %50, %56 : vector<1x24x1xi32>
    %58 = vector.broadcast %55 : vector<18x1x1xi1> to vector<18x24x1xi1>
    %59 = vector.broadcast %57 : vector<1x24x1xi1> to vector<18x24x1xi1>
    %60 = arith.andi %58, %59 : vector<18x24x1xi1>
    %c16_i32_20 = arith.constant 16 : i32
    %61 = vector.broadcast %c16_i32_20 : i32 to vector<1x24x1xi32>
    %62 = arith.cmpi slt, %50, %61 : vector<1x24x1xi32>
    %63 = vector.broadcast %62 : vector<1x24x1xi1> to vector<18x24x1xi1>
    %64 = arith.andi %60, %63 : vector<18x24x1xi1>
    %cst_21 = arith.constant 0.000000e+00 : f32
    %65 = vector.shape_cast %64 : vector<18x24x1xi1> to vector<18x24x1xi1>
    %66 = vector.broadcast %65 : vector<18x24x1xi1> to vector<18x24x128xi1>
    %67 = vector.broadcast %cst_21 : f32 to vector<18x24x128xf32>
    %68 = arith.select %66, %43, %67 : vector<18x24x128xi1>, vector<18x24x128xf32>
    %c0_22 = arith.constant 0 : index
    %c0_23 = arith.constant 0 : index
    %c0_24 = arith.constant 0 : index
    %69 = vector.load %arg10[%c0_22, %c0_23, %c0_24] : memref<18x24x128xf32, #tpu.memory_space<vmem>>, vector<18x24x128xf32>
    tpu.vector_store %arg10[%c0_22, %c0_23, %c0_24], %68 {strides = array<i32>} : memref<18x24x128xf32, #tpu.memory_space<vmem>>, vector<18x24x128xf32>,
    %c0_25 = arith.constant 0 : index
    %c0_26 = arith.constant 0 : index
    %c0_27 = arith.constant 0 : index
    %70 = vector.load %arg10[%c0_25, %c0_26, %c0_27] : memref<18x24x128xf32, #tpu.memory_space<vmem>>, vector<18x16x128xf32>
    %c0_28 = arith.constant 0 : index
    %c1_29 = arith.constant 1 : index
    %c0_30 = arith.constant 0 : index
    %71 = vector.load %arg10[%c0_28, %c1_29, %c0_30] : memref<18x24x128xf32, #tpu.memory_space<vmem>>, vector<18x16x128xf32>
    %c0_31 = arith.constant 0 : index
    %c2_32 = arith.constant 2 : index
    %c0_33 = arith.constant 0 : index
    %72 = vector.load %arg10[%c0_31, %c2_32, %c0_33] : memref<18x24x128xf32, #tpu.memory_space<vmem>>, vector<18x16x128xf32>
    %73 = tpu.concatenate %70, %71, %72 in 2 : vector<18x16x128xf32>, vector<18x16x128xf32>, vector<18x16x128xf32> -> vector<18x16x384xf32>
    %cst_34 = arith.constant 0.000000e+00 : f32
    %74 = vector.broadcast %cst_34 : f32 to vector<256x128xf32>
    %75 = vector.extract_strided_slice %73 {offsets = [0, 0, 0], sizes = [16, 16, 384], strides = [1, 1, 1]} : vector<18x16x384xf32> to vector<16x16x384xf32>
    %76 = vector.shape_cast %75 : vector<16x16x384xf32> to vector<256x384xf32>
    %77 = arith.truncf %76 : vector<256x384xf32> to vector<256x384xbf16>
    %c0_35 = arith.constant 0 : index
    %c0_36 = arith.constant 0 : index
    %c0_37 = arith.constant 0 : index
    %78 = vector.load %arg6[%c0_35, %c0_36, %c0_37] : memref<3x384x128xbf16, #tpu.memory_space<vmem>>, vector<1x384x128xbf16>
    %79 = vector.shape_cast %78 : vector<1x384x128xbf16> to vector<384x128xbf16>
    %cst_38 = arith.constant dense<0.000000e+00> : vector<256x128xf32>
    %80 = tpu.matmul %77, %79, %cst_38 {dimension_numbers = #tpu.dot_dimension_numbers<[1], [0], [0], [1], [0, 0, 1, 1], [], []>} : vector<256x384xbf16>, vector<384x128xbf16>, vector<256x128xf32> -> vector<256x128xf32>
    %81 = arith.addf %74, %80 : vector<256x128xf32>
    %82 = vector.extract_strided_slice %73 {offsets = [1, 0, 0], sizes = [16, 16, 384], strides = [1, 1, 1]} : vector<18x16x384xf32> to vector<16x16x384xf32>
    %83 = vector.shape_cast %82 : vector<16x16x384xf32> to vector<256x384xf32>
    %84 = arith.truncf %83 : vector<256x384xf32> to vector<256x384xbf16>
    %c1_39 = arith.constant 1 : index
    %c0_40 = arith.constant 0 : index
    %c0_41 = arith.constant 0 : index
    %85 = vector.load %arg6[%c1_39, %c0_40, %c0_41] : memref<3x384x128xbf16, #tpu.memory_space<vmem>>, vector<1x384x128xbf16>
    %86 = vector.shape_cast %85 : vector<1x384x128xbf16> to vector<384x128xbf16>
    %cst_42 = arith.constant dense<0.000000e+00> : vector<256x128xf32>
    %87 = tpu.matmul %84, %86, %cst_42 {dimension_numbers = #tpu.dot_dimension_numbers<[1], [0], [0], [1], [0, 0, 1, 1], [], []>} : vector<256x384xbf16>, vector<384x128xbf16>, vector<256x128xf32> -> vector<256x128xf32>
    %88 = arith.addf %81, %87 : vector<256x128xf32>
    %89 = vector.extract_strided_slice %73 {offsets = [2, 0, 0], sizes = [16, 16, 384], strides = [1, 1, 1]} : vector<18x16x384xf32> to vector<16x16x384xf32>
    %90 = vector.shape_cast %89 : vector<16x16x384xf32> to vector<256x384xf32>
    %91 = arith.truncf %90 : vector<256x384xf32> to vector<256x384xbf16>
    %c2_43 = arith.constant 2 : index
    %c0_44 = arith.constant 0 : index
    %c0_45 = arith.constant 0 : index
    %92 = vector.load %arg6[%c2_43, %c0_44, %c0_45] : memref<3x384x128xbf16, #tpu.memory_space<vmem>>, vector<1x384x128xbf16>
    %93 = vector.shape_cast %92 : vector<1x384x128xbf16> to vector<384x128xbf16>
    %cst_46 = arith.constant dense<0.000000e+00> : vector<256x128xf32>
    %94 = tpu.matmul %91, %93, %cst_46 {dimension_numbers = #tpu.dot_dimension_numbers<[1], [0], [0], [1], [0, 0, 1, 1], [], []>} : vector<256x384xbf16>, vector<384x128xbf16>, vector<256x128xf32> -> vector<256x128xf32>
    %95 = arith.addf %88, %94 : vector<256x128xf32>
    %c0_47 = arith.constant 0 : index
    %c0_48 = arith.constant 0 : index
    %96 = vector.load %arg7[%c0_47, %c0_48] : memref<1x128xf32, #tpu.memory_space<vmem>>, vector<1x128xf32>
    %97 = vector.shape_cast %96 : vector<1x128xf32> to vector<128xf32>
    %98 = vector.shape_cast %97 : vector<128xf32> to vector<1x128xf32>
    %99 = vector.broadcast %98 : vector<1x128xf32> to vector<256x128xf32>
    %100 = arith.mulf %95, %99 : vector<256x128xf32>
    %c0_49 = arith.constant 0 : index
    %c0_50 = arith.constant 0 : index
    %101 = vector.load %arg8[%c0_49, %c0_50] : memref<1x128xf32, #tpu.memory_space<vmem>>, vector<1x128xf32>
    %102 = vector.shape_cast %101 : vector<1x128xf32> to vector<128xf32>
    %103 = vector.shape_cast %102 : vector<128xf32> to vector<1x128xf32>
    %104 = vector.broadcast %103 : vector<1x128xf32> to vector<256x128xf32>
    %105 = arith.addf %100, %104 : vector<256x128xf32>
    %106 = vector.extract_strided_slice %7 {offsets = [2, 0, 0], sizes = [16, 16, 128], strides = [1, 1, 1]} : vector<20x24x128xf32> to vector<16x16x128xf32>
    %107 = vector.shape_cast %106 : vector<16x16x128xf32> to vector<256x128xf32>
    %108 = arith.addf %105, %107 : vector<256x128xf32>
    %cst_51 = arith.constant 0.000000e+00 : f32
    %109 = vector.broadcast %cst_51 : f32 to vector<256x128xf32>
    %110 = arith.maximumf %108, %109 : vector<256x128xf32>
    %111 = vector.shape_cast %110 : vector<256x128xf32> to vector<16x16x128xf32>
    %112 = vector.extract_strided_slice %111 {offsets = [0, 0, 0], sizes = [16, 16, 8], strides = [1, 1, 1]} : vector<16x16x128xf32> to vector<16x16x8xf32>
    %c0_52 = arith.constant 0 : index
    %c0_53 = arith.constant 0 : index
    %c0_54 = arith.constant 0 : index
    %c0_55 = arith.constant 0 : index
    %113 = vector.load %arg9[%c0_52, %c0_53, %c0_54, %c0_55] : memref<1x16x16x8xf32, #tpu.memory_space<vmem>>, vector<1x16x16x8xf32>
    %114 = vector.shape_cast %113 : vector<1x16x16x8xf32> to vector<16x16x8xf32>
    %115 = vector.shape_cast %112 : vector<16x16x8xf32> to vector<1x16x16x8xf32>
    tpu.vector_store %arg9[%c0_52, %c0_53, %c0_54, %c0_55], %115 {strides = array<i32>} : memref<1x16x16x8xf32, #tpu.memory_space<vmem>>, vector<1x16x16x8xf32>,
    return
  }
  func.func @transform_0(%arg0: i32, %arg1: i32) -> (i32, i32, i32, i32) {
    %c0_i32 = arith.constant 0 : i32
    %c0_i32_0 = arith.constant 0 : i32
    %c0_i32_1 = arith.constant 0 : i32
    %c0_i32_2 = arith.constant 0 : i32
    return %arg0, %c0_i32, %c0_i32_0, %c0_i32_1 : i32, i32, i32, i32
  }
  func.func @transform_1(%arg0: i32, %arg1: i32) -> (i32, i32, i32) {
    %c0_i32 = arith.constant 0 : i32
    %c0_i32_0 = arith.constant 0 : i32
    %c0_i32_1 = arith.constant 0 : i32
    %c0_i32_2 = arith.constant 0 : i32
    return %c0_i32, %c0_i32_0, %c0_i32_1 : i32, i32, i32
  }
  func.func @transform_2(%arg0: i32, %arg1: i32) -> (i32, i32) {
    %c0_i32 = arith.constant 0 : i32
    %c0_i32_0 = arith.constant 0 : i32
    %c0_i32_1 = arith.constant 0 : i32
    return %c0_i32, %c0_i32_0 : i32, i32
  }
  func.func @transform_3(%arg0: i32, %arg1: i32) -> (i32, i32) {
    %c0_i32 = arith.constant 0 : i32
    %c0_i32_0 = arith.constant 0 : i32
    %c0_i32_1 = arith.constant 0 : i32
    return %c0_i32, %c0_i32_0 : i32, i32
  }
  func.func @transform_4(%arg0: i32, %arg1: i32) -> (i32, i32, i32) {
    %c0_i32 = arith.constant 0 : i32
    %c0_i32_0 = arith.constant 0 : i32
    %c0_i32_1 = arith.constant 0 : i32
    %c0_i32_2 = arith.constant 0 : i32
    return %c0_i32, %c0_i32_0, %c0_i32_1 : i32, i32, i32
  }
  func.func @transform_5(%arg0: i32, %arg1: i32) -> (i32, i32) {
    %c0_i32 = arith.constant 0 : i32
    %c0_i32_0 = arith.constant 0 : i32
    %c0_i32_1 = arith.constant 0 : i32
    return %c0_i32, %c0_i32_0 : i32, i32
  }
  func.func @transform_6(%arg0: i32, %arg1: i32) -> (i32, i32) {
    %c0_i32 = arith.constant 0 : i32
    %c0_i32_0 = arith.constant 0 : i32
    %c0_i32_1 = arith.constant 0 : i32
    return %c0_i32, %c0_i32_0 : i32, i32
  }
  func.func @transform_7(%arg0: i32, %arg1: i32) -> (i32, i32, i32, i32) {
    %c0_i32 = arith.constant 0 : i32
    %c0_i32_0 = arith.constant 0 : i32
    %c0_i32_1 = arith.constant 0 : i32
    return %arg0, %arg1, %c0_i32, %c0_i32_0 : i32, i32, i32, i32
  }
}

module attributes {stable_mosaic.version = 11 : i64} {
  func.func @_basic_block_kernel(%arg0: i32, %arg1: i32, %arg2: memref<1x20x32x128xf32, #tpu.memory_space<vmem>>, %arg3: memref<3x384x128xbf16, #tpu.memory_space<vmem>>, %arg4: memref<1x128xf32, #tpu.memory_space<vmem>>, %arg5: memref<1x128xf32, #tpu.memory_space<vmem>>, %arg6: memref<3x384x128xbf16, #tpu.memory_space<vmem>>, %arg7: memref<1x128xf32, #tpu.memory_space<vmem>>, %arg8: memref<1x128xf32, #tpu.memory_space<vmem>>, %arg9: memref<1x16x16x8xf32, #tpu.memory_space<vmem>>, %arg10: memref<18x24x128xf32, #tpu.memory_space<vmem>>) attributes {dimension_semantics = [#tpu.dimension_semantics<parallel>, #tpu.dimension_semantics<parallel>], iteration_bounds = array<i64: 2, 1>, scalar_prefetch = 0 : i64, scratch_operands = 1 : i64, tpu.core_type = #tpu.core_type<tc>, window_params = [{transform_indices = @transform_0, window_bounds = array<i64: 1, 20, 32, 128>}, {pipeline_mode = #tpu.pipeline_mode<synchronous>, transform_indices = @transform_1, window_bounds = array<i64: 3, 384, 128>}, {pipeline_mode = #tpu.pipeline_mode<synchronous>, transform_indices = @transform_2, window_bounds = array<i64: 1, 128>}, {pipeline_mode = #tpu.pipeline_mode<synchronous>, transform_indices = @transform_3, window_bounds = array<i64: 1, 128>}, {pipeline_mode = #tpu.pipeline_mode<synchronous>, transform_indices = @transform_4, window_bounds = array<i64: 3, 384, 128>}, {pipeline_mode = #tpu.pipeline_mode<synchronous>, transform_indices = @transform_5, window_bounds = array<i64: 1, 128>}, {pipeline_mode = #tpu.pipeline_mode<synchronous>, transform_indices = @transform_6, window_bounds = array<i64: 1, 128>}, {transform_indices = @transform_7, window_bounds = array<i64: 1, 16, 16, 8>}]} {
    %c16_i32 = arith.constant 16 : i32
    %0 = arith.muli %arg1, %c16_i32 : i32
    %1 = tpu.assume_multiple %0, 16 : i32
    %c0 = arith.constant 0 : index
    %2 = arith.index_cast %1 : i32 to index
    %c0_0 = arith.constant 0 : index
    %c0_1 = arith.constant 0 : index
    %3 = vector.load %arg2[%c0, %2, %c0_0, %c0_1] : memref<1x20x32x128xf32, #tpu.memory_space<vmem>>, vector<1x20x32x128xf32>
    %4 = vector.shape_cast %3 : vector<1x20x32x128xf32> to vector<20x32x128xf32>
    %5 = vector.extract_strided_slice %4 {offsets = [0, 0, 0], sizes = [20, 24, 128], strides = [1, 1, 1]} : vector<20x32x128xf32> to vector<20x24x128xf32>
    %6 = vector.extract_strided_slice %4 {offsets = [0, 1, 0], sizes = [20, 24, 128], strides = [1, 1, 1]} : vector<20x32x128xf32> to vector<20x24x128xf32>
    %7 = vector.extract_strided_slice %4 {offsets = [0, 2, 0], sizes = [20, 24, 128], strides = [1, 1, 1]} : vector<20x32x128xf32> to vector<20x24x128xf32>
    %8 = tpu.concatenate %5, %6, %7 in 2 : vector<20x24x128xf32>, vector<20x24x128xf32>, vector<20x24x128xf32> -> vector<20x24x384xf32>
    %cst = arith.constant 0.000000e+00 : f32
    %9 = vector.broadcast %cst : f32 to vector<432x128xf32>
    %10 = vector.extract_strided_slice %8 {offsets = [0, 0, 0], sizes = [18, 24, 384], strides = [1, 1, 1]} : vector<20x24x384xf32> to vector<18x24x384xf32>
    %11 = vector.shape_cast %10 : vector<18x24x384xf32> to vector<432x384xf32>
    %12 = arith.truncf %11 : vector<432x384xf32> to vector<432x384xbf16>
    %c0_2 = arith.constant 0 : index
    %c0_3 = arith.constant 0 : index
    %c0_4 = arith.constant 0 : index
    %13 = vector.load %arg3[%c0_2, %c0_3, %c0_4] : memref<3x384x128xbf16, #tpu.memory_space<vmem>>, vector<1x384x128xbf16>
    %14 = vector.shape_cast %13 : vector<1x384x128xbf16> to vector<384x128xbf16>
    %cst_5 = arith.constant dense<0.000000e+00> : vector<432x128xf32>
    %15 = tpu.matmul %12, %14, %cst_5 {dimension_numbers = #tpu.dot_dimension_numbers<[1], [0], [0], [1], [0, 0, 1, 1], [], []>} : vector<432x384xbf16>, vector<384x128xbf16>, vector<432x128xf32> -> vector<432x128xf32>
    %16 = arith.addf %9, %15 : vector<432x128xf32>
    %17 = vector.extract_strided_slice %8 {offsets = [1, 0, 0], sizes = [18, 24, 384], strides = [1, 1, 1]} : vector<20x24x384xf32> to vector<18x24x384xf32>
    %18 = vector.shape_cast %17 : vector<18x24x384xf32> to vector<432x384xf32>
    %19 = arith.truncf %18 : vector<432x384xf32> to vector<432x384xbf16>
    %c1 = arith.constant 1 : index
    %c0_6 = arith.constant 0 : index
    %c0_7 = arith.constant 0 : index
    %20 = vector.load %arg3[%c1, %c0_6, %c0_7] : memref<3x384x128xbf16, #tpu.memory_space<vmem>>, vector<1x384x128xbf16>
    %21 = vector.shape_cast %20 : vector<1x384x128xbf16> to vector<384x128xbf16>
    %cst_8 = arith.constant dense<0.000000e+00> : vector<432x128xf32>
    %22 = tpu.matmul %19, %21, %cst_8 {dimension_numbers = #tpu.dot_dimension_numbers<[1], [0], [0], [1], [0, 0, 1, 1], [], []>} : vector<432x384xbf16>, vector<384x128xbf16>, vector<432x128xf32> -> vector<432x128xf32>
    %23 = arith.addf %16, %22 : vector<432x128xf32>
    %24 = vector.extract_strided_slice %8 {offsets = [2, 0, 0], sizes = [18, 24, 384], strides = [1, 1, 1]} : vector<20x24x384xf32> to vector<18x24x384xf32>
    %25 = vector.shape_cast %24 : vector<18x24x384xf32> to vector<432x384xf32>
    %26 = arith.truncf %25 : vector<432x384xf32> to vector<432x384xbf16>
    %c2 = arith.constant 2 : index
    %c0_9 = arith.constant 0 : index
    %c0_10 = arith.constant 0 : index
    %27 = vector.load %arg3[%c2, %c0_9, %c0_10] : memref<3x384x128xbf16, #tpu.memory_space<vmem>>, vector<1x384x128xbf16>
    %28 = vector.shape_cast %27 : vector<1x384x128xbf16> to vector<384x128xbf16>
    %cst_11 = arith.constant dense<0.000000e+00> : vector<432x128xf32>
    %29 = tpu.matmul %26, %28, %cst_11 {dimension_numbers = #tpu.dot_dimension_numbers<[1], [0], [0], [1], [0, 0, 1, 1], [], []>} : vector<432x384xbf16>, vector<384x128xbf16>, vector<432x128xf32> -> vector<432x128xf32>
    %30 = arith.addf %23, %29 : vector<432x128xf32>
    %c0_12 = arith.constant 0 : index
    %c0_13 = arith.constant 0 : index
    %31 = vector.load %arg4[%c0_12, %c0_13] : memref<1x128xf32, #tpu.memory_space<vmem>>, vector<1x128xf32>
    %32 = vector.shape_cast %31 : vector<1x128xf32> to vector<128xf32>
    %33 = vector.shape_cast %32 : vector<128xf32> to vector<1x128xf32>
    %34 = vector.broadcast %33 : vector<1x128xf32> to vector<432x128xf32>
    %35 = arith.mulf %30, %34 : vector<432x128xf32>
    %c0_14 = arith.constant 0 : index
    %c0_15 = arith.constant 0 : index
    %36 = vector.load %arg5[%c0_14, %c0_15] : memref<1x128xf32, #tpu.memory_space<vmem>>, vector<1x128xf32>
    %37 = vector.shape_cast %36 : vector<1x128xf32> to vector<128xf32>
    %38 = vector.shape_cast %37 : vector<128xf32> to vector<1x128xf32>
    %39 = vector.broadcast %38 : vector<1x128xf32> to vector<432x128xf32>
    %40 = arith.addf %35, %39 : vector<432x128xf32>
    %cst_16 = arith.constant 0.000000e+00 : f32
    %41 = vector.broadcast %cst_16 : f32 to vector<432x128xf32>
    %42 = arith.maximumf %40, %41 : vector<432x128xf32>
    %43 = vector.shape_cast %42 : vector<432x128xf32> to vector<18x24x128xf32>
    %44 = tpu.iota {dimensions = array<i32: 0>} : vector<18x1x1xi32>
    %c1_i32 = arith.constant 1 : i32
    %45 = arith.subi %1, %c1_i32 : i32
    %46 = vector.broadcast %45 : i32 to vector<18x1x1xi32>
    %47 = arith.addi %44, %46 : vector<18x1x1xi32>
    %48 = tpu.iota {dimensions = array<i32: 1>} : vector<1x24x1xi32>
    %c1_i32_17 = arith.constant 1 : i32
    %49 = vector.broadcast %c1_i32_17 : i32 to vector<1x24x1xi32>
    %50 = arith.subi %48, %49 : vector<1x24x1xi32>
    %c0_i32 = arith.constant 0 : i32
    %51 = vector.broadcast %c0_i32 : i32 to vector<18x1x1xi32>
    %52 = arith.cmpi sge, %47, %51 : vector<18x1x1xi32>
    %c16_i32_18 = arith.constant 16 : i32
    %53 = vector.broadcast %c16_i32_18 : i32 to vector<18x1x1xi32>
    %54 = arith.cmpi slt, %47, %53 : vector<18x1x1xi32>
    %55 = arith.andi %52, %54 : vector<18x1x1xi1>
    %c0_i32_19 = arith.constant 0 : i32
    %56 = vector.broadcast %c0_i32_19 : i32 to vector<1x24x1xi32>
    %57 = arith.cmpi sge, %50, %56 : vector<1x24x1xi32>
    %58 = vector.broadcast %55 : vector<18x1x1xi1> to vector<18x24x1xi1>
    %59 = vector.broadcast %57 : vector<1x24x1xi1> to vector<18x24x1xi1>
    %60 = arith.andi %58, %59 : vector<18x24x1xi1>
    %c16_i32_20 = arith.constant 16 : i32
    %61 = vector.broadcast %c16_i32_20 : i32 to vector<1x24x1xi32>
    %62 = arith.cmpi slt, %50, %61 : vector<1x24x1xi32>
    %63 = vector.broadcast %62 : vector<1x24x1xi1> to vector<18x24x1xi1>
    %64 = arith.andi %60, %63 : vector<18x24x1xi1>
    %cst_21 = arith.constant 0.000000e+00 : f32
    %65 = vector.shape_cast %64 : vector<18x24x1xi1> to vector<18x24x1xi1>
    %66 = vector.broadcast %65 : vector<18x24x1xi1> to vector<18x24x128xi1>
    %67 = vector.broadcast %cst_21 : f32 to vector<18x24x128xf32>
    %68 = arith.select %66, %43, %67 : vector<18x24x128xi1>, vector<18x24x128xf32>
    %c0_22 = arith.constant 0 : index
    %c0_23 = arith.constant 0 : index
    %c0_24 = arith.constant 0 : index
    %69 = vector.load %arg10[%c0_22, %c0_23, %c0_24] : memref<18x24x128xf32, #tpu.memory_space<vmem>>, vector<18x24x128xf32>
    tpu.vector_store %arg10[%c0_22, %c0_23, %c0_24], %68 {strides = array<i32>} : memref<18x24x128xf32, #tpu.memory_space<vmem>>, vector<18x24x128xf32>,
    %c0_25 = arith.constant 0 : index
    %c0_26 = arith.constant 0 : index
    %c0_27 = arith.constant 0 : index
    %70 = vector.load %arg10[%c0_25, %c0_26, %c0_27] : memref<18x24x128xf32, #tpu.memory_space<vmem>>, vector<18x16x128xf32>
    %c0_28 = arith.constant 0 : index
    %c1_29 = arith.constant 1 : index
    %c0_30 = arith.constant 0 : index
    %71 = vector.load %arg10[%c0_28, %c1_29, %c0_30] : memref<18x24x128xf32, #tpu.memory_space<vmem>>, vector<18x16x128xf32>
    %c0_31 = arith.constant 0 : index
    %c2_32 = arith.constant 2 : index
    %c0_33 = arith.constant 0 : index
    %72 = vector.load %arg10[%c0_31, %c2_32, %c0_33] : memref<18x24x128xf32, #tpu.memory_space<vmem>>, vector<18x16x128xf32>
    %73 = tpu.concatenate %70, %71, %72 in 2 : vector<18x16x128xf32>, vector<18x16x128xf32>, vector<18x16x128xf32> -> vector<18x16x384xf32>
    %cst_34 = arith.constant 0.000000e+00 : f32
    %74 = vector.broadcast %cst_34 : f32 to vector<256x128xf32>
    %75 = vector.extract_strided_slice %73 {offsets = [0, 0, 0], sizes = [16, 16, 384], strides = [1, 1, 1]} : vector<18x16x384xf32> to vector<16x16x384xf32>
    %76 = vector.shape_cast %75 : vector<16x16x384xf32> to vector<256x384xf32>
    %77 = arith.truncf %76 : vector<256x384xf32> to vector<256x384xbf16>
    %c0_35 = arith.constant 0 : index
    %c0_36 = arith.constant 0 : index
    %c0_37 = arith.constant 0 : index
    %78 = vector.load %arg6[%c0_35, %c0_36, %c0_37] : memref<3x384x128xbf16, #tpu.memory_space<vmem>>, vector<1x384x128xbf16>
    %79 = vector.shape_cast %78 : vector<1x384x128xbf16> to vector<384x128xbf16>
    %cst_38 = arith.constant dense<0.000000e+00> : vector<256x128xf32>
    %80 = tpu.matmul %77, %79, %cst_38 {dimension_numbers = #tpu.dot_dimension_numbers<[1], [0], [0], [1], [0, 0, 1, 1], [], []>} : vector<256x384xbf16>, vector<384x128xbf16>, vector<256x128xf32> -> vector<256x128xf32>
    %81 = arith.addf %74, %80 : vector<256x128xf32>
    %82 = vector.extract_strided_slice %73 {offsets = [1, 0, 0], sizes = [16, 16, 384], strides = [1, 1, 1]} : vector<18x16x384xf32> to vector<16x16x384xf32>
    %83 = vector.shape_cast %82 : vector<16x16x384xf32> to vector<256x384xf32>
    %84 = arith.truncf %83 : vector<256x384xf32> to vector<256x384xbf16>
    %c1_39 = arith.constant 1 : index
    %c0_40 = arith.constant 0 : index
    %c0_41 = arith.constant 0 : index
    %85 = vector.load %arg6[%c1_39, %c0_40, %c0_41] : memref<3x384x128xbf16, #tpu.memory_space<vmem>>, vector<1x384x128xbf16>
    %86 = vector.shape_cast %85 : vector<1x384x128xbf16> to vector<384x128xbf16>
    %cst_42 = arith.constant dense<0.000000e+00> : vector<256x128xf32>
    %87 = tpu.matmul %84, %86, %cst_42 {dimension_numbers = #tpu.dot_dimension_numbers<[1], [0], [0], [1], [0, 0, 1, 1], [], []>} : vector<256x384xbf16>, vector<384x128xbf16>, vector<256x128xf32> -> vector<256x128xf32>
    %88 = arith.addf %81, %87 : vector<256x128xf32>
    %89 = vector.extract_strided_slice %73 {offsets = [2, 0, 0], sizes = [16, 16, 384], strides = [1, 1, 1]} : vector<18x16x384xf32> to vector<16x16x384xf32>
    %90 = vector.shape_cast %89 : vector<16x16x384xf32> to vector<256x384xf32>
    %91 = arith.truncf %90 : vector<256x384xf32> to vector<256x384xbf16>
    %c2_43 = arith.constant 2 : index
    %c0_44 = arith.constant 0 : index
    %c0_45 = arith.constant 0 : index
    %92 = vector.load %arg6[%c2_43, %c0_44, %c0_45] : memref<3x384x128xbf16, #tpu.memory_space<vmem>>, vector<1x384x128xbf16>
    %93 = vector.shape_cast %92 : vector<1x384x128xbf16> to vector<384x128xbf16>
    %cst_46 = arith.constant dense<0.000000e+00> : vector<256x128xf32>
    %94 = tpu.matmul %91, %93, %cst_46 {dimension_numbers = #tpu.dot_dimension_numbers<[1], [0], [0], [1], [0, 0, 1, 1], [], []>} : vector<256x384xbf16>, vector<384x128xbf16>, vector<256x128xf32> -> vector<256x128xf32>
    %95 = arith.addf %88, %94 : vector<256x128xf32>
    %c0_47 = arith.constant 0 : index
    %c0_48 = arith.constant 0 : index
    %96 = vector.load %arg7[%c0_47, %c0_48] : memref<1x128xf32, #tpu.memory_space<vmem>>, vector<1x128xf32>
    %97 = vector.shape_cast %96 : vector<1x128xf32> to vector<128xf32>
    %98 = vector.shape_cast %97 : vector<128xf32> to vector<1x128xf32>
    %99 = vector.broadcast %98 : vector<1x128xf32> to vector<256x128xf32>
    %100 = arith.mulf %95, %99 : vector<256x128xf32>
    %c0_49 = arith.constant 0 : index
    %c0_50 = arith.constant 0 : index
    %101 = vector.load %arg8[%c0_49, %c0_50] : memref<1x128xf32, #tpu.memory_space<vmem>>, vector<1x128xf32>
    %102 = vector.shape_cast %101 : vector<1x128xf32> to vector<128xf32>
    %103 = vector.shape_cast %102 : vector<128xf32> to vector<1x128xf32>
    %104 = vector.broadcast %103 : vector<1x128xf32> to vector<256x128xf32>
    %105 = arith.addf %100, %104 : vector<256x128xf32>
    %106 = vector.extract_strided_slice %7 {offsets = [2, 0, 0], sizes = [16, 16, 128], strides = [1, 1, 1]} : vector<20x24x128xf32> to vector<16x16x128xf32>
    %107 = vector.shape_cast %106 : vector<16x16x128xf32> to vector<256x128xf32>
    %108 = arith.addf %105, %107 : vector<256x128xf32>
    %cst_51 = arith.constant 0.000000e+00 : f32
    %109 = vector.broadcast %cst_51 : f32 to vector<256x128xf32>
    %110 = arith.maximumf %108, %109 : vector<256x128xf32>
    %111 = vector.shape_cast %110 : vector<256x128xf32> to vector<16x16x128xf32>
    %112 = vector.extract_strided_slice %111 {offsets = [0, 0, 0], sizes = [16, 16, 8], strides = [1, 1, 1]} : vector<16x16x128xf32> to vector<16x16x8xf32>
    %c0_52 = arith.constant 0 : index
    %c0_53 = arith.constant 0 : index
    %c0_54 = arith.constant 0 : index
    %c0_55 = arith.constant 0 : index
    %113 = vector.load %arg9[%c0_52, %c0_53, %c0_54, %c0_55] : memref<1x16x16x8xf32, #tpu.memory_space<vmem>>, vector<1x16x16x8xf32>
    %114 = vector.shape_cast %113 : vector<1x16x16x8xf32> to vector<16x16x8xf32>
    %115 = vector.shape_cast %112 : vector<16x16x8xf32> to vector<1x16x16x8xf32>
    tpu.vector_store %arg9[%c0_52, %c0_53, %c0_54, %c0_55], %115 {strides = array<i32>} : memref<1x16x16x8xf32, #tpu.memory_space<vmem>>, vector<1x16x16x8xf32>,
    return
  }
  func.func @transform_0(%arg0: i32, %arg1: i32) -> (i32, i32, i32, i32) {
    %c0_i32 = arith.constant 0 : i32
    %c0_i32_0 = arith.constant 0 : i32
    %c0_i32_1 = arith.constant 0 : i32
    %c0_i32_2 = arith.constant 0 : i32
    return %arg0, %c0_i32, %c0_i32_0, %c0_i32_1 : i32, i32, i32, i32
  }
  func.func @transform_1(%arg0: i32, %arg1: i32) -> (i32, i32, i32) {
    %c0_i32 = arith.constant 0 : i32
    %c0_i32_0 = arith.constant 0 : i32
    %c0_i32_1 = arith.constant 0 : i32
    %c0_i32_2 = arith.constant 0 : i32
    return %c0_i32, %c0_i32_0, %c0_i32_1 : i32, i32, i32
  }
  func.func @transform_2(%arg0: i32, %arg1: i32) -> (i32, i32) {
    %c0_i32 = arith.constant 0 : i32
    %c0_i32_0 = arith.constant 0 : i32
    %c0_i32_1 = arith.constant 0 : i32
    return %c0_i32, %c0_i32_0 : i32, i32
  }
  func.func @transform_3(%arg0: i32, %arg1: i32) -> (i32, i32) {
    %c0_i32 = arith.constant 0 : i32
    %c0_i32_0 = arith.constant 0 : i32
    %c0_i32_1 = arith.constant 0 : i32
    return %c0_i32, %c0_i32_0 : i32, i32
  }
  func.func @transform_4(%arg0: i32, %arg1: i32) -> (i32, i32, i32) {
    %c0_i32 = arith.constant 0 : i32
    %c0_i32_0 = arith.constant 0 : i32
    %c0_i32_1 = arith.constant 0 : i32
    %c0_i32_2 = arith.constant 0 : i32
    return %c0_i32, %c0_i32_0, %c0_i32_1 : i32, i32, i32
  }
  func.func @transform_5(%arg0: i32, %arg1: i32) -> (i32, i32) {
    %c0_i32 = arith.constant 0 : i32
    %c0_i32_0 = arith.constant 0 : i32
    %c0_i32_1 = arith.constant 0 : i32
    return %c0_i32, %c0_i32_0 : i32, i32
  }
  func.func @transform_6(%arg0: i32, %arg1: i32) -> (i32, i32) {
    %c0_i32 = arith.constant 0 : i32
    %c0_i32_0 = arith.constant 0 : i32
    %c0_i32_1 = arith.constant 0 : i32
    return %c0_i32, %c0_i32_0 : i32, i32
  }
  func.func @transform_7(%arg0: i32, %arg1: i32) -> (i32, i32, i32, i32) {
    %c0_i32 = arith.constant 0 : i32
    %c0_i32_0 = arith.constant 0 : i32
    %c0_i32_1 = arith.constant 0 : i32
    return %arg0, %arg1, %c0_i32, %c0_i32_0 : i32, i32, i32, i32
  }
}

</mosaic_0001>

<llo_original>
// kernel: tpu_custom_call.1
$region0: #{tpu_custom_call.1}
  #allocation0 [shape = 'u32[]', space=smem, size = 0x4, offset = 0x4, fixed_abs, tag = 'smem constant byte address 0x4 - core index']
  #allocation1 [shape = 'u32[72,128]{1,0:T(1,128)}', space=vmem, size = 0x9000, scoped, tag = 'internal scratch']
  #allocation2 [shape = 'f32[18,24,128]{2,1,0:T(8,128)}', space=vmem, size = 0x36000, scoped, tag = 'scratch operand']
  %s0 = inlined_call_operand.hbm [shape: f32[2,20,32,128], index: 0, kind: input, shape index: {}]
  %s1 = inlined_call_operand.hbm [shape: bf16[3,384,128], index: 1, kind: input, shape index: {}]
  %s2 = inlined_call_operand.vmem [shape: f32[1,128], index: 2, kind: input, shape index: {}]
  %s3 = inlined_call_operand.vmem [shape: f32[1,128], index: 3, kind: input, shape index: {}]
  %s4 = inlined_call_operand.hbm [shape: bf16[3,384,128], index: 4, kind: input, shape index: {}]
  %s5 = inlined_call_operand.vmem [shape: f32[1,128], index: 5, kind: input, shape index: {}]
  %s6 = inlined_call_operand.vmem [shape: f32[1,128], index: 6, kind: input, shape index: {}]
  %s7 = inlined_call_operand.vmem [shape: f32[2,16,16,8], index: 7, kind: output, shape index: {}]
  %s8 = sld [smem:[#allocation0]]
  $region73: #{tpu_custom_call.1} parent=0
    _
  %s10 = ssub.s32 1, %s8
  %s11 = scalar_select 0, %s10, %s8
  $region1: #{tpu_custom_call.1} parent=0
    #allocation3 [shape = 'u8[655360]{0}', space=vmem, size = 0xa0000, scoped, tag = 'input window, operand 0']
    #allocation4 [shape = 's32[2]{0}', space=sflag, size = 0x8, scoped, tag = 'scoped memory for tpu_custom_call.1']
    #allocation5 [shape = 'u8[294912]{0}', space=vmem, size = 0x48000, scoped, tag = 'input window, operand 1, single buffered']
    #allocation6 [shape = 's32[1]{0}', space=sflag, size = 0x4, scoped, tag = 'scoped memory for tpu_custom_call.1']
    #allocation7 [shape = 'u8[294912]{0}', space=vmem, size = 0x48000, scoped, tag = 'input window, operand 4, single buffered']
    %12 = vsyncpa [#allocation4], 0
    %s13 = scalar_lea.sflag [#allocation4], 1
    %14 = vsyncpa %s13, 0
    %15 = vsyncpa [#allocation6], 0
    loop: start=0, step=1, limit=4
    $region2: #{tpu_custom_call.1} parent=1 // loop_pre_header
      _
    $region3: #{tpu_custom_call.1} parent=1 // loop_header
      %s17 = sphi 0, %s21
      %p18 = scmp.ge.s32.totalorder %s17, 4
      %s24 = sphi 0, %s36
      %s25 = sphi 0, %s32
      %s26 = sphi 0, %s24
      %s27 = sphi 0, %s25
      %s28 = sphi 0, %s26
      %s29 = sphi 0, %s27
      %s39 = sphi 0, %s41
      %s42 = sphi 0, %s39
      %s43 = sphi 0, %s42
      %s59 = sphi 0, %s43
      %s63 = sphi 0, %s63
      %s65 = sphi 0, %s63
      %s66 = sphi 0, %s65
      %s80 = sphi 0, %s66
      %s84 = sphi 0, %s84
      %s86 = sphi 0, %s84
      %s87 = sphi 0, %s86
      %s101 = sphi 0, %s87
      %s105 = sphi 0, %s105
      %s107 = sphi 0, %s105
      %s108 = sphi 0, %s107
      %s122 = sphi 0, %s108
      %s126 = sphi 0, %s126
      %s128 = sphi 0, %s126
      %s129 = sphi 0, %s128
      %s143 = sphi 0, %s129
      %s147 = sphi 0, %s147
      %s149 = sphi 0, %s147
      %s150 = sphi 0, %s149
      %s164 = sphi 0, %s150
      %s168 = sphi 0, %s168
      %s170 = sphi 0, %s168
      %s171 = sphi 0, %s170
      %s185 = sphi 0, %s171
      %s193 = sphi 0, %s195
      %s196 = sphi 0, %s193
      %s197 = sphi 0, %s196
      %s213 = sphi 0, %s197
    $region4: #{tpu_custom_call.1} parent=1 // loop_header_branch
      %20 = sbr.rel (%p18) target = $region8
    $region5: #{tpu_custom_call.1} parent=1 // loop_body
      %s22 = ssub.s32 %s17, 1
      %s23 = ssub.s32 %s17, 2
      %s30 = sadd.s32 1, %s25
      %p31 = scmp.ge.s32.totalorder %s30, 1
      %s32 = scalar_select %p31, 0, %s30
      %s33 = sadd.s32 1, %s24
      %s34 = scalar_select %p31, %s33, %s24
      %p35 = scmp.ge.s32.totalorder %s34, 2
      %s36 = scalar_select %p35, 0, %s34
      %s37 = ssub.s32 %s24, %s36
      %p38 = scmp.eq.s32.totalorder %s37, 0
      %s40 = sadd.s32 %s39, 1
      %s41 = scalar_select %p38, %s39, %s40
      %p44 = pneg %p38
      %p45 = scmp.eq.s32.totalorder %s17, 1
      %p46 = por %p44, %p45
      %p47 = scmp.ne.s32.totalorder %s39, %s42
      %p48 = scmp.eq.s32.totalorder %s17, 0
      %p49 = por %p47, %p48
      %p50 = scmp.ne.s32.totalorder %s39, %s42
      %p51 = scmp.eq.s32.totalorder %s22, 1
      %p52 = por %p50, %p51
      %p53 = scmp.ne.s32.totalorder %s42, %s43
      %p54 = scmp.eq.s32.totalorder %s22, 0
      %p55 = por %p53, %p54
      %p56 = scmp.ne.s32.totalorder %s42, %s43
      %p57 = scmp.eq.s32.totalorder %s23, 1
      %p58 = por %p56, %p57
      %p60 = scmp.ne.s32.totalorder %s43, %s59
      %p61 = scmp.eq.s32.totalorder %s23, 0
      %p62 = por %p60, %p61
      %s64 = sadd.s32 %s63, 1
      %p67 = scmp.eq.s32.totalorder %s17, 1
      %p68 = scmp.ne.s32.totalorder %s63, %s65
      %p69 = scmp.eq.s32.totalorder %s17, 0
      %p70 = por %p68, %p69
      %p71 = scmp.ne.s32.totalorder %s63, %s65
      %p72 = scmp.eq.s32.totalorder %s22, 1
      %p73 = por %p71, %p72
      %p74 = scmp.ne.s32.totalorder %s65, %s66
      %p75 = scmp.eq.s32.totalorder %s22, 0
      %p76 = por %p74, %p75
      %p77 = scmp.ne.s32.totalorder %s65, %s66
      %p78 = scmp.eq.s32.totalorder %s23, 1
      %p79 = por %p77, %p78
      %p81 = scmp.ne.s32.totalorder %s66, %s80
      %p82 = scmp.eq.s32.totalorder %s23, 0
      %p83 = por %p81, %p82
      %s85 = sadd.s32 %s84, 1
      %p88 = scmp.eq.s32.totalorder %s17, 1
      %p89 = scmp.ne.s32.totalorder %s84, %s86
      %p90 = scmp.eq.s32.totalorder %s17, 0
      %p91 = por %p89, %p90
      %p92 = scmp.ne.s32.totalorder %s84, %s86
      %p93 = scmp.eq.s32.totalorder %s22, 1
      %p94 = por %p92, %p93
      %p95 = scmp.ne.s32.totalorder %s86, %s87
      %p96 = scmp.eq.s32.totalorder %s22, 0
      %p97 = por %p95, %p96
      %p98 = scmp.ne.s32.totalorder %s86, %s87
      %p99 = scmp.eq.s32.totalorder %s23, 1
      %p100 = por %p98, %p99
      %p102 = scmp.ne.s32.totalorder %s87, %s101
      %p103 = scmp.eq.s32.totalorder %s23, 0
      %p104 = por %p102, %p103
      %s106 = sadd.s32 %s105, 1
      %p109 = scmp.eq.s32.totalorder %s17, 1
      %p110 = scmp.ne.s32.totalorder %s105, %s107
      %p111 = scmp.eq.s32.totalorder %s17, 0
      %p112 = por %p110, %p111
      %p113 = scmp.ne.s32.totalorder %s105, %s107
      %p114 = scmp.eq.s32.totalorder %s22, 1
      %p115 = por %p113, %p114
      %p116 = scmp.ne.s32.totalorder %s107, %s108
      %p117 = scmp.eq.s32.totalorder %s22, 0
      %p118 = por %p116, %p117
      %p119 = scmp.ne.s32.totalorder %s107, %s108
      %p120 = scmp.eq.s32.totalorder %s23, 1
      %p121 = por %p119, %p120
      %p123 = scmp.ne.s32.totalorder %s108, %s122
      %p124 = scmp.eq.s32.totalorder %s23, 0
      %p125 = por %p123, %p124
      %s127 = sadd.s32 %s126, 1
      %p130 = scmp.eq.s32.totalorder %s17, 1
      %p131 = scmp.ne.s32.totalorder %s126, %s128
      %p132 = scmp.eq.s32.totalorder %s17, 0
      %p133 = por %p131, %p132
      %p134 = scmp.ne.s32.totalorder %s126, %s128
      %p135 = scmp.eq.s32.totalorder %s22, 1
      %p136 = por %p134, %p135
      %p137 = scmp.ne.s32.totalorder %s128, %s129
      %p138 = scmp.eq.s32.totalorder %s22, 0
      %p139 = por %p137, %p138
      %p140 = scmp.ne.s32.totalorder %s128, %s129
      %p141 = scmp.eq.s32.totalorder %s23, 1
      %p142 = por %p140, %p141
      %p144 = scmp.ne.s32.totalorder %s129, %s143
      %p145 = scmp.eq.s32.totalorder %s23, 0
      %p146 = por %p144, %p145
      %s148 = sadd.s32 %s147, 1
      %p151 = scmp.eq.s32.totalorder %s17, 1
      %p152 = scmp.ne.s32.totalorder %s147, %s149
      %p153 = scmp.eq.s32.totalorder %s17, 0
      %p154 = por %p152, %p153
      %p155 = scmp.ne.s32.totalorder %s147, %s149
      %p156 = scmp.eq.s32.totalorder %s22, 1
      %p157 = por %p155, %p156
      %p158 = scmp.ne.s32.totalorder %s149, %s150
      %p159 = scmp.eq.s32.totalorder %s22, 0
      %p160 = por %p158, %p159
      %p161 = scmp.ne.s32.totalorder %s149, %s150
      %p162 = scmp.eq.s32.totalorder %s23, 1
      %p163 = por %p161, %p162
      %p165 = scmp.ne.s32.totalorder %s150, %s164
      %p166 = scmp.eq.s32.totalorder %s23, 0
      %p167 = por %p165, %p166
      %s169 = sadd.s32 %s168, 1
      %p172 = scmp.eq.s32.totalorder %s17, 1
      %p173 = scmp.ne.s32.totalorder %s168, %s170
      %p174 = scmp.eq.s32.totalorder %s17, 0
      %p175 = por %p173, %p174
      %p176 = scmp.ne.s32.totalorder %s168, %s170
      %p177 = scmp.eq.s32.totalorder %s22, 1
      %p178 = por %p176, %p177
      %p179 = scmp.ne.s32.totalorder %s170, %s171
      %p180 = scmp.eq.s32.totalorder %s22, 0
      %p181 = por %p179, %p180
      %p182 = scmp.ne.s32.totalorder %s170, %s171
      %p183 = scmp.eq.s32.totalorder %s23, 1
      %p184 = por %p182, %p183
      %p186 = scmp.ne.s32.totalorder %s171, %s185
      %p187 = scmp.eq.s32.totalorder %s23, 0
      %p188 = por %p186, %p187
      %s189 = ssub.s32 %s24, %s36
      %s190 = ssub.s32 %s25, %s32
      %s191 = sor.u32 %s189, %s190
      %p192 = scmp.eq.s32.totalorder %s191, 0
      %s194 = sadd.s32 %s193, 1
      %s195 = scalar_select %p192, %s193, %s194
      %p198 = pneg %p192
      %p199 = scmp.eq.s32.totalorder %s17, 1
      %p200 = por %p198, %p199
      %p201 = scmp.ne.s32.totalorder %s193, %s196
      %p202 = scmp.eq.s32.totalorder %s17, 0
      %p203 = por %p201, %p202
      %p204 = scmp.ne.s32.totalorder %s193, %s196
      %p205 = scmp.eq.s32.totalorder %s22, 1
      %p206 = por %p204, %p205
      %p207 = scmp.ne.s32.totalorder %s196, %s197
      %p208 = scmp.eq.s32.totalorder %s22, 0
      %p209 = por %p207, %p208
      %p210 = scmp.ne.s32.totalorder %s196, %s197
      %p211 = scmp.eq.s32.totalorder %s23, 1
      %p212 = por %p210, %p211
      %p214 = scmp.ne.s32.totalorder %s197, %s213
      %p215 = scmp.eq.s32.totalorder %s23, 0
      %p216 = por %p214, %p215
      %p217 = scmp.le.s32.totalorder 1, %s17
      %p218 = scmp.lt.s32.totalorder %s17, 3
      %p219 = pnand %p217, %p218
      %p220 = pneg %p219
      // Predicated region
      $region9: #{tpu_custom_call.1} parent=5 // pred_check
        _
      $region10: #{tpu_custom_call.1} parent=5 // pred_check_branch
        %222 = sbr.rel (%p219) target = $region12
      $region11: #{tpu_custom_call.1} parent=5 // pred_region
        %s223 = ssub.s32 %s17, 1
        // Predicated region
        $region13: #{tpu_custom_call.1} parent=11 // pred_check
          %p224 = pneg %p76
        $region14: #{tpu_custom_call.1} parent=11 // pred_check_branch
          %226 = sbr.rel (%p224) target = $region16
        $region15: #{tpu_custom_call.1} parent=11 // pred_region
          %228 = vsyncadd [#allocation6], 0
          %s229 = sshll.u32 %s1, 4
          %s230 = int_to_ptr.hbm [resolvable:$true] %s229
          %s231 = sshll.u32 [#allocation5], 4
          %s232 = int_to_ptr.vmem [resolvable:$true] %s231
          %237 = dma.hbm_to_vmem [thread:$0]  %s230, 9216, %s232, [#allocation6], 64, 64, 4
        $region16: #{tpu_custom_call.1} parent=11 // pred_fallthru
          _
        // Predicated region
        $region17: #{tpu_custom_call.1} parent=11 // pred_check
          %p238 = pneg %p97
        $region18: #{tpu_custom_call.1} parent=11 // pred_check_branch
          %240 = sbr.rel (%p238) target = $region20
        $region19: #{tpu_custom_call.1} parent=11 // pred_region
          _
        $region20: #{tpu_custom_call.1} parent=11 // pred_fallthru
          _
        // Predicated region
        $region21: #{tpu_custom_call.1} parent=11 // pred_check
          %p241 = pneg %p118
        $region22: #{tpu_custom_call.1} parent=11 // pred_check_branch
          %243 = sbr.rel (%p241) target = $region24
        $region23: #{tpu_custom_call.1} parent=11 // pred_region
          _
        $region24: #{tpu_custom_call.1} parent=11 // pred_fallthru
          _
        // Predicated region
        $region25: #{tpu_custom_call.1} parent=11 // pred_check
          %p244 = pneg %p139
        $region26: #{tpu_custom_call.1} parent=11 // pred_check_branch
          %246 = sbr.rel (%p244) target = $region28
        $region27: #{tpu_custom_call.1} parent=11 // pred_region
          %248 = vsyncadd [#allocation6], 0
          %s249 = sshll.u32 %s4, 4
          %s250 = int_to_ptr.hbm [resolvable:$true] %s249
          %s251 = sshll.u32 [#allocation7], 4
          %s252 = int_to_ptr.vmem [resolvable:$true] %s251
          %257 = dma.hbm_to_vmem [thread:$0]  %s250, 9216, %s252, [#allocation6], 64, 64, 4
        $region28: #{tpu_custom_call.1} parent=11 // pred_fallthru
          _
        // Predicated region
        $region29: #{tpu_custom_call.1} parent=11 // pred_check
          %p258 = pneg %p160
        $region30: #{tpu_custom_call.1} parent=11 // pred_check_branch
          %260 = sbr.rel (%p258) target = $region32
        $region31: #{tpu_custom_call.1} parent=11 // pred_region
          _
        $region32: #{tpu_custom_call.1} parent=11 // pred_fallthru
          _
        // Predicated region
        $region33: #{tpu_custom_call.1} parent=11 // pred_check
          %p261 = pneg %p181
        $region34: #{tpu_custom_call.1} parent=11 // pred_check_branch
          %263 = sbr.rel (%p261) target = $region36
        $region35: #{tpu_custom_call.1} parent=11 // pred_region
          _
        $region36: #{tpu_custom_call.1} parent=11 // pred_fallthru
          _
      $region12: #{tpu_custom_call.1} parent=5 // pred_fallthru
        _
      %p264 = scmp.lt.s32.totalorder %s17, 2
      // Predicated region
      $region37: #{tpu_custom_call.1} parent=5 // pred_check
        %p265 = pneg %p264
      $region38: #{tpu_custom_call.1} parent=5 // pred_check_branch
        %267 = sbr.rel (%p265) target = $region40
      $region39: #{tpu_custom_call.1} parent=5 // pred_region
        // Predicated region
        $region41: #{tpu_custom_call.1} parent=39 // pred_check
          %p268 = pneg %p49
        $region42: #{tpu_custom_call.1} parent=39 // pred_check_branch
          %270 = sbr.rel (%p268) target = $region44
        $region43: #{tpu_custom_call.1} parent=39 // pred_region
          %s271 = sand.u32 %s39, 1
          %s272 = scalar_lea.sflag [#allocation4], %s271
          %s273 = sand.u32 %s39, 1
          %s274 = smul.addr %s273, 640
          %s275 = scalar_lea.vmem [#allocation3], %s274
          %277 = vsyncadd %s272, 0
          %s278 = smul.addr %s24, 80
          %s279 = smul.addr %s278, 8
          %s280 = scalar_lea.hbm %s0, %s279
          %s281 = sshll.u32 %s280, 4
          %s282 = int_to_ptr.hbm [resolvable:$true] %s281
          %s283 = sshll.u32 %s275, 4
          %s284 = int_to_ptr.vmem [resolvable:$true] %s283
          %289 = dma.hbm_to_vmem [thread:$0]  %s282, 10240, %s284, %s272, 128, 128, 8
        $region44: #{tpu_custom_call.1} parent=39 // pred_fallthru
          _
      $region40: #{tpu_custom_call.1} parent=5 // pred_fallthru
        _
      %p290 = scmp.le.s32.totalorder 1, %s17
      %p291 = scmp.lt.s32.totalorder %s17, 3
      %p292 = pnand %p290, %p291
      %p293 = pneg %p292
      // Predicated region
      $region45: #{tpu_custom_call.1} parent=5 // pred_check
        _
      $region46: #{tpu_custom_call.1} parent=5 // pred_check_branch
        %295 = sbr.rel (%p292) target = $region48
      $region47: #{tpu_custom_call.1} parent=5 // pred_region
        %s296 = ssub.s32 %s17, 1
        %s297 = sand.u32 %s42, 1
        %s298 = scalar_lea.sflag [#allocation4], %s297
        %s299 = sand.u32 %s42, 1
        %s300 = smul.addr %s299, 640
        %s301 = scalar_lea.vmem [#allocation3], %s300
        // Predicated region
        $region49: #{tpu_custom_call.1} parent=47 // pred_check
          %p302 = pneg %p55
        $region50: #{tpu_custom_call.1} parent=47 // pred_check_branch
          %304 = sbr.rel (%p302) target = $region52
        $region51: #{tpu_custom_call.1} parent=47 // pred_region
          %306 = dma.done %s298, 10240
        $region52: #{tpu_custom_call.1} parent=47 // pred_fallthru
          _
        // Predicated region
        $region53: #{tpu_custom_call.1} parent=47 // pred_check
          %p307 = pneg %p76
        $region54: #{tpu_custom_call.1} parent=47 // pred_check_branch
          %309 = sbr.rel (%p307) target = $region56
        $region55: #{tpu_custom_call.1} parent=47 // pred_region
          %311 = dma.done [#allocation6], 9216
        $region56: #{tpu_custom_call.1} parent=47 // pred_fallthru
          _
        // Predicated region
        $region57: #{tpu_custom_call.1} parent=47 // pred_check
          %p312 = pneg %p139
        $region58: #{tpu_custom_call.1} parent=47 // pred_check_branch
          %314 = sbr.rel (%p312) target = $region60
        $region59: #{tpu_custom_call.1} parent=47 // pred_region
          %316 = dma.done [#allocation6], 9216
        $region60: #{tpu_custom_call.1} parent=47 // pred_fallthru
          _
        %s317 = sand.u32 %s42, 1
        %s318 = scalar_lea.sflag [#allocation4], %s317
        %s319 = sand.u32 %s42, 1
        %s320 = smul.addr %s319, 640
        %s321 = scalar_lea.vmem [#allocation3], %s320
        %p322 = pneg %p55
        %p323 = pneg %p52
        %p324 = pneg %p76
        %p325 = pneg %p73
        %p326 = pneg %p97
        %p327 = pneg %p94
        %p328 = pneg %p118
        %p329 = pneg %p115
        %p330 = pneg %p139
        %p331 = pneg %p136
        %p332 = pneg %p160
        %p333 = pneg %p157
        %p334 = pneg %p181
        %p335 = pneg %p178
        %p336 = pneg %p209
        %p337 = pneg %p206
        %s338 = smul.u32 16, %s27
        %p339 = scmp.lt.s32.totalorder %s26, 1
        %s340 = scalar_select %p339, %s26, 1
        %p341 = scmp.lt.s32.totalorder %s338, 15
        %s342 = scalar_select %p341, %s338, 15
        %s343 = smul.addr %s342, 2
        %s344 = smul.addr %s340, 32
        %s345 = sadd.s32 %s343, %s344
        %s346 = smul.addr %s345, 8
        %s347 = scalar_lea.vmem %s7, %s346
        %s348 = smul.u32 16, %s27
        %p349 = scmp.lt.s32.totalorder %s26, 1
        %s350 = scalar_select %p349, %s26, 1
        %p351 = scmp.lt.s32.totalorder %s348, 15
        %s352 = scalar_select %p351, %s348, 15
        %s353 = smul.addr %s352, 2
        %s354 = smul.addr %s350, 32
        %s355 = sadd.s32 %s353, %s354
        %s356 = smul.addr %s355, 8
        %s357 = scalar_lea.vmem %s7, %s356
        %s358 = smul.u32 16, %s27
        %s359 = smul.u32 %s27, 16
        %s360 = smul.u32 %s359, 32
        %s361 = scalar_lea.vmem %s301, %s360 [#allocation3]
        %v362 = vld [vmem:[%s361] sm:$0xff]
        %v363 = vld [vmem:[%s361 + $0x8] sm:$0xff]
        %v364 = vld [vmem:[%s361 + $0x10] sm:$0xff]
        %v365 = vld [vmem:[%s361 + $0x18] sm:$0xff]
        %v366 = vld [vmem:[%s361 + $0x20] sm:$0xff]
        %v367 = vld [vmem:[%s361 + $0x28] sm:$0xff]
        %v368 = vld [vmem:[%s361 + $0x30] sm:$0xff]
        %v369 = vld [vmem:[%s361 + $0x38] sm:$0xff]
        %v370 = vld [vmem:[%s361 + $0x40] sm:$0xff]
        %v371 = vld [vmem:[%s361 + $0x48] sm:$0xff]
        %v372 = vld [vmem:[%s361 + $0x50] sm:$0xff]
        %v373 = vld [vmem:[%s361 + $0x58] sm:$0xff]
        %v374 = vld [vmem:[%s361 + $0x60] sm:$0xff]
        %v375 = vld [vmem:[%s361 + $0x68] sm:$0xff]
        %v376 = vld [vmem:[%s361 + $0x70] sm:$0xff]
        %v377 = vld [vmem:[%s361 + $0x78] sm:$0xff]
        %v378 = vld [vmem:[%s361 + $0x80] sm:$0xff]
        %v379 = vld [vmem:[%s361 + $0x88] sm:$0xff]
        %v380 = vld [vmem:[%s361 + $0x90] sm:$0xff]
        %v381 = vld [vmem:[%s361 + $0x98] sm:$0xff]
        %v382 = vld [vmem:[%s361 + $0xa0] sm:$0xff]
        %v383 = vld [vmem:[%s361 + $0xa8] sm:$0xff]
        %v384 = vld [vmem:[%s361 + $0xb0] sm:$0xff]
        %v385 = vld [vmem:[%s361 + $0xb8] sm:$0xff]
        %v386 = vld [vmem:[%s361 + $0xc0] sm:$0xff]
        %v387 = vld [vmem:[%s361 + $0xc8] sm:$0xff]
        %v388 = vld [vmem:[%s361 + $0xd0] sm:$0xff]
        %v389 = vld [vmem:[%s361 + $0xd8] sm:$0xff]
        %v390 = vld [vmem:[%s361 + $0xe0] sm:$0xff]
        %v391 = vld [vmem:[%s361 + $0xe8] sm:$0xff]
        %v392 = vld [vmem:[%s361 + $0xf0] sm:$0xff]
        %v393 = vld [vmem:[%s361 + $0xf8] sm:$0xff]
        %v394 = vld [vmem:[%s361 + $0x100] sm:$0xff]
        %v395 = vld [vmem:[%s361 + $0x108] sm:$0xff]
        %v396 = vld [vmem:[%s361 + $0x110] sm:$0xff]
        %v397 = vld [vmem:[%s361 + $0x118] sm:$0xff]
        %v398 = vld [vmem:[%s361 + $0x120] sm:$0xff]
        %v399 = vld [vmem:[%s361 + $0x128] sm:$0xff]
        %v400 = vld [vmem:[%s361 + $0x130] sm:$0xff]
        %v401 = vld [vmem:[%s361 + $0x138] sm:$0xff]
        %v402 = vld [vmem:[%s361 + $0x140] sm:$0xff]
        %v403 = vld [vmem:[%s361 + $0x148] sm:$0xff]
        %v404 = vld [vmem:[%s361 + $0x150] sm:$0xff]
        %v405 = vld [vmem:[%s361 + $0x158] sm:$0xff]
        %v406 = vld [vmem:[%s361 + $0x160] sm:$0xff]
        %v407 = vld [vmem:[%s361 + $0x168] sm:$0xff]
        %v408 = vld [vmem:[%s361 + $0x170] sm:$0xff]
        %v409 = vld [vmem:[%s361 + $0x178] sm:$0xff]
        %v410 = vld [vmem:[%s361 + $0x180] sm:$0xff]
        %v411 = vld [vmem:[%s361 + $0x188] sm:$0xff]
        %v412 = vld [vmem:[%s361 + $0x190] sm:$0xff]
        %v413 = vld [vmem:[%s361 + $0x198] sm:$0xff]
        %v414 = vld [vmem:[%s361 + $0x1a0] sm:$0xff]
        %v415 = vld [vmem:[%s361 + $0x1a8] sm:$0xff]
        %v416 = vld [vmem:[%s361 + $0x1b0] sm:$0xff]
        %v417 = vld [vmem:[%s361 + $0x1b8] sm:$0xff]
        %v418 = vld [vmem:[%s361 + $0x1c0] sm:$0xff]
        %v419 = vld [vmem:[%s361 + $0x1c8] sm:$0xff]
        %v420 = vld [vmem:[%s361 + $0x1d0] sm:$0xff]
        %v421 = vld [vmem:[%s361 + $0x1d8] sm:$0xff]
        %v422 = vld [vmem:[%s361 + $0x1e0] sm:$0xff]
        %v423 = vld [vmem:[%s361 + $0x1e8] sm:$0xff]
        %v424 = vld [vmem:[%s361 + $0x1f0] sm:$0xff]
        %v425 = vld [vmem:[%s361 + $0x1f8] sm:$0xff]
        %v426 = vld [vmem:[%s361 + $0x200] sm:$0xff]
        %v427 = vld [vmem:[%s361 + $0x208] sm:$0xff]
        %v428 = vld [vmem:[%s361 + $0x210] sm:$0xff]
        %v429 = vld [vmem:[%s361 + $0x218] sm:$0xff]
        %v430 = vld [vmem:[%s361 + $0x220] sm:$0xff]
        %v431 = vld [vmem:[%s361 + $0x228] sm:$0xff]
        %v432 = vld [vmem:[%s361 + $0x230] sm:$0xff]
        %v433 = vld [vmem:[%s361 + $0x238] sm:$0xff]
        %v434 = vld [vmem:[%s361 + $0x240] sm:$0xff]
        %v435 = vld [vmem:[%s361 + $0x248] sm:$0xff]
        %v436 = vld [vmem:[%s361 + $0x250] sm:$0xff]
        %v437 = vld [vmem:[%s361 + $0x258] sm:$0xff]
        %v438 = vld [vmem:[%s361 + $0x260] sm:$0xff]
        %v439 = vld [vmem:[%s361 + $0x268] sm:$0xff]
        %v440 = vld [vmem:[%s361 + $0x270] sm:$0xff]
        %v441 = vld [vmem:[%s361 + $0x278] sm:$0xff]
        %vm522 = vcmask 1046528
        %v523 = vrot.slane %v362, 1
        %v524 = vrot.slane %v363, 1
        %v525 = vsel %vm522, %v523, %v524
        %v526 = vrot.slane %v364, 1
        %v527 = vsel %vm522, %v524, %v526
        %v528 = vrot.slane %v365, 1
        %v529 = vsel %vm522, %v526, %v528
        %v530 = vrot.slane %v366, 1
        %v531 = vrot.slane %v367, 1
        %v532 = vsel %vm522, %v530, %v531
        %v533 = vrot.slane %v368, 1
        %v534 = vsel %vm522, %v531, %v533
        %v535 = vrot.slane %v369, 1
        %v536 = vsel %vm522, %v533, %v535
        %v537 = vrot.slane %v370, 1
        %v538 = vrot.slane %v371, 1
        %v539 = vsel %vm522, %v537, %v538
        %v540 = vrot.slane %v372, 1
        %v541 = vsel %vm522, %v538, %v540
        %v542 = vrot.slane %v373, 1
        %v543 = vsel %vm522, %v540, %v542
        %v544 = vrot.slane %v374, 1
        %v545 = vrot.slane %v375, 1
        %v546 = vsel %vm522, %v544, %v545
        %v547 = vrot.slane %v376, 1
        %v548 = vsel %vm522, %v545, %v547
        %v549 = vrot.slane %v377, 1
        %v550 = vsel %vm522, %v547, %v549
        %v551 = vrot.slane %v378, 1
        %v552 = vrot.slane %v379, 1
        %v553 = vsel %vm522, %v551, %v552
        %v554 = vrot.slane %v380, 1
        %v555 = vsel %vm522, %v552, %v554
        %v556 = vrot.slane %v381, 1
        %v557 = vsel %vm522, %v554, %v556
        %v558 = vrot.slane %v382, 1
        %v559 = vrot.slane %v383, 1
        %v560 = vsel %vm522, %v558, %v559
        %v561 = vrot.slane %v384, 1
        %v562 = vsel %vm522, %v559, %v561
        %v563 = vrot.slane %v385, 1
        %v564 = vsel %vm522, %v561, %v563
        %v565 = vrot.slane %v386, 1
        %v566 = vrot.slane %v387, 1
        %v567 = vsel %vm522, %v565, %v566
        %v568 = vrot.slane %v388, 1
        %v569 = vsel %vm522, %v566, %v568
        %v570 = vrot.slane %v389, 1
        %v571 = vsel %vm522, %v568, %v570
        %v572 = vrot.slane %v390, 1
        %v573 = vrot.slane %v391, 1
        %v574 = vsel %vm522, %v572, %v573
        %v575 = vrot.slane %v392, 1
        %v576 = vsel %vm522, %v573, %v575
        %v577 = vrot.slane %v393, 1
        %v578 = vsel %vm522, %v575, %v577
        %v579 = vrot.slane %v394, 1
        %v580 = vrot.slane %v395, 1
        %v581 = vsel %vm522, %v579, %v580
        %v582 = vrot.slane %v396, 1
        %v583 = vsel %vm522, %v580, %v582
        %v584 = vrot.slane %v397, 1
        %v585 = vsel %vm522, %v582, %v584
        %v586 = vrot.slane %v398, 1
        %v587 = vrot.slane %v399, 1
        %v588 = vsel %vm522, %v586, %v587
        %v589 = vrot.slane %v400, 1
        %v590 = vsel %vm522, %v587, %v589
        %v591 = vrot.slane %v401, 1
        %v592 = vsel %vm522, %v589, %v591
        %v593 = vrot.slane %v402, 1
        %v594 = vrot.slane %v403, 1
        %v595 = vsel %vm522, %v593, %v594
        %v596 = vrot.slane %v404, 1
        %v597 = vsel %vm522, %v594, %v596
        %v598 = vrot.slane %v405, 1
        %v599 = vsel %vm522, %v596, %v598
        %v600 = vrot.slane %v406, 1
        %v601 = vrot.slane %v407, 1
        %v602 = vsel %vm522, %v600, %v601
        %v603 = vrot.slane %v408, 1
        %v604 = vsel %vm522, %v601, %v603
        %v605 = vrot.slane %v409, 1
        %v606 = vsel %vm522, %v603, %v605
        %v607 = vrot.slane %v410, 1
        %v608 = vrot.slane %v411, 1
        %v609 = vsel %vm522, %v607, %v608
        %v610 = vrot.slane %v412, 1
        %v611 = vsel %vm522, %v608, %v610
        %v612 = vrot.slane %v413, 1
        %v613 = vsel %vm522, %v610, %v612
        %v614 = vrot.slane %v414, 1
        %v615 = vrot.slane %v415, 1
        %v616 = vsel %vm522, %v614, %v615
        %v617 = vrot.slane %v416, 1
        %v618 = vsel %vm522, %v615, %v617
        %v619 = vrot.slane %v417, 1
        %v620 = vsel %vm522, %v617, %v619
        %v621 = vrot.slane %v418, 1
        %v622 = vrot.slane %v419, 1
        %v623 = vsel %vm522, %v621, %v622
        %v624 = vrot.slane %v420, 1
        %v625 = vsel %vm522, %v622, %v624
        %v626 = vrot.slane %v421, 1
        %v627 = vsel %vm522, %v624, %v626
        %v628 = vrot.slane %v422, 1
        %v629 = vrot.slane %v423, 1
        %v630 = vsel %vm522, %v628, %v629
        %v631 = vrot.slane %v424, 1
        %v632 = vsel %vm522, %v629, %v631
        %v633 = vrot.slane %v425, 1
        %v634 = vsel %vm522, %v631, %v633
        %v635 = vrot.slane %v426, 1
        %v636 = vrot.slane %v427, 1
        %v637 = vsel %vm522, %v635, %v636
        %v638 = vrot.slane %v428, 1
        %v639 = vsel %vm522, %v636, %v638
        %v640 = vrot.slane %v429, 1
        %v641 = vsel %vm522, %v638, %v640
        %v642 = vrot.slane %v430, 1
        %v643 = vrot.slane %v431, 1
        %v644 = vsel %vm522, %v642, %v643
        %v645 = vrot.slane %v432, 1
        %v646 = vsel %vm522, %v643, %v645
        %v647 = vrot.slane %v433, 1
        %v648 = vsel %vm522, %v645, %v647
        %v649 = vrot.slane %v434, 1
        %v650 = vrot.slane %v435, 1
        %v651 = vsel %vm522, %v649, %v650
        %v652 = vrot.slane %v436, 1
        %v653 = vsel %vm522, %v650, %v652
        %v654 = vrot.slane %v437, 1
        %v655 = vsel %vm522, %v652, %v654
        %v656 = vrot.slane %v438, 1
        %v657 = vrot.slane %v439, 1
        %v658 = vsel %vm522, %v656, %v657
        %v659 = vrot.slane %v440, 1
        %v660 = vsel %vm522, %v657, %v659
        %v661 = vrot.slane %v441, 1
        %v662 = vsel %vm522, %v659, %v661
        %vm723 = vcmask 1045504
        %v724 = vrot.slane %v362, 2
        %v725 = vrot.slane %v363, 2
        %v726 = vsel %vm723, %v724, %v725
        %v727 = vrot.slane %v364, 2
        %v728 = vsel %vm723, %v725, %v727
        %v729 = vrot.slane %v365, 2
        %v730 = vsel %vm723, %v727, %v729
        %v731 = vrot.slane %v366, 2
        %v732 = vrot.slane %v367, 2
        %v733 = vsel %vm723, %v731, %v732
        %v734 = vrot.slane %v368, 2
        %v735 = vsel %vm723, %v732, %v734
        %v736 = vrot.slane %v369, 2
        %v737 = vsel %vm723, %v734, %v736
        %v738 = vrot.slane %v370, 2
        %v739 = vrot.slane %v371, 2
        %v740 = vsel %vm723, %v738, %v739
        %v741 = vrot.slane %v372, 2
        %v742 = vsel %vm723, %v739, %v741
        %v743 = vrot.slane %v373, 2
        %v744 = vsel %vm723, %v741, %v743
        %v745 = vrot.slane %v374, 2
        %v746 = vrot.slane %v375, 2
        %v747 = vsel %vm723, %v745, %v746
        %v748 = vrot.slane %v376, 2
        %v749 = vsel %vm723, %v746, %v748
        %v750 = vrot.slane %v377, 2
        %v751 = vsel %vm723, %v748, %v750
        %v752 = vrot.slane %v378, 2
        %v753 = vrot.slane %v379, 2
        %v754 = vsel %vm723, %v752, %v753
        %v755 = vrot.slane %v380, 2
        %v756 = vsel %vm723, %v753, %v755
        %v757 = vrot.slane %v381, 2
        %v758 = vsel %vm723, %v755, %v757
        %v759 = vrot.slane %v382, 2
        %v760 = vrot.slane %v383, 2
        %v761 = vsel %vm723, %v759, %v760
        %v762 = vrot.slane %v384, 2
        %v763 = vsel %vm723, %v760, %v762
        %v764 = vrot.slane %v385, 2
        %v765 = vsel %vm723, %v762, %v764
        %v766 = vrot.slane %v386, 2
        %v767 = vrot.slane %v387, 2
        %v768 = vsel %vm723, %v766, %v767
        %v769 = vrot.slane %v388, 2
        %v770 = vsel %vm723, %v767, %v769
        %v771 = vrot.slane %v389, 2
        %v772 = vsel %vm723, %v769, %v771
        %v773 = vrot.slane %v390, 2
        %v774 = vrot.slane %v391, 2
        %v775 = vsel %vm723, %v773, %v774
        %v776 = vrot.slane %v392, 2
        %v777 = vsel %vm723, %v774, %v776
        %v778 = vrot.slane %v393, 2
        %v779 = vsel %vm723, %v776, %v778
        %v780 = vrot.slane %v394, 2
        %v781 = vrot.slane %v395, 2
        %v782 = vsel %vm723, %v780, %v781
        %v783 = vrot.slane %v396, 2
        %v784 = vsel %vm723, %v781, %v783
        %v785 = vrot.slane %v397, 2
        %v786 = vsel %vm723, %v783, %v785
        %v787 = vrot.slane %v398, 2
        %v788 = vrot.slane %v399, 2
        %v789 = vsel %vm723, %v787, %v788
        %v790 = vrot.slane %v400, 2
        %v791 = vsel %vm723, %v788, %v790
        %v792 = vrot.slane %v401, 2
        %v793 = vsel %vm723, %v790, %v792
        %v794 = vrot.slane %v402, 2
        %v795 = vrot.slane %v403, 2
        %v796 = vsel %vm723, %v794, %v795
        %v797 = vrot.slane %v404, 2
        %v798 = vsel %vm723, %v795, %v797
        %v799 = vrot.slane %v405, 2
        %v800 = vsel %vm723, %v797, %v799
        %v801 = vrot.slane %v406, 2
        %v802 = vrot.slane %v407, 2
        %v803 = vsel %vm723, %v801, %v802
        %v804 = vrot.slane %v408, 2
        %v805 = vsel %vm723, %v802, %v804
        %v806 = vrot.slane %v409, 2
        %v807 = vsel %vm723, %v804, %v806
        %v808 = vrot.slane %v410, 2
        %v809 = vrot.slane %v411, 2
        %v810 = vsel %vm723, %v808, %v809
        %v811 = vrot.slane %v412, 2
        %v812 = vsel %vm723, %v809, %v811
        %v813 = vrot.slane %v413, 2
        %v814 = vsel %vm723, %v811, %v813
        %v815 = vrot.slane %v414, 2
        %v816 = vrot.slane %v415, 2
        %v817 = vsel %vm723, %v815, %v816
        %v818 = vrot.slane %v416, 2
        %v819 = vsel %vm723, %v816, %v818
        %v820 = vrot.slane %v417, 2
        %v821 = vsel %vm723, %v818, %v820
        %v822 = vrot.slane %v418, 2
        %v823 = vrot.slane %v419, 2
        %v824 = vsel %vm723, %v822, %v823
        %v825 = vrot.slane %v420, 2
        %v826 = vsel %vm723, %v823, %v825
        %v827 = vrot.slane %v421, 2
        %v828 = vsel %vm723, %v825, %v827
        %v829 = vrot.slane %v422, 2
        %v830 = vrot.slane %v423, 2
        %v831 = vsel %vm723, %v829, %v830
        %v832 = vrot.slane %v424, 2
        %v833 = vsel %vm723, %v830, %v832
        %v834 = vrot.slane %v425, 2
        %v835 = vsel %vm723, %v832, %v834
        %v836 = vrot.slane %v426, 2
        %v837 = vrot.slane %v427, 2
        %v838 = vsel %vm723, %v836, %v837
        %v839 = vrot.slane %v428, 2
        %v840 = vsel %vm723, %v837, %v839
        %v841 = vrot.slane %v429, 2
        %v842 = vsel %vm723, %v839, %v841
        %v843 = vrot.slane %v430, 2
        %v844 = vrot.slane %v431, 2
        %v845 = vsel %vm723, %v843, %v844
        %v846 = vrot.slane %v432, 2
        %v847 = vsel %vm723, %v844, %v846
        %v848 = vrot.slane %v433, 2
        %v849 = vsel %vm723, %v846, %v848
        %v850 = vrot.slane %v434, 2
        %v851 = vrot.slane %v435, 2
        %v852 = vsel %vm723, %v850, %v851
        %v853 = vrot.slane %v436, 2
        %v854 = vsel %vm723, %v851, %v853
        %v855 = vrot.slane %v437, 2
        %v856 = vsel %vm723, %v853, %v855
        %v857 = vrot.slane %v438, 2
        %v858 = vrot.slane %v439, 2
        %v859 = vsel %vm723, %v857, %v858
        %v860 = vrot.slane %v440, 2
        %v861 = vsel %vm723, %v858, %v860
        %v862 = vrot.slane %v441, 2
        %v863 = vsel %vm723, %v860, %v862
        %v924 = vpack.c.bf16 %v363, %v362
        %v925 = vpack.c.bf16 %v527, %v525
        %v926 = vpack.c.bf16 %v728, %v726
        %v927 = vpack.c.bf16 %v366, %v364
        %v928 = vpack.c.bf16 %v532, %v529
        %v929 = vpack.c.bf16 %v733, %v730
        %v930 = vpack.c.bf16 %v368, %v367
        %v931 = vpack.c.bf16 %v536, %v534
        %v932 = vpack.c.bf16 %v737, %v735
        %v933 = vpack.c.bf16 %v371, %v370
        %v934 = vpack.c.bf16 %v541, %v539
        %v935 = vpack.c.bf16 %v742, %v740
        %v936 = vpack.c.bf16 %v374, %v372
        %v937 = vpack.c.bf16 %v546, %v543
        %v938 = vpack.c.bf16 %v747, %v744
        %v939 = vpack.c.bf16 %v376, %v375
        %v940 = vpack.c.bf16 %v550, %v548
        %v941 = vpack.c.bf16 %v751, %v749
        %v942 = vpack.c.bf16 %v379, %v378
        %v943 = vpack.c.bf16 %v555, %v553
        %v944 = vpack.c.bf16 %v756, %v754
        %v945 = vpack.c.bf16 %v382, %v380
        %v946 = vpack.c.bf16 %v560, %v557
        %v947 = vpack.c.bf16 %v761, %v758
        %v948 = vpack.c.bf16 %v384, %v383
        %v949 = vpack.c.bf16 %v564, %v562
        %v950 = vpack.c.bf16 %v765, %v763
        %v951 = vpack.c.bf16 %v387, %v386
        %v952 = vpack.c.bf16 %v569, %v567
        %v953 = vpack.c.bf16 %v770, %v768
        %v954 = vpack.c.bf16 %v390, %v388
        %v955 = vpack.c.bf16 %v574, %v571
        %v956 = vpack.c.bf16 %v775, %v772
        %v957 = vpack.c.bf16 %v392, %v391
        %v958 = vpack.c.bf16 %v578, %v576
        %v959 = vpack.c.bf16 %v779, %v777
        %v960 = vpack.c.bf16 %v395, %v394
        %v961 = vpack.c.bf16 %v583, %v581
        %v962 = vpack.c.bf16 %v784, %v782
        %v963 = vpack.c.bf16 %v398, %v396
        %v964 = vpack.c.bf16 %v588, %v585
        %v965 = vpack.c.bf16 %v789, %v786
        %v966 = vpack.c.bf16 %v400, %v399
        %v967 = vpack.c.bf16 %v592, %v590
        %v968 = vpack.c.bf16 %v793, %v791
        %v969 = vpack.c.bf16 %v403, %v402
        %v970 = vpack.c.bf16 %v597, %v595
        %v971 = vpack.c.bf16 %v798, %v796
        %v972 = vpack.c.bf16 %v406, %v404
        %v973 = vpack.c.bf16 %v602, %v599
        %v974 = vpack.c.bf16 %v803, %v800
        %v975 = vpack.c.bf16 %v408, %v407
        %v976 = vpack.c.bf16 %v606, %v604
        %v977 = vpack.c.bf16 %v807, %v805
        %v978 = vpack.c.bf16 %v411, %v410
        %v979 = vpack.c.bf16 %v611, %v609
        %v980 = vpack.c.bf16 %v812, %v810
        %v981 = vpack.c.bf16 %v414, %v412
        %v982 = vpack.c.bf16 %v616, %v613
        %v983 = vpack.c.bf16 %v817, %v814
        %v984 = vpack.c.bf16 %v416, %v415
        %v985 = vpack.c.bf16 %v620, %v618
        %v986 = vpack.c.bf16 %v821, %v819
        %v987 = vpack.c.bf16 %v419, %v418
        %v988 = vpack.c.bf16 %v625, %v623
        %v989 = vpack.c.bf16 %v826, %v824
        %v990 = vpack.c.bf16 %v422, %v420
        %v991 = vpack.c.bf16 %v630, %v627
        %v992 = vpack.c.bf16 %v831, %v828
        %v993 = vpack.c.bf16 %v424, %v423
        %v994 = vpack.c.bf16 %v634, %v632
        %v995 = vpack.c.bf16 %v835, %v833
        %v996 = vpack.c.bf16 %v427, %v426
        %v997 = vpack.c.bf16 %v639, %v637
        %v998 = vpack.c.bf16 %v840, %v838
        %v999 = vpack.c.bf16 %v430, %v428
        %v1000 = vpack.c.bf16 %v644, %v641
        %v1001 = vpack.c.bf16 %v845, %v842
        %v1002 = vpack.c.bf16 %v432, %v431
        %v1003 = vpack.c.bf16 %v648, %v646
        %v1004 = vpack.c.bf16 %v849, %v847
        %v1005 = vld [vmem:[#allocation5] sm:$0xf]
        %v1006 = vld [vmem:[#allocation5 + $0x4] sm:$0xf]
        %v1007 = vld [vmem:[#allocation5 + $0x8] sm:$0xf]
        %v1008 = vld [vmem:[#allocation5 + $0xc] sm:$0xf]
        %v1009 = vld [vmem:[#allocation5 + $0x10] sm:$0xf]
        %v1010 = vld [vmem:[#allocation5 + $0x14] sm:$0xf]
        %v1011 = vld [vmem:[#allocation5 + $0x18] sm:$0xf]
        %v1012 = vld [vmem:[#allocation5 + $0x1c] sm:$0xf]
        %v1013 = vld [vmem:[#allocation5 + $0x20] sm:$0xf]
        %v1014 = vld [vmem:[#allocation5 + $0x24] sm:$0xf]
        %v1015 = vld [vmem:[#allocation5 + $0x28] sm:$0xf]
        %v1016 = vld [vmem:[#allocation5 + $0x2c] sm:$0xf]
        %v1017 = vld [vmem:[#allocation5 + $0x30] sm:$0xf]
        %v1018 = vld [vmem:[#allocation5 + $0x34] sm:$0xf]
        %v1019 = vld [vmem:[#allocation5 + $0x38] sm:$0xf]
        %v1020 = vld [vmem:[#allocation5 + $0x3c] sm:$0xf]
        %v1021 = vld [vmem:[#allocation5 + $0x40] sm:$0xf]
        %v1022 = vld [vmem:[#allocation5 + $0x44] sm:$0xf]
        %v1023 = vld [vmem:[#allocation5 + $0x48] sm:$0xf]
        %v1024 = vld [vmem:[#allocation5 + $0x4c] sm:$0xf]
        %v1025 = vld [vmem:[#allocation5 + $0x50] sm:$0xf]
        %v1026 = vld [vmem:[#allocation5 + $0x54] sm:$0xf]
        %v1027 = vld [vmem:[#allocation5 + $0x58] sm:$0xf]
        %v1028 = vld [vmem:[#allocation5 + $0x5c] sm:$0xf]
        %v1029 = vld [vmem:[#allocation5 + $0x60] sm:$0xf]
        %v1030 = vld [vmem:[#allocation5 + $0x64] sm:$0xf]
        %v1031 = vld [vmem:[#allocation5 + $0x68] sm:$0xf]
        %v1032 = vld [vmem:[#allocation5 + $0x6c] sm:$0xf]
        %v1033 = vld [vmem:[#allocation5 + $0x70] sm:$0xf]
        %v1034 = vld [vmem:[#allocation5 + $0x74] sm:$0xf]
        %v1035 = vld [vmem:[#allocation5 + $0x78] sm:$0xf]
        %v1036 = vld [vmem:[#allocation5 + $0x7c] sm:$0xf]
        %v1037 = vld [vmem:[#allocation5 + $0x80] sm:$0xf]
        %v1038 = vld [vmem:[#allocation5 + $0x84] sm:$0xf]
        %v1039 = vld [vmem:[#allocation5 + $0x88] sm:$0xf]
        %v1040 = vld [vmem:[#allocation5 + $0x8c] sm:$0xf]
        %v1041 = vld [vmem:[#allocation5 + $0x90] sm:$0xf]
        %v1042 = vld [vmem:[#allocation5 + $0x94] sm:$0xf]
        %v1043 = vld [vmem:[#allocation5 + $0x98] sm:$0xf]
        %v1044 = vld [vmem:[#allocation5 + $0x9c] sm:$0xf]
        %v1045 = vld [vmem:[#allocation5 + $0xa0] sm:$0xf]
        %v1046 = vld [vmem:[#allocation5 + $0xa4] sm:$0xf]
        %v1047 = vld [vmem:[#allocation5 + $0xa8] sm:$0xf]
        %v1048 = vld [vmem:[#allocation5 + $0xac] sm:$0xf]
        %v1049 = vld [vmem:[#allocation5 + $0xb0] sm:$0xf]
        %v1050 = vld [vmem:[#allocation5 + $0xb4] sm:$0xf]
        %v1051 = vld [vmem:[#allocation5 + $0xb8] sm:$0xf]
        %v1052 = vld [vmem:[#allocation5 + $0xbc] sm:$0xf]
        %v1053 = vpack.c.bf16 %v367, %v366
        %v1054 = vpack.c.bf16 %v534, %v532
        %v1055 = vpack.c.bf16 %v735, %v733
        %v1056 = vpack.c.bf16 %v370, %v368
        %v1057 = vpack.c.bf16 %v539, %v536
        %v1058 = vpack.c.bf16 %v740, %v737
        %v1059 = vpack.c.bf16 %v372, %v371
        %v1060 = vpack.c.bf16 %v543, %v541
        %v1061 = vpack.c.bf16 %v744, %v742
        %v1062 = vpack.c.bf16 %v375, %v374
        %v1063 = vpack.c.bf16 %v548, %v546
        %v1064 = vpack.c.bf16 %v749, %v747
        %v1065 = vpack.c.bf16 %v378, %v376
        %v1066 = vpack.c.bf16 %v553, %v550
        %v1067 = vpack.c.bf16 %v754, %v751
        %v1068 = vpack.c.bf16 %v380, %v379
        %v1069 = vpack.c.bf16 %v557, %v555
        %v1070 = vpack.c.bf16 %v758, %v756
        %v1071 = vpack.c.bf16 %v383, %v382
        %v1072 = vpack.c.bf16 %v562, %v560
        %v1073 = vpack.c.bf16 %v763, %v761
        %v1074 = vpack.c.bf16 %v386, %v384
        %v1075 = vpack.c.bf16 %v567, %v564
        %v1076 = vpack.c.bf16 %v768, %v765
        %v1077 = vpack.c.bf16 %v388, %v387
        %v1078 = vpack.c.bf16 %v571, %v569
        %v1079 = vpack.c.bf16 %v772, %v770
        %v1080 = vpack.c.bf16 %v391, %v390
        %v1081 = vpack.c.bf16 %v576, %v574
        %v1082 = vpack.c.bf16 %v777, %v775
        %v1083 = vpack.c.bf16 %v394, %v392
        %v1084 = vpack.c.bf16 %v581, %v578
        %v1085 = vpack.c.bf16 %v782, %v779
        %v1086 = vpack.c.bf16 %v396, %v395
        %v1087 = vpack.c.bf16 %v585, %v583
        %v1088 = vpack.c.bf16 %v786, %v784
        %v1089 = vpack.c.bf16 %v399, %v398
        %v1090 = vpack.c.bf16 %v590, %v588
        %v1091 = vpack.c.bf16 %v791, %v789
        %v1092 = vpack.c.bf16 %v402, %v400
        %v1093 = vpack.c.bf16 %v595, %v592
        %v1094 = vpack.c.bf16 %v796, %v793
        %v1095 = vpack.c.bf16 %v404, %v403
        %v1096 = vpack.c.bf16 %v599, %v597
        %v1097 = vpack.c.bf16 %v800, %v798
        %v1098 = vpack.c.bf16 %v407, %v406
        %v1099 = vpack.c.bf16 %v604, %v602
        %v1100 = vpack.c.bf16 %v805, %v803
        %v1101 = vpack.c.bf16 %v410, %v408
        %v1102 = vpack.c.bf16 %v609, %v606
        %v1103 = vpack.c.bf16 %v810, %v807
        %v1104 = vpack.c.bf16 %v412, %v411
        %v1105 = vpack.c.bf16 %v613, %v611
        %v1106 = vpack.c.bf16 %v814, %v812
        %v1107 = vpack.c.bf16 %v415, %v414
        %v1108 = vpack.c.bf16 %v618, %v616
        %v1109 = vpack.c.bf16 %v819, %v817
        %v1110 = vpack.c.bf16 %v418, %v416
        %v1111 = vpack.c.bf16 %v623, %v620
        %v1112 = vpack.c.bf16 %v824, %v821
        %v1113 = vpack.c.bf16 %v420, %v419
        %v1114 = vpack.c.bf16 %v627, %v625
        %v1115 = vpack.c.bf16 %v828, %v826
        %v1116 = vpack.c.bf16 %v423, %v422
        %v1117 = vpack.c.bf16 %v632, %v630
        %v1118 = vpack.c.bf16 %v833, %v831
        %v1119 = vpack.c.bf16 %v426, %v424
        %v1120 = vpack.c.bf16 %v637, %v634
        %v1121 = vpack.c.bf16 %v838, %v835
        %v1122 = vpack.c.bf16 %v428, %v427
        %v1123 = vpack.c.bf16 %v641, %v639
        %v1124 = vpack.c.bf16 %v842, %v840
        %v1125 = vpack.c.bf16 %v431, %v430
        %v1126 = vpack.c.bf16 %v646, %v644
        %v1127 = vpack.c.bf16 %v847, %v845
        %v1128 = vpack.c.bf16 %v434, %v432
        %v1129 = vpack.c.bf16 %v651, %v648
        %v1130 = vpack.c.bf16 %v852, %v849
        %v1131 = vpack.c.bf16 %v436, %v435
        %v1132 = vpack.c.bf16 %v655, %v653
        %v1133 = vpack.c.bf16 %v856, %v854
        %s1134 = scalar_lea.vmem [#allocation5], 192
        %v1135 = vld [vmem:[%s1134] sm:$0xf]
        %v1136 = vld [vmem:[%s1134 + $0x4] sm:$0xf]
        %v1137 = vld [vmem:[%s1134 + $0x8] sm:$0xf]
        %v1138 = vld [vmem:[%s1134 + $0xc] sm:$0xf]
        %v1139 = vld [vmem:[%s1134 + $0x10] sm:$0xf]
        %v1140 = vld [vmem:[%s1134 + $0x14] sm:$0xf]
        %v1141 = vld [vmem:[%s1134 + $0x18] sm:$0xf]
        %v1142 = vld [vmem:[%s1134 + $0x1c] sm:$0xf]
        %v1143 = vld [vmem:[%s1134 + $0x20] sm:$0xf]
        %v1144 = vld [vmem:[%s1134 + $0x24] sm:$0xf]
        %v1145 = vld [vmem:[%s1134 + $0x28] sm:$0xf]
        %v1146 = vld [vmem:[%s1134 + $0x2c] sm:$0xf]
        %v1147 = vld [vmem:[%s1134 + $0x30] sm:$0xf]
        %v1148 = vld [vmem:[%s1134 + $0x34] sm:$0xf]
        %v1149 = vld [vmem:[%s1134 + $0x38] sm:$0xf]
        %v1150 = vld [vmem:[%s1134 + $0x3c] sm:$0xf]
        %v1151 = vld [vmem:[%s1134 + $0x40] sm:$0xf]
        %v1152 = vld [vmem:[%s1134 + $0x44] sm:$0xf]
        %v1153 = vld [vmem:[%s1134 + $0x48] sm:$0xf]
        %v1154 = vld [vmem:[%s1134 + $0x4c] sm:$0xf]
        %v1155 = vld [vmem:[%s1134 + $0x50] sm:$0xf]
        %v1156 = vld [vmem:[%s1134 + $0x54] sm:$0xf]
        %v1157 = vld [vmem:[%s1134 + $0x58] sm:$0xf]
        %v1158 = vld [vmem:[%s1134 + $0x5c] sm:$0xf]
        %v1159 = vld [vmem:[%s1134 + $0x60] sm:$0xf]
        %v1160 = vld [vmem:[%s1134 + $0x64] sm:$0xf]
        %v1161 = vld [vmem:[%s1134 + $0x68] sm:$0xf]
        %v1162 = vld [vmem:[%s1134 + $0x6c] sm:$0xf]
        %v1163 = vld [vmem:[%s1134 + $0x70] sm:$0xf]
        %v1164 = vld [vmem:[%s1134 + $0x74] sm:$0xf]
        %v1165 = vld [vmem:[%s1134 + $0x78] sm:$0xf]
        %v1166 = vld [vmem:[%s1134 + $0x7c] sm:$0xf]
        %v1167 = vld [vmem:[%s1134 + $0x80] sm:$0xf]
        %v1168 = vld [vmem:[%s1134 + $0x84] sm:$0xf]
        %v1169 = vld [vmem:[%s1134 + $0x88] sm:$0xf]
        %v1170 = vld [vmem:[%s1134 + $0x8c] sm:$0xf]
        %v1171 = vld [vmem:[%s1134 + $0x90] sm:$0xf]
        %v1172 = vld [vmem:[%s1134 + $0x94] sm:$0xf]
        %v1173 = vld [vmem:[%s1134 + $0x98] sm:$0xf]
        %v1174 = vld [vmem:[%s1134 + $0x9c] sm:$0xf]
        %v1175 = vld [vmem:[%s1134 + $0xa0] sm:$0xf]
        %v1176 = vld [vmem:[%s1134 + $0xa4] sm:$0xf]
        %v1177 = vld [vmem:[%s1134 + $0xa8] sm:$0xf]
        %v1178 = vld [vmem:[%s1134 + $0xac] sm:$0xf]
        %v1179 = vld [vmem:[%s1134 + $0xb0] sm:$0xf]
        %v1180 = vld [vmem:[%s1134 + $0xb4] sm:$0xf]
        %v1181 = vld [vmem:[%s1134 + $0xb8] sm:$0xf]
        %v1182 = vld [vmem:[%s1134 + $0xbc] sm:$0xf]
        %v1231 = vunpack.c.l.b16 %v1135
        %v1232 = vunpack.c.l.b16 %v1136
        %v1233 = vunpack.c.l.b16 %v1137
        %v1234 = vunpack.c.l.b16 %v1138
        %v1235 = vunpack.c.l.b16 %v1139
        %v1236 = vunpack.c.l.b16 %v1140
        %v1237 = vunpack.c.l.b16 %v1141
        %v1238 = vunpack.c.l.b16 %v1142
        %v1239 = vunpack.c.l.b16 %v1143
        %v1240 = vunpack.c.l.b16 %v1144
        %v1241 = vunpack.c.l.b16 %v1145
        %v1242 = vunpack.c.l.b16 %v1146
        %v1243 = vunpack.c.l.b16 %v1147
        %v1244 = vunpack.c.l.b16 %v1148
        %v1245 = vunpack.c.l.b16 %v1149
        %v1246 = vunpack.c.l.b16 %v1150
        %v1247 = vunpack.c.l.b16 %v1151
        %v1248 = vunpack.c.l.b16 %v1152
        %v1249 = vunpack.c.l.b16 %v1153
        %v1250 = vunpack.c.l.b16 %v1154
        %v1251 = vunpack.c.l.b16 %v1155
        %v1252 = vunpack.c.l.b16 %v1156
        %v1253 = vunpack.c.l.b16 %v1157
        %v1254 = vunpack.c.l.b16 %v1158
        %v1255 = vunpack.c.l.b16 %v1159
        %v1256 = vunpack.c.l.b16 %v1160
        %v1257 = vunpack.c.l.b16 %v1161
        %v1258 = vunpack.c.l.b16 %v1162
        %v1259 = vunpack.c.l.b16 %v1163
        %v1260 = vunpack.c.l.b16 %v1164
        %v1261 = vunpack.c.l.b16 %v1165
        %v1262 = vunpack.c.l.b16 %v1166
        %v1263 = vunpack.c.l.b16 %v1167
        %v1264 = vunpack.c.l.b16 %v1168
        %v1265 = vunpack.c.l.b16 %v1169
        %v1266 = vunpack.c.l.b16 %v1170
        %v1267 = vunpack.c.l.b16 %v1171
        %v1268 = vunpack.c.l.b16 %v1172
        %v1269 = vunpack.c.l.b16 %v1173
        %v1270 = vunpack.c.l.b16 %v1174
        %v1271 = vunpack.c.l.b16 %v1175
        %v1272 = vunpack.c.l.b16 %v1176
        %v1273 = vunpack.c.l.b16 %v1177
        %v1274 = vunpack.c.l.b16 %v1178
        %v1275 = vunpack.c.l.b16 %v1179
        %v1276 = vunpack.c.l.b16 %v1180
        %v1277 = vunpack.c.l.b16 %v1181
        %v1278 = vunpack.c.l.b16 %v1182
        %v1279 = vpack.c.b16 %v1232, %v1231
        %v1280 = vpack.c.b16 %v1234, %v1233
        %v1281 = vpack.c.b16 %v1236, %v1235
        %v1282 = vpack.c.b16 %v1238, %v1237
        %v1283 = vpack.c.b16 %v1240, %v1239
        %v1284 = vpack.c.b16 %v1242, %v1241
        %v1285 = vpack.c.b16 %v1244, %v1243
        %v1286 = vpack.c.b16 %v1246, %v1245
        %v1287 = vpack.c.b16 %v1248, %v1247
        %v1288 = vpack.c.b16 %v1250, %v1249
        %v1289 = vpack.c.b16 %v1252, %v1251
        %v1290 = vpack.c.b16 %v1254, %v1253
        %v1291 = vpack.c.b16 %v1256, %v1255
        %v1292 = vpack.c.b16 %v1258, %v1257
        %v1293 = vpack.c.b16 %v1260, %v1259
        %v1294 = vpack.c.b16 %v1262, %v1261
        %v1295 = vpack.c.b16 %v1264, %v1263
        %v1296 = vpack.c.b16 %v1266, %v1265
        %v1297 = vpack.c.b16 %v1268, %v1267
        %v1298 = vpack.c.b16 %v1270, %v1269
        %v1299 = vpack.c.b16 %v1272, %v1271
        %v1300 = vpack.c.b16 %v1274, %v1273
        %v1301 = vpack.c.b16 %v1276, %v1275
        %v1302 = vpack.c.b16 %v1278, %v1277
        %1327 = vmatpush.bf16.msra.mxu0 %v1286
        %1328 = vmatpush.bf16.msra.mxu0 %v1285
        %1329 = vmatpush.bf16.msra.mxu0 %v1284
        %1330 = vmatpush.bf16.msra.mxu0 %v1283
        %1331 = vmatpush.bf16.msra.mxu0 %v1282
        %1332 = vmatpush.bf16.msra.mxu0 %v1281
        %1333 = vmatpush.bf16.msra.mxu0 %v1280
        %1334 = vmatpush.bf16.msra.mxu0 %v1279
        %1335 = vmatmul.bf16.gmra.mxu0 %v1053
        %v1336 = vpop.f32.mrf.mxu0
        %v1337 = vadd.f32 0.0, %v1336
        %v1338 = vpop.f32.mrf.mxu0
        %v1339 = vadd.f32 0.0, %v1338
        %1340 = vmatmul.bf16.gmra.mxu0 %v1056
        %v1341 = vpop.f32.mrf.mxu0
        %v1342 = vadd.f32 0.0, %v1341
        %v1343 = vpop.f32.mrf.mxu0
        %v1344 = vadd.f32 0.0, %v1343
        %1345 = vmatmul.bf16.gmra.mxu0 %v1059
        %v1346 = vpop.f32.mrf.mxu0
        %v1347 = vadd.f32 0.0, %v1346
        %v1348 = vpop.f32.mrf.mxu0
        %v1349 = vadd.f32 0.0, %v1348
        %1350 = vmatmul.bf16.gmra.mxu0 %v1062
        %v1351 = vpop.f32.mrf.mxu0
        %v1352 = vadd.f32 0.0, %v1351
        %v1353 = vpop.f32.mrf.mxu0
        %v1354 = vadd.f32 0.0, %v1353
        %1355 = vmatmul.bf16.gmra.mxu0 %v1065
        %v1356 = vpop.f32.mrf.mxu0
        %v1357 = vadd.f32 0.0, %v1356
        %v1358 = vpop.f32.mrf.mxu0
        %v1359 = vadd.f32 0.0, %v1358
        %1360 = vmatmul.bf16.gmra.mxu0 %v1068
        %v1361 = vpop.f32.mrf.mxu0
        %v1362 = vadd.f32 0.0, %v1361
        %v1363 = vpop.f32.mrf.mxu0
        %v1364 = vadd.f32 0.0, %v1363
        %1365 = vmatmul.bf16.gmra.mxu0 %v1071
        %v1366 = vpop.f32.mrf.mxu0
        %v1367 = vadd.f32 0.0, %v1366
        %v1368 = vpop.f32.mrf.mxu0
        %v1369 = vadd.f32 0.0, %v1368
        %1370 = vmatmul.bf16.gmra.mxu0 %v1074
        %v1371 = vpop.f32.mrf.mxu0
        %v1372 = vadd.f32 0.0, %v1371
        %v1373 = vpop.f32.mrf.mxu0
        %v1374 = vadd.f32 0.0, %v1373
        %1375 = vmatmul.bf16.gmra.mxu0 %v1077
        %v1376 = vpop.f32.mrf.mxu0
        %v1377 = vadd.f32 0.0, %v1376
        %v1378 = vpop.f32.mrf.mxu0
        %v1379 = vadd.f32 0.0, %v1378
        %1380 = vmatmul.bf16.gmra.mxu0 %v1080
        %v1381 = vpop.f32.mrf.mxu0
        %v1382 = vadd.f32 0.0, %v1381
        %v1383 = vpop.f32.mrf.mxu0
        %v1384 = vadd.f32 0.0, %v1383
        %1385 = vmatmul.bf16.gmra.mxu0 %v1083
        %v1386 = vpop.f32.mrf.mxu0
        %v1387 = vadd.f32 0.0, %v1386
        %v1388 = vpop.f32.mrf.mxu0
        %v1389 = vadd.f32 0.0, %v1388
        %1390 = vmatmul.bf16.gmra.mxu0 %v1086
        %v1391 = vpop.f32.mrf.mxu0
        %v1392 = vadd.f32 0.0, %v1391
        %v1393 = vpop.f32.mrf.mxu0
        %v1394 = vadd.f32 0.0, %v1393
        %1395 = vmatmul.bf16.gmra.mxu0 %v1089
        %v1396 = vpop.f32.mrf.mxu0
        %v1397 = vadd.f32 0.0, %v1396
        %v1398 = vpop.f32.mrf.mxu0
        %v1399 = vadd.f32 0.0, %v1398
        %1400 = vmatmul.bf16.gmra.mxu0 %v1092
        %v1401 = vpop.f32.mrf.mxu0
        %v1402 = vadd.f32 0.0, %v1401
        %v1403 = vpop.f32.mrf.mxu0
        %v1404 = vadd.f32 0.0, %v1403
        %1405 = vmatmul.bf16.gmra.mxu0 %v1095
        %v1406 = vpop.f32.mrf.mxu0
        %v1407 = vadd.f32 0.0, %v1406
        %v1408 = vpop.f32.mrf.mxu0
        %v1409 = vadd.f32 0.0, %v1408
        %1410 = vmatmul.bf16.gmra.mxu0 %v1098
        %v1411 = vpop.f32.mrf.mxu0
        %v1412 = vadd.f32 0.0, %v1411
        %v1413 = vpop.f32.mrf.mxu0
        %v1414 = vadd.f32 0.0, %v1413
        %1415 = vmatmul.bf16.gmra.mxu0 %v1101
        %v1416 = vpop.f32.mrf.mxu0
        %v1417 = vadd.f32 0.0, %v1416
        %v1418 = vpop.f32.mrf.mxu0
        %v1419 = vadd.f32 0.0, %v1418
        %1420 = vmatmul.bf16.gmra.mxu0 %v1104
        %v1421 = vpop.f32.mrf.mxu0
        %v1422 = vadd.f32 0.0, %v1421
        %v1423 = vpop.f32.mrf.mxu0
        %v1424 = vadd.f32 0.0, %v1423
        %1425 = vmatmul.bf16.gmra.mxu0 %v1107
        %v1426 = vpop.f32.mrf.mxu0
        %v1427 = vadd.f32 0.0, %v1426
        %v1428 = vpop.f32.mrf.mxu0
        %v1429 = vadd.f32 0.0, %v1428
        %1430 = vmatmul.bf16.gmra.mxu0 %v1110
        %v1431 = vpop.f32.mrf.mxu0
        %v1432 = vadd.f32 0.0, %v1431
        %v1433 = vpop.f32.mrf.mxu0
        %v1434 = vadd.f32 0.0, %v1433
        %1435 = vmatmul.bf16.gmra.mxu0 %v1113
        %v1436 = vpop.f32.mrf.mxu0
        %v1437 = vadd.f32 0.0, %v1436
        %v1438 = vpop.f32.mrf.mxu0
        %v1439 = vadd.f32 0.0, %v1438
        %1440 = vmatmul.bf16.gmra.mxu0 %v1116
        %v1441 = vpop.f32.mrf.mxu0
        %v1442 = vadd.f32 0.0, %v1441
        %v1443 = vpop.f32.mrf.mxu0
        %v1444 = vadd.f32 0.0, %v1443
        %1445 = vmatmul.bf16.gmra.mxu0 %v1119
        %v1446 = vpop.f32.mrf.mxu0
        %v1447 = vadd.f32 0.0, %v1446
        %v1448 = vpop.f32.mrf.mxu0
        %v1449 = vadd.f32 0.0, %v1448
        %1450 = vmatmul.bf16.gmra.mxu0 %v1122
        %v1451 = vpop.f32.mrf.mxu0
        %v1452 = vadd.f32 0.0, %v1451
        %v1453 = vpop.f32.mrf.mxu0
        %v1454 = vadd.f32 0.0, %v1453
        %1455 = vmatmul.bf16.gmra.mxu0 %v1125
        %v1456 = vpop.f32.mrf.mxu0
        %v1457 = vadd.f32 0.0, %v1456
        %v1458 = vpop.f32.mrf.mxu0
        %v1459 = vadd.f32 0.0, %v1458
        %1460 = vmatmul.bf16.gmra.mxu0 %v1128
        %v1461 = vpop.f32.mrf.mxu0
        %v1462 = vadd.f32 0.0, %v1461
        %v1463 = vpop.f32.mrf.mxu0
        %v1464 = vadd.f32 0.0, %v1463
        %1465 = vmatmul.bf16.gmra.mxu0 %v1131
        %v1466 = vpop.f32.mrf.mxu0
        %v1467 = vadd.f32 0.0, %v1466
        %v1468 = vpop.f32.mrf.mxu0
        %v1469 = vadd.f32 0.0, %v1468
        %1470 = vdwg.mxu0
        %1471 = vmatpush.bf16.msra.mxu0 %v1294
        %1472 = vmatpush.bf16.msra.mxu0 %v1293
        %1473 = vmatpush.bf16.msra.mxu0 %v1292
        %1474 = vmatpush.bf16.msra.mxu0 %v1291
        %1475 = vmatpush.bf16.msra.mxu0 %v1290
        %1476 = vmatpush.bf16.msra.mxu0 %v1289
        %1477 = vmatpush.bf16.msra.mxu0 %v1288
        %1478 = vmatpush.bf16.msra.mxu0 %v1287
        %1479 = vmatmul.bf16.gmra.mxu0 %v1054
        %v1480 = vpop.f32.mrf.mxu0
        %v1481 = vadd.f32 %v1337, %v1480
        %v1482 = vpop.f32.mrf.mxu0
        %v1483 = vadd.f32 %v1339, %v1482
        %1484 = vmatmul.bf16.gmra.mxu0 %v1057
        %v1485 = vpop.f32.mrf.mxu0
        %v1486 = vadd.f32 %v1342, %v1485
        %v1487 = vpop.f32.mrf.mxu0
        %v1488 = vadd.f32 %v1344, %v1487
        %1489 = vmatmul.bf16.gmra.mxu0 %v1060
        %v1490 = vpop.f32.mrf.mxu0
        %v1491 = vadd.f32 %v1347, %v1490
        %v1492 = vpop.f32.mrf.mxu0
        %v1493 = vadd.f32 %v1349, %v1492
        %1494 = vmatmul.bf16.gmra.mxu0 %v1063
        %v1495 = vpop.f32.mrf.mxu0
        %v1496 = vadd.f32 %v1352, %v1495
        %v1497 = vpop.f32.mrf.mxu0
        %v1498 = vadd.f32 %v1354, %v1497
        %1499 = vmatmul.bf16.gmra.mxu0 %v1066
        %v1500 = vpop.f32.mrf.mxu0
        %v1501 = vadd.f32 %v1357, %v1500
        %v1502 = vpop.f32.mrf.mxu0
        %v1503 = vadd.f32 %v1359, %v1502
        %1504 = vmatmul.bf16.gmra.mxu0 %v1069
        %v1505 = vpop.f32.mrf.mxu0
        %v1506 = vadd.f32 %v1362, %v1505
        %v1507 = vpop.f32.mrf.mxu0
        %v1508 = vadd.f32 %v1364, %v1507
        %1509 = vmatmul.bf16.gmra.mxu0 %v1072
        %v1510 = vpop.f32.mrf.mxu0
        %v1511 = vadd.f32 %v1367, %v1510
        %v1512 = vpop.f32.mrf.mxu0
        %v1513 = vadd.f32 %v1369, %v1512
        %1514 = vmatmul.bf16.gmra.mxu0 %v1075
        %v1515 = vpop.f32.mrf.mxu0
        %v1516 = vadd.f32 %v1372, %v1515
        %v1517 = vpop.f32.mrf.mxu0
        %v1518 = vadd.f32 %v1374, %v1517
        %1519 = vmatmul.bf16.gmra.mxu0 %v1078
        %v1520 = vpop.f32.mrf.mxu0
        %v1521 = vadd.f32 %v1377, %v1520
        %v1522 = vpop.f32.mrf.mxu0
        %v1523 = vadd.f32 %v1379, %v1522
        %1524 = vmatmul.bf16.gmra.mxu0 %v1081
        %v1525 = vpop.f32.mrf.mxu0
        %v1526 = vadd.f32 %v1382, %v1525
        %v1527 = vpop.f32.mrf.mxu0
        %v1528 = vadd.f32 %v1384, %v1527
        %1529 = vmatmul.bf16.gmra.mxu0 %v1084
        %v1530 = vpop.f32.mrf.mxu0
        %v1531 = vadd.f32 %v1387, %v1530
        %v1532 = vpop.f32.mrf.mxu0
        %v1533 = vadd.f32 %v1389, %v1532
        %1534 = vmatmul.bf16.gmra.mxu0 %v1087
        %v1535 = vpop.f32.mrf.mxu0
        %v1536 = vadd.f32 %v1392, %v1535
        %v1537 = vpop.f32.mrf.mxu0
        %v1538 = vadd.f32 %v1394, %v1537
        %1539 = vmatmul.bf16.gmra.mxu0 %v1090
        %v1540 = vpop.f32.mrf.mxu0
        %v1541 = vadd.f32 %v1397, %v1540
        %v1542 = vpop.f32.mrf.mxu0
        %v1543 = vadd.f32 %v1399, %v1542
        %1544 = vmatmul.bf16.gmra.mxu0 %v1093
        %v1545 = vpop.f32.mrf.mxu0
        %v1546 = vadd.f32 %v1402, %v1545
        %v1547 = vpop.f32.mrf.mxu0
        %v1548 = vadd.f32 %v1404, %v1547
        %1549 = vmatmul.bf16.gmra.mxu0 %v1096
        %v1550 = vpop.f32.mrf.mxu0
        %v1551 = vadd.f32 %v1407, %v1550
        %v1552 = vpop.f32.mrf.mxu0
        %v1553 = vadd.f32 %v1409, %v1552
        %1554 = vmatmul.bf16.gmra.mxu0 %v1099
        %v1555 = vpop.f32.mrf.mxu0
        %v1556 = vadd.f32 %v1412, %v1555
        %v1557 = vpop.f32.mrf.mxu0
        %v1558 = vadd.f32 %v1414, %v1557
        %1559 = vmatmul.bf16.gmra.mxu0 %v1102
        %v1560 = vpop.f32.mrf.mxu0
        %v1561 = vadd.f32 %v1417, %v1560
        %v1562 = vpop.f32.mrf.mxu0
        %v1563 = vadd.f32 %v1419, %v1562
        %1564 = vmatmul.bf16.gmra.mxu0 %v1105
        %v1565 = vpop.f32.mrf.mxu0
        %v1566 = vadd.f32 %v1422, %v1565
        %v1567 = vpop.f32.mrf.mxu0
        %v1568 = vadd.f32 %v1424, %v1567
        %1569 = vmatmul.bf16.gmra.mxu0 %v1108
        %v1570 = vpop.f32.mrf.mxu0
        %v1571 = vadd.f32 %v1427, %v1570
        %v1572 = vpop.f32.mrf.mxu0
        %v1573 = vadd.f32 %v1429, %v1572
        %1574 = vmatmul.bf16.gmra.mxu0 %v1111
        %v1575 = vpop.f32.mrf.mxu0
        %v1576 = vadd.f32 %v1432, %v1575
        %v1577 = vpop.f32.mrf.mxu0
        %v1578 = vadd.f32 %v1434, %v1577
        %1579 = vmatmul.bf16.gmra.mxu0 %v1114
        %v1580 = vpop.f32.mrf.mxu0
        %v1581 = vadd.f32 %v1437, %v1580
        %v1582 = vpop.f32.mrf.mxu0
        %v1583 = vadd.f32 %v1439, %v1582
        %1584 = vmatmul.bf16.gmra.mxu0 %v1117
        %v1585 = vpop.f32.mrf.mxu0
        %v1586 = vadd.f32 %v1442, %v1585
        %v1587 = vpop.f32.mrf.mxu0
        %v1588 = vadd.f32 %v1444, %v1587
        %1589 = vmatmul.bf16.gmra.mxu0 %v1120
        %v1590 = vpop.f32.mrf.mxu0
        %v1591 = vadd.f32 %v1447, %v1590
        %v1592 = vpop.f32.mrf.mxu0
        %v1593 = vadd.f32 %v1449, %v1592
        %1594 = vmatmul.bf16.gmra.mxu0 %v1123
        %v1595 = vpop.f32.mrf.mxu0
        %v1596 = vadd.f32 %v1452, %v1595
        %v1597 = vpop.f32.mrf.mxu0
        %v1598 = vadd.f32 %v1454, %v1597
        %1599 = vmatmul.bf16.gmra.mxu0 %v1126
        %v1600 = vpop.f32.mrf.mxu0
        %v1601 = vadd.f32 %v1457, %v1600
        %v1602 = vpop.f32.mrf.mxu0
        %v1603 = vadd.f32 %v1459, %v1602
        %1604 = vmatmul.bf16.gmra.mxu0 %v1129
        %v1605 = vpop.f32.mrf.mxu0
        %v1606 = vadd.f32 %v1462, %v1605
        %v1607 = vpop.f32.mrf.mxu0
        %v1608 = vadd.f32 %v1464, %v1607
        %1609 = vmatmul.bf16.gmra.mxu0 %v1132
        %v1610 = vpop.f32.mrf.mxu0
        %v1611 = vadd.f32 %v1467, %v1610
        %v1612 = vpop.f32.mrf.mxu0
        %v1613 = vadd.f32 %v1469, %v1612
        %1614 = vdwg.mxu0
        %1615 = vmatpush.bf16.msra.mxu0 %v1302
        %1616 = vmatpush.bf16.msra.mxu0 %v1301
        %1617 = vmatpush.bf16.msra.mxu0 %v1300
        %1618 = vmatpush.bf16.msra.mxu0 %v1299
        %1619 = vmatpush.bf16.msra.mxu0 %v1298
        %1620 = vmatpush.bf16.msra.mxu0 %v1297
        %1621 = vmatpush.bf16.msra.mxu0 %v1296
        %1622 = vmatpush.bf16.msra.mxu0 %v1295
        %1623 = vmatmul.bf16.gmra.mxu0 %v1055
        %v1624 = vpop.f32.mrf.mxu0
        %v1625 = vadd.f32 %v1481, %v1624
        %v1626 = vpop.f32.mrf.mxu0
        %v1627 = vadd.f32 %v1483, %v1626
        %1628 = vmatmul.bf16.gmra.mxu0 %v1058
        %v1629 = vpop.f32.mrf.mxu0
        %v1630 = vadd.f32 %v1486, %v1629
        %v1631 = vpop.f32.mrf.mxu0
        %v1632 = vadd.f32 %v1488, %v1631
        %1633 = vmatmul.bf16.gmra.mxu0 %v1061
        %v1634 = vpop.f32.mrf.mxu0
        %v1635 = vadd.f32 %v1491, %v1634
        %v1636 = vpop.f32.mrf.mxu0
        %v1637 = vadd.f32 %v1493, %v1636
        %1638 = vmatmul.bf16.gmra.mxu0 %v1064
        %v1639 = vpop.f32.mrf.mxu0
        %v1640 = vadd.f32 %v1496, %v1639
        %v1641 = vpop.f32.mrf.mxu0
        %v1642 = vadd.f32 %v1498, %v1641
        %1643 = vmatmul.bf16.gmra.mxu0 %v1067
        %v1644 = vpop.f32.mrf.mxu0
        %v1645 = vadd.f32 %v1501, %v1644
        %v1646 = vpop.f32.mrf.mxu0
        %v1647 = vadd.f32 %v1503, %v1646
        %1648 = vmatmul.bf16.gmra.mxu0 %v1070
        %v1649 = vpop.f32.mrf.mxu0
        %v1650 = vadd.f32 %v1506, %v1649
        %v1651 = vpop.f32.mrf.mxu0
        %v1652 = vadd.f32 %v1508, %v1651
        %1653 = vmatmul.bf16.gmra.mxu0 %v1073
        %v1654 = vpop.f32.mrf.mxu0
        %v1655 = vadd.f32 %v1511, %v1654
        %v1656 = vpop.f32.mrf.mxu0
        %v1657 = vadd.f32 %v1513, %v1656
        %1658 = vmatmul.bf16.gmra.mxu0 %v1076
        %v1659 = vpop.f32.mrf.mxu0
        %v1660 = vadd.f32 %v1516, %v1659
        %v1661 = vpop.f32.mrf.mxu0
        %v1662 = vadd.f32 %v1518, %v1661
        %1663 = vmatmul.bf16.gmra.mxu0 %v1079
        %v1664 = vpop.f32.mrf.mxu0
        %v1665 = vadd.f32 %v1521, %v1664
        %v1666 = vpop.f32.mrf.mxu0
        %v1667 = vadd.f32 %v1523, %v1666
        %1668 = vmatmul.bf16.gmra.mxu0 %v1082
        %v1669 = vpop.f32.mrf.mxu0
        %v1670 = vadd.f32 %v1526, %v1669
        %v1671 = vpop.f32.mrf.mxu0
        %v1672 = vadd.f32 %v1528, %v1671
        %1673 = vmatmul.bf16.gmra.mxu0 %v1085
        %v1674 = vpop.f32.mrf.mxu0
        %v1675 = vadd.f32 %v1531, %v1674
        %v1676 = vpop.f32.mrf.mxu0
        %v1677 = vadd.f32 %v1533, %v1676
        %1678 = vmatmul.bf16.gmra.mxu0 %v1088
        %v1679 = vpop.f32.mrf.mxu0
        %v1680 = vadd.f32 %v1536, %v1679
        %v1681 = vpop.f32.mrf.mxu0
        %v1682 = vadd.f32 %v1538, %v1681
        %1683 = vmatmul.bf16.gmra.mxu0 %v1091
        %v1684 = vpop.f32.mrf.mxu0
        %v1685 = vadd.f32 %v1541, %v1684
        %v1686 = vpop.f32.mrf.mxu0
        %v1687 = vadd.f32 %v1543, %v1686
        %1688 = vmatmul.bf16.gmra.mxu0 %v1094
        %v1689 = vpop.f32.mrf.mxu0
        %v1690 = vadd.f32 %v1546, %v1689
        %v1691 = vpop.f32.mrf.mxu0
        %v1692 = vadd.f32 %v1548, %v1691
        %1693 = vmatmul.bf16.gmra.mxu0 %v1097
        %v1694 = vpop.f32.mrf.mxu0
        %v1695 = vadd.f32 %v1551, %v1694
        %v1696 = vpop.f32.mrf.mxu0
        %v1697 = vadd.f32 %v1553, %v1696
        %1698 = vmatmul.bf16.gmra.mxu0 %v1100
        %v1699 = vpop.f32.mrf.mxu0
        %v1700 = vadd.f32 %v1556, %v1699
        %v1701 = vpop.f32.mrf.mxu0
        %v1702 = vadd.f32 %v1558, %v1701
        %1703 = vmatmul.bf16.gmra.mxu0 %v1103
        %v1704 = vpop.f32.mrf.mxu0
        %v1705 = vadd.f32 %v1561, %v1704
        %v1706 = vpop.f32.mrf.mxu0
        %v1707 = vadd.f32 %v1563, %v1706
        %1708 = vmatmul.bf16.gmra.mxu0 %v1106
        %v1709 = vpop.f32.mrf.mxu0
        %v1710 = vadd.f32 %v1566, %v1709
        %v1711 = vpop.f32.mrf.mxu0
        %v1712 = vadd.f32 %v1568, %v1711
        %1713 = vmatmul.bf16.gmra.mxu0 %v1109
        %v1714 = vpop.f32.mrf.mxu0
        %v1715 = vadd.f32 %v1571, %v1714
        %v1716 = vpop.f32.mrf.mxu0
        %v1717 = vadd.f32 %v1573, %v1716
        %1718 = vmatmul.bf16.gmra.mxu0 %v1112
        %v1719 = vpop.f32.mrf.mxu0
        %v1720 = vadd.f32 %v1576, %v1719
        %v1721 = vpop.f32.mrf.mxu0
        %v1722 = vadd.f32 %v1578, %v1721
        %1723 = vmatmul.bf16.gmra.mxu0 %v1115
        %v1724 = vpop.f32.mrf.mxu0
        %v1725 = vadd.f32 %v1581, %v1724
        %v1726 = vpop.f32.mrf.mxu0
        %v1727 = vadd.f32 %v1583, %v1726
        %1728 = vmatmul.bf16.gmra.mxu0 %v1118
        %v1729 = vpop.f32.mrf.mxu0
        %v1730 = vadd.f32 %v1586, %v1729
        %v1731 = vpop.f32.mrf.mxu0
        %v1732 = vadd.f32 %v1588, %v1731
        %1733 = vmatmul.bf16.gmra.mxu0 %v1121
        %v1734 = vpop.f32.mrf.mxu0
        %v1735 = vadd.f32 %v1591, %v1734
        %v1736 = vpop.f32.mrf.mxu0
        %v1737 = vadd.f32 %v1593, %v1736
        %1738 = vmatmul.bf16.gmra.mxu0 %v1124
        %v1739 = vpop.f32.mrf.mxu0
        %v1740 = vadd.f32 %v1596, %v1739
        %v1741 = vpop.f32.mrf.mxu0
        %v1742 = vadd.f32 %v1598, %v1741
        %1743 = vmatmul.bf16.gmra.mxu0 %v1127
        %v1744 = vpop.f32.mrf.mxu0
        %v1745 = vadd.f32 %v1601, %v1744
        %v1746 = vpop.f32.mrf.mxu0
        %v1747 = vadd.f32 %v1603, %v1746
        %1748 = vmatmul.bf16.gmra.mxu0 %v1130
        %v1749 = vpop.f32.mrf.mxu0
        %v1750 = vadd.f32 %v1606, %v1749
        %v1751 = vpop.f32.mrf.mxu0
        %v1752 = vadd.f32 %v1608, %v1751
        %1753 = vmatmul.bf16.gmra.mxu0 %v1133
        %v1754 = vpop.f32.mrf.mxu0
        %v1755 = vadd.f32 %v1611, %v1754
        %v1756 = vpop.f32.mrf.mxu0
        %v1757 = vadd.f32 %v1613, %v1756
        %1758 = vdwg.mxu0
        %v1807 = vunpack.c.l.b16 %v1005
        %v1808 = vunpack.c.l.b16 %v1006
        %v1809 = vunpack.c.l.b16 %v1007
        %v1810 = vunpack.c.l.b16 %v1008
        %v1811 = vunpack.c.l.b16 %v1009
        %v1812 = vunpack.c.l.b16 %v1010
        %v1813 = vunpack.c.l.b16 %v1011
        %v1814 = vunpack.c.l.b16 %v1012
        %v1815 = vunpack.c.l.b16 %v1013
        %v1816 = vunpack.c.l.b16 %v1014
        %v1817 = vunpack.c.l.b16 %v1015
        %v1818 = vunpack.c.l.b16 %v1016
        %v1819 = vunpack.c.l.b16 %v1017
        %v1820 = vunpack.c.l.b16 %v1018
        %v1821 = vunpack.c.l.b16 %v1019
        %v1822 = vunpack.c.l.b16 %v1020
        %v1823 = vunpack.c.l.b16 %v1021
        %v1824 = vunpack.c.l.b16 %v1022
        %v1825 = vunpack.c.l.b16 %v1023
        %v1826 = vunpack.c.l.b16 %v1024
        %v1827 = vunpack.c.l.b16 %v1025
        %v1828 = vunpack.c.l.b16 %v1026
        %v1829 = vunpack.c.l.b16 %v1027
        %v1830 = vunpack.c.l.b16 %v1028
        %v1831 = vunpack.c.l.b16 %v1029
        %v1832 = vunpack.c.l.b16 %v1030
        %v1833 = vunpack.c.l.b16 %v1031
        %v1834 = vunpack.c.l.b16 %v1032
        %v1835 = vunpack.c.l.b16 %v1033
        %v1836 = vunpack.c.l.b16 %v1034
        %v1837 = vunpack.c.l.b16 %v1035
        %v1838 = vunpack.c.l.b16 %v1036
        %v1839 = vunpack.c.l.b16 %v1037
        %v1840 = vunpack.c.l.b16 %v1038
        %v1841 = vunpack.c.l.b16 %v1039
        %v1842 = vunpack.c.l.b16 %v1040
        %v1843 = vunpack.c.l.b16 %v1041
        %v1844 = vunpack.c.l.b16 %v1042
        %v1845 = vunpack.c.l.b16 %v1043
        %v1846 = vunpack.c.l.b16 %v1044
        %v1847 = vunpack.c.l.b16 %v1045
        %v1848 = vunpack.c.l.b16 %v1046
        %v1849 = vunpack.c.l.b16 %v1047
        %v1850 = vunpack.c.l.b16 %v1048
        %v1851 = vunpack.c.l.b16 %v1049
        %v1852 = vunpack.c.l.b16 %v1050
        %v1853 = vunpack.c.l.b16 %v1051
        %v1854 = vunpack.c.l.b16 %v1052
        %v1855 = vpack.c.b16 %v1808, %v1807
        %v1856 = vpack.c.b16 %v1810, %v1809
        %v1857 = vpack.c.b16 %v1812, %v1811
        %v1858 = vpack.c.b16 %v1814, %v1813
        %v1859 = vpack.c.b16 %v1816, %v1815
        %v1860 = vpack.c.b16 %v1818, %v1817
        %v1861 = vpack.c.b16 %v1820, %v1819
        %v1862 = vpack.c.b16 %v1822, %v1821
        %v1863 = vpack.c.b16 %v1824, %v1823
        %v1864 = vpack.c.b16 %v1826, %v1825
        %v1865 = vpack.c.b16 %v1828, %v1827
        %v1866 = vpack.c.b16 %v1830, %v1829
        %v1867 = vpack.c.b16 %v1832, %v1831
        %v1868 = vpack.c.b16 %v1834, %v1833
        %v1869 = vpack.c.b16 %v1836, %v1835
        %v1870 = vpack.c.b16 %v1838, %v1837
        %v1871 = vpack.c.b16 %v1840, %v1839
        %v1872 = vpack.c.b16 %v1842, %v1841
        %v1873 = vpack.c.b16 %v1844, %v1843
        %v1874 = vpack.c.b16 %v1846, %v1845
        %v1875 = vpack.c.b16 %v1848, %v1847
        %v1876 = vpack.c.b16 %v1850, %v1849
        %v1877 = vpack.c.b16 %v1852, %v1851
        %v1878 = vpack.c.b16 %v1854, %v1853
        %1903 = vmatpush.bf16.msra.mxu0 %v1862
        %1904 = vmatpush.bf16.msra.mxu0 %v1861
        %1905 = vmatpush.bf16.msra.mxu0 %v1860
        %1906 = vmatpush.bf16.msra.mxu0 %v1859
        %1907 = vmatpush.bf16.msra.mxu0 %v1858
        %1908 = vmatpush.bf16.msra.mxu0 %v1857
        %1909 = vmatpush.bf16.msra.mxu0 %v1856
        %1910 = vmatpush.bf16.msra.mxu0 %v1855
        %1911 = vmatmul.bf16.gmra.mxu0 %v924
        %v1912 = vpop.f32.mrf.mxu0
        %v1913 = vadd.f32 %v1625, %v1912
        %v1914 = vpop.f32.mrf.mxu0
        %v1915 = vadd.f32 %v1627, %v1914
        %1916 = vmatmul.bf16.gmra.mxu0 %v927
        %v1917 = vpop.f32.mrf.mxu0
        %v1918 = vadd.f32 %v1630, %v1917
        %v1919 = vpop.f32.mrf.mxu0
        %v1920 = vadd.f32 %v1632, %v1919
        %1921 = vmatmul.bf16.gmra.mxu0 %v930
        %v1922 = vpop.f32.mrf.mxu0
        %v1923 = vadd.f32 %v1635, %v1922
        %v1924 = vpop.f32.mrf.mxu0
        %v1925 = vadd.f32 %v1637, %v1924
        %1926 = vmatmul.bf16.gmra.mxu0 %v933
        %v1927 = vpop.f32.mrf.mxu0
        %v1928 = vadd.f32 %v1640, %v1927
        %v1929 = vpop.f32.mrf.mxu0
        %v1930 = vadd.f32 %v1642, %v1929
        %1931 = vmatmul.bf16.gmra.mxu0 %v936
        %v1932 = vpop.f32.mrf.mxu0
        %v1933 = vadd.f32 %v1645, %v1932
        %v1934 = vpop.f32.mrf.mxu0
        %v1935 = vadd.f32 %v1647, %v1934
        %1936 = vmatmul.bf16.gmra.mxu0 %v939
        %v1937 = vpop.f32.mrf.mxu0
        %v1938 = vadd.f32 %v1650, %v1937
        %v1939 = vpop.f32.mrf.mxu0
        %v1940 = vadd.f32 %v1652, %v1939
        %1941 = vmatmul.bf16.gmra.mxu0 %v942
        %v1942 = vpop.f32.mrf.mxu0
        %v1943 = vadd.f32 %v1655, %v1942
        %v1944 = vpop.f32.mrf.mxu0
        %v1945 = vadd.f32 %v1657, %v1944
        %1946 = vmatmul.bf16.gmra.mxu0 %v945
        %v1947 = vpop.f32.mrf.mxu0
        %v1948 = vadd.f32 %v1660, %v1947
        %v1949 = vpop.f32.mrf.mxu0
        %v1950 = vadd.f32 %v1662, %v1949
        %1951 = vmatmul.bf16.gmra.mxu0 %v948
        %v1952 = vpop.f32.mrf.mxu0
        %v1953 = vadd.f32 %v1665, %v1952
        %v1954 = vpop.f32.mrf.mxu0
        %v1955 = vadd.f32 %v1667, %v1954
        %1956 = vmatmul.bf16.gmra.mxu0 %v951
        %v1957 = vpop.f32.mrf.mxu0
        %v1958 = vadd.f32 %v1670, %v1957
        %v1959 = vpop.f32.mrf.mxu0
        %v1960 = vadd.f32 %v1672, %v1959
        %1961 = vmatmul.bf16.gmra.mxu0 %v954
        %v1962 = vpop.f32.mrf.mxu0
        %v1963 = vadd.f32 %v1675, %v1962
        %v1964 = vpop.f32.mrf.mxu0
        %v1965 = vadd.f32 %v1677, %v1964
        %1966 = vmatmul.bf16.gmra.mxu0 %v957
        %v1967 = vpop.f32.mrf.mxu0
        %v1968 = vadd.f32 %v1680, %v1967
        %v1969 = vpop.f32.mrf.mxu0
        %v1970 = vadd.f32 %v1682, %v1969
        %1971 = vmatmul.bf16.gmra.mxu0 %v960
        %v1972 = vpop.f32.mrf.mxu0
        %v1973 = vadd.f32 %v1685, %v1972
        %v1974 = vpop.f32.mrf.mxu0
        %v1975 = vadd.f32 %v1687, %v1974
        %1976 = vmatmul.bf16.gmra.mxu0 %v963
        %v1977 = vpop.f32.mrf.mxu0
        %v1978 = vadd.f32 %v1690, %v1977
        %v1979 = vpop.f32.mrf.mxu0
        %v1980 = vadd.f32 %v1692, %v1979
        %1981 = vmatmul.bf16.gmra.mxu0 %v966
        %v1982 = vpop.f32.mrf.mxu0
        %v1983 = vadd.f32 %v1695, %v1982
        %v1984 = vpop.f32.mrf.mxu0
        %v1985 = vadd.f32 %v1697, %v1984
        %1986 = vmatmul.bf16.gmra.mxu0 %v969
        %v1987 = vpop.f32.mrf.mxu0
        %v1988 = vadd.f32 %v1700, %v1987
        %v1989 = vpop.f32.mrf.mxu0
        %v1990 = vadd.f32 %v1702, %v1989
        %1991 = vmatmul.bf16.gmra.mxu0 %v972
        %v1992 = vpop.f32.mrf.mxu0
        %v1993 = vadd.f32 %v1705, %v1992
        %v1994 = vpop.f32.mrf.mxu0
        %v1995 = vadd.f32 %v1707, %v1994
        %1996 = vmatmul.bf16.gmra.mxu0 %v975
        %v1997 = vpop.f32.mrf.mxu0
        %v1998 = vadd.f32 %v1710, %v1997
        %v1999 = vpop.f32.mrf.mxu0
        %v2000 = vadd.f32 %v1712, %v1999
        %2001 = vmatmul.bf16.gmra.mxu0 %v978
        %v2002 = vpop.f32.mrf.mxu0
        %v2003 = vadd.f32 %v1715, %v2002
        %v2004 = vpop.f32.mrf.mxu0
        %v2005 = vadd.f32 %v1717, %v2004
        %2006 = vmatmul.bf16.gmra.mxu0 %v981
        %v2007 = vpop.f32.mrf.mxu0
        %v2008 = vadd.f32 %v1720, %v2007
        %v2009 = vpop.f32.mrf.mxu0
        %v2010 = vadd.f32 %v1722, %v2009
        %2011 = vmatmul.bf16.gmra.mxu0 %v984
        %v2012 = vpop.f32.mrf.mxu0
        %v2013 = vadd.f32 %v1725, %v2012
        %v2014 = vpop.f32.mrf.mxu0
        %v2015 = vadd.f32 %v1727, %v2014
        %2016 = vmatmul.bf16.gmra.mxu0 %v987
        %v2017 = vpop.f32.mrf.mxu0
        %v2018 = vadd.f32 %v1730, %v2017
        %v2019 = vpop.f32.mrf.mxu0
        %v2020 = vadd.f32 %v1732, %v2019
        %2021 = vmatmul.bf16.gmra.mxu0 %v990
        %v2022 = vpop.f32.mrf.mxu0
        %v2023 = vadd.f32 %v1735, %v2022
        %v2024 = vpop.f32.mrf.mxu0
        %v2025 = vadd.f32 %v1737, %v2024
        %2026 = vmatmul.bf16.gmra.mxu0 %v993
        %v2027 = vpop.f32.mrf.mxu0
        %v2028 = vadd.f32 %v1740, %v2027
        %v2029 = vpop.f32.mrf.mxu0
        %v2030 = vadd.f32 %v1742, %v2029
        %2031 = vmatmul.bf16.gmra.mxu0 %v996
        %v2032 = vpop.f32.mrf.mxu0
        %v2033 = vadd.f32 %v1745, %v2032
        %v2034 = vpop.f32.mrf.mxu0
        %v2035 = vadd.f32 %v1747, %v2034
        %2036 = vmatmul.bf16.gmra.mxu0 %v999
        %v2037 = vpop.f32.mrf.mxu0
        %v2038 = vadd.f32 %v1750, %v2037
        %v2039 = vpop.f32.mrf.mxu0
        %v2040 = vadd.f32 %v1752, %v2039
        %2041 = vmatmul.bf16.gmra.mxu0 %v1002
        %v2042 = vpop.f32.mrf.mxu0
        %v2043 = vadd.f32 %v1755, %v2042
        %v2044 = vpop.f32.mrf.mxu0
        %v2045 = vadd.f32 %v1757, %v2044
        %2046 = vdwg.mxu0
        %2047 = vmatpush.bf16.msra.mxu0 %v1870
        %2048 = vmatpush.bf16.msra.mxu0 %v1869
        %2049 = vmatpush.bf16.msra.mxu0 %v1868
        %2050 = vmatpush.bf16.msra.mxu0 %v1867
        %2051 = vmatpush.bf16.msra.mxu0 %v1866
        %2052 = vmatpush.bf16.msra.mxu0 %v1865
        %2053 = vmatpush.bf16.msra.mxu0 %v1864
        %2054 = vmatpush.bf16.msra.mxu0 %v1863
        %2055 = vmatmul.bf16.gmra.mxu0 %v925
        %v2056 = vpop.f32.mrf.mxu0
        %v2057 = vadd.f32 %v1913, %v2056
        %v2058 = vpop.f32.mrf.mxu0
        %v2059 = vadd.f32 %v1915, %v2058
        %2060 = vmatmul.bf16.gmra.mxu0 %v928
        %v2061 = vpop.f32.mrf.mxu0
        %v2062 = vadd.f32 %v1918, %v2061
        %v2063 = vpop.f32.mrf.mxu0
        %v2064 = vadd.f32 %v1920, %v2063
        %2065 = vmatmul.bf16.gmra.mxu0 %v931
        %v2066 = vpop.f32.mrf.mxu0
        %v2067 = vadd.f32 %v1923, %v2066
        %v2068 = vpop.f32.mrf.mxu0
        %v2069 = vadd.f32 %v1925, %v2068
        %2070 = vmatmul.bf16.gmra.mxu0 %v934
        %v2071 = vpop.f32.mrf.mxu0
        %v2072 = vadd.f32 %v1928, %v2071
        %v2073 = vpop.f32.mrf.mxu0
        %v2074 = vadd.f32 %v1930, %v2073
        %2075 = vmatmul.bf16.gmra.mxu0 %v937
        %v2076 = vpop.f32.mrf.mxu0
        %v2077 = vadd.f32 %v1933, %v2076
        %v2078 = vpop.f32.mrf.mxu0
        %v2079 = vadd.f32 %v1935, %v2078
        %2080 = vmatmul.bf16.gmra.mxu0 %v940
        %v2081 = vpop.f32.mrf.mxu0
        %v2082 = vadd.f32 %v1938, %v2081
        %v2083 = vpop.f32.mrf.mxu0
        %v2084 = vadd.f32 %v1940, %v2083
        %2085 = vmatmul.bf16.gmra.mxu0 %v943
        %v2086 = vpop.f32.mrf.mxu0
        %v2087 = vadd.f32 %v1943, %v2086
        %v2088 = vpop.f32.mrf.mxu0
        %v2089 = vadd.f32 %v1945, %v2088
        %2090 = vmatmul.bf16.gmra.mxu0 %v946
        %v2091 = vpop.f32.mrf.mxu0
        %v2092 = vadd.f32 %v1948, %v2091
        %v2093 = vpop.f32.mrf.mxu0
        %v2094 = vadd.f32 %v1950, %v2093
        %2095 = vmatmul.bf16.gmra.mxu0 %v949
        %v2096 = vpop.f32.mrf.mxu0
        %v2097 = vadd.f32 %v1953, %v2096
        %v2098 = vpop.f32.mrf.mxu0
        %v2099 = vadd.f32 %v1955, %v2098
        %2100 = vmatmul.bf16.gmra.mxu0 %v952
        %v2101 = vpop.f32.mrf.mxu0
        %v2102 = vadd.f32 %v1958, %v2101
        %v2103 = vpop.f32.mrf.mxu0
        %v2104 = vadd.f32 %v1960, %v2103
        %2105 = vmatmul.bf16.gmra.mxu0 %v955
        %v2106 = vpop.f32.mrf.mxu0
        %v2107 = vadd.f32 %v1963, %v2106
        %v2108 = vpop.f32.mrf.mxu0
        %v2109 = vadd.f32 %v1965, %v2108
        %2110 = vmatmul.bf16.gmra.mxu0 %v958
        %v2111 = vpop.f32.mrf.mxu0
        %v2112 = vadd.f32 %v1968, %v2111
        %v2113 = vpop.f32.mrf.mxu0
        %v2114 = vadd.f32 %v1970, %v2113
        %2115 = vmatmul.bf16.gmra.mxu0 %v961
        %v2116 = vpop.f32.mrf.mxu0
        %v2117 = vadd.f32 %v1973, %v2116
        %v2118 = vpop.f32.mrf.mxu0
        %v2119 = vadd.f32 %v1975, %v2118
        %2120 = vmatmul.bf16.gmra.mxu0 %v964
        %v2121 = vpop.f32.mrf.mxu0
        %v2122 = vadd.f32 %v1978, %v2121
        %v2123 = vpop.f32.mrf.mxu0
        %v2124 = vadd.f32 %v1980, %v2123
        %2125 = vmatmul.bf16.gmra.mxu0 %v967
        %v2126 = vpop.f32.mrf.mxu0
        %v2127 = vadd.f32 %v1983, %v2126
        %v2128 = vpop.f32.mrf.mxu0
        %v2129 = vadd.f32 %v1985, %v2128
        %2130 = vmatmul.bf16.gmra.mxu0 %v970
        %v2131 = vpop.f32.mrf.mxu0
        %v2132 = vadd.f32 %v1988, %v2131
        %v2133 = vpop.f32.mrf.mxu0
        %v2134 = vadd.f32 %v1990, %v2133
        %2135 = vmatmul.bf16.gmra.mxu0 %v973
        %v2136 = vpop.f32.mrf.mxu0
        %v2137 = vadd.f32 %v1993, %v2136
        %v2138 = vpop.f32.mrf.mxu0
        %v2139 = vadd.f32 %v1995, %v2138
        %2140 = vmatmul.bf16.gmra.mxu0 %v976
        %v2141 = vpop.f32.mrf.mxu0
        %v2142 = vadd.f32 %v1998, %v2141
        %v2143 = vpop.f32.mrf.mxu0
        %v2144 = vadd.f32 %v2000, %v2143
        %2145 = vmatmul.bf16.gmra.mxu0 %v979
        %v2146 = vpop.f32.mrf.mxu0
        %v2147 = vadd.f32 %v2003, %v2146
        %v2148 = vpop.f32.mrf.mxu0
        %v2149 = vadd.f32 %v2005, %v2148
        %2150 = vmatmul.bf16.gmra.mxu0 %v982
        %v2151 = vpop.f32.mrf.mxu0
        %v2152 = vadd.f32 %v2008, %v2151
        %v2153 = vpop.f32.mrf.mxu0
        %v2154 = vadd.f32 %v2010, %v2153
        %2155 = vmatmul.bf16.gmra.mxu0 %v985
        %v2156 = vpop.f32.mrf.mxu0
        %v2157 = vadd.f32 %v2013, %v2156
        %v2158 = vpop.f32.mrf.mxu0
        %v2159 = vadd.f32 %v2015, %v2158
        %2160 = vmatmul.bf16.gmra.mxu0 %v988
        %v2161 = vpop.f32.mrf.mxu0
        %v2162 = vadd.f32 %v2018, %v2161
        %v2163 = vpop.f32.mrf.mxu0
        %v2164 = vadd.f32 %v2020, %v2163
        %2165 = vmatmul.bf16.gmra.mxu0 %v991
        %v2166 = vpop.f32.mrf.mxu0
        %v2167 = vadd.f32 %v2023, %v2166
        %v2168 = vpop.f32.mrf.mxu0
        %v2169 = vadd.f32 %v2025, %v2168
        %2170 = vmatmul.bf16.gmra.mxu0 %v994
        %v2171 = vpop.f32.mrf.mxu0
        %v2172 = vadd.f32 %v2028, %v2171
        %v2173 = vpop.f32.mrf.mxu0
        %v2174 = vadd.f32 %v2030, %v2173
        %2175 = vmatmul.bf16.gmra.mxu0 %v997
        %v2176 = vpop.f32.mrf.mxu0
        %v2177 = vadd.f32 %v2033, %v2176
        %v2178 = vpop.f32.mrf.mxu0
        %v2179 = vadd.f32 %v2035, %v2178
        %2180 = vmatmul.bf16.gmra.mxu0 %v1000
        %v2181 = vpop.f32.mrf.mxu0
        %v2182 = vadd.f32 %v2038, %v2181
        %v2183 = vpop.f32.mrf.mxu0
        %v2184 = vadd.f32 %v2040, %v2183
        %2185 = vmatmul.bf16.gmra.mxu0 %v1003
        %v2186 = vpop.f32.mrf.mxu0
        %v2187 = vadd.f32 %v2043, %v2186
        %v2188 = vpop.f32.mrf.mxu0
        %v2189 = vadd.f32 %v2045, %v2188
        %2190 = vdwg.mxu0
        %2191 = vmatpush.bf16.msra.mxu0 %v1878
        %2192 = vmatpush.bf16.msra.mxu0 %v1877
        %2193 = vmatpush.bf16.msra.mxu0 %v1876
        %2194 = vmatpush.bf16.msra.mxu0 %v1875
        %2195 = vmatpush.bf16.msra.mxu0 %v1874
        %2196 = vmatpush.bf16.msra.mxu0 %v1873
        %2197 = vmatpush.bf16.msra.mxu0 %v1872
        %2198 = vmatpush.bf16.msra.mxu0 %v1871
        %2199 = vmatmul.bf16.gmra.mxu0 %v926
        %v2200 = vpop.f32.mrf.mxu0
        %v2201 = vadd.f32 %v2057, %v2200
        %v2202 = vpop.f32.mrf.mxu0
        %v2203 = vadd.f32 %v2059, %v2202
        %2204 = vmatmul.bf16.gmra.mxu0 %v929
        %v2205 = vpop.f32.mrf.mxu0
        %v2206 = vadd.f32 %v2062, %v2205
        %v2207 = vpop.f32.mrf.mxu0
        %v2208 = vadd.f32 %v2064, %v2207
        %2209 = vmatmul.bf16.gmra.mxu0 %v932
        %v2210 = vpop.f32.mrf.mxu0
        %v2211 = vadd.f32 %v2067, %v2210
        %v2212 = vpop.f32.mrf.mxu0
        %v2213 = vadd.f32 %v2069, %v2212
        %2214 = vmatmul.bf16.gmra.mxu0 %v935
        %v2215 = vpop.f32.mrf.mxu0
        %v2216 = vadd.f32 %v2072, %v2215
        %v2217 = vpop.f32.mrf.mxu0
        %v2218 = vadd.f32 %v2074, %v2217
        %2219 = vmatmul.bf16.gmra.mxu0 %v938
        %v2220 = vpop.f32.mrf.mxu0
        %v2221 = vadd.f32 %v2077, %v2220
        %v2222 = vpop.f32.mrf.mxu0
        %v2223 = vadd.f32 %v2079, %v2222
        %2224 = vmatmul.bf16.gmra.mxu0 %v941
        %v2225 = vpop.f32.mrf.mxu0
        %v2226 = vadd.f32 %v2082, %v2225
        %v2227 = vpop.f32.mrf.mxu0
        %v2228 = vadd.f32 %v2084, %v2227
        %2229 = vmatmul.bf16.gmra.mxu0 %v944
        %v2230 = vpop.f32.mrf.mxu0
        %v2231 = vadd.f32 %v2087, %v2230
        %v2232 = vpop.f32.mrf.mxu0
        %v2233 = vadd.f32 %v2089, %v2232
        %2234 = vmatmul.bf16.gmra.mxu0 %v947
        %v2235 = vpop.f32.mrf.mxu0
        %v2236 = vadd.f32 %v2092, %v2235
        %v2237 = vpop.f32.mrf.mxu0
        %v2238 = vadd.f32 %v2094, %v2237
        %2239 = vmatmul.bf16.gmra.mxu0 %v950
        %v2240 = vpop.f32.mrf.mxu0
        %v2241 = vadd.f32 %v2097, %v2240
        %v2242 = vpop.f32.mrf.mxu0
        %v2243 = vadd.f32 %v2099, %v2242
        %2244 = vmatmul.bf16.gmra.mxu0 %v953
        %v2245 = vpop.f32.mrf.mxu0
        %v2246 = vadd.f32 %v2102, %v2245
        %v2247 = vpop.f32.mrf.mxu0
        %v2248 = vadd.f32 %v2104, %v2247
        %2249 = vmatmul.bf16.gmra.mxu0 %v956
        %v2250 = vpop.f32.mrf.mxu0
        %v2251 = vadd.f32 %v2107, %v2250
        %v2252 = vpop.f32.mrf.mxu0
        %v2253 = vadd.f32 %v2109, %v2252
        %2254 = vmatmul.bf16.gmra.mxu0 %v959
        %v2255 = vpop.f32.mrf.mxu0
        %v2256 = vadd.f32 %v2112, %v2255
        %v2257 = vpop.f32.mrf.mxu0
        %v2258 = vadd.f32 %v2114, %v2257
        %2259 = vmatmul.bf16.gmra.mxu0 %v962
        %v2260 = vpop.f32.mrf.mxu0
        %v2261 = vadd.f32 %v2117, %v2260
        %v2262 = vpop.f32.mrf.mxu0
        %v2263 = vadd.f32 %v2119, %v2262
        %2264 = vmatmul.bf16.gmra.mxu0 %v965
        %v2265 = vpop.f32.mrf.mxu0
        %v2266 = vadd.f32 %v2122, %v2265
        %v2267 = vpop.f32.mrf.mxu0
        %v2268 = vadd.f32 %v2124, %v2267
        %2269 = vmatmul.bf16.gmra.mxu0 %v968
        %v2270 = vpop.f32.mrf.mxu0
        %v2271 = vadd.f32 %v2127, %v2270
        %v2272 = vpop.f32.mrf.mxu0
        %v2273 = vadd.f32 %v2129, %v2272
        %2274 = vmatmul.bf16.gmra.mxu0 %v971
        %v2275 = vpop.f32.mrf.mxu0
        %v2276 = vadd.f32 %v2132, %v2275
        %v2277 = vpop.f32.mrf.mxu0
        %v2278 = vadd.f32 %v2134, %v2277
        %2279 = vmatmul.bf16.gmra.mxu0 %v974
        %v2280 = vpop.f32.mrf.mxu0
        %v2281 = vadd.f32 %v2137, %v2280
        %v2282 = vpop.f32.mrf.mxu0
        %v2283 = vadd.f32 %v2139, %v2282
        %2284 = vmatmul.bf16.gmra.mxu0 %v977
        %v2285 = vpop.f32.mrf.mxu0
        %v2286 = vadd.f32 %v2142, %v2285
        %v2287 = vpop.f32.mrf.mxu0
        %v2288 = vadd.f32 %v2144, %v2287
        %2289 = vmatmul.bf16.gmra.mxu0 %v980
        %v2290 = vpop.f32.mrf.mxu0
        %v2291 = vadd.f32 %v2147, %v2290
        %v2292 = vpop.f32.mrf.mxu0
        %v2293 = vadd.f32 %v2149, %v2292
        %2294 = vmatmul.bf16.gmra.mxu0 %v983
        %v2295 = vpop.f32.mrf.mxu0
        %v2296 = vadd.f32 %v2152, %v2295
        %v2297 = vpop.f32.mrf.mxu0
        %v2298 = vadd.f32 %v2154, %v2297
        %2299 = vmatmul.bf16.gmra.mxu0 %v986
        %v2300 = vpop.f32.mrf.mxu0
        %v2301 = vadd.f32 %v2157, %v2300
        %v2302 = vpop.f32.mrf.mxu0
        %v2303 = vadd.f32 %v2159, %v2302
        %2304 = vmatmul.bf16.gmra.mxu0 %v989
        %v2305 = vpop.f32.mrf.mxu0
        %v2306 = vadd.f32 %v2162, %v2305
        %v2307 = vpop.f32.mrf.mxu0
        %v2308 = vadd.f32 %v2164, %v2307
        %2309 = vmatmul.bf16.gmra.mxu0 %v992
        %v2310 = vpop.f32.mrf.mxu0
        %v2311 = vadd.f32 %v2167, %v2310
        %v2312 = vpop.f32.mrf.mxu0
        %v2313 = vadd.f32 %v2169, %v2312
        %2314 = vmatmul.bf16.gmra.mxu0 %v995
        %v2315 = vpop.f32.mrf.mxu0
        %v2316 = vadd.f32 %v2172, %v2315
        %v2317 = vpop.f32.mrf.mxu0
        %v2318 = vadd.f32 %v2174, %v2317
        %2319 = vmatmul.bf16.gmra.mxu0 %v998
        %v2320 = vpop.f32.mrf.mxu0
        %v2321 = vadd.f32 %v2177, %v2320
        %v2322 = vpop.f32.mrf.mxu0
        %v2323 = vadd.f32 %v2179, %v2322
        %2324 = vmatmul.bf16.gmra.mxu0 %v1001
        %v2325 = vpop.f32.mrf.mxu0
        %v2326 = vadd.f32 %v2182, %v2325
        %v2327 = vpop.f32.mrf.mxu0
        %v2328 = vadd.f32 %v2184, %v2327
        %2329 = vmatmul.bf16.gmra.mxu0 %v1004
        %v2330 = vpop.f32.mrf.mxu0
        %v2331 = vadd.f32 %v2187, %v2330
        %v2332 = vpop.f32.mrf.mxu0
        %v2333 = vadd.f32 %v2189, %v2332
        %2334 = vdwg.mxu0
        %v2335 = vpack.c.bf16 %v435, %v434
        %v2336 = vpack.c.bf16 %v653, %v651
        %v2337 = vpack.c.bf16 %v854, %v852
        %v2338 = vpack.c.bf16 %v438, %v436
        %v2339 = vpack.c.bf16 %v658, %v655
        %v2340 = vpack.c.bf16 %v859, %v856
        %v2341 = vpack.c.bf16 %v440, %v439
        %v2342 = vpack.c.bf16 %v662, %v660
        %v2343 = vpack.c.bf16 %v863, %v861
        %s2344 = scalar_lea.vmem [#allocation5], 384
        %v2345 = vld [vmem:[%s2344] sm:$0xf]
        %v2346 = vld [vmem:[%s2344 + $0x4] sm:$0xf]
        %v2347 = vld [vmem:[%s2344 + $0x8] sm:$0xf]
        %v2348 = vld [vmem:[%s2344 + $0xc] sm:$0xf]
        %v2349 = vld [vmem:[%s2344 + $0x10] sm:$0xf]
        %v2350 = vld [vmem:[%s2344 + $0x14] sm:$0xf]
        %v2351 = vld [vmem:[%s2344 + $0x18] sm:$0xf]
        %v2352 = vld [vmem:[%s2344 + $0x1c] sm:$0xf]
        %v2353 = vld [vmem:[%s2344 + $0x20] sm:$0xf]
        %v2354 = vld [vmem:[%s2344 + $0x24] sm:$0xf]
        %v2355 = vld [vmem:[%s2344 + $0x28] sm:$0xf]
        %v2356 = vld [vmem:[%s2344 + $0x2c] sm:$0xf]
        %v2357 = vld [vmem:[%s2344 + $0x30] sm:$0xf]
        %v2358 = vld [vmem:[%s2344 + $0x34] sm:$0xf]
        %v2359 = vld [vmem:[%s2344 + $0x38] sm:$0xf]
        %v2360 = vld [vmem:[%s2344 + $0x3c] sm:$0xf]
        %v2361 = vld [vmem:[%s2344 + $0x40] sm:$0xf]
        %v2362 = vld [vmem:[%s2344 + $0x44] sm:$0xf]
        %v2363 = vld [vmem:[%s2344 + $0x48] sm:$0xf]
        %v2364 = vld [vmem:[%s2344 + $0x4c] sm:$0xf]
        %v2365 = vld [vmem:[%s2344 + $0x50] sm:$0xf]
        %v2366 = vld [vmem:[%s2344 + $0x54] sm:$0xf]
        %v2367 = vld [vmem:[%s2344 + $0x58] sm:$0xf]
        %v2368 = vld [vmem:[%s2344 + $0x5c] sm:$0xf]
        %v2369 = vld [vmem:[%s2344 + $0x60] sm:$0xf]
        %v2370 = vld [vmem:[%s2344 + $0x64] sm:$0xf]
        %v2371 = vld [vmem:[%s2344 + $0x68] sm:$0xf]
        %v2372 = vld [vmem:[%s2344 + $0x6c] sm:$0xf]
        %v2373 = vld [vmem:[%s2344 + $0x70] sm:$0xf]
        %v2374 = vld [vmem:[%s2344 + $0x74] sm:$0xf]
        %v2375 = vld [vmem:[%s2344 + $0x78] sm:$0xf]
        %v2376 = vld [vmem:[%s2344 + $0x7c] sm:$0xf]
        %v2377 = vld [vmem:[%s2344 + $0x80] sm:$0xf]
        %v2378 = vld [vmem:[%s2344 + $0x84] sm:$0xf]
        %v2379 = vld [vmem:[%s2344 + $0x88] sm:$0xf]
        %v2380 = vld [vmem:[%s2344 + $0x8c] sm:$0xf]
        %v2381 = vld [vmem:[%s2344 + $0x90] sm:$0xf]
        %v2382 = vld [vmem:[%s2344 + $0x94] sm:$0xf]
        %v2383 = vld [vmem:[%s2344 + $0x98] sm:$0xf]
        %v2384 = vld [vmem:[%s2344 + $0x9c] sm:$0xf]
        %v2385 = vld [vmem:[%s2344 + $0xa0] sm:$0xf]
        %v2386 = vld [vmem:[%s2344 + $0xa4] sm:$0xf]
        %v2387 = vld [vmem:[%s2344 + $0xa8] sm:$0xf]
        %v2388 = vld [vmem:[%s2344 + $0xac] sm:$0xf]
        %v2389 = vld [vmem:[%s2344 + $0xb0] sm:$0xf]
        %v2390 = vld [vmem:[%s2344 + $0xb4] sm:$0xf]
        %v2391 = vld [vmem:[%s2344 + $0xb8] sm:$0xf]
        %v2392 = vld [vmem:[%s2344 + $0xbc] sm:$0xf]
        %v2441 = vunpack.c.l.b16 %v2345
        %v2442 = vunpack.c.l.b16 %v2346
        %v2443 = vunpack.c.l.b16 %v2347
        %v2444 = vunpack.c.l.b16 %v2348
        %v2445 = vunpack.c.l.b16 %v2349
        %v2446 = vunpack.c.l.b16 %v2350
        %v2447 = vunpack.c.l.b16 %v2351
        %v2448 = vunpack.c.l.b16 %v2352
        %v2449 = vunpack.c.l.b16 %v2353
        %v2450 = vunpack.c.l.b16 %v2354
        %v2451 = vunpack.c.l.b16 %v2355
        %v2452 = vunpack.c.l.b16 %v2356
        %v2453 = vunpack.c.l.b16 %v2357
        %v2454 = vunpack.c.l.b16 %v2358
        %v2455 = vunpack.c.l.b16 %v2359
        %v2456 = vunpack.c.l.b16 %v2360
        %v2457 = vunpack.c.l.b16 %v2361
        %v2458 = vunpack.c.l.b16 %v2362
        %v2459 = vunpack.c.l.b16 %v2363
        %v2460 = vunpack.c.l.b16 %v2364
        %v2461 = vunpack.c.l.b16 %v2365
        %v2462 = vunpack.c.l.b16 %v2366
        %v2463 = vunpack.c.l.b16 %v2367
        %v2464 = vunpack.c.l.b16 %v2368
        %v2465 = vunpack.c.l.b16 %v2369
        %v2466 = vunpack.c.l.b16 %v2370
        %v2467 = vunpack.c.l.b16 %v2371
        %v2468 = vunpack.c.l.b16 %v2372
        %v2469 = vunpack.c.l.b16 %v2373
        %v2470 = vunpack.c.l.b16 %v2374
        %v2471 = vunpack.c.l.b16 %v2375
        %v2472 = vunpack.c.l.b16 %v2376
        %v2473 = vunpack.c.l.b16 %v2377
        %v2474 = vunpack.c.l.b16 %v2378
        %v2475 = vunpack.c.l.b16 %v2379
        %v2476 = vunpack.c.l.b16 %v2380
        %v2477 = vunpack.c.l.b16 %v2381
        %v2478 = vunpack.c.l.b16 %v2382
        %v2479 = vunpack.c.l.b16 %v2383
        %v2480 = vunpack.c.l.b16 %v2384
        %v2481 = vunpack.c.l.b16 %v2385
        %v2482 = vunpack.c.l.b16 %v2386
        %v2483 = vunpack.c.l.b16 %v2387
        %v2484 = vunpack.c.l.b16 %v2388
        %v2485 = vunpack.c.l.b16 %v2389
        %v2486 = vunpack.c.l.b16 %v2390
        %v2487 = vunpack.c.l.b16 %v2391
        %v2488 = vunpack.c.l.b16 %v2392
        %v2489 = vpack.c.b16 %v2442, %v2441
        %v2490 = vpack.c.b16 %v2444, %v2443
        %v2491 = vpack.c.b16 %v2446, %v2445
        %v2492 = vpack.c.b16 %v2448, %v2447
        %v2493 = vpack.c.b16 %v2450, %v2449
        %v2494 = vpack.c.b16 %v2452, %v2451
        %v2495 = vpack.c.b16 %v2454, %v2453
        %v2496 = vpack.c.b16 %v2456, %v2455
        %v2497 = vpack.c.b16 %v2458, %v2457
        %v2498 = vpack.c.b16 %v2460, %v2459
        %v2499 = vpack.c.b16 %v2462, %v2461
        %v2500 = vpack.c.b16 %v2464, %v2463
        %v2501 = vpack.c.b16 %v2466, %v2465
        %v2502 = vpack.c.b16 %v2468, %v2467
        %v2503 = vpack.c.b16 %v2470, %v2469
        %v2504 = vpack.c.b16 %v2472, %v2471
        %v2505 = vpack.c.b16 %v2474, %v2473
        %v2506 = vpack.c.b16 %v2476, %v2475
        %v2507 = vpack.c.b16 %v2478, %v2477
        %v2508 = vpack.c.b16 %v2480, %v2479
        %v2509 = vpack.c.b16 %v2482, %v2481
        %v2510 = vpack.c.b16 %v2484, %v2483
        %v2511 = vpack.c.b16 %v2486, %v2485
        %v2512 = vpack.c.b16 %v2488, %v2487
        %2537 = vmatpush.bf16.msra.mxu0 %v2496
        %2538 = vmatpush.bf16.msra.mxu0 %v2495
        %2539 = vmatpush.bf16.msra.mxu0 %v2494
        %2540 = vmatpush.bf16.msra.mxu0 %v2493
        %2541 = vmatpush.bf16.msra.mxu0 %v2492
        %2542 = vmatpush.bf16.msra.mxu0 %v2491
        %2543 = vmatpush.bf16.msra.mxu0 %v2490
        %2544 = vmatpush.bf16.msra.mxu0 %v2489
        %2545 = vmatmul.bf16.gmra.mxu0 %v933
        %v2546 = vpop.f32.mrf.mxu0
        %v2547 = vadd.f32 0.0, %v2546
        %v2548 = vpop.f32.mrf.mxu0
        %v2549 = vadd.f32 0.0, %v2548
        %2550 = vmatmul.bf16.gmra.mxu0 %v936
        %v2551 = vpop.f32.mrf.mxu0
        %v2552 = vadd.f32 0.0, %v2551
        %v2553 = vpop.f32.mrf.mxu0
        %v2554 = vadd.f32 0.0, %v2553
        %2555 = vmatmul.bf16.gmra.mxu0 %v939
        %v2556 = vpop.f32.mrf.mxu0
        %v2557 = vadd.f32 0.0, %v2556
        %v2558 = vpop.f32.mrf.mxu0
        %v2559 = vadd.f32 0.0, %v2558
        %2560 = vmatmul.bf16.gmra.mxu0 %v942
        %v2561 = vpop.f32.mrf.mxu0
        %v2562 = vadd.f32 0.0, %v2561
        %v2563 = vpop.f32.mrf.mxu0
        %v2564 = vadd.f32 0.0, %v2563
        %2565 = vmatmul.bf16.gmra.mxu0 %v945
        %v2566 = vpop.f32.mrf.mxu0
        %v2567 = vadd.f32 0.0, %v2566
        %v2568 = vpop.f32.mrf.mxu0
        %v2569 = vadd.f32 0.0, %v2568
        %2570 = vmatmul.bf16.gmra.mxu0 %v948
        %v2571 = vpop.f32.mrf.mxu0
        %v2572 = vadd.f32 0.0, %v2571
        %v2573 = vpop.f32.mrf.mxu0
        %v2574 = vadd.f32 0.0, %v2573
        %2575 = vmatmul.bf16.gmra.mxu0 %v951
        %v2576 = vpop.f32.mrf.mxu0
        %v2577 = vadd.f32 0.0, %v2576
        %v2578 = vpop.f32.mrf.mxu0
        %v2579 = vadd.f32 0.0, %v2578
        %2580 = vmatmul.bf16.gmra.mxu0 %v954
        %v2581 = vpop.f32.mrf.mxu0
        %v2582 = vadd.f32 0.0, %v2581
        %v2583 = vpop.f32.mrf.mxu0
        %v2584 = vadd.f32 0.0, %v2583
        %2585 = vmatmul.bf16.gmra.mxu0 %v957
        %v2586 = vpop.f32.mrf.mxu0
        %v2587 = vadd.f32 0.0, %v2586
        %v2588 = vpop.f32.mrf.mxu0
        %v2589 = vadd.f32 0.0, %v2588
        %2590 = vmatmul.bf16.gmra.mxu0 %v960
        %v2591 = vpop.f32.mrf.mxu0
        %v2592 = vadd.f32 0.0, %v2591
        %v2593 = vpop.f32.mrf.mxu0
        %v2594 = vadd.f32 0.0, %v2593
        %2595 = vmatmul.bf16.gmra.mxu0 %v963
        %v2596 = vpop.f32.mrf.mxu0
        %v2597 = vadd.f32 0.0, %v2596
        %v2598 = vpop.f32.mrf.mxu0
        %v2599 = vadd.f32 0.0, %v2598
        %2600 = vmatmul.bf16.gmra.mxu0 %v966
        %v2601 = vpop.f32.mrf.mxu0
        %v2602 = vadd.f32 0.0, %v2601
        %v2603 = vpop.f32.mrf.mxu0
        %v2604 = vadd.f32 0.0, %v2603
        %2605 = vmatmul.bf16.gmra.mxu0 %v969
        %v2606 = vpop.f32.mrf.mxu0
        %v2607 = vadd.f32 0.0, %v2606
        %v2608 = vpop.f32.mrf.mxu0
        %v2609 = vadd.f32 0.0, %v2608
        %2610 = vmatmul.bf16.gmra.mxu0 %v972
        %v2611 = vpop.f32.mrf.mxu0
        %v2612 = vadd.f32 0.0, %v2611
        %v2613 = vpop.f32.mrf.mxu0
        %v2614 = vadd.f32 0.0, %v2613
        %2615 = vmatmul.bf16.gmra.mxu0 %v975
        %v2616 = vpop.f32.mrf.mxu0
        %v2617 = vadd.f32 0.0, %v2616
        %v2618 = vpop.f32.mrf.mxu0
        %v2619 = vadd.f32 0.0, %v2618
        %2620 = vmatmul.bf16.gmra.mxu0 %v978
        %v2621 = vpop.f32.mrf.mxu0
        %v2622 = vadd.f32 0.0, %v2621
        %v2623 = vpop.f32.mrf.mxu0
        %v2624 = vadd.f32 0.0, %v2623
        %2625 = vmatmul.bf16.gmra.mxu0 %v981
        %v2626 = vpop.f32.mrf.mxu0
        %v2627 = vadd.f32 0.0, %v2626
        %v2628 = vpop.f32.mrf.mxu0
        %v2629 = vadd.f32 0.0, %v2628
        %2630 = vmatmul.bf16.gmra.mxu0 %v984
        %v2631 = vpop.f32.mrf.mxu0
        %v2632 = vadd.f32 0.0, %v2631
        %v2633 = vpop.f32.mrf.mxu0
        %v2634 = vadd.f32 0.0, %v2633
        %2635 = vmatmul.bf16.gmra.mxu0 %v987
        %v2636 = vpop.f32.mrf.mxu0
        %v2637 = vadd.f32 0.0, %v2636
        %v2638 = vpop.f32.mrf.mxu0
        %v2639 = vadd.f32 0.0, %v2638
        %2640 = vmatmul.bf16.gmra.mxu0 %v990
        %v2641 = vpop.f32.mrf.mxu0
        %v2642 = vadd.f32 0.0, %v2641
        %v2643 = vpop.f32.mrf.mxu0
        %v2644 = vadd.f32 0.0, %v2643
        %2645 = vmatmul.bf16.gmra.mxu0 %v993
        %v2646 = vpop.f32.mrf.mxu0
        %v2647 = vadd.f32 0.0, %v2646
        %v2648 = vpop.f32.mrf.mxu0
        %v2649 = vadd.f32 0.0, %v2648
        %2650 = vmatmul.bf16.gmra.mxu0 %v996
        %v2651 = vpop.f32.mrf.mxu0
        %v2652 = vadd.f32 0.0, %v2651
        %v2653 = vpop.f32.mrf.mxu0
        %v2654 = vadd.f32 0.0, %v2653
        %2655 = vmatmul.bf16.gmra.mxu0 %v999
        %v2656 = vpop.f32.mrf.mxu0
        %v2657 = vadd.f32 0.0, %v2656
        %v2658 = vpop.f32.mrf.mxu0
        %v2659 = vadd.f32 0.0, %v2658
        %2660 = vmatmul.bf16.gmra.mxu0 %v1002
        %v2661 = vpop.f32.mrf.mxu0
        %v2662 = vadd.f32 0.0, %v2661
        %v2663 = vpop.f32.mrf.mxu0
        %v2664 = vadd.f32 0.0, %v2663
        %2665 = vmatmul.bf16.gmra.mxu0 %v2335
        %v2666 = vpop.f32.mrf.mxu0
        %v2667 = vadd.f32 0.0, %v2666
        %v2668 = vpop.f32.mrf.mxu0
        %v2669 = vadd.f32 0.0, %v2668
        %2670 = vmatmul.bf16.gmra.mxu0 %v2338
        %v2671 = vpop.f32.mrf.mxu0
        %v2672 = vadd.f32 0.0, %v2671
        %v2673 = vpop.f32.mrf.mxu0
        %v2674 = vadd.f32 0.0, %v2673
        %2675 = vmatmul.bf16.gmra.mxu0 %v2341
        %v2676 = vpop.f32.mrf.mxu0
        %v2677 = vadd.f32 0.0, %v2676
        %v2678 = vpop.f32.mrf.mxu0
        %v2679 = vadd.f32 0.0, %v2678
        %2680 = vdwg.mxu0
        %2681 = vmatpush.bf16.msra.mxu0 %v2504
        %2682 = vmatpush.bf16.msra.mxu0 %v2503
        %2683 = vmatpush.bf16.msra.mxu0 %v2502
        %2684 = vmatpush.bf16.msra.mxu0 %v2501
        %2685 = vmatpush.bf16.msra.mxu0 %v2500
        %2686 = vmatpush.bf16.msra.mxu0 %v2499
        %2687 = vmatpush.bf16.msra.mxu0 %v2498
        %2688 = vmatpush.bf16.msra.mxu0 %v2497
        %2689 = vmatmul.bf16.gmra.mxu0 %v934
        %v2690 = vpop.f32.mrf.mxu0
        %v2691 = vadd.f32 %v2547, %v2690
        %v2692 = vpop.f32.mrf.mxu0
        %v2693 = vadd.f32 %v2549, %v2692
        %2694 = vmatmul.bf16.gmra.mxu0 %v937
        %v2695 = vpop.f32.mrf.mxu0
        %v2696 = vadd.f32 %v2552, %v2695
        %v2697 = vpop.f32.mrf.mxu0
        %v2698 = vadd.f32 %v2554, %v2697
        %2699 = vmatmul.bf16.gmra.mxu0 %v940
        %v2700 = vpop.f32.mrf.mxu0
        %v2701 = vadd.f32 %v2557, %v2700
        %v2702 = vpop.f32.mrf.mxu0
        %v2703 = vadd.f32 %v2559, %v2702
        %2704 = vmatmul.bf16.gmra.mxu0 %v943
        %v2705 = vpop.f32.mrf.mxu0
        %v2706 = vadd.f32 %v2562, %v2705
        %v2707 = vpop.f32.mrf.mxu0
        %v2708 = vadd.f32 %v2564, %v2707
        %2709 = vmatmul.bf16.gmra.mxu0 %v946
        %v2710 = vpop.f32.mrf.mxu0
        %v2711 = vadd.f32 %v2567, %v2710
        %v2712 = vpop.f32.mrf.mxu0
        %v2713 = vadd.f32 %v2569, %v2712
        %2714 = vmatmul.bf16.gmra.mxu0 %v949
        %v2715 = vpop.f32.mrf.mxu0
        %v2716 = vadd.f32 %v2572, %v2715
        %v2717 = vpop.f32.mrf.mxu0
        %v2718 = vadd.f32 %v2574, %v2717
        %2719 = vmatmul.bf16.gmra.mxu0 %v952
        %v2720 = vpop.f32.mrf.mxu0
        %v2721 = vadd.f32 %v2577, %v2720
        %v2722 = vpop.f32.mrf.mxu0
        %v2723 = vadd.f32 %v2579, %v2722
        %2724 = vmatmul.bf16.gmra.mxu0 %v955
        %v2725 = vpop.f32.mrf.mxu0
        %v2726 = vadd.f32 %v2582, %v2725
        %v2727 = vpop.f32.mrf.mxu0
        %v2728 = vadd.f32 %v2584, %v2727
        %2729 = vmatmul.bf16.gmra.mxu0 %v958
        %v2730 = vpop.f32.mrf.mxu0
        %v2731 = vadd.f32 %v2587, %v2730
        %v2732 = vpop.f32.mrf.mxu0
        %v2733 = vadd.f32 %v2589, %v2732
        %2734 = vmatmul.bf16.gmra.mxu0 %v961
        %v2735 = vpop.f32.mrf.mxu0
        %v2736 = vadd.f32 %v2592, %v2735
        %v2737 = vpop.f32.mrf.mxu0
        %v2738 = vadd.f32 %v2594, %v2737
        %2739 = vmatmul.bf16.gmra.mxu0 %v964
        %v2740 = vpop.f32.mrf.mxu0
        %v2741 = vadd.f32 %v2597, %v2740
        %v2742 = vpop.f32.mrf.mxu0
        %v2743 = vadd.f32 %v2599, %v2742
        %2744 = vmatmul.bf16.gmra.mxu0 %v967
        %v2745 = vpop.f32.mrf.mxu0
        %v2746 = vadd.f32 %v2602, %v2745
        %v2747 = vpop.f32.mrf.mxu0
        %v2748 = vadd.f32 %v2604, %v2747
        %2749 = vmatmul.bf16.gmra.mxu0 %v970
        %v2750 = vpop.f32.mrf.mxu0
        %v2751 = vadd.f32 %v2607, %v2750
        %v2752 = vpop.f32.mrf.mxu0
        %v2753 = vadd.f32 %v2609, %v2752
        %2754 = vmatmul.bf16.gmra.mxu0 %v973
        %v2755 = vpop.f32.mrf.mxu0
        %v2756 = vadd.f32 %v2612, %v2755
        %v2757 = vpop.f32.mrf.mxu0
        %v2758 = vadd.f32 %v2614, %v2757
        %2759 = vmatmul.bf16.gmra.mxu0 %v976
        %v2760 = vpop.f32.mrf.mxu0
        %v2761 = vadd.f32 %v2617, %v2760
        %v2762 = vpop.f32.mrf.mxu0
        %v2763 = vadd.f32 %v2619, %v2762
        %2764 = vmatmul.bf16.gmra.mxu0 %v979
        %v2765 = vpop.f32.mrf.mxu0
        %v2766 = vadd.f32 %v2622, %v2765
        %v2767 = vpop.f32.mrf.mxu0
        %v2768 = vadd.f32 %v2624, %v2767
        %2769 = vmatmul.bf16.gmra.mxu0 %v982
        %v2770 = vpop.f32.mrf.mxu0
        %v2771 = vadd.f32 %v2627, %v2770
        %v2772 = vpop.f32.mrf.mxu0
        %v2773 = vadd.f32 %v2629, %v2772
        %2774 = vmatmul.bf16.gmra.mxu0 %v985
        %v2775 = vpop.f32.mrf.mxu0
        %v2776 = vadd.f32 %v2632, %v2775
        %v2777 = vpop.f32.mrf.mxu0
        %v2778 = vadd.f32 %v2634, %v2777
        %2779 = vmatmul.bf16.gmra.mxu0 %v988
        %v2780 = vpop.f32.mrf.mxu0
        %v2781 = vadd.f32 %v2637, %v2780
        %v2782 = vpop.f32.mrf.mxu0
        %v2783 = vadd.f32 %v2639, %v2782
        %2784 = vmatmul.bf16.gmra.mxu0 %v991
        %v2785 = vpop.f32.mrf.mxu0
        %v2786 = vadd.f32 %v2642, %v2785
        %v2787 = vpop.f32.mrf.mxu0
        %v2788 = vadd.f32 %v2644, %v2787
        %2789 = vmatmul.bf16.gmra.mxu0 %v994
        %v2790 = vpop.f32.mrf.mxu0
        %v2791 = vadd.f32 %v2647, %v2790
        %v2792 = vpop.f32.mrf.mxu0
        %v2793 = vadd.f32 %v2649, %v2792
        %2794 = vmatmul.bf16.gmra.mxu0 %v997
        %v2795 = vpop.f32.mrf.mxu0
        %v2796 = vadd.f32 %v2652, %v2795
        %v2797 = vpop.f32.mrf.mxu0
        %v2798 = vadd.f32 %v2654, %v2797
        %2799 = vmatmul.bf16.gmra.mxu0 %v1000
        %v2800 = vpop.f32.mrf.mxu0
        %v2801 = vadd.f32 %v2657, %v2800
        %v2802 = vpop.f32.mrf.mxu0
        %v2803 = vadd.f32 %v2659, %v2802
        %2804 = vmatmul.bf16.gmra.mxu0 %v1003
        %v2805 = vpop.f32.mrf.mxu0
        %v2806 = vadd.f32 %v2662, %v2805
        %v2807 = vpop.f32.mrf.mxu0
        %v2808 = vadd.f32 %v2664, %v2807
        %2809 = vmatmul.bf16.gmra.mxu0 %v2336
        %v2810 = vpop.f32.mrf.mxu0
        %v2811 = vadd.f32 %v2667, %v2810
        %v2812 = vpop.f32.mrf.mxu0
        %v2813 = vadd.f32 %v2669, %v2812
        %2814 = vmatmul.bf16.gmra.mxu0 %v2339
        %v2815 = vpop.f32.mrf.mxu0
        %v2816 = vadd.f32 %v2672, %v2815
        %v2817 = vpop.f32.mrf.mxu0
        %v2818 = vadd.f32 %v2674, %v2817
        %2819 = vmatmul.bf16.gmra.mxu0 %v2342
        %v2820 = vpop.f32.mrf.mxu0
        %v2821 = vadd.f32 %v2677, %v2820
        %v2822 = vpop.f32.mrf.mxu0
        %v2823 = vadd.f32 %v2679, %v2822
        %2824 = vdwg.mxu0
        %2825 = vmatpush.bf16.msra.mxu0 %v2512
        %2826 = vmatpush.bf16.msra.mxu0 %v2511
        %2827 = vmatpush.bf16.msra.mxu0 %v2510
        %2828 = vmatpush.bf16.msra.mxu0 %v2509
        %2829 = vmatpush.bf16.msra.mxu0 %v2508
        %2830 = vmatpush.bf16.msra.mxu0 %v2507
        %2831 = vmatpush.bf16.msra.mxu0 %v2506
        %2832 = vmatpush.bf16.msra.mxu0 %v2505
        %2833 = vmatmul.bf16.gmra.mxu0 %v935
        %v2834 = vpop.f32.mrf.mxu0
        %v2835 = vadd.f32 %v2691, %v2834
        %v2836 = vpop.f32.mrf.mxu0
        %v2837 = vadd.f32 %v2693, %v2836
        %2838 = vmatmul.bf16.gmra.mxu0 %v938
        %v2839 = vpop.f32.mrf.mxu0
        %v2840 = vadd.f32 %v2696, %v2839
        %v2841 = vpop.f32.mrf.mxu0
        %v2842 = vadd.f32 %v2698, %v2841
        %2843 = vmatmul.bf16.gmra.mxu0 %v941
        %v2844 = vpop.f32.mrf.mxu0
        %v2845 = vadd.f32 %v2701, %v2844
        %v2846 = vpop.f32.mrf.mxu0
        %v2847 = vadd.f32 %v2703, %v2846
        %2848 = vmatmul.bf16.gmra.mxu0 %v944
        %v2849 = vpop.f32.mrf.mxu0
        %v2850 = vadd.f32 %v2706, %v2849
        %v2851 = vpop.f32.mrf.mxu0
        %v2852 = vadd.f32 %v2708, %v2851
        %2853 = vmatmul.bf16.gmra.mxu0 %v947
        %v2854 = vpop.f32.mrf.mxu0
        %v2855 = vadd.f32 %v2711, %v2854
        %v2856 = vpop.f32.mrf.mxu0
        %v2857 = vadd.f32 %v2713, %v2856
        %2858 = vmatmul.bf16.gmra.mxu0 %v950
        %v2859 = vpop.f32.mrf.mxu0
        %v2860 = vadd.f32 %v2716, %v2859
        %v2861 = vpop.f32.mrf.mxu0
        %v2862 = vadd.f32 %v2718, %v2861
        %2863 = vmatmul.bf16.gmra.mxu0 %v953
        %v2864 = vpop.f32.mrf.mxu0
        %v2865 = vadd.f32 %v2721, %v2864
        %v2866 = vpop.f32.mrf.mxu0
        %v2867 = vadd.f32 %v2723, %v2866
        %2868 = vmatmul.bf16.gmra.mxu0 %v956
        %v2869 = vpop.f32.mrf.mxu0
        %v2870 = vadd.f32 %v2726, %v2869
        %v2871 = vpop.f32.mrf.mxu0
        %v2872 = vadd.f32 %v2728, %v2871
        %2873 = vmatmul.bf16.gmra.mxu0 %v959
        %v2874 = vpop.f32.mrf.mxu0
        %v2875 = vadd.f32 %v2731, %v2874
        %v2876 = vpop.f32.mrf.mxu0
        %v2877 = vadd.f32 %v2733, %v2876
        %2878 = vmatmul.bf16.gmra.mxu0 %v962
        %v2879 = vpop.f32.mrf.mxu0
        %v2880 = vadd.f32 %v2736, %v2879
        %v2881 = vpop.f32.mrf.mxu0
        %v2882 = vadd.f32 %v2738, %v2881
        %2883 = vmatmul.bf16.gmra.mxu0 %v965
        %v2884 = vpop.f32.mrf.mxu0
        %v2885 = vadd.f32 %v2741, %v2884
        %v2886 = vpop.f32.mrf.mxu0
        %v2887 = vadd.f32 %v2743, %v2886
        %2888 = vmatmul.bf16.gmra.mxu0 %v968
        %v2889 = vpop.f32.mrf.mxu0
        %v2890 = vadd.f32 %v2746, %v2889
        %v2891 = vpop.f32.mrf.mxu0
        %v2892 = vadd.f32 %v2748, %v2891
        %2893 = vmatmul.bf16.gmra.mxu0 %v971
        %v2894 = vpop.f32.mrf.mxu0
        %v2895 = vadd.f32 %v2751, %v2894
        %v2896 = vpop.f32.mrf.mxu0
        %v2897 = vadd.f32 %v2753, %v2896
        %2898 = vmatmul.bf16.gmra.mxu0 %v974
        %v2899 = vpop.f32.mrf.mxu0
        %v2900 = vadd.f32 %v2756, %v2899
        %v2901 = vpop.f32.mrf.mxu0
        %v2902 = vadd.f32 %v2758, %v2901
        %2903 = vmatmul.bf16.gmra.mxu0 %v977
        %v2904 = vpop.f32.mrf.mxu0
        %v2905 = vadd.f32 %v2761, %v2904
        %v2906 = vpop.f32.mrf.mxu0
        %v2907 = vadd.f32 %v2763, %v2906
        %2908 = vmatmul.bf16.gmra.mxu0 %v980
        %v2909 = vpop.f32.mrf.mxu0
        %v2910 = vadd.f32 %v2766, %v2909
        %v2911 = vpop.f32.mrf.mxu0
        %v2912 = vadd.f32 %v2768, %v2911
        %2913 = vmatmul.bf16.gmra.mxu0 %v983
        %v2914 = vpop.f32.mrf.mxu0
        %v2915 = vadd.f32 %v2771, %v2914
        %v2916 = vpop.f32.mrf.mxu0
        %v2917 = vadd.f32 %v2773, %v2916
        %2918 = vmatmul.bf16.gmra.mxu0 %v986
        %v2919 = vpop.f32.mrf.mxu0
        %v2920 = vadd.f32 %v2776, %v2919
        %v2921 = vpop.f32.mrf.mxu0
        %v2922 = vadd.f32 %v2778, %v2921
        %2923 = vmatmul.bf16.gmra.mxu0 %v989
        %v2924 = vpop.f32.mrf.mxu0
        %v2925 = vadd.f32 %v2781, %v2924
        %v2926 = vpop.f32.mrf.mxu0
        %v2927 = vadd.f32 %v2783, %v2926
        %2928 = vmatmul.bf16.gmra.mxu0 %v992
        %v2929 = vpop.f32.mrf.mxu0
        %v2930 = vadd.f32 %v2786, %v2929
        %v2931 = vpop.f32.mrf.mxu0
        %v2932 = vadd.f32 %v2788, %v2931
        %2933 = vmatmul.bf16.gmra.mxu0 %v995
        %v2934 = vpop.f32.mrf.mxu0
        %v2935 = vadd.f32 %v2791, %v2934
        %v2936 = vpop.f32.mrf.mxu0
        %v2937 = vadd.f32 %v2793, %v2936
        %2938 = vmatmul.bf16.gmra.mxu0 %v998
        %v2939 = vpop.f32.mrf.mxu0
        %v2940 = vadd.f32 %v2796, %v2939
        %v2941 = vpop.f32.mrf.mxu0
        %v2942 = vadd.f32 %v2798, %v2941
        %2943 = vmatmul.bf16.gmra.mxu0 %v1001
        %v2944 = vpop.f32.mrf.mxu0
        %v2945 = vadd.f32 %v2801, %v2944
        %v2946 = vpop.f32.mrf.mxu0
        %v2947 = vadd.f32 %v2803, %v2946
        %2948 = vmatmul.bf16.gmra.mxu0 %v1004
        %v2949 = vpop.f32.mrf.mxu0
        %v2950 = vadd.f32 %v2806, %v2949
        %v2951 = vpop.f32.mrf.mxu0
        %v2952 = vadd.f32 %v2808, %v2951
        %2953 = vmatmul.bf16.gmra.mxu0 %v2337
        %v2954 = vpop.f32.mrf.mxu0
        %v2955 = vadd.f32 %v2811, %v2954
        %v2956 = vpop.f32.mrf.mxu0
        %v2957 = vadd.f32 %v2813, %v2956
        %2958 = vmatmul.bf16.gmra.mxu0 %v2340
        %v2959 = vpop.f32.mrf.mxu0
        %v2960 = vadd.f32 %v2816, %v2959
        %v2961 = vpop.f32.mrf.mxu0
        %v2962 = vadd.f32 %v2818, %v2961
        %2963 = vmatmul.bf16.gmra.mxu0 %v2343
        %v2964 = vpop.f32.mrf.mxu0
        %v2965 = vadd.f32 %v2821, %v2964
        %v2966 = vpop.f32.mrf.mxu0
        %v2967 = vadd.f32 %v2823, %v2966
        %2968 = vdwg.mxu0
        %v2969 = vadd.f32 %v2201, %v2835
        %v2970 = vadd.f32 %v2203, %v2837
        %v2971 = vadd.f32 %v2206, %v2840
        %v2972 = vadd.f32 %v2208, %v2842
        %v2973 = vadd.f32 %v2211, %v2845
        %v2974 = vadd.f32 %v2213, %v2847
        %v2975 = vadd.f32 %v2216, %v2850
        %v2976 = vadd.f32 %v2218, %v2852
        %v2977 = vadd.f32 %v2221, %v2855
        %v2978 = vadd.f32 %v2223, %v2857
        %v2979 = vadd.f32 %v2226, %v2860
        %v2980 = vadd.f32 %v2228, %v2862
        %v2981 = vadd.f32 %v2231, %v2865
        %v2982 = vadd.f32 %v2233, %v2867
        %v2983 = vadd.f32 %v2236, %v2870
        %v2984 = vadd.f32 %v2238, %v2872
        %v2985 = vadd.f32 %v2241, %v2875
        %v2986 = vadd.f32 %v2243, %v2877
        %v2987 = vadd.f32 %v2246, %v2880
        %v2988 = vadd.f32 %v2248, %v2882
        %v2989 = vadd.f32 %v2251, %v2885
        %v2990 = vadd.f32 %v2253, %v2887
        %v2991 = vadd.f32 %v2256, %v2890
        %v2992 = vadd.f32 %v2258, %v2892
        %v2993 = vadd.f32 %v2261, %v2895
        %v2994 = vadd.f32 %v2263, %v2897
        %v2995 = vadd.f32 %v2266, %v2900
        %v2996 = vadd.f32 %v2268, %v2902
        %v2997 = vadd.f32 %v2271, %v2905
        %v2998 = vadd.f32 %v2273, %v2907
        %v2999 = vadd.f32 %v2276, %v2910
        %v3000 = vadd.f32 %v2278, %v2912
        %v3001 = vadd.f32 %v2281, %v2915
        %v3002 = vadd.f32 %v2283, %v2917
        %v3003 = vadd.f32 %v2286, %v2920
        %v3004 = vadd.f32 %v2288, %v2922
        %v3005 = vadd.f32 %v2291, %v2925
        %v3006 = vadd.f32 %v2293, %v2927
        %v3007 = vadd.f32 %v2296, %v2930
        %v3008 = vadd.f32 %v2298, %v2932
        %v3009 = vadd.f32 %v2301, %v2935
        %v3010 = vadd.f32 %v2303, %v2937
        %v3011 = vadd.f32 %v2306, %v2940
        %v3012 = vadd.f32 %v2308, %v2942
        %v3013 = vadd.f32 %v2311, %v2945
        %v3014 = vadd.f32 %v2313, %v2947
        %v3015 = vadd.f32 %v2316, %v2950
        %v3016 = vadd.f32 %v2318, %v2952
        %v3017 = vadd.f32 %v2321, %v2955
        %v3018 = vadd.f32 %v2323, %v2957
        %v3019 = vadd.f32 %v2326, %v2960
        %v3020 = vadd.f32 %v2328, %v2962
        %v3021 = vadd.f32 %v2331, %v2965
        %v3022 = vadd.f32 %v2333, %v2967
        %v3023 = vld [vmem:[%s2] sm:$0x1]
        %v3025 = vperm.slane %v3023, 0
        %v3027 = vmul.f32 %v2969, %v3025
        %v3028 = vmul.f32 %v2970, %v3025
        %v3029 = vmul.f32 %v2971, %v3025
        %v3030 = vmul.f32 %v2972, %v3025
        %v3031 = vmul.f32 %v2973, %v3025
        %v3032 = vmul.f32 %v2974, %v3025
        %v3033 = vmul.f32 %v2975, %v3025
        %v3034 = vmul.f32 %v2976, %v3025
        %v3035 = vmul.f32 %v2977, %v3025
        %v3036 = vmul.f32 %v2978, %v3025
        %v3037 = vmul.f32 %v2979, %v3025
        %v3038 = vmul.f32 %v2980, %v3025
        %v3039 = vmul.f32 %v2981, %v3025
        %v3040 = vmul.f32 %v2982, %v3025
        %v3041 = vmul.f32 %v2983, %v3025
        %v3042 = vmul.f32 %v2984, %v3025
        %v3043 = vmul.f32 %v2985, %v3025
        %v3044 = vmul.f32 %v2986, %v3025
        %v3045 = vmul.f32 %v2987, %v3025
        %v3046 = vmul.f32 %v2988, %v3025
        %v3047 = vmul.f32 %v2989, %v3025
        %v3048 = vmul.f32 %v2990, %v3025
        %v3049 = vmul.f32 %v2991, %v3025
        %v3050 = vmul.f32 %v2992, %v3025
        %v3051 = vmul.f32 %v2993, %v3025
        %v3052 = vmul.f32 %v2994, %v3025
        %v3053 = vmul.f32 %v2995, %v3025
        %v3054 = vmul.f32 %v2996, %v3025
        %v3055 = vmul.f32 %v2997, %v3025
        %v3056 = vmul.f32 %v2998, %v3025
        %v3057 = vmul.f32 %v2999, %v3025
        %v3058 = vmul.f32 %v3000, %v3025
        %v3059 = vmul.f32 %v3001, %v3025
        %v3060 = vmul.f32 %v3002, %v3025
        %v3061 = vmul.f32 %v3003, %v3025
        %v3062 = vmul.f32 %v3004, %v3025
        %v3063 = vmul.f32 %v3005, %v3025
        %v3064 = vmul.f32 %v3006, %v3025
        %v3065 = vmul.f32 %v3007, %v3025
        %v3066 = vmul.f32 %v3008, %v3025
        %v3067 = vmul.f32 %v3009, %v3025
        %v3068 = vmul.f32 %v3010, %v3025
        %v3069 = vmul.f32 %v3011, %v3025
        %v3070 = vmul.f32 %v3012, %v3025
        %v3071 = vmul.f32 %v3013, %v3025
        %v3072 = vmul.f32 %v3014, %v3025
        %v3073 = vmul.f32 %v3015, %v3025
        %v3074 = vmul.f32 %v3016, %v3025
        %v3075 = vmul.f32 %v3017, %v3025
        %v3076 = vmul.f32 %v3018, %v3025
        %v3077 = vmul.f32 %v3019, %v3025
        %v3078 = vmul.f32 %v3020, %v3025
        %v3079 = vmul.f32 %v3021, %v3025
        %v3080 = vmul.f32 %v3022, %v3025
        %v3081 = vld [vmem:[%s3] sm:$0x1]
        %v3083 = vperm.slane %v3081, 0
        %v3085 = vadd.f32 %v3027, %v3083
        %v3086 = vadd.f32 %v3028, %v3083
        %v3087 = vadd.f32 %v3029, %v3083
        %v3088 = vadd.f32 %v3030, %v3083
        %v3089 = vadd.f32 %v3031, %v3083
        %v3090 = vadd.f32 %v3032, %v3083
        %v3091 = vadd.f32 %v3033, %v3083
        %v3092 = vadd.f32 %v3034, %v3083
        %v3093 = vadd.f32 %v3035, %v3083
        %v3094 = vadd.f32 %v3036, %v3083
        %v3095 = vadd.f32 %v3037, %v3083
        %v3096 = vadd.f32 %v3038, %v3083
        %v3097 = vadd.f32 %v3039, %v3083
        %v3098 = vadd.f32 %v3040, %v3083
        %v3099 = vadd.f32 %v3041, %v3083
        %v3100 = vadd.f32 %v3042, %v3083
        %v3101 = vadd.f32 %v3043, %v3083
        %v3102 = vadd.f32 %v3044, %v3083
        %v3103 = vadd.f32 %v3045, %v3083
        %v3104 = vadd.f32 %v3046, %v3083
        %v3105 = vadd.f32 %v3047, %v3083
        %v3106 = vadd.f32 %v3048, %v3083
        %v3107 = vadd.f32 %v3049, %v3083
        %v3108 = vadd.f32 %v3050, %v3083
        %v3109 = vadd.f32 %v3051, %v3083
        %v3110 = vadd.f32 %v3052, %v3083
        %v3111 = vadd.f32 %v3053, %v3083
        %v3112 = vadd.f32 %v3054, %v3083
        %v3113 = vadd.f32 %v3055, %v3083
        %v3114 = vadd.f32 %v3056, %v3083
        %v3115 = vadd.f32 %v3057, %v3083
        %v3116 = vadd.f32 %v3058, %v3083
        %v3117 = vadd.f32 %v3059, %v3083
        %v3118 = vadd.f32 %v3060, %v3083
        %v3119 = vadd.f32 %v3061, %v3083
        %v3120 = vadd.f32 %v3062, %v3083
        %v3121 = vadd.f32 %v3063, %v3083
        %v3122 = vadd.f32 %v3064, %v3083
        %v3123 = vadd.f32 %v3065, %v3083
        %v3124 = vadd.f32 %v3066, %v3083
        %v3125 = vadd.f32 %v3067, %v3083
        %v3126 = vadd.f32 %v3068, %v3083
        %v3127 = vadd.f32 %v3069, %v3083
        %v3128 = vadd.f32 %v3070, %v3083
        %v3129 = vadd.f32 %v3071, %v3083
        %v3130 = vadd.f32 %v3072, %v3083
        %v3131 = vadd.f32 %v3073, %v3083
        %v3132 = vadd.f32 %v3074, %v3083
        %v3133 = vadd.f32 %v3075, %v3083
        %v3134 = vadd.f32 %v3076, %v3083
        %v3135 = vadd.f32 %v3077, %v3083
        %v3136 = vadd.f32 %v3078, %v3083
        %v3137 = vadd.f32 %v3079, %v3083
        %v3138 = vadd.f32 %v3080, %v3083
        %v3139 = vmax.f32 %v3085, 0.0
        %v3140 = vmax.f32 %v3086, 0.0
        %v3141 = vmax.f32 %v3087, 0.0
        %v3142 = vmax.f32 %v3088, 0.0
        %v3143 = vmax.f32 %v3089, 0.0
        %v3144 = vmax.f32 %v3090, 0.0
        %v3145 = vmax.f32 %v3091, 0.0
        %v3146 = vmax.f32 %v3092, 0.0
        %v3147 = vmax.f32 %v3093, 0.0
        %v3148 = vmax.f32 %v3094, 0.0
        %v3149 = vmax.f32 %v3095, 0.0
        %v3150 = vmax.f32 %v3096, 0.0
        %v3151 = vmax.f32 %v3097, 0.0
        %v3152 = vmax.f32 %v3098, 0.0
        %v3153 = vmax.f32 %v3099, 0.0
        %v3154 = vmax.f32 %v3100, 0.0
        %v3155 = vmax.f32 %v3101, 0.0
        %v3156 = vmax.f32 %v3102, 0.0
        %v3157 = vmax.f32 %v3103, 0.0
        %v3158 = vmax.f32 %v3104, 0.0
        %v3159 = vmax.f32 %v3105, 0.0
        %v3160 = vmax.f32 %v3106, 0.0
        %v3161 = vmax.f32 %v3107, 0.0
        %v3162 = vmax.f32 %v3108, 0.0
        %v3163 = vmax.f32 %v3109, 0.0
        %v3164 = vmax.f32 %v3110, 0.0
        %v3165 = vmax.f32 %v3111, 0.0
        %v3166 = vmax.f32 %v3112, 0.0
        %v3167 = vmax.f32 %v3113, 0.0
        %v3168 = vmax.f32 %v3114, 0.0
        %v3169 = vmax.f32 %v3115, 0.0
        %v3170 = vmax.f32 %v3116, 0.0
        %v3171 = vmax.f32 %v3117, 0.0
        %v3172 = vmax.f32 %v3118, 0.0
        %v3173 = vmax.f32 %v3119, 0.0
        %v3174 = vmax.f32 %v3120, 0.0
        %v3175 = vmax.f32 %v3121, 0.0
        %v3176 = vmax.f32 %v3122, 0.0
        %v3177 = vmax.f32 %v3123, 0.0
        %v3178 = vmax.f32 %v3124, 0.0
        %v3179 = vmax.f32 %v3125, 0.0
        %v3180 = vmax.f32 %v3126, 0.0
        %v3181 = vmax.f32 %v3127, 0.0
        %v3182 = vmax.f32 %v3128, 0.0
        %v3183 = vmax.f32 %v3129, 0.0
        %v3184 = vmax.f32 %v3130, 0.0
        %v3185 = vmax.f32 %v3131, 0.0
        %v3186 = vmax.f32 %v3132, 0.0
        %v3187 = vmax.f32 %v3133, 0.0
        %v3188 = vmax.f32 %v3134, 0.0
        %v3189 = vmax.f32 %v3135, 0.0
        %v3190 = vmax.f32 %v3136, 0.0
        %v3191 = vmax.f32 %v3137, 0.0
        %v3192 = vmax.f32 %v3138, 0.0
        %s3193 = ssub.s32 %s359, 1
        %v3194 = vstv %s3193
        %v3195 = vadd.s32 %v3194, 1
        %v3196 = vadd.s32 %v3194, 2
        %v3197 = vadd.s32 %v3194, 3
        %v3198 = vadd.s32 %v3194, 4
        %v3199 = vadd.s32 %v3194, 5
        %v3200 = vadd.s32 %v3194, 6
        %v3201 = vadd.s32 %v3194, 7
        %v3202 = vadd.s32 %v3194, 8
        %v3203 = vadd.s32 %v3194, 9
        %v3204 = vadd.s32 %v3194, 10
        %v3205 = vadd.s32 %v3194, 11
        %v3206 = vadd.s32 %v3194, 12
        %v3207 = vadd.s32 %v3194, 13
        %v3208 = vadd.s32 %v3194, 14
        %v3209 = vadd.s32 %v3194, 15
        %v3210 = vadd.s32 %v3194, 16
        %v3211 = vadd.s32 %v3194, 17
        %v3212 = vlaneseq
        %v3213 = vshrl.u32 %v3212, 7
        %v3214 = vadd.s32 %v3213, 8
        %v3215 = vadd.s32 %v3213, 16
        %v3216 = vsub.s32 %v3213, 1
        %v3217 = vsub.s32 %v3214, 1
        %v3218 = vsub.s32 %v3215, 1
        %vm3219 = vcmp.ge.s32.totalorder %v3194, 0
        %vm3220 = vcmp.ge.s32.totalorder %v3195, 0
        %vm3221 = vcmp.ge.s32.totalorder %v3196, 0
        %vm3222 = vcmp.ge.s32.totalorder %v3197, 0
        %vm3223 = vcmp.ge.s32.totalorder %v3198, 0
        %vm3224 = vcmp.ge.s32.totalorder %v3199, 0
        %vm3225 = vcmp.ge.s32.totalorder %v3200, 0
        %vm3226 = vcmp.ge.s32.totalorder %v3201, 0
        %vm3227 = vcmp.ge.s32.totalorder %v3202, 0
        %vm3228 = vcmp.ge.s32.totalorder %v3203, 0
        %vm3229 = vcmp.ge.s32.totalorder %v3204, 0
        %vm3230 = vcmp.ge.s32.totalorder %v3205, 0
        %vm3231 = vcmp.ge.s32.totalorder %v3206, 0
        %vm3232 = vcmp.ge.s32.totalorder %v3207, 0
        %vm3233 = vcmp.ge.s32.totalorder %v3208, 0
        %vm3234 = vcmp.ge.s32.totalorder %v3209, 0
        %vm3235 = vcmp.ge.s32.totalorder %v3210, 0
        %vm3236 = vcmp.ge.s32.totalorder %v3211, 0
        %vm3237 = vcmp.lt.s32.totalorder %v3194, 16
        %vm3238 = vcmp.lt.s32.totalorder %v3195, 16
        %vm3239 = vcmp.lt.s32.totalorder %v3196, 16
        %vm3240 = vcmp.lt.s32.totalorder %v3197, 16
        %vm3241 = vcmp.lt.s32.totalorder %v3198, 16
        %vm3242 = vcmp.lt.s32.totalorder %v3199, 16
        %vm3243 = vcmp.lt.s32.totalorder %v3200, 16
        %vm3244 = vcmp.lt.s32.totalorder %v3201, 16
        %vm3245 = vcmp.lt.s32.totalorder %v3202, 16
        %vm3246 = vcmp.lt.s32.totalorder %v3203, 16
        %vm3247 = vcmp.lt.s32.totalorder %v3204, 16
        %vm3248 = vcmp.lt.s32.totalorder %v3205, 16
        %vm3249 = vcmp.lt.s32.totalorder %v3206, 16
        %vm3250 = vcmp.lt.s32.totalorder %v3207, 16
        %vm3251 = vcmp.lt.s32.totalorder %v3208, 16
        %vm3252 = vcmp.lt.s32.totalorder %v3209, 16
        %vm3253 = vcmp.lt.s32.totalorder %v3210, 16
        %vm3254 = vcmp.lt.s32.totalorder %v3211, 16
        %vm3255 = vmand %vm3219, %vm3237
        %vm3256 = vmand %vm3220, %vm3238
        %vm3257 = vmand %vm3221, %vm3239
        %vm3258 = vmand %vm3222, %vm3240
        %vm3259 = vmand %vm3223, %vm3241
        %vm3260 = vmand %vm3224, %vm3242
        %vm3261 = vmand %vm3225, %vm3243
        %vm3262 = vmand %vm3226, %vm3244
        %vm3263 = vmand %vm3227, %vm3245
        %vm3264 = vmand %vm3228, %vm3246
        %vm3265 = vmand %vm3229, %vm3247
        %vm3266 = vmand %vm3230, %vm3248
        %vm3267 = vmand %vm3231, %vm3249
        %vm3268 = vmand %vm3232, %vm3250
        %vm3269 = vmand %vm3233, %vm3251
        %vm3270 = vmand %vm3234, %vm3252
        %vm3271 = vmand %vm3235, %vm3253
        %vm3272 = vmand %vm3236, %vm3254
        %vm3273 = vcmp.ge.s32.totalorder %v3216, 0
        %vm3274 = vcmp.ge.s32.totalorder %v3217, 0
        %vm3275 = vcmp.ge.s32.totalorder %v3218, 0
        %v3276 = vsel %vm3255, 1, 0
        %v3277 = vsel %vm3256, 1, 0
        %v3278 = vsel %vm3257, 1, 0
        %v3279 = vsel %vm3258, 1, 0
        %v3280 = vsel %vm3259, 1, 0
        %v3281 = vsel %vm3260, 1, 0
        %v3282 = vsel %vm3261, 1, 0
        %v3283 = vsel %vm3262, 1, 0
        %v3284 = vsel %vm3263, 1, 0
        %v3285 = vsel %vm3264, 1, 0
        %v3286 = vsel %vm3265, 1, 0
        %v3287 = vsel %vm3266, 1, 0
        %v3288 = vsel %vm3267, 1, 0
        %v3289 = vsel %vm3268, 1, 0
        %v3290 = vsel %vm3269, 1, 0
        %v3291 = vsel %vm3270, 1, 0
        %v3292 = vsel %vm3271, 1, 0
        %v3293 = vsel %vm3272, 1, 0
        %vm3294 = vcmp.eq.s32.totalorder %v3276, 1
        %vm3295 = vcmp.eq.s32.totalorder %v3277, 1
        %vm3296 = vcmp.eq.s32.totalorder %v3278, 1
        %vm3297 = vcmp.eq.s32.totalorder %v3279, 1
        %vm3298 = vcmp.eq.s32.totalorder %v3280, 1
        %vm3299 = vcmp.eq.s32.totalorder %v3281, 1
        %vm3300 = vcmp.eq.s32.totalorder %v3282, 1
        %vm3301 = vcmp.eq.s32.totalorder %v3283, 1
        %vm3302 = vcmp.eq.s32.totalorder %v3284, 1
        %vm3303 = vcmp.eq.s32.totalorder %v3285, 1
        %vm3304 = vcmp.eq.s32.totalorder %v3286, 1
        %vm3305 = vcmp.eq.s32.totalorder %v3287, 1
        %vm3306 = vcmp.eq.s32.totalorder %v3288, 1
        %vm3307 = vcmp.eq.s32.totalorder %v3289, 1
        %vm3308 = vcmp.eq.s32.totalorder %v3290, 1
        %vm3309 = vcmp.eq.s32.totalorder %v3291, 1
        %vm3310 = vcmp.eq.s32.totalorder %v3292, 1
        %vm3311 = vcmp.eq.s32.totalorder %v3293, 1
        %v3312 = vsel %vm3273, 1, 0
        %v3313 = vsel %vm3274, 1, 0
        %v3314 = vsel %vm3275, 1, 0
        %vm3315 = vcmp.eq.s32.totalorder %v3312, 1
        %vm3316 = vcmp.eq.s32.totalorder %v3313, 1
        %vm3317 = vcmp.eq.s32.totalorder %v3314, 1
        %vm3318 = vmand %vm3294, %vm3315
        %vm3319 = vmand %vm3294, %vm3316
        %vm3320 = vmand %vm3294, %vm3317
        %vm3321 = vmand %vm3295, %vm3315
        %vm3322 = vmand %vm3295, %vm3316
        %vm3323 = vmand %vm3295, %vm3317
        %vm3324 = vmand %vm3296, %vm3315
        %vm3325 = vmand %vm3296, %vm3316
        %vm3326 = vmand %vm3296, %vm3317
        %vm3327 = vmand %vm3297, %vm3315
        %vm3328 = vmand %vm3297, %vm3316
        %vm3329 = vmand %vm3297, %vm3317
        %vm3330 = vmand %vm3298, %vm3315
        %vm3331 = vmand %vm3298, %vm3316
        %vm3332 = vmand %vm3298, %vm3317
        %vm3333 = vmand %vm3299, %vm3315
        %vm3334 = vmand %vm3299, %vm3316
        %vm3335 = vmand %vm3299, %vm3317
        %vm3336 = vmand %vm3300, %vm3315
        %vm3337 = vmand %vm3300, %vm3316
        %vm3338 = vmand %vm3300, %vm3317
        %vm3339 = vmand %vm3301, %vm3315
        %vm3340 = vmand %vm3301, %vm3316
        %vm3341 = vmand %vm3301, %vm3317
        %vm3342 = vmand %vm3302, %vm3315
        %vm3343 = vmand %vm3302, %vm3316
        %vm3344 = vmand %vm3302, %vm3317
        %vm3345 = vmand %vm3303, %vm3315
        %vm3346 = vmand %vm3303, %vm3316
        %vm3347 = vmand %vm3303, %vm3317
        %vm3348 = vmand %vm3304, %vm3315
        %vm3349 = vmand %vm3304, %vm3316
        %vm3350 = vmand %vm3304, %vm3317
        %vm3351 = vmand %vm3305, %vm3315
        %vm3352 = vmand %vm3305, %vm3316
        %vm3353 = vmand %vm3305, %vm3317
        %vm3354 = vmand %vm3306, %vm3315
        %vm3355 = vmand %vm3306, %vm3316
        %vm3356 = vmand %vm3306, %vm3317
        %vm3357 = vmand %vm3307, %vm3315
        %vm3358 = vmand %vm3307, %vm3316
        %vm3359 = vmand %vm3307, %vm3317
        %vm3360 = vmand %vm3308, %vm3315
        %vm3361 = vmand %vm3308, %vm3316
        %vm3362 = vmand %vm3308, %vm3317
        %vm3363 = vmand %vm3309, %vm3315
        %vm3364 = vmand %vm3309, %vm3316
        %vm3365 = vmand %vm3309, %vm3317
        %vm3366 = vmand %vm3310, %vm3315
        %vm3367 = vmand %vm3310, %vm3316
        %vm3368 = vmand %vm3310, %vm3317
        %vm3369 = vmand %vm3311, %vm3315
        %vm3370 = vmand %vm3311, %vm3316
        %vm3371 = vmand %vm3311, %vm3317
        %vm3372 = vcmp.lt.s32.totalorder %v3216, 16
        %vm3373 = vcmp.lt.s32.totalorder %v3217, 16
        %vm3374 = vcmp.lt.s32.totalorder %v3218, 16
        %v3375 = vsel %vm3372, 1, 0
        %v3376 = vsel %vm3373, 1, 0
        %v3377 = vsel %vm3374, 1, 0
        %vm3378 = vcmp.eq.s32.totalorder %v3375, 1
        %vm3379 = vcmp.eq.s32.totalorder %v3376, 1
        %vm3380 = vcmp.eq.s32.totalorder %v3377, 1
        %vm3381 = vmand %vm3318, %vm3378
        %vm3382 = vmand %vm3319, %vm3379
        %vm3383 = vmand %vm3320, %vm3380
        %vm3384 = vmand %vm3321, %vm3378
        %vm3385 = vmand %vm3322, %vm3379
        %vm3386 = vmand %vm3323, %vm3380
        %vm3387 = vmand %vm3324, %vm3378
        %vm3388 = vmand %vm3325, %vm3379
        %vm3389 = vmand %vm3326, %vm3380
        %vm3390 = vmand %vm3327, %vm3378
        %vm3391 = vmand %vm3328, %vm3379
        %vm3392 = vmand %vm3329, %vm3380
        %vm3393 = vmand %vm3330, %vm3378
        %vm3394 = vmand %vm3331, %vm3379
        %vm3395 = vmand %vm3332, %vm3380
        %vm3396 = vmand %vm3333, %vm3378
        %vm3397 = vmand %vm3334, %vm3379
        %vm3398 = vmand %vm3335, %vm3380
        %vm3399 = vmand %vm3336, %vm3378
        %vm3400 = vmand %vm3337, %vm3379
        %vm3401 = vmand %vm3338, %vm3380
        %vm3402 = vmand %vm3339, %vm3378
        %vm3403 = vmand %vm3340, %vm3379
        %vm3404 = vmand %vm3341, %vm3380
        %vm3405 = vmand %vm3342, %vm3378
        %vm3406 = vmand %vm3343, %vm3379
        %vm3407 = vmand %vm3344, %vm3380
        %vm3408 = vmand %vm3345, %vm3378
        %vm3409 = vmand %vm3346, %vm3379
        %vm3410 = vmand %vm3347, %vm3380
        %vm3411 = vmand %vm3348, %vm3378
        %vm3412 = vmand %vm3349, %vm3379
        %vm3413 = vmand %vm3350, %vm3380
        %vm3414 = vmand %vm3351, %vm3378
        %vm3415 = vmand %vm3352, %vm3379
        %vm3416 = vmand %vm3353, %vm3380
        %vm3417 = vmand %vm3354, %vm3378
        %vm3418 = vmand %vm3355, %vm3379
        %vm3419 = vmand %vm3356, %vm3380
        %vm3420 = vmand %vm3357, %vm3378
        %vm3421 = vmand %vm3358, %vm3379
        %vm3422 = vmand %vm3359, %vm3380
        %vm3423 = vmand %vm3360, %vm3378
        %vm3424 = vmand %vm3361, %vm3379
        %vm3425 = vmand %vm3362, %vm3380
        %vm3426 = vmand %vm3363, %vm3378
        %vm3427 = vmand %vm3364, %vm3379
        %vm3428 = vmand %vm3365, %vm3380
        %vm3429 = vmand %vm3366, %vm3378
        %vm3430 = vmand %vm3367, %vm3379
        %vm3431 = vmand %vm3368, %vm3380
        %vm3432 = vmand %vm3369, %vm3378
        %vm3433 = vmand %vm3370, %vm3379
        %vm3434 = vmand %vm3371, %vm3380
        %v3435 = vsel %vm3381, 1, 0
        %v3436 = vsel %vm3382, 1, 0
        %v3437 = vsel %vm3383, 1, 0
        %v3438 = vsel %vm3384, 1, 0
        %v3439 = vsel %vm3385, 1, 0
        %v3440 = vsel %vm3386, 1, 0
        %v3441 = vsel %vm3387, 1, 0
        %v3442 = vsel %vm3388, 1, 0
        %v3443 = vsel %vm3389, 1, 0
        %v3444 = vsel %vm3390, 1, 0
        %v3445 = vsel %vm3391, 1, 0
        %v3446 = vsel %vm3392, 1, 0
        %v3447 = vsel %vm3393, 1, 0
        %v3448 = vsel %vm3394, 1, 0
        %v3449 = vsel %vm3395, 1, 0
        %v3450 = vsel %vm3396, 1, 0
        %v3451 = vsel %vm3397, 1, 0
        %v3452 = vsel %vm3398, 1, 0
        %v3453 = vsel %vm3399, 1, 0
        %v3454 = vsel %vm3400, 1, 0
        %v3455 = vsel %vm3401, 1, 0
        %v3456 = vsel %vm3402, 1, 0
        %v3457 = vsel %vm3403, 1, 0
        %v3458 = vsel %vm3404, 1, 0
        %v3459 = vsel %vm3405, 1, 0
        %v3460 = vsel %vm3406, 1, 0
        %v3461 = vsel %vm3407, 1, 0
        %v3462 = vsel %vm3408, 1, 0
        %v3463 = vsel %vm3409, 1, 0
        %v3464 = vsel %vm3410, 1, 0
        %v3465 = vsel %vm3411, 1, 0
        %v3466 = vsel %vm3412, 1, 0
        %v3467 = vsel %vm3413, 1, 0
        %v3468 = vsel %vm3414, 1, 0
        %v3469 = vsel %vm3415, 1, 0
        %v3470 = vsel %vm3416, 1, 0
        %v3471 = vsel %vm3417, 1, 0
        %v3472 = vsel %vm3418, 1, 0
        %v3473 = vsel %vm3419, 1, 0
        %v3474 = vsel %vm3420, 1, 0
        %v3475 = vsel %vm3421, 1, 0
        %v3476 = vsel %vm3422, 1, 0
        %v3477 = vsel %vm3423, 1, 0
        %v3478 = vsel %vm3424, 1, 0
        %v3479 = vsel %vm3425, 1, 0
        %v3480 = vsel %vm3426, 1, 0
        %v3481 = vsel %vm3427, 1, 0
        %v3482 = vsel %vm3428, 1, 0
        %v3483 = vsel %vm3429, 1, 0
        %v3484 = vsel %vm3430, 1, 0
        %v3485 = vsel %vm3431, 1, 0
        %v3486 = vsel %vm3432, 1, 0
        %v3487 = vsel %vm3433, 1, 0
        %v3488 = vsel %vm3434, 1, 0
        %vm3489 = vcmp.eq.s32.totalorder %v3435, 1
        %vm3490 = vcmp.eq.s32.totalorder %v3436, 1
        %vm3491 = vcmp.eq.s32.totalorder %v3437, 1
        %vm3492 = vcmp.eq.s32.totalorder %v3438, 1
        %vm3493 = vcmp.eq.s32.totalorder %v3439, 1
        %vm3494 = vcmp.eq.s32.totalorder %v3440, 1
        %vm3495 = vcmp.eq.s32.totalorder %v3441, 1
        %vm3496 = vcmp.eq.s32.totalorder %v3442, 1
        %vm3497 = vcmp.eq.s32.totalorder %v3443, 1
        %vm3498 = vcmp.eq.s32.totalorder %v3444, 1
        %vm3499 = vcmp.eq.s32.totalorder %v3445, 1
        %vm3500 = vcmp.eq.s32.totalorder %v3446, 1
        %vm3501 = vcmp.eq.s32.totalorder %v3447, 1
        %vm3502 = vcmp.eq.s32.totalorder %v3448, 1
        %vm3503 = vcmp.eq.s32.totalorder %v3449, 1
        %vm3504 = vcmp.eq.s32.totalorder %v3450, 1
        %vm3505 = vcmp.eq.s32.totalorder %v3451, 1
        %vm3506 = vcmp.eq.s32.totalorder %v3452, 1
        %vm3507 = vcmp.eq.s32.totalorder %v3453, 1
        %vm3508 = vcmp.eq.s32.totalorder %v3454, 1
        %vm3509 = vcmp.eq.s32.totalorder %v3455, 1
        %vm3510 = vcmp.eq.s32.totalorder %v3456, 1
        %vm3511 = vcmp.eq.s32.totalorder %v3457, 1
        %vm3512 = vcmp.eq.s32.totalorder %v3458, 1
        %vm3513 = vcmp.eq.s32.totalorder %v3459, 1
        %vm3514 = vcmp.eq.s32.totalorder %v3460, 1
        %vm3515 = vcmp.eq.s32.totalorder %v3461, 1
        %vm3516 = vcmp.eq.s32.totalorder %v3462, 1
        %vm3517 = vcmp.eq.s32.totalorder %v3463, 1
        %vm3518 = vcmp.eq.s32.totalorder %v3464, 1
        %vm3519 = vcmp.eq.s32.totalorder %v3465, 1
        %vm3520 = vcmp.eq.s32.totalorder %v3466, 1
        %vm3521 = vcmp.eq.s32.totalorder %v3467, 1
        %vm3522 = vcmp.eq.s32.totalorder %v3468, 1
        %vm3523 = vcmp.eq.s32.totalorder %v3469, 1
        %vm3524 = vcmp.eq.s32.totalorder %v3470, 1
        %vm3525 = vcmp.eq.s32.totalorder %v3471, 1
        %vm3526 = vcmp.eq.s32.totalorder %v3472, 1
        %vm3527 = vcmp.eq.s32.totalorder %v3473, 1
        %vm3528 = vcmp.eq.s32.totalorder %v3474, 1
        %vm3529 = vcmp.eq.s32.totalorder %v3475, 1
        %vm3530 = vcmp.eq.s32.totalorder %v3476, 1
        %vm3531 = vcmp.eq.s32.totalorder %v3477, 1
        %vm3532 = vcmp.eq.s32.totalorder %v3478, 1
        %vm3533 = vcmp.eq.s32.totalorder %v3479, 1
        %vm3534 = vcmp.eq.s32.totalorder %v3480, 1
        %vm3535 = vcmp.eq.s32.totalorder %v3481, 1
        %vm3536 = vcmp.eq.s32.totalorder %v3482, 1
        %vm3537 = vcmp.eq.s32.totalorder %v3483, 1
        %vm3538 = vcmp.eq.s32.totalorder %v3484, 1
        %vm3539 = vcmp.eq.s32.totalorder %v3485, 1
        %vm3540 = vcmp.eq.s32.totalorder %v3486, 1
        %vm3541 = vcmp.eq.s32.totalorder %v3487, 1
        %vm3542 = vcmp.eq.s32.totalorder %v3488, 1
        %v3543 = vsel %vm3489, %v3139, 0.0
        %v3544 = vsel %vm3490, %v3140, 0.0
        %v3545 = vsel %vm3491, %v3141, 0.0
        %v3546 = vsel %vm3492, %v3142, 0.0
        %v3547 = vsel %vm3493, %v3143, 0.0
        %v3548 = vsel %vm3494, %v3144, 0.0
        %v3549 = vsel %vm3495, %v3145, 0.0
        %v3550 = vsel %vm3496, %v3146, 0.0
        %v3551 = vsel %vm3497, %v3147, 0.0
        %v3552 = vsel %vm3498, %v3148, 0.0
        %v3553 = vsel %vm3499, %v3149, 0.0
        %v3554 = vsel %vm3500, %v3150, 0.0
        %v3555 = vsel %vm3501, %v3151, 0.0
        %v3556 = vsel %vm3502, %v3152, 0.0
        %v3557 = vsel %vm3503, %v3153, 0.0
        %v3558 = vsel %vm3504, %v3154, 0.0
        %v3559 = vsel %vm3505, %v3155, 0.0
        %v3560 = vsel %vm3506, %v3156, 0.0
        %v3561 = vsel %vm3507, %v3157, 0.0
        %v3562 = vsel %vm3508, %v3158, 0.0
        %v3563 = vsel %vm3509, %v3159, 0.0
        %v3564 = vsel %vm3510, %v3160, 0.0
        %v3565 = vsel %vm3511, %v3161, 0.0
        %v3566 = vsel %vm3512, %v3162, 0.0
        %v3567 = vsel %vm3513, %v3163, 0.0
        %v3568 = vsel %vm3514, %v3164, 0.0
        %v3569 = vsel %vm3515, %v3165, 0.0
        %v3570 = vsel %vm3516, %v3166, 0.0
        %v3571 = vsel %vm3517, %v3167, 0.0
        %v3572 = vsel %vm3518, %v3168, 0.0
        %v3573 = vsel %vm3519, %v3169, 0.0
        %v3574 = vsel %vm3520, %v3170, 0.0
        %v3575 = vsel %vm3521, %v3171, 0.0
        %v3576 = vsel %vm3522, %v3172, 0.0
        %v3577 = vsel %vm3523, %v3173, 0.0
        %v3578 = vsel %vm3524, %v3174, 0.0
        %v3579 = vsel %vm3525, %v3175, 0.0
        %v3580 = vsel %vm3526, %v3176, 0.0
        %v3581 = vsel %vm3527, %v3177, 0.0
        %v3582 = vsel %vm3528, %v3178, 0.0
        %v3583 = vsel %vm3529, %v3179, 0.0
        %v3584 = vsel %vm3530, %v3180, 0.0
        %v3585 = vsel %vm3531, %v3181, 0.0
        %v3586 = vsel %vm3532, %v3182, 0.0
        %v3587 = vsel %vm3533, %v3183, 0.0
        %v3588 = vsel %vm3534, %v3184, 0.0
        %v3589 = vsel %vm3535, %v3185, 0.0
        %v3590 = vsel %vm3536, %v3186, 0.0
        %v3591 = vsel %vm3537, %v3187, 0.0
        %v3592 = vsel %vm3538, %v3188, 0.0
        %v3593 = vsel %vm3539, %v3189, 0.0
        %v3594 = vsel %vm3540, %v3190, 0.0
        %v3595 = vsel %vm3541, %v3191, 0.0
        %v3596 = vsel %vm3542, %v3192, 0.0
        %3597 = vst [vmem:[#allocation2] sm:$0xff] %v3543
        %3598 = vst [vmem:[#allocation2 + $0x8] sm:$0xff] %v3544
        %3599 = vst [vmem:[#allocation2 + $0x10] sm:$0xff] %v3545
        %3600 = vst [vmem:[#allocation2 + $0x18] sm:$0xff] %v3546
        %3601 = vst [vmem:[#allocation2 + $0x20] sm:$0xff] %v3547
        %3602 = vst [vmem:[#allocation2 + $0x28] sm:$0xff] %v3548
        %3603 = vst [vmem:[#allocation2 + $0x30] sm:$0xff] %v3549
        %3604 = vst [vmem:[#allocation2 + $0x38] sm:$0xff] %v3550
        %3605 = vst [vmem:[#allocation2 + $0x40] sm:$0xff] %v3551
        %3606 = vst [vmem:[#allocation2 + $0x48] sm:$0xff] %v3552
        %3607 = vst [vmem:[#allocation2 + $0x50] sm:$0xff] %v3553
        %3608 = vst [vmem:[#allocation2 + $0x58] sm:$0xff] %v3554
        %3609 = vst [vmem:[#allocation2 + $0x60] sm:$0xff] %v3555
        %3610 = vst [vmem:[#allocation2 + $0x68] sm:$0xff] %v3556
        %3611 = vst [vmem:[#allocation2 + $0x70] sm:$0xff] %v3557
        %3612 = vst [vmem:[#allocation2 + $0x78] sm:$0xff] %v3558
        %3613 = vst [vmem:[#allocation2 + $0x80] sm:$0xff] %v3559
        %3614 = vst [vmem:[#allocation2 + $0x88] sm:$0xff] %v3560
        %3615 = vst [vmem:[#allocation2 + $0x90] sm:$0xff] %v3561
        %3616 = vst [vmem:[#allocation2 + $0x98] sm:$0xff] %v3562
        %3617 = vst [vmem:[#allocation2 + $0xa0] sm:$0xff] %v3563
        %3618 = vst [vmem:[#allocation2 + $0xa8] sm:$0xff] %v3564
        %3619 = vst [vmem:[#allocation2 + $0xb0] sm:$0xff] %v3565
        %3620 = vst [vmem:[#allocation2 + $0xb8] sm:$0xff] %v3566
        %3621 = vst [vmem:[#allocation2 + $0xc0] sm:$0xff] %v3567
        %3622 = vst [vmem:[#allocation2 + $0xc8] sm:$0xff] %v3568
        %3623 = vst [vmem:[#allocation2 + $0xd0] sm:$0xff] %v3569
        %3624 = vst [vmem:[#allocation2 + $0xd8] sm:$0xff] %v3570
        %3625 = vst [vmem:[#allocation2 + $0xe0] sm:$0xff] %v3571
        %3626 = vst [vmem:[#allocation2 + $0xe8] sm:$0xff] %v3572
        %3627 = vst [vmem:[#allocation2 + $0xf0] sm:$0xff] %v3573
        %3628 = vst [vmem:[#allocation2 + $0xf8] sm:$0xff] %v3574
        %3629 = vst [vmem:[#allocation2 + $0x100] sm:$0xff] %v3575
        %3630 = vst [vmem:[#allocation2 + $0x108] sm:$0xff] %v3576
        %3631 = vst [vmem:[#allocation2 + $0x110] sm:$0xff] %v3577
        %3632 = vst [vmem:[#allocation2 + $0x118] sm:$0xff] %v3578
        %3633 = vst [vmem:[#allocation2 + $0x120] sm:$0xff] %v3579
        %3634 = vst [vmem:[#allocation2 + $0x128] sm:$0xff] %v3580
        %3635 = vst [vmem:[#allocation2 + $0x130] sm:$0xff] %v3581
        %3636 = vst [vmem:[#allocation2 + $0x138] sm:$0xff] %v3582
        %3637 = vst [vmem:[#allocation2 + $0x140] sm:$0xff] %v3583
        %3638 = vst [vmem:[#allocation2 + $0x148] sm:$0xff] %v3584
        %3639 = vst [vmem:[#allocation2 + $0x150] sm:$0xff] %v3585
        %3640 = vst [vmem:[#allocation2 + $0x158] sm:$0xff] %v3586
        %3641 = vst [vmem:[#allocation2 + $0x160] sm:$0xff] %v3587
        %3642 = vst [vmem:[#allocation2 + $0x168] sm:$0xff] %v3588
        %3643 = vst [vmem:[#allocation2 + $0x170] sm:$0xff] %v3589
        %3644 = vst [vmem:[#allocation2 + $0x178] sm:$0xff] %v3590
        %3645 = vst [vmem:[#allocation2 + $0x180] sm:$0xff] %v3591
        %3646 = vst [vmem:[#allocation2 + $0x188] sm:$0xff] %v3592
        %3647 = vst [vmem:[#allocation2 + $0x190] sm:$0xff] %v3593
        %3648 = vst [vmem:[#allocation2 + $0x198] sm:$0xff] %v3594
        %3649 = vst [vmem:[#allocation2 + $0x1a0] sm:$0xff] %v3595
        %3650 = vst [vmem:[#allocation2 + $0x1a8] sm:$0xff] %v3596
        %v3651 = vld [vmem:[#allocation2] sm:$0xff]
        %v3652 = vld [vmem:[#allocation2 + $0x8] sm:$0xff]
        %v3653 = vld [vmem:[#allocation2 + $0x18] sm:$0xff]
        %v3654 = vld [vmem:[#allocation2 + $0x20] sm:$0xff]
        %v3655 = vld [vmem:[#allocation2 + $0x30] sm:$0xff]
        %v3656 = vld [vmem:[#allocation2 + $0x38] sm:$0xff]
        %v3657 = vld [vmem:[#allocation2 + $0x48] sm:$0xff]
        %v3658 = vld [vmem:[#allocation2 + $0x50] sm:$0xff]
        %v3659 = vld [vmem:[#allocation2 + $0x60] sm:$0xff]
        %v3660 = vld [vmem:[#allocation2 + $0x68] sm:$0xff]
        %v3661 = vld [vmem:[#allocation2 + $0x78] sm:$0xff]
        %v3662 = vld [vmem:[#allocation2 + $0x80] sm:$0xff]
        %v3663 = vld [vmem:[#allocation2 + $0x90] sm:$0xff]
        %v3664 = vld [vmem:[#allocation2 + $0x98] sm:$0xff]
        %v3665 = vld [vmem:[#allocation2 + $0xa8] sm:$0xff]
        %v3666 = vld [vmem:[#allocation2 + $0xb0] sm:$0xff]
        %v3667 = vld [vmem:[#allocation2 + $0xc0] sm:$0xff]
        %v3668 = vld [vmem:[#allocation2 + $0xc8] sm:$0xff]
        %v3669 = vld [vmem:[#allocation2 + $0xd8] sm:$0xff]
        %v3670 = vld [vmem:[#allocation2 + $0xe0] sm:$0xff]
        %v3671 = vld [vmem:[#allocation2 + $0xf0] sm:$0xff]
        %v3672 = vld [vmem:[#allocation2 + $0xf8] sm:$0xff]
        %v3673 = vld [vmem:[#allocation2 + $0x108] sm:$0xff]
        %v3674 = vld [vmem:[#allocation2 + $0x110] sm:$0xff]
        %v3675 = vld [vmem:[#allocation2 + $0x120] sm:$0xff]
        %v3676 = vld [vmem:[#allocation2 + $0x128] sm:$0xff]
        %v3677 = vld [vmem:[#allocation2 + $0x138] sm:$0xff]
        %v3678 = vld [vmem:[#allocation2 + $0x140] sm:$0xff]
        %v3679 = vld [vmem:[#allocation2 + $0x150] sm:$0xff]
        %v3680 = vld [vmem:[#allocation2 + $0x158] sm:$0xff]
        %v3681 = vld [vmem:[#allocation2 + $0x168] sm:$0xff]
        %v3682 = vld [vmem:[#allocation2 + $0x170] sm:$0xff]
        %v3683 = vld [vmem:[#allocation2 + $0x180] sm:$0xff]
        %v3684 = vld [vmem:[#allocation2 + $0x188] sm:$0xff]
        %v3685 = vld [vmem:[#allocation2 + $0x198] sm:$0xff]
        %v3686 = vld [vmem:[#allocation2 + $0x1a0] sm:$0xff]
        %v3687 = vld [vmem:[#allocation2 + $0x1] sm:$0xff]
        %v3688 = vld [vmem:[#allocation2 + $0x9] sm:$0xff]
        %v3689 = vld [vmem:[#allocation2 + $0x19] sm:$0xff]
        %v3690 = vld [vmem:[#allocation2 + $0x21] sm:$0xff]
        %v3691 = vld [vmem:[#allocation2 + $0x31] sm:$0xff]
        %v3692 = vld [vmem:[#allocation2 + $0x39] sm:$0xff]
        %v3693 = vld [vmem:[#allocation2 + $0x49] sm:$0xff]
        %v3694 = vld [vmem:[#allocation2 + $0x51] sm:$0xff]
        %v3695 = vld [vmem:[#allocation2 + $0x61] sm:$0xff]
        %v3696 = vld [vmem:[#allocation2 + $0x69] sm:$0xff]
        %v3697 = vld [vmem:[#allocation2 + $0x79] sm:$0xff]
        %v3698 = vld [vmem:[#allocation2 + $0x81] sm:$0xff]
        %v3699 = vld [vmem:[#allocation2 + $0x91] sm:$0xff]
        %v3700 = vld [vmem:[#allocation2 + $0x99] sm:$0xff]
        %v3701 = vld [vmem:[#allocation2 + $0xa9] sm:$0xff]
        %v3702 = vld [vmem:[#allocation2 + $0xb1] sm:$0xff]
        %v3703 = vld [vmem:[#allocation2 + $0xc1] sm:$0xff]
        %v3704 = vld [vmem:[#allocation2 + $0xc9] sm:$0xff]
        %v3705 = vld [vmem:[#allocation2 + $0xd9] sm:$0xff]
        %v3706 = vld [vmem:[#allocation2 + $0xe1] sm:$0xff]
        %v3707 = vld [vmem:[#allocation2 + $0xf1] sm:$0xff]
        %v3708 = vld [vmem:[#allocation2 + $0xf9] sm:$0xff]
        %v3709 = vld [vmem:[#allocation2 + $0x109] sm:$0xff]
        %v3710 = vld [vmem:[#allocation2 + $0x111] sm:$0xff]
        %v3711 = vld [vmem:[#allocation2 + $0x121] sm:$0xff]
        %v3712 = vld [vmem:[#allocation2 + $0x129] sm:$0xff]
        %v3713 = vld [vmem:[#allocation2 + $0x139] sm:$0xff]
        %v3714 = vld [vmem:[#allocation2 + $0x141] sm:$0xff]
        %v3715 = vld [vmem:[#allocation2 + $0x151] sm:$0xff]
        %v3716 = vld [vmem:[#allocation2 + $0x159] sm:$0xff]
        %v3717 = vld [vmem:[#allocation2 + $0x169] sm:$0xff]
        %v3718 = vld [vmem:[#allocation2 + $0x171] sm:$0xff]
        %v3719 = vld [vmem:[#allocation2 + $0x181] sm:$0xff]
        %v3720 = vld [vmem:[#allocation2 + $0x189] sm:$0xff]
        %v3721 = vld [vmem:[#allocation2 + $0x199] sm:$0xff]
        %v3722 = vld [vmem:[#allocation2 + $0x1a1] sm:$0xff]
        %v3723 = vld [vmem:[#allocation2 + $0x2] sm:$0xff]
        %v3724 = vld [vmem:[#allocation2 + $0xa] sm:$0xff]
        %v3725 = vld [vmem:[#allocation2 + $0x1a] sm:$0xff]
        %v3726 = vld [vmem:[#allocation2 + $0x22] sm:$0xff]
        %v3727 = vld [vmem:[#allocation2 + $0x32] sm:$0xff]
        %v3728 = vld [vmem:[#allocation2 + $0x3a] sm:$0xff]
        %v3729 = vld [vmem:[#allocation2 + $0x4a] sm:$0xff]
        %v3730 = vld [vmem:[#allocation2 + $0x52] sm:$0xff]
        %v3731 = vld [vmem:[#allocation2 + $0x62] sm:$0xff]
        %v3732 = vld [vmem:[#allocation2 + $0x6a] sm:$0xff]
        %v3733 = vld [vmem:[#allocation2 + $0x7a] sm:$0xff]
        %v3734 = vld [vmem:[#allocation2 + $0x82] sm:$0xff]
        %v3735 = vld [vmem:[#allocation2 + $0x92] sm:$0xff]
        %v3736 = vld [vmem:[#allocation2 + $0x9a] sm:$0xff]
        %v3737 = vld [vmem:[#allocation2 + $0xaa] sm:$0xff]
        %v3738 = vld [vmem:[#allocation2 + $0xb2] sm:$0xff]
        %v3739 = vld [vmem:[#allocation2 + $0xc2] sm:$0xff]
        %v3740 = vld [vmem:[#allocation2 + $0xca] sm:$0xff]
        %v3741 = vld [vmem:[#allocation2 + $0xda] sm:$0xff]
        %v3742 = vld [vmem:[#allocation2 + $0xe2] sm:$0xff]
        %v3743 = vld [vmem:[#allocation2 + $0xf2] sm:$0xff]
        %v3744 = vld [vmem:[#allocation2 + $0xfa] sm:$0xff]
        %v3745 = vld [vmem:[#allocation2 + $0x10a] sm:$0xff]
        %v3746 = vld [vmem:[#allocation2 + $0x112] sm:$0xff]
        %v3747 = vld [vmem:[#allocation2 + $0x122] sm:$0xff]
        %v3748 = vld [vmem:[#allocation2 + $0x12a] sm:$0xff]
        %v3749 = vld [vmem:[#allocation2 + $0x13a] sm:$0xff]
        %v3750 = vld [vmem:[#allocation2 + $0x142] sm:$0xff]
        %v3751 = vld [vmem:[#allocation2 + $0x152] sm:$0xff]
        %v3752 = vld [vmem:[#allocation2 + $0x15a] sm:$0xff]
        %v3753 = vld [vmem:[#allocation2 + $0x16a] sm:$0xff]
        %v3754 = vld [vmem:[#allocation2 + $0x172] sm:$0xff]
        %v3755 = vld [vmem:[#allocation2 + $0x182] sm:$0xff]
        %v3756 = vld [vmem:[#allocation2 + $0x18a] sm:$0xff]
        %v3757 = vld [vmem:[#allocation2 + $0x19a] sm:$0xff]
        %v3758 = vld [vmem:[#allocation2 + $0x1a2] sm:$0xff]
        %v3759 = vpack.c.bf16 %v3652, %v3651
        %v3760 = vpack.c.bf16 %v3688, %v3687
        %v3761 = vpack.c.bf16 %v3724, %v3723
        %v3762 = vpack.c.bf16 %v3654, %v3653
        %v3763 = vpack.c.bf16 %v3690, %v3689
        %v3764 = vpack.c.bf16 %v3726, %v3725
        %v3765 = vpack.c.bf16 %v3656, %v3655
        %v3766 = vpack.c.bf16 %v3692, %v3691
        %v3767 = vpack.c.bf16 %v3728, %v3727
        %v3768 = vpack.c.bf16 %v3658, %v3657
        %v3769 = vpack.c.bf16 %v3694, %v3693
        %v3770 = vpack.c.bf16 %v3730, %v3729
        %v3771 = vpack.c.bf16 %v3660, %v3659
        %v3772 = vpack.c.bf16 %v3696, %v3695
        %v3773 = vpack.c.bf16 %v3732, %v3731
        %v3774 = vpack.c.bf16 %v3662, %v3661
        %v3775 = vpack.c.bf16 %v3698, %v3697
        %v3776 = vpack.c.bf16 %v3734, %v3733
        %v3777 = vpack.c.bf16 %v3664, %v3663
        %v3778 = vpack.c.bf16 %v3700, %v3699
        %v3779 = vpack.c.bf16 %v3736, %v3735
        %v3780 = vpack.c.bf16 %v3666, %v3665
        %v3781 = vpack.c.bf16 %v3702, %v3701
        %v3782 = vpack.c.bf16 %v3738, %v3737
        %v3783 = vpack.c.bf16 %v3668, %v3667
        %v3784 = vpack.c.bf16 %v3704, %v3703
        %v3785 = vpack.c.bf16 %v3740, %v3739
        %v3786 = vpack.c.bf16 %v3670, %v3669
        %v3787 = vpack.c.bf16 %v3706, %v3705
        %v3788 = vpack.c.bf16 %v3742, %v3741
        %v3789 = vpack.c.bf16 %v3672, %v3671
        %v3790 = vpack.c.bf16 %v3708, %v3707
        %v3791 = vpack.c.bf16 %v3744, %v3743
        %v3792 = vpack.c.bf16 %v3674, %v3673
        %v3793 = vpack.c.bf16 %v3710, %v3709
        %v3794 = vpack.c.bf16 %v3746, %v3745
        %v3795 = vpack.c.bf16 %v3676, %v3675
        %v3796 = vpack.c.bf16 %v3712, %v3711
        %v3797 = vpack.c.bf16 %v3748, %v3747
        %v3798 = vpack.c.bf16 %v3678, %v3677
        %v3799 = vpack.c.bf16 %v3714, %v3713
        %v3800 = vpack.c.bf16 %v3750, %v3749
        %v3801 = vpack.c.bf16 %v3680, %v3679
        %v3802 = vpack.c.bf16 %v3716, %v3715
        %v3803 = vpack.c.bf16 %v3752, %v3751
        %v3804 = vpack.c.bf16 %v3682, %v3681
        %v3805 = vpack.c.bf16 %v3718, %v3717
        %v3806 = vpack.c.bf16 %v3754, %v3753
        %v3807 = vld [vmem:[#allocation7] sm:$0xf]
        %v3808 = vld [vmem:[#allocation7 + $0x4] sm:$0xf]
        %v3809 = vld [vmem:[#allocation7 + $0x8] sm:$0xf]
        %v3810 = vld [vmem:[#allocation7 + $0xc] sm:$0xf]
        %v3811 = vld [vmem:[#allocation7 + $0x10] sm:$0xf]
        %v3812 = vld [vmem:[#allocation7 + $0x14] sm:$0xf]
        %v3813 = vld [vmem:[#allocation7 + $0x18] sm:$0xf]
        %v3814 = vld [vmem:[#allocation7 + $0x1c] sm:$0xf]
        %v3815 = vld [vmem:[#allocation7 + $0x20] sm:$0xf]
        %v3816 = vld [vmem:[#allocation7 + $0x24] sm:$0xf]
        %v3817 = vld [vmem:[#allocation7 + $0x28] sm:$0xf]
        %v3818 = vld [vmem:[#allocation7 + $0x2c] sm:$0xf]
        %v3819 = vld [vmem:[#allocation7 + $0x30] sm:$0xf]
        %v3820 = vld [vmem:[#allocation7 + $0x34] sm:$0xf]
        %v3821 = vld [vmem:[#allocation7 + $0x38] sm:$0xf]
        %v3822 = vld [vmem:[#allocation7 + $0x3c] sm:$0xf]
        %v3823 = vld [vmem:[#allocation7 + $0x40] sm:$0xf]
        %v3824 = vld [vmem:[#allocation7 + $0x44] sm:$0xf]
        %v3825 = vld [vmem:[#allocation7 + $0x48] sm:$0xf]
        %v3826 = vld [vmem:[#allocation7 + $0x4c] sm:$0xf]
        %v3827 = vld [vmem:[#allocation7 + $0x50] sm:$0xf]
        %v3828 = vld [vmem:[#allocation7 + $0x54] sm:$0xf]
        %v3829 = vld [vmem:[#allocation7 + $0x58] sm:$0xf]
        %v3830 = vld [vmem:[#allocation7 + $0x5c] sm:$0xf]
        %v3831 = vld [vmem:[#allocation7 + $0x60] sm:$0xf]
        %v3832 = vld [vmem:[#allocation7 + $0x64] sm:$0xf]
        %v3833 = vld [vmem:[#allocation7 + $0x68] sm:$0xf]
        %v3834 = vld [vmem:[#allocation7 + $0x6c] sm:$0xf]
        %v3835 = vld [vmem:[#allocation7 + $0x70] sm:$0xf]
        %v3836 = vld [vmem:[#allocation7 + $0x74] sm:$0xf]
        %v3837 = vld [vmem:[#allocation7 + $0x78] sm:$0xf]
        %v3838 = vld [vmem:[#allocation7 + $0x7c] sm:$0xf]
        %v3839 = vld [vmem:[#allocation7 + $0x80] sm:$0xf]
        %v3840 = vld [vmem:[#allocation7 + $0x84] sm:$0xf]
        %v3841 = vld [vmem:[#allocation7 + $0x88] sm:$0xf]
        %v3842 = vld [vmem:[#allocation7 + $0x8c] sm:$0xf]
        %v3843 = vld [vmem:[#allocation7 + $0x90] sm:$0xf]
        %v3844 = vld [vmem:[#allocation7 + $0x94] sm:$0xf]
        %v3845 = vld [vmem:[#allocation7 + $0x98] sm:$0xf]
        %v3846 = vld [vmem:[#allocation7 + $0x9c] sm:$0xf]
        %v3847 = vld [vmem:[#allocation7 + $0xa0] sm:$0xf]
        %v3848 = vld [vmem:[#allocation7 + $0xa4] sm:$0xf]
        %v3849 = vld [vmem:[#allocation7 + $0xa8] sm:$0xf]
        %v3850 = vld [vmem:[#allocation7 + $0xac] sm:$0xf]
        %v3851 = vld [vmem:[#allocation7 + $0xb0] sm:$0xf]
        %v3852 = vld [vmem:[#allocation7 + $0xb4] sm:$0xf]
        %v3853 = vld [vmem:[#allocation7 + $0xb8] sm:$0xf]
        %v3854 = vld [vmem:[#allocation7 + $0xbc] sm:$0xf]
        %v3855 = vpack.c.bf16 %v3684, %v3683
        %v3856 = vpack.c.bf16 %v3720, %v3719
        %v3857 = vpack.c.bf16 %v3756, %v3755
        %s3858 = scalar_lea.vmem [#allocation7], 192
        %v3859 = vld [vmem:[%s3858] sm:$0xf]
        %v3860 = vld [vmem:[%s3858 + $0x4] sm:$0xf]
        %v3861 = vld [vmem:[%s3858 + $0x8] sm:$0xf]
        %v3862 = vld [vmem:[%s3858 + $0xc] sm:$0xf]
        %v3863 = vld [vmem:[%s3858 + $0x10] sm:$0xf]
        %v3864 = vld [vmem:[%s3858 + $0x14] sm:$0xf]
        %v3865 = vld [vmem:[%s3858 + $0x18] sm:$0xf]
        %v3866 = vld [vmem:[%s3858 + $0x1c] sm:$0xf]
        %v3867 = vld [vmem:[%s3858 + $0x20] sm:$0xf]
        %v3868 = vld [vmem:[%s3858 + $0x24] sm:$0xf]
        %v3869 = vld [vmem:[%s3858 + $0x28] sm:$0xf]
        %v3870 = vld [vmem:[%s3858 + $0x2c] sm:$0xf]
        %v3871 = vld [vmem:[%s3858 + $0x30] sm:$0xf]
        %v3872 = vld [vmem:[%s3858 + $0x34] sm:$0xf]
        %v3873 = vld [vmem:[%s3858 + $0x38] sm:$0xf]
        %v3874 = vld [vmem:[%s3858 + $0x3c] sm:$0xf]
        %v3875 = vld [vmem:[%s3858 + $0x40] sm:$0xf]
        %v3876 = vld [vmem:[%s3858 + $0x44] sm:$0xf]
        %v3877 = vld [vmem:[%s3858 + $0x48] sm:$0xf]
        %v3878 = vld [vmem:[%s3858 + $0x4c] sm:$0xf]
        %v3879 = vld [vmem:[%s3858 + $0x50] sm:$0xf]
        %v3880 = vld [vmem:[%s3858 + $0x54] sm:$0xf]
        %v3881 = vld [vmem:[%s3858 + $0x58] sm:$0xf]
        %v3882 = vld [vmem:[%s3858 + $0x5c] sm:$0xf]
        %v3883 = vld [vmem:[%s3858 + $0x60] sm:$0xf]
        %v3884 = vld [vmem:[%s3858 + $0x64] sm:$0xf]
        %v3885 = vld [vmem:[%s3858 + $0x68] sm:$0xf]
        %v3886 = vld [vmem:[%s3858 + $0x6c] sm:$0xf]
        %v3887 = vld [vmem:[%s3858 + $0x70] sm:$0xf]
        %v3888 = vld [vmem:[%s3858 + $0x74] sm:$0xf]
        %v3889 = vld [vmem:[%s3858 + $0x78] sm:$0xf]
        %v3890 = vld [vmem:[%s3858 + $0x7c] sm:$0xf]
        %v3891 = vld [vmem:[%s3858 + $0x80] sm:$0xf]
        %v3892 = vld [vmem:[%s3858 + $0x84] sm:$0xf]
        %v3893 = vld [vmem:[%s3858 + $0x88] sm:$0xf]
        %v3894 = vld [vmem:[%s3858 + $0x8c] sm:$0xf]
        %v3895 = vld [vmem:[%s3858 + $0x90] sm:$0xf]
        %v3896 = vld [vmem:[%s3858 + $0x94] sm:$0xf]
        %v3897 = vld [vmem:[%s3858 + $0x98] sm:$0xf]
        %v3898 = vld [vmem:[%s3858 + $0x9c] sm:$0xf]
        %v3899 = vld [vmem:[%s3858 + $0xa0] sm:$0xf]
        %v3900 = vld [vmem:[%s3858 + $0xa4] sm:$0xf]
        %v3901 = vld [vmem:[%s3858 + $0xa8] sm:$0xf]
        %v3902 = vld [vmem:[%s3858 + $0xac] sm:$0xf]
        %v3903 = vld [vmem:[%s3858 + $0xb0] sm:$0xf]
        %v3904 = vld [vmem:[%s3858 + $0xb4] sm:$0xf]
        %v3905 = vld [vmem:[%s3858 + $0xb8] sm:$0xf]
        %v3906 = vld [vmem:[%s3858 + $0xbc] sm:$0xf]
        %v3955 = vunpack.c.l.b16 %v3859
        %v3956 = vunpack.c.l.b16 %v3860
        %v3957 = vunpack.c.l.b16 %v3861
        %v3958 = vunpack.c.l.b16 %v3862
        %v3959 = vunpack.c.l.b16 %v3863
        %v3960 = vunpack.c.l.b16 %v3864
        %v3961 = vunpack.c.l.b16 %v3865
        %v3962 = vunpack.c.l.b16 %v3866
        %v3963 = vunpack.c.l.b16 %v3867
        %v3964 = vunpack.c.l.b16 %v3868
        %v3965 = vunpack.c.l.b16 %v3869
        %v3966 = vunpack.c.l.b16 %v3870
        %v3967 = vunpack.c.l.b16 %v3871
        %v3968 = vunpack.c.l.b16 %v3872
        %v3969 = vunpack.c.l.b16 %v3873
        %v3970 = vunpack.c.l.b16 %v3874
        %v3971 = vunpack.c.l.b16 %v3875
        %v3972 = vunpack.c.l.b16 %v3876
        %v3973 = vunpack.c.l.b16 %v3877
        %v3974 = vunpack.c.l.b16 %v3878
        %v3975 = vunpack.c.l.b16 %v3879
        %v3976 = vunpack.c.l.b16 %v3880
        %v3977 = vunpack.c.l.b16 %v3881
        %v3978 = vunpack.c.l.b16 %v3882
        %v3979 = vunpack.c.l.b16 %v3883
        %v3980 = vunpack.c.l.b16 %v3884
        %v3981 = vunpack.c.l.b16 %v3885
        %v3982 = vunpack.c.l.b16 %v3886
        %v3983 = vunpack.c.l.b16 %v3887
        %v3984 = vunpack.c.l.b16 %v3888
        %v3985 = vunpack.c.l.b16 %v3889
        %v3986 = vunpack.c.l.b16 %v3890
        %v3987 = vunpack.c.l.b16 %v3891
        %v3988 = vunpack.c.l.b16 %v3892
        %v3989 = vunpack.c.l.b16 %v3893
        %v3990 = vunpack.c.l.b16 %v3894
        %v3991 = vunpack.c.l.b16 %v3895
        %v3992 = vunpack.c.l.b16 %v3896
        %v3993 = vunpack.c.l.b16 %v3897
        %v3994 = vunpack.c.l.b16 %v3898
        %v3995 = vunpack.c.l.b16 %v3899
        %v3996 = vunpack.c.l.b16 %v3900
        %v3997 = vunpack.c.l.b16 %v3901
        %v3998 = vunpack.c.l.b16 %v3902
        %v3999 = vunpack.c.l.b16 %v3903
        %v4000 = vunpack.c.l.b16 %v3904
        %v4001 = vunpack.c.l.b16 %v3905
        %v4002 = vunpack.c.l.b16 %v3906
        %v4003 = vpack.c.b16 %v3956, %v3955
        %v4004 = vpack.c.b16 %v3958, %v3957
        %v4005 = vpack.c.b16 %v3960, %v3959
        %v4006 = vpack.c.b16 %v3962, %v3961
        %v4007 = vpack.c.b16 %v3964, %v3963
        %v4008 = vpack.c.b16 %v3966, %v3965
        %v4009 = vpack.c.b16 %v3968, %v3967
        %v4010 = vpack.c.b16 %v3970, %v3969
        %v4011 = vpack.c.b16 %v3972, %v3971
        %v4012 = vpack.c.b16 %v3974, %v3973
        %v4013 = vpack.c.b16 %v3976, %v3975
        %v4014 = vpack.c.b16 %v3978, %v3977
        %v4015 = vpack.c.b16 %v3980, %v3979
        %v4016 = vpack.c.b16 %v3982, %v3981
        %v4017 = vpack.c.b16 %v3984, %v3983
        %v4018 = vpack.c.b16 %v3986, %v3985
        %v4019 = vpack.c.b16 %v3988, %v3987
        %v4020 = vpack.c.b16 %v3990, %v3989
        %v4021 = vpack.c.b16 %v3992, %v3991
        %v4022 = vpack.c.b16 %v3994, %v3993
        %v4023 = vpack.c.b16 %v3996, %v3995
        %v4024 = vpack.c.b16 %v3998, %v3997
        %v4025 = vpack.c.b16 %v4000, %v3999
        %v4026 = vpack.c.b16 %v4002, %v4001
        %4051 = vmatpush.bf16.msra.mxu0 %v4010
        %4052 = vmatpush.bf16.msra.mxu0 %v4009
        %4053 = vmatpush.bf16.msra.mxu0 %v4008
        %4054 = vmatpush.bf16.msra.mxu0 %v4007
        %4055 = vmatpush.bf16.msra.mxu0 %v4006
        %4056 = vmatpush.bf16.msra.mxu0 %v4005
        %4057 = vmatpush.bf16.msra.mxu0 %v4004
        %4058 = vmatpush.bf16.msra.mxu0 %v4003
        %4059 = vmatmul.bf16.gmra.mxu0 %v3762
        %v4060 = vpop.f32.mrf.mxu0
        %v4061 = vadd.f32 0.0, %v4060
        %v4062 = vpop.f32.mrf.mxu0
        %v4063 = vadd.f32 0.0, %v4062
        %4064 = vmatmul.bf16.gmra.mxu0 %v3765
        %v4065 = vpop.f32.mrf.mxu0
        %v4066 = vadd.f32 0.0, %v4065
        %v4067 = vpop.f32.mrf.mxu0
        %v4068 = vadd.f32 0.0, %v4067
        %4069 = vmatmul.bf16.gmra.mxu0 %v3768
        %v4070 = vpop.f32.mrf.mxu0
        %v4071 = vadd.f32 0.0, %v4070
        %v4072 = vpop.f32.mrf.mxu0
        %v4073 = vadd.f32 0.0, %v4072
        %4074 = vmatmul.bf16.gmra.mxu0 %v3771
        %v4075 = vpop.f32.mrf.mxu0
        %v4076 = vadd.f32 0.0, %v4075
        %v4077 = vpop.f32.mrf.mxu0
        %v4078 = vadd.f32 0.0, %v4077
        %4079 = vmatmul.bf16.gmra.mxu0 %v3774
        %v4080 = vpop.f32.mrf.mxu0
        %v4081 = vadd.f32 0.0, %v4080
        %v4082 = vpop.f32.mrf.mxu0
        %v4083 = vadd.f32 0.0, %v4082
        %4084 = vmatmul.bf16.gmra.mxu0 %v3777
        %v4085 = vpop.f32.mrf.mxu0
        %v4086 = vadd.f32 0.0, %v4085
        %v4087 = vpop.f32.mrf.mxu0
        %v4088 = vadd.f32 0.0, %v4087
        %4089 = vmatmul.bf16.gmra.mxu0 %v3780
        %v4090 = vpop.f32.mrf.mxu0
        %v4091 = vadd.f32 0.0, %v4090
        %v4092 = vpop.f32.mrf.mxu0
        %v4093 = vadd.f32 0.0, %v4092
        %4094 = vmatmul.bf16.gmra.mxu0 %v3783
        %v4095 = vpop.f32.mrf.mxu0
        %v4096 = vadd.f32 0.0, %v4095
        %v4097 = vpop.f32.mrf.mxu0
        %v4098 = vadd.f32 0.0, %v4097
        %4099 = vmatmul.bf16.gmra.mxu0 %v3786
        %v4100 = vpop.f32.mrf.mxu0
        %v4101 = vadd.f32 0.0, %v4100
        %v4102 = vpop.f32.mrf.mxu0
        %v4103 = vadd.f32 0.0, %v4102
        %4104 = vmatmul.bf16.gmra.mxu0 %v3789
        %v4105 = vpop.f32.mrf.mxu0
        %v4106 = vadd.f32 0.0, %v4105
        %v4107 = vpop.f32.mrf.mxu0
        %v4108 = vadd.f32 0.0, %v4107
        %4109 = vmatmul.bf16.gmra.mxu0 %v3792
        %v4110 = vpop.f32.mrf.mxu0
        %v4111 = vadd.f32 0.0, %v4110
        %v4112 = vpop.f32.mrf.mxu0
        %v4113 = vadd.f32 0.0, %v4112
        %4114 = vmatmul.bf16.gmra.mxu0 %v3795
        %v4115 = vpop.f32.mrf.mxu0
        %v4116 = vadd.f32 0.0, %v4115
        %v4117 = vpop.f32.mrf.mxu0
        %v4118 = vadd.f32 0.0, %v4117
        %4119 = vmatmul.bf16.gmra.mxu0 %v3798
        %v4120 = vpop.f32.mrf.mxu0
        %v4121 = vadd.f32 0.0, %v4120
        %v4122 = vpop.f32.mrf.mxu0
        %v4123 = vadd.f32 0.0, %v4122
        %4124 = vmatmul.bf16.gmra.mxu0 %v3801
        %v4125 = vpop.f32.mrf.mxu0
        %v4126 = vadd.f32 0.0, %v4125
        %v4127 = vpop.f32.mrf.mxu0
        %v4128 = vadd.f32 0.0, %v4127
        %4129 = vmatmul.bf16.gmra.mxu0 %v3804
        %v4130 = vpop.f32.mrf.mxu0
        %v4131 = vadd.f32 0.0, %v4130
        %v4132 = vpop.f32.mrf.mxu0
        %v4133 = vadd.f32 0.0, %v4132
        %4134 = vmatmul.bf16.gmra.mxu0 %v3855
        %v4135 = vpop.f32.mrf.mxu0
        %v4136 = vadd.f32 0.0, %v4135
        %v4137 = vpop.f32.mrf.mxu0
        %v4138 = vadd.f32 0.0, %v4137
        %4139 = vdwg.mxu0
        %4140 = vmatpush.bf16.msra.mxu0 %v4018
        %4141 = vmatpush.bf16.msra.mxu0 %v4017
        %4142 = vmatpush.bf16.msra.mxu0 %v4016
        %4143 = vmatpush.bf16.msra.mxu0 %v4015
        %4144 = vmatpush.bf16.msra.mxu0 %v4014
        %4145 = vmatpush.bf16.msra.mxu0 %v4013
        %4146 = vmatpush.bf16.msra.mxu0 %v4012
        %4147 = vmatpush.bf16.msra.mxu0 %v4011
        %4148 = vmatmul.bf16.gmra.mxu0 %v3763
        %v4149 = vpop.f32.mrf.mxu0
        %v4150 = vadd.f32 %v4061, %v4149
        %v4151 = vpop.f32.mrf.mxu0
        %v4152 = vadd.f32 %v4063, %v4151
        %4153 = vmatmul.bf16.gmra.mxu0 %v3766
        %v4154 = vpop.f32.mrf.mxu0
        %v4155 = vadd.f32 %v4066, %v4154
        %v4156 = vpop.f32.mrf.mxu0
        %v4157 = vadd.f32 %v4068, %v4156
        %4158 = vmatmul.bf16.gmra.mxu0 %v3769
        %v4159 = vpop.f32.mrf.mxu0
        %v4160 = vadd.f32 %v4071, %v4159
        %v4161 = vpop.f32.mrf.mxu0
        %v4162 = vadd.f32 %v4073, %v4161
        %4163 = vmatmul.bf16.gmra.mxu0 %v3772
        %v4164 = vpop.f32.mrf.mxu0
        %v4165 = vadd.f32 %v4076, %v4164
        %v4166 = vpop.f32.mrf.mxu0
        %v4167 = vadd.f32 %v4078, %v4166
        %4168 = vmatmul.bf16.gmra.mxu0 %v3775
        %v4169 = vpop.f32.mrf.mxu0
        %v4170 = vadd.f32 %v4081, %v4169
        %v4171 = vpop.f32.mrf.mxu0
        %v4172 = vadd.f32 %v4083, %v4171
        %4173 = vmatmul.bf16.gmra.mxu0 %v3778
        %v4174 = vpop.f32.mrf.mxu0
        %v4175 = vadd.f32 %v4086, %v4174
        %v4176 = vpop.f32.mrf.mxu0
        %v4177 = vadd.f32 %v4088, %v4176
        %4178 = vmatmul.bf16.gmra.mxu0 %v3781
        %v4179 = vpop.f32.mrf.mxu0
        %v4180 = vadd.f32 %v4091, %v4179
        %v4181 = vpop.f32.mrf.mxu0
        %v4182 = vadd.f32 %v4093, %v4181
        %4183 = vmatmul.bf16.gmra.mxu0 %v3784
        %v4184 = vpop.f32.mrf.mxu0
        %v4185 = vadd.f32 %v4096, %v4184
        %v4186 = vpop.f32.mrf.mxu0
        %v4187 = vadd.f32 %v4098, %v4186
        %4188 = vmatmul.bf16.gmra.mxu0 %v3787
        %v4189 = vpop.f32.mrf.mxu0
        %v4190 = vadd.f32 %v4101, %v4189
        %v4191 = vpop.f32.mrf.mxu0
        %v4192 = vadd.f32 %v4103, %v4191
        %4193 = vmatmul.bf16.gmra.mxu0 %v3790
        %v4194 = vpop.f32.mrf.mxu0
        %v4195 = vadd.f32 %v4106, %v4194
        %v4196 = vpop.f32.mrf.mxu0
        %v4197 = vadd.f32 %v4108, %v4196
        %4198 = vmatmul.bf16.gmra.mxu0 %v3793
        %v4199 = vpop.f32.mrf.mxu0
        %v4200 = vadd.f32 %v4111, %v4199
        %v4201 = vpop.f32.mrf.mxu0
        %v4202 = vadd.f32 %v4113, %v4201
        %4203 = vmatmul.bf16.gmra.mxu0 %v3796
        %v4204 = vpop.f32.mrf.mxu0
        %v4205 = vadd.f32 %v4116, %v4204
        %v4206 = vpop.f32.mrf.mxu0
        %v4207 = vadd.f32 %v4118, %v4206
        %4208 = vmatmul.bf16.gmra.mxu0 %v3799
        %v4209 = vpop.f32.mrf.mxu0
        %v4210 = vadd.f32 %v4121, %v4209
        %v4211 = vpop.f32.mrf.mxu0
        %v4212 = vadd.f32 %v4123, %v4211
        %4213 = vmatmul.bf16.gmra.mxu0 %v3802
        %v4214 = vpop.f32.mrf.mxu0
        %v4215 = vadd.f32 %v4126, %v4214
        %v4216 = vpop.f32.mrf.mxu0
        %v4217 = vadd.f32 %v4128, %v4216
        %4218 = vmatmul.bf16.gmra.mxu0 %v3805
        %v4219 = vpop.f32.mrf.mxu0
        %v4220 = vadd.f32 %v4131, %v4219
        %v4221 = vpop.f32.mrf.mxu0
        %v4222 = vadd.f32 %v4133, %v4221
        %4223 = vmatmul.bf16.gmra.mxu0 %v3856
        %v4224 = vpop.f32.mrf.mxu0
        %v4225 = vadd.f32 %v4136, %v4224
        %v4226 = vpop.f32.mrf.mxu0
        %v4227 = vadd.f32 %v4138, %v4226
        %4228 = vdwg.mxu0
        %4229 = vmatpush.bf16.msra.mxu0 %v4026
        %4230 = vmatpush.bf16.msra.mxu0 %v4025
        %4231 = vmatpush.bf16.msra.mxu0 %v4024
        %4232 = vmatpush.bf16.msra.mxu0 %v4023
        %4233 = vmatpush.bf16.msra.mxu0 %v4022
        %4234 = vmatpush.bf16.msra.mxu0 %v4021
        %4235 = vmatpush.bf16.msra.mxu0 %v4020
        %4236 = vmatpush.bf16.msra.mxu0 %v4019
        %4237 = vmatmul.bf16.gmra.mxu0 %v3764
        %v4238 = vpop.f32.mrf.mxu0
        %v4239 = vadd.f32 %v4150, %v4238
        %v4240 = vpop.f32.mrf.mxu0
        %v4241 = vadd.f32 %v4152, %v4240
        %4242 = vmatmul.bf16.gmra.mxu0 %v3767
        %v4243 = vpop.f32.mrf.mxu0
        %v4244 = vadd.f32 %v4155, %v4243
        %v4245 = vpop.f32.mrf.mxu0
        %v4246 = vadd.f32 %v4157, %v4245
        %4247 = vmatmul.bf16.gmra.mxu0 %v3770
        %v4248 = vpop.f32.mrf.mxu0
        %v4249 = vadd.f32 %v4160, %v4248
        %v4250 = vpop.f32.mrf.mxu0
        %v4251 = vadd.f32 %v4162, %v4250
        %4252 = vmatmul.bf16.gmra.mxu0 %v3773
        %v4253 = vpop.f32.mrf.mxu0
        %v4254 = vadd.f32 %v4165, %v4253
        %v4255 = vpop.f32.mrf.mxu0
        %v4256 = vadd.f32 %v4167, %v4255
        %4257 = vmatmul.bf16.gmra.mxu0 %v3776
        %v4258 = vpop.f32.mrf.mxu0
        %v4259 = vadd.f32 %v4170, %v4258
        %v4260 = vpop.f32.mrf.mxu0
        %v4261 = vadd.f32 %v4172, %v4260
        %4262 = vmatmul.bf16.gmra.mxu0 %v3779
        %v4263 = vpop.f32.mrf.mxu0
        %v4264 = vadd.f32 %v4175, %v4263
        %v4265 = vpop.f32.mrf.mxu0
        %v4266 = vadd.f32 %v4177, %v4265
        %4267 = vmatmul.bf16.gmra.mxu0 %v3782
        %v4268 = vpop.f32.mrf.mxu0
        %v4269 = vadd.f32 %v4180, %v4268
        %v4270 = vpop.f32.mrf.mxu0
        %v4271 = vadd.f32 %v4182, %v4270
        %4272 = vmatmul.bf16.gmra.mxu0 %v3785
        %v4273 = vpop.f32.mrf.mxu0
        %v4274 = vadd.f32 %v4185, %v4273
        %v4275 = vpop.f32.mrf.mxu0
        %v4276 = vadd.f32 %v4187, %v4275
        %4277 = vmatmul.bf16.gmra.mxu0 %v3788
        %v4278 = vpop.f32.mrf.mxu0
        %v4279 = vadd.f32 %v4190, %v4278
        %v4280 = vpop.f32.mrf.mxu0
        %v4281 = vadd.f32 %v4192, %v4280
        %4282 = vmatmul.bf16.gmra.mxu0 %v3791
        %v4283 = vpop.f32.mrf.mxu0
        %v4284 = vadd.f32 %v4195, %v4283
        %v4285 = vpop.f32.mrf.mxu0
        %v4286 = vadd.f32 %v4197, %v4285
        %4287 = vmatmul.bf16.gmra.mxu0 %v3794
        %v4288 = vpop.f32.mrf.mxu0
        %v4289 = vadd.f32 %v4200, %v4288
        %v4290 = vpop.f32.mrf.mxu0
        %v4291 = vadd.f32 %v4202, %v4290
        %4292 = vmatmul.bf16.gmra.mxu0 %v3797
        %v4293 = vpop.f32.mrf.mxu0
        %v4294 = vadd.f32 %v4205, %v4293
        %v4295 = vpop.f32.mrf.mxu0
        %v4296 = vadd.f32 %v4207, %v4295
        %4297 = vmatmul.bf16.gmra.mxu0 %v3800
        %v4298 = vpop.f32.mrf.mxu0
        %v4299 = vadd.f32 %v4210, %v4298
        %v4300 = vpop.f32.mrf.mxu0
        %v4301 = vadd.f32 %v4212, %v4300
        %4302 = vmatmul.bf16.gmra.mxu0 %v3803
        %v4303 = vpop.f32.mrf.mxu0
        %v4304 = vadd.f32 %v4215, %v4303
        %v4305 = vpop.f32.mrf.mxu0
        %v4306 = vadd.f32 %v4217, %v4305
        %4307 = vmatmul.bf16.gmra.mxu0 %v3806
        %v4308 = vpop.f32.mrf.mxu0
        %v4309 = vadd.f32 %v4220, %v4308
        %v4310 = vpop.f32.mrf.mxu0
        %v4311 = vadd.f32 %v4222, %v4310
        %4312 = vmatmul.bf16.gmra.mxu0 %v3857
        %v4313 = vpop.f32.mrf.mxu0
        %v4314 = vadd.f32 %v4225, %v4313
        %v4315 = vpop.f32.mrf.mxu0
        %v4316 = vadd.f32 %v4227, %v4315
        %4317 = vdwg.mxu0
        %v4366 = vunpack.c.l.b16 %v3807
        %v4367 = vunpack.c.l.b16 %v3808
        %v4368 = vunpack.c.l.b16 %v3809
        %v4369 = vunpack.c.l.b16 %v3810
        %v4370 = vunpack.c.l.b16 %v3811
        %v4371 = vunpack.c.l.b16 %v3812
        %v4372 = vunpack.c.l.b16 %v3813
        %v4373 = vunpack.c.l.b16 %v3814
        %v4374 = vunpack.c.l.b16 %v3815
        %v4375 = vunpack.c.l.b16 %v3816
        %v4376 = vunpack.c.l.b16 %v3817
        %v4377 = vunpack.c.l.b16 %v3818
        %v4378 = vunpack.c.l.b16 %v3819
        %v4379 = vunpack.c.l.b16 %v3820
        %v4380 = vunpack.c.l.b16 %v3821
        %v4381 = vunpack.c.l.b16 %v3822
        %v4382 = vunpack.c.l.b16 %v3823
        %v4383 = vunpack.c.l.b16 %v3824
        %v4384 = vunpack.c.l.b16 %v3825
        %v4385 = vunpack.c.l.b16 %v3826
        %v4386 = vunpack.c.l.b16 %v3827
        %v4387 = vunpack.c.l.b16 %v3828
        %v4388 = vunpack.c.l.b16 %v3829
        %v4389 = vunpack.c.l.b16 %v3830
        %v4390 = vunpack.c.l.b16 %v3831
        %v4391 = vunpack.c.l.b16 %v3832
        %v4392 = vunpack.c.l.b16 %v3833
        %v4393 = vunpack.c.l.b16 %v3834
        %v4394 = vunpack.c.l.b16 %v3835
        %v4395 = vunpack.c.l.b16 %v3836
        %v4396 = vunpack.c.l.b16 %v3837
        %v4397 = vunpack.c.l.b16 %v3838
        %v4398 = vunpack.c.l.b16 %v3839
        %v4399 = vunpack.c.l.b16 %v3840
        %v4400 = vunpack.c.l.b16 %v3841
        %v4401 = vunpack.c.l.b16 %v3842
        %v4402 = vunpack.c.l.b16 %v3843
        %v4403 = vunpack.c.l.b16 %v3844
        %v4404 = vunpack.c.l.b16 %v3845
        %v4405 = vunpack.c.l.b16 %v3846
        %v4406 = vunpack.c.l.b16 %v3847
        %v4407 = vunpack.c.l.b16 %v3848
        %v4408 = vunpack.c.l.b16 %v3849
        %v4409 = vunpack.c.l.b16 %v3850
        %v4410 = vunpack.c.l.b16 %v3851
        %v4411 = vunpack.c.l.b16 %v3852
        %v4412 = vunpack.c.l.b16 %v3853
        %v4413 = vunpack.c.l.b16 %v3854
        %v4414 = vpack.c.b16 %v4367, %v4366
        %v4415 = vpack.c.b16 %v4369, %v4368
        %v4416 = vpack.c.b16 %v4371, %v4370
        %v4417 = vpack.c.b16 %v4373, %v4372
        %v4418 = vpack.c.b16 %v4375, %v4374
        %v4419 = vpack.c.b16 %v4377, %v4376
        %v4420 = vpack.c.b16 %v4379, %v4378
        %v4421 = vpack.c.b16 %v4381, %v4380
        %v4422 = vpack.c.b16 %v4383, %v4382
        %v4423 = vpack.c.b16 %v4385, %v4384
        %v4424 = vpack.c.b16 %v4387, %v4386
        %v4425 = vpack.c.b16 %v4389, %v4388
        %v4426 = vpack.c.b16 %v4391, %v4390
        %v4427 = vpack.c.b16 %v4393, %v4392
        %v4428 = vpack.c.b16 %v4395, %v4394
        %v4429 = vpack.c.b16 %v4397, %v4396
        %v4430 = vpack.c.b16 %v4399, %v4398
        %v4431 = vpack.c.b16 %v4401, %v4400
        %v4432 = vpack.c.b16 %v4403, %v4402
        %v4433 = vpack.c.b16 %v4405, %v4404
        %v4434 = vpack.c.b16 %v4407, %v4406
        %v4435 = vpack.c.b16 %v4409, %v4408
        %v4436 = vpack.c.b16 %v4411, %v4410
        %v4437 = vpack.c.b16 %v4413, %v4412
        %4462 = vmatpush.bf16.msra.mxu0 %v4421
        %4463 = vmatpush.bf16.msra.mxu0 %v4420
        %4464 = vmatpush.bf16.msra.mxu0 %v4419
        %4465 = vmatpush.bf16.msra.mxu0 %v4418
        %4466 = vmatpush.bf16.msra.mxu0 %v4417
        %4467 = vmatpush.bf16.msra.mxu0 %v4416
        %4468 = vmatpush.bf16.msra.mxu0 %v4415
        %4469 = vmatpush.bf16.msra.mxu0 %v4414
        %4470 = vmatmul.bf16.gmra.mxu0 %v3759
        %v4471 = vpop.f32.mrf.mxu0
        %v4472 = vadd.f32 %v4239, %v4471
        %v4473 = vpop.f32.mrf.mxu0
        %v4474 = vadd.f32 %v4241, %v4473
        %4475 = vmatmul.bf16.gmra.mxu0 %v3762
        %v4476 = vpop.f32.mrf.mxu0
        %v4477 = vadd.f32 %v4244, %v4476
        %v4478 = vpop.f32.mrf.mxu0
        %v4479 = vadd.f32 %v4246, %v4478
        %4480 = vmatmul.bf16.gmra.mxu0 %v3765
        %v4481 = vpop.f32.mrf.mxu0
        %v4482 = vadd.f32 %v4249, %v4481
        %v4483 = vpop.f32.mrf.mxu0
        %v4484 = vadd.f32 %v4251, %v4483
        %4485 = vmatmul.bf16.gmra.mxu0 %v3768
        %v4486 = vpop.f32.mrf.mxu0
        %v4487 = vadd.f32 %v4254, %v4486
        %v4488 = vpop.f32.mrf.mxu0
        %v4489 = vadd.f32 %v4256, %v4488
        %4490 = vmatmul.bf16.gmra.mxu0 %v3771
        %v4491 = vpop.f32.mrf.mxu0
        %v4492 = vadd.f32 %v4259, %v4491
        %v4493 = vpop.f32.mrf.mxu0
        %v4494 = vadd.f32 %v4261, %v4493
        %4495 = vmatmul.bf16.gmra.mxu0 %v3774
        %v4496 = vpop.f32.mrf.mxu0
        %v4497 = vadd.f32 %v4264, %v4496
        %v4498 = vpop.f32.mrf.mxu0
        %v4499 = vadd.f32 %v4266, %v4498
        %4500 = vmatmul.bf16.gmra.mxu0 %v3777
        %v4501 = vpop.f32.mrf.mxu0
        %v4502 = vadd.f32 %v4269, %v4501
        %v4503 = vpop.f32.mrf.mxu0
        %v4504 = vadd.f32 %v4271, %v4503
        %4505 = vmatmul.bf16.gmra.mxu0 %v3780
        %v4506 = vpop.f32.mrf.mxu0
        %v4507 = vadd.f32 %v4274, %v4506
        %v4508 = vpop.f32.mrf.mxu0
        %v4509 = vadd.f32 %v4276, %v4508
        %4510 = vmatmul.bf16.gmra.mxu0 %v3783
        %v4511 = vpop.f32.mrf.mxu0
        %v4512 = vadd.f32 %v4279, %v4511
        %v4513 = vpop.f32.mrf.mxu0
        %v4514 = vadd.f32 %v4281, %v4513
        %4515 = vmatmul.bf16.gmra.mxu0 %v3786
        %v4516 = vpop.f32.mrf.mxu0
        %v4517 = vadd.f32 %v4284, %v4516
        %v4518 = vpop.f32.mrf.mxu0
        %v4519 = vadd.f32 %v4286, %v4518
        %4520 = vmatmul.bf16.gmra.mxu0 %v3789
        %v4521 = vpop.f32.mrf.mxu0
        %v4522 = vadd.f32 %v4289, %v4521
        %v4523 = vpop.f32.mrf.mxu0
        %v4524 = vadd.f32 %v4291, %v4523
        %4525 = vmatmul.bf16.gmra.mxu0 %v3792
        %v4526 = vpop.f32.mrf.mxu0
        %v4527 = vadd.f32 %v4294, %v4526
        %v4528 = vpop.f32.mrf.mxu0
        %v4529 = vadd.f32 %v4296, %v4528
        %4530 = vmatmul.bf16.gmra.mxu0 %v3795
        %v4531 = vpop.f32.mrf.mxu0
        %v4532 = vadd.f32 %v4299, %v4531
        %v4533 = vpop.f32.mrf.mxu0
        %v4534 = vadd.f32 %v4301, %v4533
        %4535 = vmatmul.bf16.gmra.mxu0 %v3798
        %v4536 = vpop.f32.mrf.mxu0
        %v4537 = vadd.f32 %v4304, %v4536
        %v4538 = vpop.f32.mrf.mxu0
        %v4539 = vadd.f32 %v4306, %v4538
        %4540 = vmatmul.bf16.gmra.mxu0 %v3801
        %v4541 = vpop.f32.mrf.mxu0
        %v4542 = vadd.f32 %v4309, %v4541
        %v4543 = vpop.f32.mrf.mxu0
        %v4544 = vadd.f32 %v4311, %v4543
        %4545 = vmatmul.bf16.gmra.mxu0 %v3804
        %v4546 = vpop.f32.mrf.mxu0
        %v4547 = vadd.f32 %v4314, %v4546
        %v4548 = vpop.f32.mrf.mxu0
        %v4549 = vadd.f32 %v4316, %v4548
        %4550 = vdwg.mxu0
        %4551 = vmatpush.bf16.msra.mxu0 %v4429
        %4552 = vmatpush.bf16.msra.mxu0 %v4428
        %4553 = vmatpush.bf16.msra.mxu0 %v4427
        %4554 = vmatpush.bf16.msra.mxu0 %v4426
        %4555 = vmatpush.bf16.msra.mxu0 %v4425
        %4556 = vmatpush.bf16.msra.mxu0 %v4424
        %4557 = vmatpush.bf16.msra.mxu0 %v4423
        %4558 = vmatpush.bf16.msra.mxu0 %v4422
        %4559 = vmatmul.bf16.gmra.mxu0 %v3760
        %v4560 = vpop.f32.mrf.mxu0
        %v4561 = vadd.f32 %v4472, %v4560
        %v4562 = vpop.f32.mrf.mxu0
        %v4563 = vadd.f32 %v4474, %v4562
        %4564 = vmatmul.bf16.gmra.mxu0 %v3763
        %v4565 = vpop.f32.mrf.mxu0
        %v4566 = vadd.f32 %v4477, %v4565
        %v4567 = vpop.f32.mrf.mxu0
        %v4568 = vadd.f32 %v4479, %v4567
        %4569 = vmatmul.bf16.gmra.mxu0 %v3766
        %v4570 = vpop.f32.mrf.mxu0
        %v4571 = vadd.f32 %v4482, %v4570
        %v4572 = vpop.f32.mrf.mxu0
        %v4573 = vadd.f32 %v4484, %v4572
        %4574 = vmatmul.bf16.gmra.mxu0 %v3769
        %v4575 = vpop.f32.mrf.mxu0
        %v4576 = vadd.f32 %v4487, %v4575
        %v4577 = vpop.f32.mrf.mxu0
        %v4578 = vadd.f32 %v4489, %v4577
        %4579 = vmatmul.bf16.gmra.mxu0 %v3772
        %v4580 = vpop.f32.mrf.mxu0
        %v4581 = vadd.f32 %v4492, %v4580
        %v4582 = vpop.f32.mrf.mxu0
        %v4583 = vadd.f32 %v4494, %v4582
        %4584 = vmatmul.bf16.gmra.mxu0 %v3775
        %v4585 = vpop.f32.mrf.mxu0
        %v4586 = vadd.f32 %v4497, %v4585
        %v4587 = vpop.f32.mrf.mxu0
        %v4588 = vadd.f32 %v4499, %v4587
        %4589 = vmatmul.bf16.gmra.mxu0 %v3778
        %v4590 = vpop.f32.mrf.mxu0
        %v4591 = vadd.f32 %v4502, %v4590
        %v4592 = vpop.f32.mrf.mxu0
        %v4593 = vadd.f32 %v4504, %v4592
        %4594 = vmatmul.bf16.gmra.mxu0 %v3781
        %v4595 = vpop.f32.mrf.mxu0
        %v4596 = vadd.f32 %v4507, %v4595
        %v4597 = vpop.f32.mrf.mxu0
        %v4598 = vadd.f32 %v4509, %v4597
        %4599 = vmatmul.bf16.gmra.mxu0 %v3784
        %v4600 = vpop.f32.mrf.mxu0
        %v4601 = vadd.f32 %v4512, %v4600
        %v4602 = vpop.f32.mrf.mxu0
        %v4603 = vadd.f32 %v4514, %v4602
        %4604 = vmatmul.bf16.gmra.mxu0 %v3787
        %v4605 = vpop.f32.mrf.mxu0
        %v4606 = vadd.f32 %v4517, %v4605
        %v4607 = vpop.f32.mrf.mxu0
        %v4608 = vadd.f32 %v4519, %v4607
        %4609 = vmatmul.bf16.gmra.mxu0 %v3790
        %v4610 = vpop.f32.mrf.mxu0
        %v4611 = vadd.f32 %v4522, %v4610
        %v4612 = vpop.f32.mrf.mxu0
        %v4613 = vadd.f32 %v4524, %v4612
        %4614 = vmatmul.bf16.gmra.mxu0 %v3793
        %v4615 = vpop.f32.mrf.mxu0
        %v4616 = vadd.f32 %v4527, %v4615
        %v4617 = vpop.f32.mrf.mxu0
        %v4618 = vadd.f32 %v4529, %v4617
        %4619 = vmatmul.bf16.gmra.mxu0 %v3796
        %v4620 = vpop.f32.mrf.mxu0
        %v4621 = vadd.f32 %v4532, %v4620
        %v4622 = vpop.f32.mrf.mxu0
        %v4623 = vadd.f32 %v4534, %v4622
        %4624 = vmatmul.bf16.gmra.mxu0 %v3799
        %v4625 = vpop.f32.mrf.mxu0
        %v4626 = vadd.f32 %v4537, %v4625
        %v4627 = vpop.f32.mrf.mxu0
        %v4628 = vadd.f32 %v4539, %v4627
        %4629 = vmatmul.bf16.gmra.mxu0 %v3802
        %v4630 = vpop.f32.mrf.mxu0
        %v4631 = vadd.f32 %v4542, %v4630
        %v4632 = vpop.f32.mrf.mxu0
        %v4633 = vadd.f32 %v4544, %v4632
        %4634 = vmatmul.bf16.gmra.mxu0 %v3805
        %v4635 = vpop.f32.mrf.mxu0
        %v4636 = vadd.f32 %v4547, %v4635
        %v4637 = vpop.f32.mrf.mxu0
        %v4638 = vadd.f32 %v4549, %v4637
        %4639 = vdwg.mxu0
        %4640 = vmatpush.bf16.msra.mxu0 %v4437
        %4641 = vmatpush.bf16.msra.mxu0 %v4436
        %4642 = vmatpush.bf16.msra.mxu0 %v4435
        %4643 = vmatpush.bf16.msra.mxu0 %v4434
        %4644 = vmatpush.bf16.msra.mxu0 %v4433
        %4645 = vmatpush.bf16.msra.mxu0 %v4432
        %4646 = vmatpush.bf16.msra.mxu0 %v4431
        %4647 = vmatpush.bf16.msra.mxu0 %v4430
        %4648 = vmatmul.bf16.gmra.mxu0 %v3761
        %v4649 = vpop.f32.mrf.mxu0
        %v4650 = vadd.f32 %v4561, %v4649
        %v4651 = vpop.f32.mrf.mxu0
        %v4652 = vadd.f32 %v4563, %v4651
        %4653 = vmatmul.bf16.gmra.mxu0 %v3764
        %v4654 = vpop.f32.mrf.mxu0
        %v4655 = vadd.f32 %v4566, %v4654
        %v4656 = vpop.f32.mrf.mxu0
        %v4657 = vadd.f32 %v4568, %v4656
        %4658 = vmatmul.bf16.gmra.mxu0 %v3767
        %v4659 = vpop.f32.mrf.mxu0
        %v4660 = vadd.f32 %v4571, %v4659
        %v4661 = vpop.f32.mrf.mxu0
        %v4662 = vadd.f32 %v4573, %v4661
        %4663 = vmatmul.bf16.gmra.mxu0 %v3770
        %v4664 = vpop.f32.mrf.mxu0
        %v4665 = vadd.f32 %v4576, %v4664
        %v4666 = vpop.f32.mrf.mxu0
        %v4667 = vadd.f32 %v4578, %v4666
        %4668 = vmatmul.bf16.gmra.mxu0 %v3773
        %v4669 = vpop.f32.mrf.mxu0
        %v4670 = vadd.f32 %v4581, %v4669
        %v4671 = vpop.f32.mrf.mxu0
        %v4672 = vadd.f32 %v4583, %v4671
        %4673 = vmatmul.bf16.gmra.mxu0 %v3776
        %v4674 = vpop.f32.mrf.mxu0
        %v4675 = vadd.f32 %v4586, %v4674
        %v4676 = vpop.f32.mrf.mxu0
        %v4677 = vadd.f32 %v4588, %v4676
        %4678 = vmatmul.bf16.gmra.mxu0 %v3779
        %v4679 = vpop.f32.mrf.mxu0
        %v4680 = vadd.f32 %v4591, %v4679
        %v4681 = vpop.f32.mrf.mxu0
        %v4682 = vadd.f32 %v4593, %v4681
        %4683 = vmatmul.bf16.gmra.mxu0 %v3782
        %v4684 = vpop.f32.mrf.mxu0
        %v4685 = vadd.f32 %v4596, %v4684
        %v4686 = vpop.f32.mrf.mxu0
        %v4687 = vadd.f32 %v4598, %v4686
        %4688 = vmatmul.bf16.gmra.mxu0 %v3785
        %v4689 = vpop.f32.mrf.mxu0
        %v4690 = vadd.f32 %v4601, %v4689
        %v4691 = vpop.f32.mrf.mxu0
        %v4692 = vadd.f32 %v4603, %v4691
        %4693 = vmatmul.bf16.gmra.mxu0 %v3788
        %v4694 = vpop.f32.mrf.mxu0
        %v4695 = vadd.f32 %v4606, %v4694
        %v4696 = vpop.f32.mrf.mxu0
        %v4697 = vadd.f32 %v4608, %v4696
        %4698 = vmatmul.bf16.gmra.mxu0 %v3791
        %v4699 = vpop.f32.mrf.mxu0
        %v4700 = vadd.f32 %v4611, %v4699
        %v4701 = vpop.f32.mrf.mxu0
        %v4702 = vadd.f32 %v4613, %v4701
        %4703 = vmatmul.bf16.gmra.mxu0 %v3794
        %v4704 = vpop.f32.mrf.mxu0
        %v4705 = vadd.f32 %v4616, %v4704
        %v4706 = vpop.f32.mrf.mxu0
        %v4707 = vadd.f32 %v4618, %v4706
        %4708 = vmatmul.bf16.gmra.mxu0 %v3797
        %v4709 = vpop.f32.mrf.mxu0
        %v4710 = vadd.f32 %v4621, %v4709
        %v4711 = vpop.f32.mrf.mxu0
        %v4712 = vadd.f32 %v4623, %v4711
        %4713 = vmatmul.bf16.gmra.mxu0 %v3800
        %v4714 = vpop.f32.mrf.mxu0
        %v4715 = vadd.f32 %v4626, %v4714
        %v4716 = vpop.f32.mrf.mxu0
        %v4717 = vadd.f32 %v4628, %v4716
        %4718 = vmatmul.bf16.gmra.mxu0 %v3803
        %v4719 = vpop.f32.mrf.mxu0
        %v4720 = vadd.f32 %v4631, %v4719
        %v4721 = vpop.f32.mrf.mxu0
        %v4722 = vadd.f32 %v4633, %v4721
        %4723 = vmatmul.bf16.gmra.mxu0 %v3806
        %v4724 = vpop.f32.mrf.mxu0
        %v4725 = vadd.f32 %v4636, %v4724
        %v4726 = vpop.f32.mrf.mxu0
        %v4727 = vadd.f32 %v4638, %v4726
        %4728 = vdwg.mxu0
        %v4729 = vpack.c.bf16 %v3686, %v3685
        %v4730 = vpack.c.bf16 %v3722, %v3721
        %v4731 = vpack.c.bf16 %v3758, %v3757
        %s4732 = scalar_lea.vmem [#allocation7], 384
        %v4733 = vld [vmem:[%s4732] sm:$0xf]
        %v4734 = vld [vmem:[%s4732 + $0x4] sm:$0xf]
        %v4735 = vld [vmem:[%s4732 + $0x8] sm:$0xf]
        %v4736 = vld [vmem:[%s4732 + $0xc] sm:$0xf]
        %v4737 = vld [vmem:[%s4732 + $0x10] sm:$0xf]
        %v4738 = vld [vmem:[%s4732 + $0x14] sm:$0xf]
        %v4739 = vld [vmem:[%s4732 + $0x18] sm:$0xf]
        %v4740 = vld [vmem:[%s4732 + $0x1c] sm:$0xf]
        %v4741 = vld [vmem:[%s4732 + $0x20] sm:$0xf]
        %v4742 = vld [vmem:[%s4732 + $0x24] sm:$0xf]
        %v4743 = vld [vmem:[%s4732 + $0x28] sm:$0xf]
        %v4744 = vld [vmem:[%s4732 + $0x2c] sm:$0xf]
        %v4745 = vld [vmem:[%s4732 + $0x30] sm:$0xf]
        %v4746 = vld [vmem:[%s4732 + $0x34] sm:$0xf]
        %v4747 = vld [vmem:[%s4732 + $0x38] sm:$0xf]
        %v4748 = vld [vmem:[%s4732 + $0x3c] sm:$0xf]
        %v4749 = vld [vmem:[%s4732 + $0x40] sm:$0xf]
        %v4750 = vld [vmem:[%s4732 + $0x44] sm:$0xf]
        %v4751 = vld [vmem:[%s4732 + $0x48] sm:$0xf]
        %v4752 = vld [vmem:[%s4732 + $0x4c] sm:$0xf]
        %v4753 = vld [vmem:[%s4732 + $0x50] sm:$0xf]
        %v4754 = vld [vmem:[%s4732 + $0x54] sm:$0xf]
        %v4755 = vld [vmem:[%s4732 + $0x58] sm:$0xf]
        %v4756 = vld [vmem:[%s4732 + $0x5c] sm:$0xf]
        %v4757 = vld [vmem:[%s4732 + $0x60] sm:$0xf]
        %v4758 = vld [vmem:[%s4732 + $0x64] sm:$0xf]
        %v4759 = vld [vmem:[%s4732 + $0x68] sm:$0xf]
        %v4760 = vld [vmem:[%s4732 + $0x6c] sm:$0xf]
        %v4761 = vld [vmem:[%s4732 + $0x70] sm:$0xf]
        %v4762 = vld [vmem:[%s4732 + $0x74] sm:$0xf]
        %v4763 = vld [vmem:[%s4732 + $0x78] sm:$0xf]
        %v4764 = vld [vmem:[%s4732 + $0x7c] sm:$0xf]
        %v4765 = vld [vmem:[%s4732 + $0x80] sm:$0xf]
        %v4766 = vld [vmem:[%s4732 + $0x84] sm:$0xf]
        %v4767 = vld [vmem:[%s4732 + $0x88] sm:$0xf]
        %v4768 = vld [vmem:[%s4732 + $0x8c] sm:$0xf]
        %v4769 = vld [vmem:[%s4732 + $0x90] sm:$0xf]
        %v4770 = vld [vmem:[%s4732 + $0x94] sm:$0xf]
        %v4771 = vld [vmem:[%s4732 + $0x98] sm:$0xf]
        %v4772 = vld [vmem:[%s4732 + $0x9c] sm:$0xf]
        %v4773 = vld [vmem:[%s4732 + $0xa0] sm:$0xf]
        %v4774 = vld [vmem:[%s4732 + $0xa4] sm:$0xf]
        %v4775 = vld [vmem:[%s4732 + $0xa8] sm:$0xf]
        %v4776 = vld [vmem:[%s4732 + $0xac] sm:$0xf]
        %v4777 = vld [vmem:[%s4732 + $0xb0] sm:$0xf]
        %v4778 = vld [vmem:[%s4732 + $0xb4] sm:$0xf]
        %v4779 = vld [vmem:[%s4732 + $0xb8] sm:$0xf]
        %v4780 = vld [vmem:[%s4732 + $0xbc] sm:$0xf]
        %v4829 = vunpack.c.l.b16 %v4733
        %v4830 = vunpack.c.l.b16 %v4734
        %v4831 = vunpack.c.l.b16 %v4735
        %v4832 = vunpack.c.l.b16 %v4736
        %v4833 = vunpack.c.l.b16 %v4737
        %v4834 = vunpack.c.l.b16 %v4738
        %v4835 = vunpack.c.l.b16 %v4739
        %v4836 = vunpack.c.l.b16 %v4740
        %v4837 = vunpack.c.l.b16 %v4741
        %v4838 = vunpack.c.l.b16 %v4742
        %v4839 = vunpack.c.l.b16 %v4743
        %v4840 = vunpack.c.l.b16 %v4744
        %v4841 = vunpack.c.l.b16 %v4745
        %v4842 = vunpack.c.l.b16 %v4746
        %v4843 = vunpack.c.l.b16 %v4747
        %v4844 = vunpack.c.l.b16 %v4748
        %v4845 = vunpack.c.l.b16 %v4749
        %v4846 = vunpack.c.l.b16 %v4750
        %v4847 = vunpack.c.l.b16 %v4751
        %v4848 = vunpack.c.l.b16 %v4752
        %v4849 = vunpack.c.l.b16 %v4753
        %v4850 = vunpack.c.l.b16 %v4754
        %v4851 = vunpack.c.l.b16 %v4755
        %v4852 = vunpack.c.l.b16 %v4756
        %v4853 = vunpack.c.l.b16 %v4757
        %v4854 = vunpack.c.l.b16 %v4758
        %v4855 = vunpack.c.l.b16 %v4759
        %v4856 = vunpack.c.l.b16 %v4760
        %v4857 = vunpack.c.l.b16 %v4761
        %v4858 = vunpack.c.l.b16 %v4762
        %v4859 = vunpack.c.l.b16 %v4763
        %v4860 = vunpack.c.l.b16 %v4764
        %v4861 = vunpack.c.l.b16 %v4765
        %v4862 = vunpack.c.l.b16 %v4766
        %v4863 = vunpack.c.l.b16 %v4767
        %v4864 = vunpack.c.l.b16 %v4768
        %v4865 = vunpack.c.l.b16 %v4769
        %v4866 = vunpack.c.l.b16 %v4770
        %v4867 = vunpack.c.l.b16 %v4771
        %v4868 = vunpack.c.l.b16 %v4772
        %v4869 = vunpack.c.l.b16 %v4773
        %v4870 = vunpack.c.l.b16 %v4774
        %v4871 = vunpack.c.l.b16 %v4775
        %v4872 = vunpack.c.l.b16 %v4776
        %v4873 = vunpack.c.l.b16 %v4777
        %v4874 = vunpack.c.l.b16 %v4778
        %v4875 = vunpack.c.l.b16 %v4779
        %v4876 = vunpack.c.l.b16 %v4780
        %v4877 = vpack.c.b16 %v4830, %v4829
        %v4878 = vpack.c.b16 %v4832, %v4831
        %v4879 = vpack.c.b16 %v4834, %v4833
        %v4880 = vpack.c.b16 %v4836, %v4835
        %v4881 = vpack.c.b16 %v4838, %v4837
        %v4882 = vpack.c.b16 %v4840, %v4839
        %v4883 = vpack.c.b16 %v4842, %v4841
        %v4884 = vpack.c.b16 %v4844, %v4843
        %v4885 = vpack.c.b16 %v4846, %v4845
        %v4886 = vpack.c.b16 %v4848, %v4847
        %v4887 = vpack.c.b16 %v4850, %v4849
        %v4888 = vpack.c.b16 %v4852, %v4851
        %v4889 = vpack.c.b16 %v4854, %v4853
        %v4890 = vpack.c.b16 %v4856, %v4855
        %v4891 = vpack.c.b16 %v4858, %v4857
        %v4892 = vpack.c.b16 %v4860, %v4859
        %v4893 = vpack.c.b16 %v4862, %v4861
        %v4894 = vpack.c.b16 %v4864, %v4863
        %v4895 = vpack.c.b16 %v4866, %v4865
        %v4896 = vpack.c.b16 %v4868, %v4867
        %v4897 = vpack.c.b16 %v4870, %v4869
        %v4898 = vpack.c.b16 %v4872, %v4871
        %v4899 = vpack.c.b16 %v4874, %v4873
        %v4900 = vpack.c.b16 %v4876, %v4875
        %4925 = vmatpush.bf16.msra.mxu0 %v4884
        %4926 = vmatpush.bf16.msra.mxu0 %v4883
        %4927 = vmatpush.bf16.msra.mxu0 %v4882
        %4928 = vmatpush.bf16.msra.mxu0 %v4881
        %4929 = vmatpush.bf16.msra.mxu0 %v4880
        %4930 = vmatpush.bf16.msra.mxu0 %v4879
        %4931 = vmatpush.bf16.msra.mxu0 %v4878
        %4932 = vmatpush.bf16.msra.mxu0 %v4877
        %4933 = vmatmul.bf16.gmra.mxu0 %v3765
        %v4934 = vpop.f32.mrf.mxu0
        %v4935 = vadd.f32 0.0, %v4934
        %v4936 = vpop.f32.mrf.mxu0
        %v4937 = vadd.f32 0.0, %v4936
        %4938 = vmatmul.bf16.gmra.mxu0 %v3768
        %v4939 = vpop.f32.mrf.mxu0
        %v4940 = vadd.f32 0.0, %v4939
        %v4941 = vpop.f32.mrf.mxu0
        %v4942 = vadd.f32 0.0, %v4941
        %4943 = vmatmul.bf16.gmra.mxu0 %v3771
        %v4944 = vpop.f32.mrf.mxu0
        %v4945 = vadd.f32 0.0, %v4944
        %v4946 = vpop.f32.mrf.mxu0
        %v4947 = vadd.f32 0.0, %v4946
        %4948 = vmatmul.bf16.gmra.mxu0 %v3774
        %v4949 = vpop.f32.mrf.mxu0
        %v4950 = vadd.f32 0.0, %v4949
        %v4951 = vpop.f32.mrf.mxu0
        %v4952 = vadd.f32 0.0, %v4951
        %4953 = vmatmul.bf16.gmra.mxu0 %v3777
        %v4954 = vpop.f32.mrf.mxu0
        %v4955 = vadd.f32 0.0, %v4954
        %v4956 = vpop.f32.mrf.mxu0
        %v4957 = vadd.f32 0.0, %v4956
        %4958 = vmatmul.bf16.gmra.mxu0 %v3780
        %v4959 = vpop.f32.mrf.mxu0
        %v4960 = vadd.f32 0.0, %v4959
        %v4961 = vpop.f32.mrf.mxu0
        %v4962 = vadd.f32 0.0, %v4961
        %4963 = vmatmul.bf16.gmra.mxu0 %v3783
        %v4964 = vpop.f32.mrf.mxu0
        %v4965 = vadd.f32 0.0, %v4964
        %v4966 = vpop.f32.mrf.mxu0
        %v4967 = vadd.f32 0.0, %v4966
        %4968 = vmatmul.bf16.gmra.mxu0 %v3786
        %v4969 = vpop.f32.mrf.mxu0
        %v4970 = vadd.f32 0.0, %v4969
        %v4971 = vpop.f32.mrf.mxu0
        %v4972 = vadd.f32 0.0, %v4971
        %4973 = vmatmul.bf16.gmra.mxu0 %v3789
        %v4974 = vpop.f32.mrf.mxu0
        %v4975 = vadd.f32 0.0, %v4974
        %v4976 = vpop.f32.mrf.mxu0
        %v4977 = vadd.f32 0.0, %v4976
        %4978 = vmatmul.bf16.gmra.mxu0 %v3792
        %v4979 = vpop.f32.mrf.mxu0
        %v4980 = vadd.f32 0.0, %v4979
        %v4981 = vpop.f32.mrf.mxu0
        %v4982 = vadd.f32 0.0, %v4981
        %4983 = vmatmul.bf16.gmra.mxu0 %v3795
        %v4984 = vpop.f32.mrf.mxu0
        %v4985 = vadd.f32 0.0, %v4984
        %v4986 = vpop.f32.mrf.mxu0
        %v4987 = vadd.f32 0.0, %v4986
        %4988 = vmatmul.bf16.gmra.mxu0 %v3798
        %v4989 = vpop.f32.mrf.mxu0
        %v4990 = vadd.f32 0.0, %v4989
        %v4991 = vpop.f32.mrf.mxu0
        %v4992 = vadd.f32 0.0, %v4991
        %4993 = vmatmul.bf16.gmra.mxu0 %v3801
        %v4994 = vpop.f32.mrf.mxu0
        %v4995 = vadd.f32 0.0, %v4994
        %v4996 = vpop.f32.mrf.mxu0
        %v4997 = vadd.f32 0.0, %v4996
        %4998 = vmatmul.bf16.gmra.mxu0 %v3804
        %v4999 = vpop.f32.mrf.mxu0
        %v5000 = vadd.f32 0.0, %v4999
        %v5001 = vpop.f32.mrf.mxu0
        %v5002 = vadd.f32 0.0, %v5001
        %5003 = vmatmul.bf16.gmra.mxu0 %v3855
        %v5004 = vpop.f32.mrf.mxu0
        %v5005 = vadd.f32 0.0, %v5004
        %v5006 = vpop.f32.mrf.mxu0
        %v5007 = vadd.f32 0.0, %v5006
        %5008 = vmatmul.bf16.gmra.mxu0 %v4729
        %v5009 = vpop.f32.mrf.mxu0
        %v5010 = vadd.f32 0.0, %v5009
        %v5011 = vpop.f32.mrf.mxu0
        %v5012 = vadd.f32 0.0, %v5011
        %5013 = vdwg.mxu0
        %5014 = vmatpush.bf16.msra.mxu0 %v4892
        %5015 = vmatpush.bf16.msra.mxu0 %v4891
        %5016 = vmatpush.bf16.msra.mxu0 %v4890
        %5017 = vmatpush.bf16.msra.mxu0 %v4889
        %5018 = vmatpush.bf16.msra.mxu0 %v4888
        %5019 = vmatpush.bf16.msra.mxu0 %v4887
        %5020 = vmatpush.bf16.msra.mxu0 %v4886
        %5021 = vmatpush.bf16.msra.mxu0 %v4885
        %5022 = vmatmul.bf16.gmra.mxu0 %v3766
        %v5023 = vpop.f32.mrf.mxu0
        %v5024 = vadd.f32 %v4935, %v5023
        %v5025 = vpop.f32.mrf.mxu0
        %v5026 = vadd.f32 %v4937, %v5025
        %5027 = vmatmul.bf16.gmra.mxu0 %v3769
        %v5028 = vpop.f32.mrf.mxu0
        %v5029 = vadd.f32 %v4940, %v5028
        %v5030 = vpop.f32.mrf.mxu0
        %v5031 = vadd.f32 %v4942, %v5030
        %5032 = vmatmul.bf16.gmra.mxu0 %v3772
        %v5033 = vpop.f32.mrf.mxu0
        %v5034 = vadd.f32 %v4945, %v5033
        %v5035 = vpop.f32.mrf.mxu0
        %v5036 = vadd.f32 %v4947, %v5035
        %5037 = vmatmul.bf16.gmra.mxu0 %v3775
        %v5038 = vpop.f32.mrf.mxu0
        %v5039 = vadd.f32 %v4950, %v5038
        %v5040 = vpop.f32.mrf.mxu0
        %v5041 = vadd.f32 %v4952, %v5040
        %5042 = vmatmul.bf16.gmra.mxu0 %v3778
        %v5043 = vpop.f32.mrf.mxu0
        %v5044 = vadd.f32 %v4955, %v5043
        %v5045 = vpop.f32.mrf.mxu0
        %v5046 = vadd.f32 %v4957, %v5045
        %5047 = vmatmul.bf16.gmra.mxu0 %v3781
        %v5048 = vpop.f32.mrf.mxu0
        %v5049 = vadd.f32 %v4960, %v5048
        %v5050 = vpop.f32.mrf.mxu0
        %v5051 = vadd.f32 %v4962, %v5050
        %5052 = vmatmul.bf16.gmra.mxu0 %v3784
        %v5053 = vpop.f32.mrf.mxu0
        %v5054 = vadd.f32 %v4965, %v5053
        %v5055 = vpop.f32.mrf.mxu0
        %v5056 = vadd.f32 %v4967, %v5055
        %5057 = vmatmul.bf16.gmra.mxu0 %v3787
        %v5058 = vpop.f32.mrf.mxu0
        %v5059 = vadd.f32 %v4970, %v5058
        %v5060 = vpop.f32.mrf.mxu0
        %v5061 = vadd.f32 %v4972, %v5060
        %5062 = vmatmul.bf16.gmra.mxu0 %v3790
        %v5063 = vpop.f32.mrf.mxu0
        %v5064 = vadd.f32 %v4975, %v5063
        %v5065 = vpop.f32.mrf.mxu0
        %v5066 = vadd.f32 %v4977, %v5065
        %5067 = vmatmul.bf16.gmra.mxu0 %v3793
        %v5068 = vpop.f32.mrf.mxu0
        %v5069 = vadd.f32 %v4980, %v5068
        %v5070 = vpop.f32.mrf.mxu0
        %v5071 = vadd.f32 %v4982, %v5070
        %5072 = vmatmul.bf16.gmra.mxu0 %v3796
        %v5073 = vpop.f32.mrf.mxu0
        %v5074 = vadd.f32 %v4985, %v5073
        %v5075 = vpop.f32.mrf.mxu0
        %v5076 = vadd.f32 %v4987, %v5075
        %5077 = vmatmul.bf16.gmra.mxu0 %v3799
        %v5078 = vpop.f32.mrf.mxu0
        %v5079 = vadd.f32 %v4990, %v5078
        %v5080 = vpop.f32.mrf.mxu0
        %v5081 = vadd.f32 %v4992, %v5080
        %5082 = vmatmul.bf16.gmra.mxu0 %v3802
        %v5083 = vpop.f32.mrf.mxu0
        %v5084 = vadd.f32 %v4995, %v5083
        %v5085 = vpop.f32.mrf.mxu0
        %v5086 = vadd.f32 %v4997, %v5085
        %5087 = vmatmul.bf16.gmra.mxu0 %v3805
        %v5088 = vpop.f32.mrf.mxu0
        %v5089 = vadd.f32 %v5000, %v5088
        %v5090 = vpop.f32.mrf.mxu0
        %v5091 = vadd.f32 %v5002, %v5090
        %5092 = vmatmul.bf16.gmra.mxu0 %v3856
        %v5093 = vpop.f32.mrf.mxu0
        %v5094 = vadd.f32 %v5005, %v5093
        %v5095 = vpop.f32.mrf.mxu0
        %v5096 = vadd.f32 %v5007, %v5095
        %5097 = vmatmul.bf16.gmra.mxu0 %v4730
        %v5098 = vpop.f32.mrf.mxu0
        %v5099 = vadd.f32 %v5010, %v5098
        %v5100 = vpop.f32.mrf.mxu0
        %v5101 = vadd.f32 %v5012, %v5100
        %5102 = vdwg.mxu0
        %5103 = vmatpush.bf16.msra.mxu0 %v4900
        %5104 = vmatpush.bf16.msra.mxu0 %v4899
        %5105 = vmatpush.bf16.msra.mxu0 %v4898
        %5106 = vmatpush.bf16.msra.mxu0 %v4897
        %5107 = vmatpush.bf16.msra.mxu0 %v4896
        %5108 = vmatpush.bf16.msra.mxu0 %v4895
        %5109 = vmatpush.bf16.msra.mxu0 %v4894
        %5110 = vmatpush.bf16.msra.mxu0 %v4893
        %5111 = vmatmul.bf16.gmra.mxu0 %v3767
        %v5112 = vpop.f32.mrf.mxu0
        %v5113 = vadd.f32 %v5024, %v5112
        %v5114 = vpop.f32.mrf.mxu0
        %v5115 = vadd.f32 %v5026, %v5114
        %5116 = vmatmul.bf16.gmra.mxu0 %v3770
        %v5117 = vpop.f32.mrf.mxu0
        %v5118 = vadd.f32 %v5029, %v5117
        %v5119 = vpop.f32.mrf.mxu0
        %v5120 = vadd.f32 %v5031, %v5119
        %5121 = vmatmul.bf16.gmra.mxu0 %v3773
        %v5122 = vpop.f32.mrf.mxu0
        %v5123 = vadd.f32 %v5034, %v5122
        %v5124 = vpop.f32.mrf.mxu0
        %v5125 = vadd.f32 %v5036, %v5124
        %5126 = vmatmul.bf16.gmra.mxu0 %v3776
        %v5127 = vpop.f32.mrf.mxu0
        %v5128 = vadd.f32 %v5039, %v5127
        %v5129 = vpop.f32.mrf.mxu0
        %v5130 = vadd.f32 %v5041, %v5129
        %5131 = vmatmul.bf16.gmra.mxu0 %v3779
        %v5132 = vpop.f32.mrf.mxu0
        %v5133 = vadd.f32 %v5044, %v5132
        %v5134 = vpop.f32.mrf.mxu0
        %v5135 = vadd.f32 %v5046, %v5134
        %5136 = vmatmul.bf16.gmra.mxu0 %v3782
        %v5137 = vpop.f32.mrf.mxu0
        %v5138 = vadd.f32 %v5049, %v5137
        %v5139 = vpop.f32.mrf.mxu0
        %v5140 = vadd.f32 %v5051, %v5139
        %5141 = vmatmul.bf16.gmra.mxu0 %v3785
        %v5142 = vpop.f32.mrf.mxu0
        %v5143 = vadd.f32 %v5054, %v5142
        %v5144 = vpop.f32.mrf.mxu0
        %v5145 = vadd.f32 %v5056, %v5144
        %5146 = vmatmul.bf16.gmra.mxu0 %v3788
        %v5147 = vpop.f32.mrf.mxu0
        %v5148 = vadd.f32 %v5059, %v5147
        %v5149 = vpop.f32.mrf.mxu0
        %v5150 = vadd.f32 %v5061, %v5149
        %5151 = vmatmul.bf16.gmra.mxu0 %v3791
        %v5152 = vpop.f32.mrf.mxu0
        %v5153 = vadd.f32 %v5064, %v5152
        %v5154 = vpop.f32.mrf.mxu0
        %v5155 = vadd.f32 %v5066, %v5154
        %5156 = vmatmul.bf16.gmra.mxu0 %v3794
        %v5157 = vpop.f32.mrf.mxu0
        %v5158 = vadd.f32 %v5069, %v5157
        %v5159 = vpop.f32.mrf.mxu0
        %v5160 = vadd.f32 %v5071, %v5159
        %5161 = vmatmul.bf16.gmra.mxu0 %v3797
        %v5162 = vpop.f32.mrf.mxu0
        %v5163 = vadd.f32 %v5074, %v5162
        %v5164 = vpop.f32.mrf.mxu0
        %v5165 = vadd.f32 %v5076, %v5164
        %5166 = vmatmul.bf16.gmra.mxu0 %v3800
        %v5167 = vpop.f32.mrf.mxu0
        %v5168 = vadd.f32 %v5079, %v5167
        %v5169 = vpop.f32.mrf.mxu0
        %v5170 = vadd.f32 %v5081, %v5169
        %5171 = vmatmul.bf16.gmra.mxu0 %v3803
        %v5172 = vpop.f32.mrf.mxu0
        %v5173 = vadd.f32 %v5084, %v5172
        %v5174 = vpop.f32.mrf.mxu0
        %v5175 = vadd.f32 %v5086, %v5174
        %5176 = vmatmul.bf16.gmra.mxu0 %v3806
        %v5177 = vpop.f32.mrf.mxu0
        %v5178 = vadd.f32 %v5089, %v5177
        %v5179 = vpop.f32.mrf.mxu0
        %v5180 = vadd.f32 %v5091, %v5179
        %5181 = vmatmul.bf16.gmra.mxu0 %v3857
        %v5182 = vpop.f32.mrf.mxu0
        %v5183 = vadd.f32 %v5094, %v5182
        %v5184 = vpop.f32.mrf.mxu0
        %v5185 = vadd.f32 %v5096, %v5184
        %5186 = vmatmul.bf16.gmra.mxu0 %v4731
        %v5187 = vpop.f32.mrf.mxu0
        %v5188 = vadd.f32 %v5099, %v5187
        %v5189 = vpop.f32.mrf.mxu0
        %v5190 = vadd.f32 %v5101, %v5189
        %5191 = vdwg.mxu0
        %v5192 = vadd.f32 %v4650, %v5113
        %v5193 = vadd.f32 %v4652, %v5115
        %v5194 = vadd.f32 %v4655, %v5118
        %v5195 = vadd.f32 %v4657, %v5120
        %v5196 = vadd.f32 %v4660, %v5123
        %v5197 = vadd.f32 %v4662, %v5125
        %v5198 = vadd.f32 %v4665, %v5128
        %v5199 = vadd.f32 %v4667, %v5130
        %v5200 = vadd.f32 %v4670, %v5133
        %v5201 = vadd.f32 %v4672, %v5135
        %v5202 = vadd.f32 %v4675, %v5138
        %v5203 = vadd.f32 %v4677, %v5140
        %v5204 = vadd.f32 %v4680, %v5143
        %v5205 = vadd.f32 %v4682, %v5145
        %v5206 = vadd.f32 %v4685, %v5148
        %v5207 = vadd.f32 %v4687, %v5150
        %v5208 = vadd.f32 %v4690, %v5153
        %v5209 = vadd.f32 %v4692, %v5155
        %v5210 = vadd.f32 %v4695, %v5158
        %v5211 = vadd.f32 %v4697, %v5160
        %v5212 = vadd.f32 %v4700, %v5163
        %v5213 = vadd.f32 %v4702, %v5165
        %v5214 = vadd.f32 %v4705, %v5168
        %v5215 = vadd.f32 %v4707, %v5170
        %v5216 = vadd.f32 %v4710, %v5173
        %v5217 = vadd.f32 %v4712, %v5175
        %v5218 = vadd.f32 %v4715, %v5178
        %v5219 = vadd.f32 %v4717, %v5180
        %v5220 = vadd.f32 %v4720, %v5183
        %v5221 = vadd.f32 %v4722, %v5185
        %v5222 = vadd.f32 %v4725, %v5188
        %v5223 = vadd.f32 %v4727, %v5190
        %v5224 = vld [vmem:[%s5] sm:$0x1]
        %v5226 = vperm.slane %v5224, 0
        %v5228 = vmul.f32 %v5192, %v5226
        %v5229 = vmul.f32 %v5193, %v5226
        %v5230 = vmul.f32 %v5194, %v5226
        %v5231 = vmul.f32 %v5195, %v5226
        %v5232 = vmul.f32 %v5196, %v5226
        %v5233 = vmul.f32 %v5197, %v5226
        %v5234 = vmul.f32 %v5198, %v5226
        %v5235 = vmul.f32 %v5199, %v5226
        %v5236 = vmul.f32 %v5200, %v5226
        %v5237 = vmul.f32 %v5201, %v5226
        %v5238 = vmul.f32 %v5202, %v5226
        %v5239 = vmul.f32 %v5203, %v5226
        %v5240 = vmul.f32 %v5204, %v5226
        %v5241 = vmul.f32 %v5205, %v5226
        %v5242 = vmul.f32 %v5206, %v5226
        %v5243 = vmul.f32 %v5207, %v5226
        %v5244 = vmul.f32 %v5208, %v5226
        %v5245 = vmul.f32 %v5209, %v5226
        %v5246 = vmul.f32 %v5210, %v5226
        %v5247 = vmul.f32 %v5211, %v5226
        %v5248 = vmul.f32 %v5212, %v5226
        %v5249 = vmul.f32 %v5213, %v5226
        %v5250 = vmul.f32 %v5214, %v5226
        %v5251 = vmul.f32 %v5215, %v5226
        %v5252 = vmul.f32 %v5216, %v5226
        %v5253 = vmul.f32 %v5217, %v5226
        %v5254 = vmul.f32 %v5218, %v5226
        %v5255 = vmul.f32 %v5219, %v5226
        %v5256 = vmul.f32 %v5220, %v5226
        %v5257 = vmul.f32 %v5221, %v5226
        %v5258 = vmul.f32 %v5222, %v5226
        %v5259 = vmul.f32 %v5223, %v5226
        %v5260 = vld [vmem:[%s6] sm:$0x1]
        %v5262 = vperm.slane %v5260, 0
        %v5264 = vadd.f32 %v5228, %v5262
        %v5265 = vadd.f32 %v5229, %v5262
        %v5266 = vadd.f32 %v5230, %v5262
        %v5267 = vadd.f32 %v5231, %v5262
        %v5268 = vadd.f32 %v5232, %v5262
        %v5269 = vadd.f32 %v5233, %v5262
        %v5270 = vadd.f32 %v5234, %v5262
        %v5271 = vadd.f32 %v5235, %v5262
        %v5272 = vadd.f32 %v5236, %v5262
        %v5273 = vadd.f32 %v5237, %v5262
        %v5274 = vadd.f32 %v5238, %v5262
        %v5275 = vadd.f32 %v5239, %v5262
        %v5276 = vadd.f32 %v5240, %v5262
        %v5277 = vadd.f32 %v5241, %v5262
        %v5278 = vadd.f32 %v5242, %v5262
        %v5279 = vadd.f32 %v5243, %v5262
        %v5280 = vadd.f32 %v5244, %v5262
        %v5281 = vadd.f32 %v5245, %v5262
        %v5282 = vadd.f32 %v5246, %v5262
        %v5283 = vadd.f32 %v5247, %v5262
        %v5284 = vadd.f32 %v5248, %v5262
        %v5285 = vadd.f32 %v5249, %v5262
        %v5286 = vadd.f32 %v5250, %v5262
        %v5287 = vadd.f32 %v5251, %v5262
        %v5288 = vadd.f32 %v5252, %v5262
        %v5289 = vadd.f32 %v5253, %v5262
        %v5290 = vadd.f32 %v5254, %v5262
        %v5291 = vadd.f32 %v5255, %v5262
        %v5292 = vadd.f32 %v5256, %v5262
        %v5293 = vadd.f32 %v5257, %v5262
        %v5294 = vadd.f32 %v5258, %v5262
        %v5295 = vadd.f32 %v5259, %v5262
        %v5296 = vadd.f32 %v5264, %v740
        %v5297 = vadd.f32 %v5265, %v742
        %v5298 = vadd.f32 %v5266, %v747
        %v5299 = vadd.f32 %v5267, %v749
        %v5300 = vadd.f32 %v5268, %v754
        %v5301 = vadd.f32 %v5269, %v756
        %v5302 = vadd.f32 %v5270, %v761
        %v5303 = vadd.f32 %v5271, %v763
        %v5304 = vadd.f32 %v5272, %v768
        %v5305 = vadd.f32 %v5273, %v770
        %v5306 = vadd.f32 %v5274, %v775
        %v5307 = vadd.f32 %v5275, %v777
        %v5308 = vadd.f32 %v5276, %v782
        %v5309 = vadd.f32 %v5277, %v784
        %v5310 = vadd.f32 %v5278, %v789
        %v5311 = vadd.f32 %v5279, %v791
        %v5312 = vadd.f32 %v5280, %v796
        %v5313 = vadd.f32 %v5281, %v798
        %v5314 = vadd.f32 %v5282, %v803
        %v5315 = vadd.f32 %v5283, %v805
        %v5316 = vadd.f32 %v5284, %v810
        %v5317 = vadd.f32 %v5285, %v812
        %v5318 = vadd.f32 %v5286, %v817
        %v5319 = vadd.f32 %v5287, %v819
        %v5320 = vadd.f32 %v5288, %v824
        %v5321 = vadd.f32 %v5289, %v826
        %v5322 = vadd.f32 %v5290, %v831
        %v5323 = vadd.f32 %v5291, %v833
        %v5324 = vadd.f32 %v5292, %v838
        %v5325 = vadd.f32 %v5293, %v840
        %v5326 = vadd.f32 %v5294, %v845
        %v5327 = vadd.f32 %v5295, %v847
        %v5328 = vmax.f32 %v5296, 0.0
        %v5329 = vmax.f32 %v5297, 0.0
        %v5330 = vmax.f32 %v5298, 0.0
        %v5331 = vmax.f32 %v5299, 0.0
        %v5332 = vmax.f32 %v5300, 0.0
        %v5333 = vmax.f32 %v5301, 0.0
        %v5334 = vmax.f32 %v5302, 0.0
        %v5335 = vmax.f32 %v5303, 0.0
        %v5336 = vmax.f32 %v5304, 0.0
        %v5337 = vmax.f32 %v5305, 0.0
        %v5338 = vmax.f32 %v5306, 0.0
        %v5339 = vmax.f32 %v5307, 0.0
        %v5340 = vmax.f32 %v5308, 0.0
        %v5341 = vmax.f32 %v5309, 0.0
        %v5342 = vmax.f32 %v5310, 0.0
        %v5343 = vmax.f32 %v5311, 0.0
        %v5344 = vmax.f32 %v5312, 0.0
        %v5345 = vmax.f32 %v5313, 0.0
        %v5346 = vmax.f32 %v5314, 0.0
        %v5347 = vmax.f32 %v5315, 0.0
        %v5348 = vmax.f32 %v5316, 0.0
        %v5349 = vmax.f32 %v5317, 0.0
        %v5350 = vmax.f32 %v5318, 0.0
        %v5351 = vmax.f32 %v5319, 0.0
        %v5352 = vmax.f32 %v5320, 0.0
        %v5353 = vmax.f32 %v5321, 0.0
        %v5354 = vmax.f32 %v5322, 0.0
        %v5355 = vmax.f32 %v5323, 0.0
        %v5356 = vmax.f32 %v5324, 0.0
        %v5357 = vmax.f32 %v5325, 0.0
        %v5358 = vmax.f32 %v5326, 0.0
        %v5359 = vmax.f32 %v5327, 0.0
        %vm5360 = vcmask 64512
        %5361 = vst.msk [vmem:[%s357] sm:$0xff] %vm5360, %v5328
        %5362 = vst.msk [vmem:[%s357 + $0x8] sm:$0xff] %vm5360, %v5329
        %5363 = vst.msk [vmem:[%s357 + $0x10] sm:$0xff] %vm5360, %v5330
        %5364 = vst.msk [vmem:[%s357 + $0x18] sm:$0xff] %vm5360, %v5331
        %5365 = vst.msk [vmem:[%s357 + $0x20] sm:$0xff] %vm5360, %v5332
        %5366 = vst.msk [vmem:[%s357 + $0x28] sm:$0xff] %vm5360, %v5333
        %5367 = vst.msk [vmem:[%s357 + $0x30] sm:$0xff] %vm5360, %v5334
        %5368 = vst.msk [vmem:[%s357 + $0x38] sm:$0xff] %vm5360, %v5335
        %5369 = vst.msk [vmem:[%s357 + $0x40] sm:$0xff] %vm5360, %v5336
        %5370 = vst.msk [vmem:[%s357 + $0x48] sm:$0xff] %vm5360, %v5337
        %5371 = vst.msk [vmem:[%s357 + $0x50] sm:$0xff] %vm5360, %v5338
        %5372 = vst.msk [vmem:[%s357 + $0x58] sm:$0xff] %vm5360, %v5339
        %5373 = vst.msk [vmem:[%s357 + $0x60] sm:$0xff] %vm5360, %v5340
        %5374 = vst.msk [vmem:[%s357 + $0x68] sm:$0xff] %vm5360, %v5341
        %5375 = vst.msk [vmem:[%s357 + $0x70] sm:$0xff] %vm5360, %v5342
        %5376 = vst.msk [vmem:[%s357 + $0x78] sm:$0xff] %vm5360, %v5343
        %5377 = vst.msk [vmem:[%s357 + $0x80] sm:$0xff] %vm5360, %v5344
        %5378 = vst.msk [vmem:[%s357 + $0x88] sm:$0xff] %vm5360, %v5345
        %5379 = vst.msk [vmem:[%s357 + $0x90] sm:$0xff] %vm5360, %v5346
        %5380 = vst.msk [vmem:[%s357 + $0x98] sm:$0xff] %vm5360, %v5347
        %5381 = vst.msk [vmem:[%s357 + $0xa0] sm:$0xff] %vm5360, %v5348
        %5382 = vst.msk [vmem:[%s357 + $0xa8] sm:$0xff] %vm5360, %v5349
        %5383 = vst.msk [vmem:[%s357 + $0xb0] sm:$0xff] %vm5360, %v5350
        %5384 = vst.msk [vmem:[%s357 + $0xb8] sm:$0xff] %vm5360, %v5351
        %5385 = vst.msk [vmem:[%s357 + $0xc0] sm:$0xff] %vm5360, %v5352
        %5386 = vst.msk [vmem:[%s357 + $0xc8] sm:$0xff] %vm5360, %v5353
        %5387 = vst.msk [vmem:[%s357 + $0xd0] sm:$0xff] %vm5360, %v5354
        %5388 = vst.msk [vmem:[%s357 + $0xd8] sm:$0xff] %vm5360, %v5355
        %5389 = vst.msk [vmem:[%s357 + $0xe0] sm:$0xff] %vm5360, %v5356
        %5390 = vst.msk [vmem:[%s357 + $0xe8] sm:$0xff] %vm5360, %v5357
        %5391 = vst.msk [vmem:[%s357 + $0xf0] sm:$0xff] %vm5360, %v5358
        %5392 = vst.msk [vmem:[%s357 + $0xf8] sm:$0xff] %vm5360, %v5359
        %s5393 = smul.u32 16, %s27
        %p5394 = scmp.lt.s32.totalorder %s26, 1
        %s5395 = scalar_select %p5394, %s26, 1
        %p5396 = scmp.lt.s32.totalorder %s5393, 15
        %s5397 = scalar_select %p5396, %s5393, 15
        %s5398 = smul.addr %s5397, 2
        %s5399 = smul.addr %s5395, 32
        %s5400 = sadd.s32 %s5398, %s5399
        %s5401 = smul.addr %s5400, 8
        %s5402 = scalar_lea.vmem %s7, %s5401
        // Predicated region
        $region61: #{tpu_custom_call.1} parent=47 // pred_check
          %p5403 = pneg %p206
        $region62: #{tpu_custom_call.1} parent=47 // pred_check_branch
          %5405 = sbr.rel (%p5403) target = $region64
        $region63: #{tpu_custom_call.1} parent=47 // pred_region
          %s5406 = smul.u32 16, %s27
        $region64: #{tpu_custom_call.1} parent=47 // pred_fallthru
          _
      $region48: #{tpu_custom_call.1} parent=5 // pred_fallthru
        _
      %p5407 = scmp.le.s32.totalorder 2, %s17
      // Predicated region
      $region65: #{tpu_custom_call.1} parent=5 // pred_check
        %p5408 = pneg %p5407
      $region66: #{tpu_custom_call.1} parent=5 // pred_check_branch
        %5410 = sbr.rel (%p5408) target = $region68
      $region67: #{tpu_custom_call.1} parent=5 // pred_region
        %s5411 = ssub.s32 %s17, 2
        // Predicated region
        $region69: #{tpu_custom_call.1} parent=67 // pred_check
          %p5412 = pneg %p212
        $region70: #{tpu_custom_call.1} parent=67 // pred_check_branch
          %5414 = sbr.rel (%p5412) target = $region72
        $region71: #{tpu_custom_call.1} parent=67 // pred_region
          %s5415 = smul.u32 16, %s29
          %p5416 = scmp.lt.s32.totalorder %s28, 1
          %s5417 = scalar_select %p5416, %s28, 1
          %p5418 = scmp.lt.s32.totalorder %s5415, 15
          %s5419 = scalar_select %p5418, %s5415, 15
          %s5420 = smul.addr %s5419, 2
          %s5421 = smul.addr %s5417, 32
          %s5422 = sadd.s32 %s5420, %s5421
          %s5423 = smul.addr %s5422, 8
          %s5424 = scalar_lea.vmem %s7, %s5423
        $region72: #{tpu_custom_call.1} parent=67 // pred_fallthru
          _
      $region68: #{tpu_custom_call.1} parent=5 // pred_fallthru
        _
    $region6: #{tpu_custom_call.1} parent=1 // loop_footer
      %s21 = sadd.s32 1, %s17
    $region7: #{tpu_custom_call.1} parent=1 // loop_footer_branch
      %16 = sbr.rel target = $region3
    $region8: #{tpu_custom_call.1} parent=1 // loop_exit
      _
    %5425 = vsyncpa [#allocation4], 1
    %s5426 = scalar_lea.sflag [#allocation4], 1
    %5427 = vsyncpa %s5426, 1
    %5428 = vsyncpa [#allocation6], 1

// kernel: tpu_custom_call.1
$region0: #{tpu_custom_call.1}
  #allocation0 [shape = 'u32[]', space=smem, size = 0x4, offset = 0x4, fixed_abs, tag = 'smem constant byte address 0x4 - core index']
  #allocation1 [shape = 'u32[72,128]{1,0:T(1,128)}', space=vmem, size = 0x9000, scoped, tag = 'internal scratch']
  #allocation2 [shape = 'f32[18,24,128]{2,1,0:T(8,128)}', space=vmem, size = 0x36000, scoped, tag = 'scratch operand']
  %s0 = inlined_call_operand.hbm [shape: f32[2,20,32,128], index: 0, kind: input, shape index: {}]
  %s1 = inlined_call_operand.hbm [shape: bf16[3,384,128], index: 1, kind: input, shape index: {}]
  %s2 = inlined_call_operand.vmem [shape: f32[1,128], index: 2, kind: input, shape index: {}]
  %s3 = inlined_call_operand.vmem [shape: f32[1,128], index: 3, kind: input, shape index: {}]
  %s4 = inlined_call_operand.hbm [shape: bf16[3,384,128], index: 4, kind: input, shape index: {}]
  %s5 = inlined_call_operand.vmem [shape: f32[1,128], index: 5, kind: input, shape index: {}]
  %s6 = inlined_call_operand.vmem [shape: f32[1,128], index: 6, kind: input, shape index: {}]
  %s7 = inlined_call_operand.vmem [shape: f32[2,16,16,8], index: 7, kind: output, shape index: {}]
  %s8 = sld [smem:[#allocation0]]
  $region73: #{tpu_custom_call.1} parent=0
    _
  %s10 = ssub.s32 1, %s8
  %s11 = scalar_select 0, %s10, %s8
  $region1: #{tpu_custom_call.1} parent=0
    #allocation3 [shape = 'u8[655360]{0}', space=vmem, size = 0xa0000, scoped, tag = 'input window, operand 0']
    #allocation4 [shape = 's32[2]{0}', space=sflag, size = 0x8, scoped, tag = 'scoped memory for tpu_custom_call.1']
    #allocation5 [shape = 'u8[294912]{0}', space=vmem, size = 0x48000, scoped, tag = 'input window, operand 1, single buffered']
    #allocation6 [shape = 's32[1]{0}', space=sflag, size = 0x4, scoped, tag = 'scoped memory for tpu_custom_call.1']
    #allocation7 [shape = 'u8[294912]{0}', space=vmem, size = 0x48000, scoped, tag = 'input window, operand 4, single buffered']
    %12 = vsyncpa [#allocation4], 0
    %s13 = scalar_lea.sflag [#allocation4], 1
    %14 = vsyncpa %s13, 0
    %15 = vsyncpa [#allocation6], 0
    loop: start=0, step=1, limit=4
    $region2: #{tpu_custom_call.1} parent=1 // loop_pre_header
      _
    $region3: #{tpu_custom_call.1} parent=1 // loop_header
      %s17 = sphi 0, %s21
      %p18 = scmp.ge.s32.totalorder %s17, 4
      %s24 = sphi 0, %s36
      %s25 = sphi 0, %s32
      %s26 = sphi 0, %s24
      %s27 = sphi 0, %s25
      %s28 = sphi 0, %s26
      %s29 = sphi 0, %s27
      %s39 = sphi 0, %s41
      %s42 = sphi 0, %s39
      %s43 = sphi 0, %s42
      %s59 = sphi 0, %s43
      %s63 = sphi 0, %s63
      %s65 = sphi 0, %s63
      %s66 = sphi 0, %s65
      %s80 = sphi 0, %s66
      %s84 = sphi 0, %s84
      %s86 = sphi 0, %s84
      %s87 = sphi 0, %s86
      %s101 = sphi 0, %s87
      %s105 = sphi 0, %s105
      %s107 = sphi 0, %s105
      %s108 = sphi 0, %s107
      %s122 = sphi 0, %s108
      %s126 = sphi 0, %s126
      %s128 = sphi 0, %s126
      %s129 = sphi 0, %s128
      %s143 = sphi 0, %s129
      %s147 = sphi 0, %s147
      %s149 = sphi 0, %s147
      %s150 = sphi 0, %s149
      %s164 = sphi 0, %s150
      %s168 = sphi 0, %s168
      %s170 = sphi 0, %s168
      %s171 = sphi 0, %s170
      %s185 = sphi 0, %s171
      %s193 = sphi 0, %s195
      %s196 = sphi 0, %s193
      %s197 = sphi 0, %s196
      %s213 = sphi 0, %s197
    $region4: #{tpu_custom_call.1} parent=1 // loop_header_branch
      %20 = sbr.rel (%p18) target = $region8
    $region5: #{tpu_custom_call.1} parent=1 // loop_body
      %s22 = ssub.s32 %s17, 1
      %s23 = ssub.s32 %s17, 2
      %s30 = sadd.s32 1, %s25
      %p31 = scmp.ge.s32.totalorder %s30, 1
      %s32 = scalar_select %p31, 0, %s30
      %s33 = sadd.s32 1, %s24
      %s34 = scalar_select %p31, %s33, %s24
      %p35 = scmp.ge.s32.totalorder %s34, 2
      %s36 = scalar_select %p35, 0, %s34
      %s37 = ssub.s32 %s24, %s36
      %p38 = scmp.eq.s32.totalorder %s37, 0
      %s40 = sadd.s32 %s39, 1
      %s41 = scalar_select %p38, %s39, %s40
      %p44 = pneg %p38
      %p45 = scmp.eq.s32.totalorder %s17, 1
      %p46 = por %p44, %p45
      %p47 = scmp.ne.s32.totalorder %s39, %s42
      %p48 = scmp.eq.s32.totalorder %s17, 0
      %p49 = por %p47, %p48
      %p50 = scmp.ne.s32.totalorder %s39, %s42
      %p51 = scmp.eq.s32.totalorder %s22, 1
      %p52 = por %p50, %p51
      %p53 = scmp.ne.s32.totalorder %s42, %s43
      %p54 = scmp.eq.s32.totalorder %s22, 0
      %p55 = por %p53, %p54
      %p56 = scmp.ne.s32.totalorder %s42, %s43
      %p57 = scmp.eq.s32.totalorder %s23, 1
      %p58 = por %p56, %p57
      %p60 = scmp.ne.s32.totalorder %s43, %s59
      %p61 = scmp.eq.s32.totalorder %s23, 0
      %p62 = por %p60, %p61
      %s64 = sadd.s32 %s63, 1
      %p67 = scmp.eq.s32.totalorder %s17, 1
      %p68 = scmp.ne.s32.totalorder %s63, %s65
      %p69 = scmp.eq.s32.totalorder %s17, 0
      %p70 = por %p68, %p69
      %p71 = scmp.ne.s32.totalorder %s63, %s65
      %p72 = scmp.eq.s32.totalorder %s22, 1
      %p73 = por %p71, %p72
      %p74 = scmp.ne.s32.totalorder %s65, %s66
      %p75 = scmp.eq.s32.totalorder %s22, 0
      %p76 = por %p74, %p75
      %p77 = scmp.ne.s32.totalorder %s65, %s66
      %p78 = scmp.eq.s32.totalorder %s23, 1
      %p79 = por %p77, %p78
      %p81 = scmp.ne.s32.totalorder %s66, %s80
      %p82 = scmp.eq.s32.totalorder %s23, 0
      %p83 = por %p81, %p82
      %s85 = sadd.s32 %s84, 1
      %p88 = scmp.eq.s32.totalorder %s17, 1
      %p89 = scmp.ne.s32.totalorder %s84, %s86
      %p90 = scmp.eq.s32.totalorder %s17, 0
      %p91 = por %p89, %p90
      %p92 = scmp.ne.s32.totalorder %s84, %s86
      %p93 = scmp.eq.s32.totalorder %s22, 1
      %p94 = por %p92, %p93
      %p95 = scmp.ne.s32.totalorder %s86, %s87
      %p96 = scmp.eq.s32.totalorder %s22, 0
      %p97 = por %p95, %p96
      %p98 = scmp.ne.s32.totalorder %s86, %s87
      %p99 = scmp.eq.s32.totalorder %s23, 1
      %p100 = por %p98, %p99
      %p102 = scmp.ne.s32.totalorder %s87, %s101
      %p103 = scmp.eq.s32.totalorder %s23, 0
      %p104 = por %p102, %p103
      %s106 = sadd.s32 %s105, 1
      %p109 = scmp.eq.s32.totalorder %s17, 1
      %p110 = scmp.ne.s32.totalorder %s105, %s107
      %p111 = scmp.eq.s32.totalorder %s17, 0
      %p112 = por %p110, %p111
      %p113 = scmp.ne.s32.totalorder %s105, %s107
      %p114 = scmp.eq.s32.totalorder %s22, 1
      %p115 = por %p113, %p114
      %p116 = scmp.ne.s32.totalorder %s107, %s108
      %p117 = scmp.eq.s32.totalorder %s22, 0
      %p118 = por %p116, %p117
      %p119 = scmp.ne.s32.totalorder %s107, %s108
      %p120 = scmp.eq.s32.totalorder %s23, 1
      %p121 = por %p119, %p120
      %p123 = scmp.ne.s32.totalorder %s108, %s122
      %p124 = scmp.eq.s32.totalorder %s23, 0
      %p125 = por %p123, %p124
      %s127 = sadd.s32 %s126, 1
      %p130 = scmp.eq.s32.totalorder %s17, 1
      %p131 = scmp.ne.s32.totalorder %s126, %s128
      %p132 = scmp.eq.s32.totalorder %s17, 0
      %p133 = por %p131, %p132
      %p134 = scmp.ne.s32.totalorder %s126, %s128
      %p135 = scmp.eq.s32.totalorder %s22, 1
      %p136 = por %p134, %p135
      %p137 = scmp.ne.s32.totalorder %s128, %s129
      %p138 = scmp.eq.s32.totalorder %s22, 0
      %p139 = por %p137, %p138
      %p140 = scmp.ne.s32.totalorder %s128, %s129
      %p141 = scmp.eq.s32.totalorder %s23, 1
      %p142 = por %p140, %p141
      %p144 = scmp.ne.s32.totalorder %s129, %s143
      %p145 = scmp.eq.s32.totalorder %s23, 0
      %p146 = por %p144, %p145
      %s148 = sadd.s32 %s147, 1
      %p151 = scmp.eq.s32.totalorder %s17, 1
      %p152 = scmp.ne.s32.totalorder %s147, %s149
      %p153 = scmp.eq.s32.totalorder %s17, 0
      %p154 = por %p152, %p153
      %p155 = scmp.ne.s32.totalorder %s147, %s149
      %p156 = scmp.eq.s32.totalorder %s22, 1
      %p157 = por %p155, %p156
      %p158 = scmp.ne.s32.totalorder %s149, %s150
      %p159 = scmp.eq.s32.totalorder %s22, 0
      %p160 = por %p158, %p159
      %p161 = scmp.ne.s32.totalorder %s149, %s150
      %p162 = scmp.eq.s32.totalorder %s23, 1
      %p163 = por %p161, %p162
      %p165 = scmp.ne.s32.totalorder %s150, %s164
      %p166 = scmp.eq.s32.totalorder %s23, 0
      %p167 = por %p165, %p166
      %s169 = sadd.s32 %s168, 1
      %p172 = scmp.eq.s32.totalorder %s17, 1
      %p173 = scmp.ne.s32.totalorder %s168, %s170
      %p174 = scmp.eq.s32.totalorder %s17, 0
      %p175 = por %p173, %p174
      %p176 = scmp.ne.s32.totalorder %s168, %s170
      %p177 = scmp.eq.s32.totalorder %s22, 1
      %p178 = por %p176, %p177
      %p179 = scmp.ne.s32.totalorder %s170, %s171
      %p180 = scmp.eq.s32.totalorder %s22, 0
      %p181 = por %p179, %p180
      %p182 = scmp.ne.s32.totalorder %s170, %s171
      %p183 = scmp.eq.s32.totalorder %s23, 1
      %p184 = por %p182, %p183
      %p186 = scmp.ne.s32.totalorder %s171, %s185
      %p187 = scmp.eq.s32.totalorder %s23, 0
      %p188 = por %p186, %p187
      %s189 = ssub.s32 %s24, %s36
      %s190 = ssub.s32 %s25, %s32
      %s191 = sor.u32 %s189, %s190
      %p192 = scmp.eq.s32.totalorder %s191, 0
      %s194 = sadd.s32 %s193, 1
      %s195 = scalar_select %p192, %s193, %s194
      %p198 = pneg %p192
      %p199 = scmp.eq.s32.totalorder %s17, 1
      %p200 = por %p198, %p199
      %p201 = scmp.ne.s32.totalorder %s193, %s196
      %p202 = scmp.eq.s32.totalorder %s17, 0
      %p203 = por %p201, %p202
      %p204 = scmp.ne.s32.totalorder %s193, %s196
      %p205 = scmp.eq.s32.totalorder %s22, 1
      %p206 = por %p204, %p205
      %p207 = scmp.ne.s32.totalorder %s196, %s197
      %p208 = scmp.eq.s32.totalorder %s22, 0
      %p209 = por %p207, %p208
      %p210 = scmp.ne.s32.totalorder %s196, %s197
      %p211 = scmp.eq.s32.totalorder %s23, 1
      %p212 = por %p210, %p211
      %p214 = scmp.ne.s32.totalorder %s197, %s213
      %p215 = scmp.eq.s32.totalorder %s23, 0
      %p216 = por %p214, %p215
      %p217 = scmp.le.s32.totalorder 1, %s17
      %p218 = scmp.lt.s32.totalorder %s17, 3
      %p219 = pnand %p217, %p218
      %p220 = pneg %p219
      // Predicated region
      $region9: #{tpu_custom_call.1} parent=5 // pred_check
        _
      $region10: #{tpu_custom_call.1} parent=5 // pred_check_branch
        %222 = sbr.rel (%p219) target = $region12
      $region11: #{tpu_custom_call.1} parent=5 // pred_region
        %s223 = ssub.s32 %s17, 1
        // Predicated region
        $region13: #{tpu_custom_call.1} parent=11 // pred_check
          %p224 = pneg %p76
        $region14: #{tpu_custom_call.1} parent=11 // pred_check_branch
          %226 = sbr.rel (%p224) target = $region16
        $region15: #{tpu_custom_call.1} parent=11 // pred_region
          %228 = vsyncadd [#allocation6], 0
          %s229 = sshll.u32 %s1, 4
          %s230 = int_to_ptr.hbm [resolvable:$true] %s229
          %s231 = sshll.u32 [#allocation5], 4
          %s232 = int_to_ptr.vmem [resolvable:$true] %s231
          %237 = dma.hbm_to_vmem [thread:$0]  %s230, 9216, %s232, [#allocation6], 64, 64, 4
        $region16: #{tpu_custom_call.1} parent=11 // pred_fallthru
          _
        // Predicated region
        $region17: #{tpu_custom_call.1} parent=11 // pred_check
          %p238 = pneg %p97
        $region18: #{tpu_custom_call.1} parent=11 // pred_check_branch
          %240 = sbr.rel (%p238) target = $region20
        $region19: #{tpu_custom_call.1} parent=11 // pred_region
          _
        $region20: #{tpu_custom_call.1} parent=11 // pred_fallthru
          _
        // Predicated region
        $region21: #{tpu_custom_call.1} parent=11 // pred_check
          %p241 = pneg %p118
        $region22: #{tpu_custom_call.1} parent=11 // pred_check_branch
          %243 = sbr.rel (%p241) target = $region24
        $region23: #{tpu_custom_call.1} parent=11 // pred_region
          _
        $region24: #{tpu_custom_call.1} parent=11 // pred_fallthru
          _
        // Predicated region
        $region25: #{tpu_custom_call.1} parent=11 // pred_check
          %p244 = pneg %p139
        $region26: #{tpu_custom_call.1} parent=11 // pred_check_branch
          %246 = sbr.rel (%p244) target = $region28
        $region27: #{tpu_custom_call.1} parent=11 // pred_region
          %248 = vsyncadd [#allocation6], 0
          %s249 = sshll.u32 %s4, 4
          %s250 = int_to_ptr.hbm [resolvable:$true] %s249
          %s251 = sshll.u32 [#allocation7], 4
          %s252 = int_to_ptr.vmem [resolvable:$true] %s251
          %257 = dma.hbm_to_vmem [thread:$0]  %s250, 9216, %s252, [#allocation6], 64, 64, 4
        $region28: #{tpu_custom_call.1} parent=11 // pred_fallthru
          _
        // Predicated region
        $region29: #{tpu_custom_call.1} parent=11 // pred_check
          %p258 = pneg %p160
        $region30: #{tpu_custom_call.1} parent=11 // pred_check_branch
          %260 = sbr.rel (%p258) target = $region32
        $region31: #{tpu_custom_call.1} parent=11 // pred_region
          _
        $region32: #{tpu_custom_call.1} parent=11 // pred_fallthru
          _
        // Predicated region
        $region33: #{tpu_custom_call.1} parent=11 // pred_check
          %p261 = pneg %p181
        $region34: #{tpu_custom_call.1} parent=11 // pred_check_branch
          %263 = sbr.rel (%p261) target = $region36
        $region35: #{tpu_custom_call.1} parent=11 // pred_region
          _
        $region36: #{tpu_custom_call.1} parent=11 // pred_fallthru
          _
      $region12: #{tpu_custom_call.1} parent=5 // pred_fallthru
        _
      %p264 = scmp.lt.s32.totalorder %s17, 2
      // Predicated region
      $region37: #{tpu_custom_call.1} parent=5 // pred_check
        %p265 = pneg %p264
      $region38: #{tpu_custom_call.1} parent=5 // pred_check_branch
        %267 = sbr.rel (%p265) target = $region40
      $region39: #{tpu_custom_call.1} parent=5 // pred_region
        // Predicated region
        $region41: #{tpu_custom_call.1} parent=39 // pred_check
          %p268 = pneg %p49
        $region42: #{tpu_custom_call.1} parent=39 // pred_check_branch
          %270 = sbr.rel (%p268) target = $region44
        $region43: #{tpu_custom_call.1} parent=39 // pred_region
          %s271 = sand.u32 %s39, 1
          %s272 = scalar_lea.sflag [#allocation4], %s271
          %s273 = sand.u32 %s39, 1
          %s274 = smul.addr %s273, 640
          %s275 = scalar_lea.vmem [#allocation3], %s274
          %277 = vsyncadd %s272, 0
          %s278 = smul.addr %s24, 80
          %s279 = smul.addr %s278, 8
          %s280 = scalar_lea.hbm %s0, %s279
          %s281 = sshll.u32 %s280, 4
          %s282 = int_to_ptr.hbm [resolvable:$true] %s281
          %s283 = sshll.u32 %s275, 4
          %s284 = int_to_ptr.vmem [resolvable:$true] %s283
          %289 = dma.hbm_to_vmem [thread:$0]  %s282, 10240, %s284, %s272, 128, 128, 8
        $region44: #{tpu_custom_call.1} parent=39 // pred_fallthru
          _
      $region40: #{tpu_custom_call.1} parent=5 // pred_fallthru
        _
      %p290 = scmp.le.s32.totalorder 1, %s17
      %p291 = scmp.lt.s32.totalorder %s17, 3
      %p292 = pnand %p290, %p291
      %p293 = pneg %p292
      // Predicated region
      $region45: #{tpu_custom_call.1} parent=5 // pred_check
        _
      $region46: #{tpu_custom_call.1} parent=5 // pred_check_branch
        %295 = sbr.rel (%p292) target = $region48
      $region47: #{tpu_custom_call.1} parent=5 // pred_region
        %s296 = ssub.s32 %s17, 1
        %s297 = sand.u32 %s42, 1
        %s298 = scalar_lea.sflag [#allocation4], %s297
        %s299 = sand.u32 %s42, 1
        %s300 = smul.addr %s299, 640
        %s301 = scalar_lea.vmem [#allocation3], %s300
        // Predicated region
        $region49: #{tpu_custom_call.1} parent=47 // pred_check
          %p302 = pneg %p55
        $region50: #{tpu_custom_call.1} parent=47 // pred_check_branch
          %304 = sbr.rel (%p302) target = $region52
        $region51: #{tpu_custom_call.1} parent=47 // pred_region
          %306 = dma.done %s298, 10240
        $region52: #{tpu_custom_call.1} parent=47 // pred_fallthru
          _
        // Predicated region
        $region53: #{tpu_custom_call.1} parent=47 // pred_check
          %p307 = pneg %p76
        $region54: #{tpu_custom_call.1} parent=47 // pred_check_branch
          %309 = sbr.rel (%p307) target = $region56
        $region55: #{tpu_custom_call.1} parent=47 // pred_region
          %311 = dma.done [#allocation6], 9216
        $region56: #{tpu_custom_call.1} parent=47 // pred_fallthru
          _
        // Predicated region
        $region57: #{tpu_custom_call.1} parent=47 // pred_check
          %p312 = pneg %p139
        $region58: #{tpu_custom_call.1} parent=47 // pred_check_branch
          %314 = sbr.rel (%p312) target = $region60
        $region59: #{tpu_custom_call.1} parent=47 // pred_region
          %316 = dma.done [#allocation6], 9216
        $region60: #{tpu_custom_call.1} parent=47 // pred_fallthru
          _
        %s317 = sand.u32 %s42, 1
        %s318 = scalar_lea.sflag [#allocation4], %s317
        %s319 = sand.u32 %s42, 1
        %s320 = smul.addr %s319, 640
        %s321 = scalar_lea.vmem [#allocation3], %s320
        %p322 = pneg %p55
        %p323 = pneg %p52
        %p324 = pneg %p76
        %p325 = pneg %p73
        %p326 = pneg %p97
        %p327 = pneg %p94
        %p328 = pneg %p118
        %p329 = pneg %p115
        %p330 = pneg %p139
        %p331 = pneg %p136
        %p332 = pneg %p160
        %p333 = pneg %p157
        %p334 = pneg %p181
        %p335 = pneg %p178
        %p336 = pneg %p209
        %p337 = pneg %p206
        %s338 = smul.u32 16, %s27
        %p339 = scmp.lt.s32.totalorder %s26, 1
        %s340 = scalar_select %p339, %s26, 1
        %p341 = scmp.lt.s32.totalorder %s338, 15
        %s342 = scalar_select %p341, %s338, 15
        %s343 = smul.addr %s342, 2
        %s344 = smul.addr %s340, 32
        %s345 = sadd.s32 %s343, %s344
        %s346 = smul.addr %s345, 8
        %s347 = scalar_lea.vmem %s7, %s346
        %s348 = smul.u32 16, %s27
        %p349 = scmp.lt.s32.totalorder %s26, 1
        %s350 = scalar_select %p349, %s26, 1
        %p351 = scmp.lt.s32.totalorder %s348, 15
        %s352 = scalar_select %p351, %s348, 15
        %s353 = smul.addr %s352, 2
        %s354 = smul.addr %s350, 32
        %s355 = sadd.s32 %s353, %s354
        %s356 = smul.addr %s355, 8
        %s357 = scalar_lea.vmem %s7, %s356
        %s358 = smul.u32 16, %s27
        %s359 = smul.u32 %s27, 16
        %s360 = smul.u32 %s359, 32
        %s361 = scalar_lea.vmem %s301, %s360 [#allocation3]
        %v362 = vld [vmem:[%s361] sm:$0xff]
        %v363 = vld [vmem:[%s361 + $0x8] sm:$0xff]
        %v364 = vld [vmem:[%s361 + $0x10] sm:$0xff]
        %v365 = vld [vmem:[%s361 + $0x18] sm:$0xff]
        %v366 = vld [vmem:[%s361 + $0x20] sm:$0xff]
        %v367 = vld [vmem:[%s361 + $0x28] sm:$0xff]
        %v368 = vld [vmem:[%s361 + $0x30] sm:$0xff]
        %v369 = vld [vmem:[%s361 + $0x38] sm:$0xff]
        %v370 = vld [vmem:[%s361 + $0x40] sm:$0xff]
        %v371 = vld [vmem:[%s361 + $0x48] sm:$0xff]
        %v372 = vld [vmem:[%s361 + $0x50] sm:$0xff]
        %v373 = vld [vmem:[%s361 + $0x58] sm:$0xff]
        %v374 = vld [vmem:[%s361 + $0x60] sm:$0xff]
        %v375 = vld [vmem:[%s361 + $0x68] sm:$0xff]
        %v376 = vld [vmem:[%s361 + $0x70] sm:$0xff]
        %v377 = vld [vmem:[%s361 + $0x78] sm:$0xff]
        %v378 = vld [vmem:[%s361 + $0x80] sm:$0xff]
        %v379 = vld [vmem:[%s361 + $0x88] sm:$0xff]
        %v380 = vld [vmem:[%s361 + $0x90] sm:$0xff]
        %v381 = vld [vmem:[%s361 + $0x98] sm:$0xff]
        %v382 = vld [vmem:[%s361 + $0xa0] sm:$0xff]
        %v383 = vld [vmem:[%s361 + $0xa8] sm:$0xff]
        %v384 = vld [vmem:[%s361 + $0xb0] sm:$0xff]
        %v385 = vld [vmem:[%s361 + $0xb8] sm:$0xff]
        %v386 = vld [vmem:[%s361 + $0xc0] sm:$0xff]
        %v387 = vld [vmem:[%s361 + $0xc8] sm:$0xff]
        %v388 = vld [vmem:[%s361 + $0xd0] sm:$0xff]
        %v389 = vld [vmem:[%s361 + $0xd8] sm:$0xff]
        %v390 = vld [vmem:[%s361 + $0xe0] sm:$0xff]
        %v391 = vld [vmem:[%s361 + $0xe8] sm:$0xff]
        %v392 = vld [vmem:[%s361 + $0xf0] sm:$0xff]
        %v393 = vld [vmem:[%s361 + $0xf8] sm:$0xff]
        %v394 = vld [vmem:[%s361 + $0x100] sm:$0xff]
        %v395 = vld [vmem:[%s361 + $0x108] sm:$0xff]
        %v396 = vld [vmem:[%s361 + $0x110] sm:$0xff]
        %v397 = vld [vmem:[%s361 + $0x118] sm:$0xff]
        %v398 = vld [vmem:[%s361 + $0x120] sm:$0xff]
        %v399 = vld [vmem:[%s361 + $0x128] sm:$0xff]
        %v400 = vld [vmem:[%s361 + $0x130] sm:$0xff]
        %v401 = vld [vmem:[%s361 + $0x138] sm:$0xff]
        %v402 = vld [vmem:[%s361 + $0x140] sm:$0xff]
        %v403 = vld [vmem:[%s361 + $0x148] sm:$0xff]
        %v404 = vld [vmem:[%s361 + $0x150] sm:$0xff]
        %v405 = vld [vmem:[%s361 + $0x158] sm:$0xff]
        %v406 = vld [vmem:[%s361 + $0x160] sm:$0xff]
        %v407 = vld [vmem:[%s361 + $0x168] sm:$0xff]
        %v408 = vld [vmem:[%s361 + $0x170] sm:$0xff]
        %v409 = vld [vmem:[%s361 + $0x178] sm:$0xff]
        %v410 = vld [vmem:[%s361 + $0x180] sm:$0xff]
        %v411 = vld [vmem:[%s361 + $0x188] sm:$0xff]
        %v412 = vld [vmem:[%s361 + $0x190] sm:$0xff]
        %v413 = vld [vmem:[%s361 + $0x198] sm:$0xff]
        %v414 = vld [vmem:[%s361 + $0x1a0] sm:$0xff]
        %v415 = vld [vmem:[%s361 + $0x1a8] sm:$0xff]
        %v416 = vld [vmem:[%s361 + $0x1b0] sm:$0xff]
        %v417 = vld [vmem:[%s361 + $0x1b8] sm:$0xff]
        %v418 = vld [vmem:[%s361 + $0x1c0] sm:$0xff]
        %v419 = vld [vmem:[%s361 + $0x1c8] sm:$0xff]
        %v420 = vld [vmem:[%s361 + $0x1d0] sm:$0xff]
        %v421 = vld [vmem:[%s361 + $0x1d8] sm:$0xff]
        %v422 = vld [vmem:[%s361 + $0x1e0] sm:$0xff]
        %v423 = vld [vmem:[%s361 + $0x1e8] sm:$0xff]
        %v424 = vld [vmem:[%s361 + $0x1f0] sm:$0xff]
        %v425 = vld [vmem:[%s361 + $0x1f8] sm:$0xff]
        %v426 = vld [vmem:[%s361 + $0x200] sm:$0xff]
        %v427 = vld [vmem:[%s361 + $0x208] sm:$0xff]
        %v428 = vld [vmem:[%s361 + $0x210] sm:$0xff]
        %v429 = vld [vmem:[%s361 + $0x218] sm:$0xff]
        %v430 = vld [vmem:[%s361 + $0x220] sm:$0xff]
        %v431 = vld [vmem:[%s361 + $0x228] sm:$0xff]
        %v432 = vld [vmem:[%s361 + $0x230] sm:$0xff]
        %v433 = vld [vmem:[%s361 + $0x238] sm:$0xff]
        %v434 = vld [vmem:[%s361 + $0x240] sm:$0xff]
        %v435 = vld [vmem:[%s361 + $0x248] sm:$0xff]
        %v436 = vld [vmem:[%s361 + $0x250] sm:$0xff]
        %v437 = vld [vmem:[%s361 + $0x258] sm:$0xff]
        %v438 = vld [vmem:[%s361 + $0x260] sm:$0xff]
        %v439 = vld [vmem:[%s361 + $0x268] sm:$0xff]
        %v440 = vld [vmem:[%s361 + $0x270] sm:$0xff]
        %v441 = vld [vmem:[%s361 + $0x278] sm:$0xff]
        %vm522 = vcmask 1046528
        %v523 = vrot.slane %v362, 1
        %v524 = vrot.slane %v363, 1
        %v525 = vsel %vm522, %v523, %v524
        %v526 = vrot.slane %v364, 1
        %v527 = vsel %vm522, %v524, %v526
        %v528 = vrot.slane %v365, 1
        %v529 = vsel %vm522, %v526, %v528
        %v530 = vrot.slane %v366, 1
        %v531 = vrot.slane %v367, 1
        %v532 = vsel %vm522, %v530, %v531
        %v533 = vrot.slane %v368, 1
        %v534 = vsel %vm522, %v531, %v533
        %v535 = vrot.slane %v369, 1
        %v536 = vsel %vm522, %v533, %v535
        %v537 = vrot.slane %v370, 1
        %v538 = vrot.slane %v371, 1
        %v539 = vsel %vm522, %v537, %v538
        %v540 = vrot.slane %v372, 1
        %v541 = vsel %vm522, %v538, %v540
        %v542 = vrot.slane %v373, 1
        %v543 = vsel %vm522, %v540, %v542
        %v544 = vrot.slane %v374, 1
        %v545 = vrot.slane %v375, 1
        %v546 = vsel %vm522, %v544, %v545
        %v547 = vrot.slane %v376, 1
        %v548 = vsel %vm522, %v545, %v547
        %v549 = vrot.slane %v377, 1
        %v550 = vsel %vm522, %v547, %v549
        %v551 = vrot.slane %v378, 1
        %v552 = vrot.slane %v379, 1
        %v553 = vsel %vm522, %v551, %v552
        %v554 = vrot.slane %v380, 1
        %v555 = vsel %vm522, %v552, %v554
        %v556 = vrot.slane %v381, 1
        %v557 = vsel %vm522, %v554, %v556
        %v558 = vrot.slane %v382, 1
        %v559 = vrot.slane %v383, 1
        %v560 = vsel %vm522, %v558, %v559
        %v561 = vrot.slane %v384, 1
        %v562 = vsel %vm522, %v559, %v561
        %v563 = vrot.slane %v385, 1
        %v564 = vsel %vm522, %v561, %v563
        %v565 = vrot.slane %v386, 1
        %v566 = vrot.slane %v387, 1
        %v567 = vsel %vm522, %v565, %v566
        %v568 = vrot.slane %v388, 1
        %v569 = vsel %vm522, %v566, %v568
        %v570 = vrot.slane %v389, 1
        %v571 = vsel %vm522, %v568, %v570
        %v572 = vrot.slane %v390, 1
        %v573 = vrot.slane %v391, 1
        %v574 = vsel %vm522, %v572, %v573
        %v575 = vrot.slane %v392, 1
        %v576 = vsel %vm522, %v573, %v575
        %v577 = vrot.slane %v393, 1
        %v578 = vsel %vm522, %v575, %v577
        %v579 = vrot.slane %v394, 1
        %v580 = vrot.slane %v395, 1
        %v581 = vsel %vm522, %v579, %v580
        %v582 = vrot.slane %v396, 1
        %v583 = vsel %vm522, %v580, %v582
        %v584 = vrot.slane %v397, 1
        %v585 = vsel %vm522, %v582, %v584
        %v586 = vrot.slane %v398, 1
        %v587 = vrot.slane %v399, 1
        %v588 = vsel %vm522, %v586, %v587
        %v589 = vrot.slane %v400, 1
        %v590 = vsel %vm522, %v587, %v589
        %v591 = vrot.slane %v401, 1
        %v592 = vsel %vm522, %v589, %v591
        %v593 = vrot.slane %v402, 1
        %v594 = vrot.slane %v403, 1
        %v595 = vsel %vm522, %v593, %v594
        %v596 = vrot.slane %v404, 1
        %v597 = vsel %vm522, %v594, %v596
        %v598 = vrot.slane %v405, 1
        %v599 = vsel %vm522, %v596, %v598
        %v600 = vrot.slane %v406, 1
        %v601 = vrot.slane %v407, 1
        %v602 = vsel %vm522, %v600, %v601
        %v603 = vrot.slane %v408, 1
        %v604 = vsel %vm522, %v601, %v603
        %v605 = vrot.slane %v409, 1
        %v606 = vsel %vm522, %v603, %v605
        %v607 = vrot.slane %v410, 1
        %v608 = vrot.slane %v411, 1
        %v609 = vsel %vm522, %v607, %v608
        %v610 = vrot.slane %v412, 1
        %v611 = vsel %vm522, %v608, %v610
        %v612 = vrot.slane %v413, 1
        %v613 = vsel %vm522, %v610, %v612
        %v614 = vrot.slane %v414, 1
        %v615 = vrot.slane %v415, 1
        %v616 = vsel %vm522, %v614, %v615
        %v617 = vrot.slane %v416, 1
        %v618 = vsel %vm522, %v615, %v617
        %v619 = vrot.slane %v417, 1
        %v620 = vsel %vm522, %v617, %v619
        %v621 = vrot.slane %v418, 1
        %v622 = vrot.slane %v419, 1
        %v623 = vsel %vm522, %v621, %v622
        %v624 = vrot.slane %v420, 1
        %v625 = vsel %vm522, %v622, %v624
        %v626 = vrot.slane %v421, 1
        %v627 = vsel %vm522, %v624, %v626
        %v628 = vrot.slane %v422, 1
        %v629 = vrot.slane %v423, 1
        %v630 = vsel %vm522, %v628, %v629
        %v631 = vrot.slane %v424, 1
        %v632 = vsel %vm522, %v629, %v631
        %v633 = vrot.slane %v425, 1
        %v634 = vsel %vm522, %v631, %v633
        %v635 = vrot.slane %v426, 1
        %v636 = vrot.slane %v427, 1
        %v637 = vsel %vm522, %v635, %v636
        %v638 = vrot.slane %v428, 1
        %v639 = vsel %vm522, %v636, %v638
        %v640 = vrot.slane %v429, 1
        %v641 = vsel %vm522, %v638, %v640
        %v642 = vrot.slane %v430, 1
        %v643 = vrot.slane %v431, 1
        %v644 = vsel %vm522, %v642, %v643
        %v645 = vrot.slane %v432, 1
        %v646 = vsel %vm522, %v643, %v645
        %v647 = vrot.slane %v433, 1
        %v648 = vsel %vm522, %v645, %v647
        %v649 = vrot.slane %v434, 1
        %v650 = vrot.slane %v435, 1
        %v651 = vsel %vm522, %v649, %v650
        %v652 = vrot.slane %v436, 1
        %v653 = vsel %vm522, %v650, %v652
        %v654 = vrot.slane %v437, 1
        %v655 = vsel %vm522, %v652, %v654
        %v656 = vrot.slane %v438, 1
        %v657 = vrot.slane %v439, 1
        %v658 = vsel %vm522, %v656, %v657
        %v659 = vrot.slane %v440, 1
        %v660 = vsel %vm522, %v657, %v659
        %v661 = vrot.slane %v441, 1
        %v662 = vsel %vm522, %v659, %v661
        %vm723 = vcmask 1045504
        %v724 = vrot.slane %v362, 2
        %v725 = vrot.slane %v363, 2
        %v726 = vsel %vm723, %v724, %v725
        %v727 = vrot.slane %v364, 2
        %v728 = vsel %vm723, %v725, %v727
        %v729 = vrot.slane %v365, 2
        %v730 = vsel %vm723, %v727, %v729
        %v731 = vrot.slane %v366, 2
        %v732 = vrot.slane %v367, 2
        %v733 = vsel %vm723, %v731, %v732
        %v734 = vrot.slane %v368, 2
        %v735 = vsel %vm723, %v732, %v734
        %v736 = vrot.slane %v369, 2
        %v737 = vsel %vm723, %v734, %v736
        %v738 = vrot.slane %v370, 2
        %v739 = vrot.slane %v371, 2
        %v740 = vsel %vm723, %v738, %v739
        %v741 = vrot.slane %v372, 2
        %v742 = vsel %vm723, %v739, %v741
        %v743 = vrot.slane %v373, 2
        %v744 = vsel %vm723, %v741, %v743
        %v745 = vrot.slane %v374, 2
        %v746 = vrot.slane %v375, 2
        %v747 = vsel %vm723, %v745, %v746
        %v748 = vrot.slane %v376, 2
        %v749 = vsel %vm723, %v746, %v748
        %v750 = vrot.slane %v377, 2
        %v751 = vsel %vm723, %v748, %v750
        %v752 = vrot.slane %v378, 2
        %v753 = vrot.slane %v379, 2
        %v754 = vsel %vm723, %v752, %v753
        %v755 = vrot.slane %v380, 2
        %v756 = vsel %vm723, %v753, %v755
        %v757 = vrot.slane %v381, 2
        %v758 = vsel %vm723, %v755, %v757
        %v759 = vrot.slane %v382, 2
        %v760 = vrot.slane %v383, 2
        %v761 = vsel %vm723, %v759, %v760
        %v762 = vrot.slane %v384, 2
        %v763 = vsel %vm723, %v760, %v762
        %v764 = vrot.slane %v385, 2
        %v765 = vsel %vm723, %v762, %v764
        %v766 = vrot.slane %v386, 2
        %v767 = vrot.slane %v387, 2
        %v768 = vsel %vm723, %v766, %v767
        %v769 = vrot.slane %v388, 2
        %v770 = vsel %vm723, %v767, %v769
        %v771 = vrot.slane %v389, 2
        %v772 = vsel %vm723, %v769, %v771
        %v773 = vrot.slane %v390, 2
        %v774 = vrot.slane %v391, 2
        %v775 = vsel %vm723, %v773, %v774
        %v776 = vrot.slane %v392, 2
        %v777 = vsel %vm723, %v774, %v776
        %v778 = vrot.slane %v393, 2
        %v779 = vsel %vm723, %v776, %v778
        %v780 = vrot.slane %v394, 2
        %v781 = vrot.slane %v395, 2
        %v782 = vsel %vm723, %v780, %v781
        %v783 = vrot.slane %v396, 2
        %v784 = vsel %vm723, %v781, %v783
        %v785 = vrot.slane %v397, 2
        %v786 = vsel %vm723, %v783, %v785
        %v787 = vrot.slane %v398, 2
        %v788 = vrot.slane %v399, 2
        %v789 = vsel %vm723, %v787, %v788
        %v790 = vrot.slane %v400, 2
        %v791 = vsel %vm723, %v788, %v790
        %v792 = vrot.slane %v401, 2
        %v793 = vsel %vm723, %v790, %v792
        %v794 = vrot.slane %v402, 2
        %v795 = vrot.slane %v403, 2
        %v796 = vsel %vm723, %v794, %v795
        %v797 = vrot.slane %v404, 2
        %v798 = vsel %vm723, %v795, %v797
        %v799 = vrot.slane %v405, 2
        %v800 = vsel %vm723, %v797, %v799
        %v801 = vrot.slane %v406, 2
        %v802 = vrot.slane %v407, 2
        %v803 = vsel %vm723, %v801, %v802
        %v804 = vrot.slane %v408, 2
        %v805 = vsel %vm723, %v802, %v804
        %v806 = vrot.slane %v409, 2
        %v807 = vsel %vm723, %v804, %v806
        %v808 = vrot.slane %v410, 2
        %v809 = vrot.slane %v411, 2
        %v810 = vsel %vm723, %v808, %v809
        %v811 = vrot.slane %v412, 2
        %v812 = vsel %vm723, %v809, %v811
        %v813 = vrot.slane %v413, 2
        %v814 = vsel %vm723, %v811, %v813
        %v815 = vrot.slane %v414, 2
        %v816 = vrot.slane %v415, 2
        %v817 = vsel %vm723, %v815, %v816
        %v818 = vrot.slane %v416, 2
        %v819 = vsel %vm723, %v816, %v818
        %v820 = vrot.slane %v417, 2
        %v821 = vsel %vm723, %v818, %v820
        %v822 = vrot.slane %v418, 2
        %v823 = vrot.slane %v419, 2
        %v824 = vsel %vm723, %v822, %v823
        %v825 = vrot.slane %v420, 2
        %v826 = vsel %vm723, %v823, %v825
        %v827 = vrot.slane %v421, 2
        %v828 = vsel %vm723, %v825, %v827
        %v829 = vrot.slane %v422, 2
        %v830 = vrot.slane %v423, 2
        %v831 = vsel %vm723, %v829, %v830
        %v832 = vrot.slane %v424, 2
        %v833 = vsel %vm723, %v830, %v832
        %v834 = vrot.slane %v425, 2
        %v835 = vsel %vm723, %v832, %v834
        %v836 = vrot.slane %v426, 2
        %v837 = vrot.slane %v427, 2
        %v838 = vsel %vm723, %v836, %v837
        %v839 = vrot.slane %v428, 2
        %v840 = vsel %vm723, %v837, %v839
        %v841 = vrot.slane %v429, 2
        %v842 = vsel %vm723, %v839, %v841
        %v843 = vrot.slane %v430, 2
        %v844 = vrot.slane %v431, 2
        %v845 = vsel %vm723, %v843, %v844
        %v846 = vrot.slane %v432, 2
        %v847 = vsel %vm723, %v844, %v846
        %v848 = vrot.slane %v433, 2
        %v849 = vsel %vm723, %v846, %v848
        %v850 = vrot.slane %v434, 2
        %v851 = vrot.slane %v435, 2
        %v852 = vsel %vm723, %v850, %v851
        %v853 = vrot.slane %v436, 2
        %v854 = vsel %vm723, %v851, %v853
        %v855 = vrot.slane %v437, 2
        %v856 = vsel %vm723, %v853, %v855
        %v857 = vrot.slane %v438, 2
        %v858 = vrot.slane %v439, 2
        %v859 = vsel %vm723, %v857, %v858
        %v860 = vrot.slane %v440, 2
        %v861 = vsel %vm723, %v858, %v860
        %v862 = vrot.slane %v441, 2
        %v863 = vsel %vm723, %v860, %v862
        %v924 = vpack.c.bf16 %v363, %v362
        %v925 = vpack.c.bf16 %v527, %v525
        %v926 = vpack.c.bf16 %v728, %v726
        %v927 = vpack.c.bf16 %v366, %v364
        %v928 = vpack.c.bf16 %v532, %v529
        %v929 = vpack.c.bf16 %v733, %v730
        %v930 = vpack.c.bf16 %v368, %v367
        %v931 = vpack.c.bf16 %v536, %v534
        %v932 = vpack.c.bf16 %v737, %v735
        %v933 = vpack.c.bf16 %v371, %v370
        %v934 = vpack.c.bf16 %v541, %v539
        %v935 = vpack.c.bf16 %v742, %v740
        %v936 = vpack.c.bf16 %v374, %v372
        %v937 = vpack.c.bf16 %v546, %v543
        %v938 = vpack.c.bf16 %v747, %v744
        %v939 = vpack.c.bf16 %v376, %v375
        %v940 = vpack.c.bf16 %v550, %v548
        %v941 = vpack.c.bf16 %v751, %v749
        %v942 = vpack.c.bf16 %v379, %v378
        %v943 = vpack.c.bf16 %v555, %v553
        %v944 = vpack.c.bf16 %v756, %v754
        %v945 = vpack.c.bf16 %v382, %v380
        %v946 = vpack.c.bf16 %v560, %v557
        %v947 = vpack.c.bf16 %v761, %v758
        %v948 = vpack.c.bf16 %v384, %v383
        %v949 = vpack.c.bf16 %v564, %v562
        %v950 = vpack.c.bf16 %v765, %v763
        %v951 = vpack.c.bf16 %v387, %v386
        %v952 = vpack.c.bf16 %v569, %v567
        %v953 = vpack.c.bf16 %v770, %v768
        %v954 = vpack.c.bf16 %v390, %v388
        %v955 = vpack.c.bf16 %v574, %v571
        %v956 = vpack.c.bf16 %v775, %v772
        %v957 = vpack.c.bf16 %v392, %v391
        %v958 = vpack.c.bf16 %v578, %v576
        %v959 = vpack.c.bf16 %v779, %v777
        %v960 = vpack.c.bf16 %v395, %v394
        %v961 = vpack.c.bf16 %v583, %v581
        %v962 = vpack.c.bf16 %v784, %v782
        %v963 = vpack.c.bf16 %v398, %v396
        %v964 = vpack.c.bf16 %v588, %v585
        %v965 = vpack.c.bf16 %v789, %v786
        %v966 = vpack.c.bf16 %v400, %v399
        %v967 = vpack.c.bf16 %v592, %v590
        %v968 = vpack.c.bf16 %v793, %v791
        %v969 = vpack.c.bf16 %v403, %v402
        %v970 = vpack.c.bf16 %v597, %v595
        %v971 = vpack.c.bf16 %v798, %v796
        %v972 = vpack.c.bf16 %v406, %v404
        %v973 = vpack.c.bf16 %v602, %v599
        %v974 = vpack.c.bf16 %v803, %v800
        %v975 = vpack.c.bf16 %v408, %v407
        %v976 = vpack.c.bf16 %v606, %v604
        %v977 = vpack.c.bf16 %v807, %v805
        %v978 = vpack.c.bf16 %v411, %v410
        %v979 = vpack.c.bf16 %v611, %v609
        %v980 = vpack.c.bf16 %v812, %v810
        %v981 = vpack.c.bf16 %v414, %v412
        %v982 = vpack.c.bf16 %v616, %v613
        %v983 = vpack.c.bf16 %v817, %v814
        %v984 = vpack.c.bf16 %v416, %v415
        %v985 = vpack.c.bf16 %v620, %v618
        %v986 = vpack.c.bf16 %v821, %v819
        %v987 = vpack.c.bf16 %v419, %v418
        %v988 = vpack.c.bf16 %v625, %v623
        %v989 = vpack.c.bf16 %v826, %v824
        %v990 = vpack.c.bf16 %v422, %v420
        %v991 = vpack.c.bf16 %v630, %v627
        %v992 = vpack.c.bf16 %v831, %v828
        %v993 = vpack.c.bf16 %v424, %v423
        %v994 = vpack.c.bf16 %v634, %v632
        %v995 = vpack.c.bf16 %v835, %v833
        %v996 = vpack.c.bf16 %v427, %v426
        %v997 = vpack.c.bf16 %v639, %v637
        %v998 = vpack.c.bf16 %v840, %v838
        %v999 = vpack.c.bf16 %v430, %v428
        %v1000 = vpack.c.bf16 %v644, %v641
        %v1001 = vpack.c.bf16 %v845, %v842
        %v1002 = vpack.c.bf16 %v432, %v431
        %v1003 = vpack.c.bf16 %v648, %v646
        %v1004 = vpack.c.bf16 %v849, %v847
        %v1005 = vld [vmem:[#allocation5] sm:$0xf]
        %v1006 = vld [vmem:[#allocation5 + $0x4] sm:$0xf]
        %v1007 = vld [vmem:[#allocation5 + $0x8] sm:$0xf]
        %v1008 = vld [vmem:[#allocation5 + $0xc] sm:$0xf]
        %v1009 = vld [vmem:[#allocation5 + $0x10] sm:$0xf]
        %v1010 = vld [vmem:[#allocation5 + $0x14] sm:$0xf]
        %v1011 = vld [vmem:[#allocation5 + $0x18] sm:$0xf]
        %v1012 = vld [vmem:[#allocation5 + $0x1c] sm:$0xf]
        %v1013 = vld [vmem:[#allocation5 + $0x20] sm:$0xf]
        %v1014 = vld [vmem:[#allocation5 + $0x24] sm:$0xf]
        %v1015 = vld [vmem:[#allocation5 + $0x28] sm:$0xf]
        %v1016 = vld [vmem:[#allocation5 + $0x2c] sm:$0xf]
        %v1017 = vld [vmem:[#allocation5 + $0x30] sm:$0xf]
        %v1018 = vld [vmem:[#allocation5 + $0x34] sm:$0xf]
        %v1019 = vld [vmem:[#allocation5 + $0x38] sm:$0xf]
        %v1020 = vld [vmem:[#allocation5 + $0x3c] sm:$0xf]
        %v1021 = vld [vmem:[#allocation5 + $0x40] sm:$0xf]
        %v1022 = vld [vmem:[#allocation5 + $0x44] sm:$0xf]
        %v1023 = vld [vmem:[#allocation5 + $0x48] sm:$0xf]
        %v1024 = vld [vmem:[#allocation5 + $0x4c] sm:$0xf]
        %v1025 = vld [vmem:[#allocation5 + $0x50] sm:$0xf]
        %v1026 = vld [vmem:[#allocation5 + $0x54] sm:$0xf]
        %v1027 = vld [vmem:[#allocation5 + $0x58] sm:$0xf]
        %v1028 = vld [vmem:[#allocation5 + $0x5c] sm:$0xf]
        %v1029 = vld [vmem:[#allocation5 + $0x60] sm:$0xf]
        %v1030 = vld [vmem:[#allocation5 + $0x64] sm:$0xf]
        %v1031 = vld [vmem:[#allocation5 + $0x68] sm:$0xf]
        %v1032 = vld [vmem:[#allocation5 + $0x6c] sm:$0xf]
        %v1033 = vld [vmem:[#allocation5 + $0x70] sm:$0xf]
        %v1034 = vld [vmem:[#allocation5 + $0x74] sm:$0xf]
        %v1035 = vld [vmem:[#allocation5 + $0x78] sm:$0xf]
        %v1036 = vld [vmem:[#allocation5 + $0x7c] sm:$0xf]
        %v1037 = vld [vmem:[#allocation5 + $0x80] sm:$0xf]
        %v1038 = vld [vmem:[#allocation5 + $0x84] sm:$0xf]
        %v1039 = vld [vmem:[#allocation5 + $0x88] sm:$0xf]
        %v1040 = vld [vmem:[#allocation5 + $0x8c] sm:$0xf]
        %v1041 = vld [vmem:[#allocation5 + $0x90] sm:$0xf]
        %v1042 = vld [vmem:[#allocation5 + $0x94] sm:$0xf]
        %v1043 = vld [vmem:[#allocation5 + $0x98] sm:$0xf]
        %v1044 = vld [vmem:[#allocation5 + $0x9c] sm:$0xf]
        %v1045 = vld [vmem:[#allocation5 + $0xa0] sm:$0xf]
        %v1046 = vld [vmem:[#allocation5 + $0xa4] sm:$0xf]
        %v1047 = vld [vmem:[#allocation5 + $0xa8] sm:$0xf]
        %v1048 = vld [vmem:[#allocation5 + $0xac] sm:$0xf]
        %v1049 = vld [vmem:[#allocation5 + $0xb0] sm:$0xf]
        %v1050 = vld [vmem:[#allocation5 + $0xb4] sm:$0xf]
        %v1051 = vld [vmem:[#allocation5 + $0xb8] sm:$0xf]
        %v1052 = vld [vmem:[#allocation5 + $0xbc] sm:$0xf]
        %v1053 = vpack.c.bf16 %v367, %v366
        %v1054 = vpack.c.bf16 %v534, %v532
        %v1055 = vpack.c.bf16 %v735, %v733
        %v1056 = vpack.c.bf16 %v370, %v368
        %v1057 = vpack.c.bf16 %v539, %v536
        %v1058 = vpack.c.bf16 %v740, %v737
        %v1059 = vpack.c.bf16 %v372, %v371
        %v1060 = vpack.c.bf16 %v543, %v541
        %v1061 = vpack.c.bf16 %v744, %v742
        %v1062 = vpack.c.bf16 %v375, %v374
        %v1063 = vpack.c.bf16 %v548, %v546
        %v1064 = vpack.c.bf16 %v749, %v747
        %v1065 = vpack.c.bf16 %v378, %v376
        %v1066 = vpack.c.bf16 %v553, %v550
        %v1067 = vpack.c.bf16 %v754, %v751
        %v1068 = vpack.c.bf16 %v380, %v379
        %v1069 = vpack.c.bf16 %v557, %v555
        %v1070 = vpack.c.bf16 %v758, %v756
        %v1071 = vpack.c.bf16 %v383, %v382
        %v1072 = vpack.c.bf16 %v562, %v560
        %v1073 = vpack.c.bf16 %v763, %v761
        %v1074 = vpack.c.bf16 %v386, %v384
        %v1075 = vpack.c.bf16 %v567, %v564
        %v1076 = vpack.c.bf16 %v768, %v765
        %v1077 = vpack.c.bf16 %v388, %v387
        %v1078 = vpack.c.bf16 %v571, %v569
        %v1079 = vpack.c.bf16 %v772, %v770
        %v1080 = vpack.c.bf16 %v391, %v390
        %v1081 = vpack.c.bf16 %v576, %v574
        %v1082 = vpack.c.bf16 %v777, %v775
        %v1083 = vpack.c.bf16 %v394, %v392
        %v1084 = vpack.c.bf16 %v581, %v578
        %v1085 = vpack.c.bf16 %v782, %v779
        %v1086 = vpack.c.bf16 %v396, %v395
        %v1087 = vpack.c.bf16 %v585, %v583
        %v1088 = vpack.c.bf16 %v786, %v784
        %v1089 = vpack.c.bf16 %v399, %v398
        %v1090 = vpack.c.bf16 %v590, %v588
        %v1091 = vpack.c.bf16 %v791, %v789
        %v1092 = vpack.c.bf16 %v402, %v400
        %v1093 = vpack.c.bf16 %v595, %v592
        %v1094 = vpack.c.bf16 %v796, %v793
        %v1095 = vpack.c.bf16 %v404, %v403
        %v1096 = vpack.c.bf16 %v599, %v597
        %v1097 = vpack.c.bf16 %v800, %v798
        %v1098 = vpack.c.bf16 %v407, %v406
        %v1099 = vpack.c.bf16 %v604, %v602
        %v1100 = vpack.c.bf16 %v805, %v803
        %v1101 = vpack.c.bf16 %v410, %v408
        %v1102 = vpack.c.bf16 %v609, %v606
        %v1103 = vpack.c.bf16 %v810, %v807
        %v1104 = vpack.c.bf16 %v412, %v411
        %v1105 = vpack.c.bf16 %v613, %v611
        %v1106 = vpack.c.bf16 %v814, %v812
        %v1107 = vpack.c.bf16 %v415, %v414
        %v1108 = vpack.c.bf16 %v618, %v616
        %v1109 = vpack.c.bf16 %v819, %v817
        %v1110 = vpack.c.bf16 %v418, %v416
        %v1111 = vpack.c.bf16 %v623, %v620
        %v1112 = vpack.c.bf16 %v824, %v821
        %v1113 = vpack.c.bf16 %v420, %v419
        %v1114 = vpack.c.bf16 %v627, %v625
        %v1115 = vpack.c.bf16 %v828, %v826
        %v1116 = vpack.c.bf16 %v423, %v422
        %v1117 = vpack.c.bf16 %v632, %v630
        %v1118 = vpack.c.bf16 %v833, %v831
        %v1119 = vpack.c.bf16 %v426, %v424
        %v1120 = vpack.c.bf16 %v637, %v634
        %v1121 = vpack.c.bf16 %v838, %v835
        %v1122 = vpack.c.bf16 %v428, %v427
        %v1123 = vpack.c.bf16 %v641, %v639
        %v1124 = vpack.c.bf16 %v842, %v840
        %v1125 = vpack.c.bf16 %v431, %v430
        %v1126 = vpack.c.bf16 %v646, %v644
        %v1127 = vpack.c.bf16 %v847, %v845
        %v1128 = vpack.c.bf16 %v434, %v432
        %v1129 = vpack.c.bf16 %v651, %v648
        %v1130 = vpack.c.bf16 %v852, %v849
        %v1131 = vpack.c.bf16 %v436, %v435
        %v1132 = vpack.c.bf16 %v655, %v653
        %v1133 = vpack.c.bf16 %v856, %v854
        %s1134 = scalar_lea.vmem [#allocation5], 192
        %v1135 = vld [vmem:[%s1134] sm:$0xf]
        %v1136 = vld [vmem:[%s1134 + $0x4] sm:$0xf]
        %v1137 = vld [vmem:[%s1134 + $0x8] sm:$0xf]
        %v1138 = vld [vmem:[%s1134 + $0xc] sm:$0xf]
        %v1139 = vld [vmem:[%s1134 + $0x10] sm:$0xf]
        %v1140 = vld [vmem:[%s1134 + $0x14] sm:$0xf]
        %v1141 = vld [vmem:[%s1134 + $0x18] sm:$0xf]
        %v1142 = vld [vmem:[%s1134 + $0x1c] sm:$0xf]
        %v1143 = vld [vmem:[%s1134 + $0x20] sm:$0xf]
        %v1144 = vld [vmem:[%s1134 + $0x24] sm:$0xf]
        %v1145 = vld [vmem:[%s1134 + $0x28] sm:$0xf]
        %v1146 = vld [vmem:[%s1134 + $0x2c] sm:$0xf]
        %v1147 = vld [vmem:[%s1134 + $0x30] sm:$0xf]
        %v1148 = vld [vmem:[%s1134 + $0x34] sm:$0xf]
        %v1149 = vld [vmem:[%s1134 + $0x38] sm:$0xf]
        %v1150 = vld [vmem:[%s1134 + $0x3c] sm:$0xf]
        %v1151 = vld [vmem:[%s1134 + $0x40] sm:$0xf]
        %v1152 = vld [vmem:[%s1134 + $0x44] sm:$0xf]
        %v1153 = vld [vmem:[%s1134 + $0x48] sm:$0xf]
        %v1154 = vld [vmem:[%s1134 + $0x4c] sm:$0xf]
        %v1155 = vld [vmem:[%s1134 + $0x50] sm:$0xf]
        %v1156 = vld [vmem:[%s1134 + $0x54] sm:$0xf]
        %v1157 = vld [vmem:[%s1134 + $0x58] sm:$0xf]
        %v1158 = vld [vmem:[%s1134 + $0x5c] sm:$0xf]
        %v1159 = vld [vmem:[%s1134 + $0x60] sm:$0xf]
        %v1160 = vld [vmem:[%s1134 + $0x64] sm:$0xf]
        %v1161 = vld [vmem:[%s1134 + $0x68] sm:$0xf]
        %v1162 = vld [vmem:[%s1134 + $0x6c] sm:$0xf]
        %v1163 = vld [vmem:[%s1134 + $0x70] sm:$0xf]
        %v1164 = vld [vmem:[%s1134 + $0x74] sm:$0xf]
        %v1165 = vld [vmem:[%s1134 + $0x78] sm:$0xf]
        %v1166 = vld [vmem:[%s1134 + $0x7c] sm:$0xf]
        %v1167 = vld [vmem:[%s1134 + $0x80] sm:$0xf]
        %v1168 = vld [vmem:[%s1134 + $0x84] sm:$0xf]
        %v1169 = vld [vmem:[%s1134 + $0x88] sm:$0xf]
        %v1170 = vld [vmem:[%s1134 + $0x8c] sm:$0xf]
        %v1171 = vld [vmem:[%s1134 + $0x90] sm:$0xf]
        %v1172 = vld [vmem:[%s1134 + $0x94] sm:$0xf]
        %v1173 = vld [vmem:[%s1134 + $0x98] sm:$0xf]
        %v1174 = vld [vmem:[%s1134 + $0x9c] sm:$0xf]
        %v1175 = vld [vmem:[%s1134 + $0xa0] sm:$0xf]
        %v1176 = vld [vmem:[%s1134 + $0xa4] sm:$0xf]
        %v1177 = vld [vmem:[%s1134 + $0xa8] sm:$0xf]
        %v1178 = vld [vmem:[%s1134 + $0xac] sm:$0xf]
        %v1179 = vld [vmem:[%s1134 + $0xb0] sm:$0xf]
        %v1180 = vld [vmem:[%s1134 + $0xb4] sm:$0xf]
        %v1181 = vld [vmem:[%s1134 + $0xb8] sm:$0xf]
        %v1182 = vld [vmem:[%s1134 + $0xbc] sm:$0xf]
        %v1231 = vunpack.c.l.b16 %v1135
        %v1232 = vunpack.c.l.b16 %v1136
        %v1233 = vunpack.c.l.b16 %v1137
        %v1234 = vunpack.c.l.b16 %v1138
        %v1235 = vunpack.c.l.b16 %v1139
        %v1236 = vunpack.c.l.b16 %v1140
        %v1237 = vunpack.c.l.b16 %v1141
        %v1238 = vunpack.c.l.b16 %v1142
        %v1239 = vunpack.c.l.b16 %v1143
        %v1240 = vunpack.c.l.b16 %v1144
        %v1241 = vunpack.c.l.b16 %v1145
        %v1242 = vunpack.c.l.b16 %v1146
        %v1243 = vunpack.c.l.b16 %v1147
        %v1244 = vunpack.c.l.b16 %v1148
        %v1245 = vunpack.c.l.b16 %v1149
        %v1246 = vunpack.c.l.b16 %v1150
        %v1247 = vunpack.c.l.b16 %v1151
        %v1248 = vunpack.c.l.b16 %v1152
        %v1249 = vunpack.c.l.b16 %v1153
        %v1250 = vunpack.c.l.b16 %v1154
        %v1251 = vunpack.c.l.b16 %v1155
        %v1252 = vunpack.c.l.b16 %v1156
        %v1253 = vunpack.c.l.b16 %v1157
        %v1254 = vunpack.c.l.b16 %v1158
        %v1255 = vunpack.c.l.b16 %v1159
        %v1256 = vunpack.c.l.b16 %v1160
        %v1257 = vunpack.c.l.b16 %v1161
        %v1258 = vunpack.c.l.b16 %v1162
        %v1259 = vunpack.c.l.b16 %v1163
        %v1260 = vunpack.c.l.b16 %v1164
        %v1261 = vunpack.c.l.b16 %v1165
        %v1262 = vunpack.c.l.b16 %v1166
        %v1263 = vunpack.c.l.b16 %v1167
        %v1264 = vunpack.c.l.b16 %v1168
        %v1265 = vunpack.c.l.b16 %v1169
        %v1266 = vunpack.c.l.b16 %v1170
        %v1267 = vunpack.c.l.b16 %v1171
        %v1268 = vunpack.c.l.b16 %v1172
        %v1269 = vunpack.c.l.b16 %v1173
        %v1270 = vunpack.c.l.b16 %v1174
        %v1271 = vunpack.c.l.b16 %v1175
        %v1272 = vunpack.c.l.b16 %v1176
        %v1273 = vunpack.c.l.b16 %v1177
        %v1274 = vunpack.c.l.b16 %v1178
        %v1275 = vunpack.c.l.b16 %v1179
        %v1276 = vunpack.c.l.b16 %v1180
        %v1277 = vunpack.c.l.b16 %v1181
        %v1278 = vunpack.c.l.b16 %v1182
        %v1279 = vpack.c.b16 %v1232, %v1231
        %v1280 = vpack.c.b16 %v1234, %v1233
        %v1281 = vpack.c.b16 %v1236, %v1235
        %v1282 = vpack.c.b16 %v1238, %v1237
        %v1283 = vpack.c.b16 %v1240, %v1239
        %v1284 = vpack.c.b16 %v1242, %v1241
        %v1285 = vpack.c.b16 %v1244, %v1243
        %v1286 = vpack.c.b16 %v1246, %v1245
        %v1287 = vpack.c.b16 %v1248, %v1247
        %v1288 = vpack.c.b16 %v1250, %v1249
        %v1289 = vpack.c.b16 %v1252, %v1251
        %v1290 = vpack.c.b16 %v1254, %v1253
        %v1291 = vpack.c.b16 %v1256, %v1255
        %v1292 = vpack.c.b16 %v1258, %v1257
        %v1293 = vpack.c.b16 %v1260, %v1259
        %v1294 = vpack.c.b16 %v1262, %v1261
        %v1295 = vpack.c.b16 %v1264, %v1263
        %v1296 = vpack.c.b16 %v1266, %v1265
        %v1297 = vpack.c.b16 %v1268, %v1267
        %v1298 = vpack.c.b16 %v1270, %v1269
        %v1299 = vpack.c.b16 %v1272, %v1271
        %v1300 = vpack.c.b16 %v1274, %v1273
        %v1301 = vpack.c.b16 %v1276, %v1275
        %v1302 = vpack.c.b16 %v1278, %v1277
        %1327 = vmatpush.bf16.msra.mxu0 %v1286
        %1328 = vmatpush.bf16.msra.mxu0 %v1285
        %1329 = vmatpush.bf16.msra.mxu0 %v1284
        %1330 = vmatpush.bf16.msra.mxu0 %v1283
        %1331 = vmatpush.bf16.msra.mxu0 %v1282
        %1332 = vmatpush.bf16.msra.mxu0 %v1281
        %1333 = vmatpush.bf16.msra.mxu0 %v1280
        %1334 = vmatpush.bf16.msra.mxu0 %v1279
        %1335 = vmatmul.bf16.gmra.mxu0 %v1053
        %v1336 = vpop.f32.mrf.mxu0
        %v1337 = vadd.f32 0.0, %v1336
        %v1338 = vpop.f32.mrf.mxu0
        %v1339 = vadd.f32 0.0, %v1338
        %1340 = vmatmul.bf16.gmra.mxu0 %v1056
        %v1341 = vpop.f32.mrf.mxu0
        %v1342 = vadd.f32 0.0, %v1341
        %v1343 = vpop.f32.mrf.mxu0
        %v1344 = vadd.f32 0.0, %v1343
        %1345 = vmatmul.bf16.gmra.mxu0 %v1059
        %v1346 = vpop.f32.mrf.mxu0
        %v1347 = vadd.f32 0.0, %v1346
        %v1348 = vpop.f32.mrf.mxu0
        %v1349 = vadd.f32 0.0, %v1348
        %1350 = vmatmul.bf16.gmra.mxu0 %v1062
        %v1351 = vpop.f32.mrf.mxu0
        %v1352 = vadd.f32 0.0, %v1351
        %v1353 = vpop.f32.mrf.mxu0
        %v1354 = vadd.f32 0.0, %v1353
        %1355 = vmatmul.bf16.gmra.mxu0 %v1065
        %v1356 = vpop.f32.mrf.mxu0
        %v1357 = vadd.f32 0.0, %v1356
        %v1358 = vpop.f32.mrf.mxu0
        %v1359 = vadd.f32 0.0, %v1358
        %1360 = vmatmul.bf16.gmra.mxu0 %v1068
        %v1361 = vpop.f32.mrf.mxu0
        %v1362 = vadd.f32 0.0, %v1361
        %v1363 = vpop.f32.mrf.mxu0
        %v1364 = vadd.f32 0.0, %v1363
        %1365 = vmatmul.bf16.gmra.mxu0 %v1071
        %v1366 = vpop.f32.mrf.mxu0
        %v1367 = vadd.f32 0.0, %v1366
        %v1368 = vpop.f32.mrf.mxu0
        %v1369 = vadd.f32 0.0, %v1368
        %1370 = vmatmul.bf16.gmra.mxu0 %v1074
        %v1371 = vpop.f32.mrf.mxu0
        %v1372 = vadd.f32 0.0, %v1371
        %v1373 = vpop.f32.mrf.mxu0
        %v1374 = vadd.f32 0.0, %v1373
        %1375 = vmatmul.bf16.gmra.mxu0 %v1077
        %v1376 = vpop.f32.mrf.mxu0
        %v1377 = vadd.f32 0.0, %v1376
        %v1378 = vpop.f32.mrf.mxu0
        %v1379 = vadd.f32 0.0, %v1378
        %1380 = vmatmul.bf16.gmra.mxu0 %v1080
        %v1381 = vpop.f32.mrf.mxu0
        %v1382 = vadd.f32 0.0, %v1381
        %v1383 = vpop.f32.mrf.mxu0
        %v1384 = vadd.f32 0.0, %v1383
        %1385 = vmatmul.bf16.gmra.mxu0 %v1083
        %v1386 = vpop.f32.mrf.mxu0
        %v1387 = vadd.f32 0.0, %v1386
        %v1388 = vpop.f32.mrf.mxu0
        %v1389 = vadd.f32 0.0, %v1388
        %1390 = vmatmul.bf16.gmra.mxu0 %v1086
        %v1391 = vpop.f32.mrf.mxu0
        %v1392 = vadd.f32 0.0, %v1391
        %v1393 = vpop.f32.mrf.mxu0
        %v1394 = vadd.f32 0.0, %v1393
        %1395 = vmatmul.bf16.gmra.mxu0 %v1089
        %v1396 = vpop.f32.mrf.mxu0
        %v1397 = vadd.f32 0.0, %v1396
        %v1398 = vpop.f32.mrf.mxu0
        %v1399 = vadd.f32 0.0, %v1398
        %1400 = vmatmul.bf16.gmra.mxu0 %v1092
        %v1401 = vpop.f32.mrf.mxu0
        %v1402 = vadd.f32 0.0, %v1401
        %v1403 = vpop.f32.mrf.mxu0
        %v1404 = vadd.f32 0.0, %v1403
        %1405 = vmatmul.bf16.gmra.mxu0 %v1095
        %v1406 = vpop.f32.mrf.mxu0
        %v1407 = vadd.f32 0.0, %v1406
        %v1408 = vpop.f32.mrf.mxu0
        %v1409 = vadd.f32 0.0, %v1408
        %1410 = vmatmul.bf16.gmra.mxu0 %v1098
        %v1411 = vpop.f32.mrf.mxu0
        %v1412 = vadd.f32 0.0, %v1411
        %v1413 = vpop.f32.mrf.mxu0
        %v1414 = vadd.f32 0.0, %v1413
        %1415 = vmatmul.bf16.gmra.mxu0 %v1101
        %v1416 = vpop.f32.mrf.mxu0
        %v1417 = vadd.f32 0.0, %v1416
        %v1418 = vpop.f32.mrf.mxu0
        %v1419 = vadd.f32 0.0, %v1418
        %1420 = vmatmul.bf16.gmra.mxu0 %v1104
        %v1421 = vpop.f32.mrf.mxu0
        %v1422 = vadd.f32 0.0, %v1421
        %v1423 = vpop.f32.mrf.mxu0
        %v1424 = vadd.f32 0.0, %v1423
        %1425 = vmatmul.bf16.gmra.mxu0 %v1107
        %v1426 = vpop.f32.mrf.mxu0
        %v1427 = vadd.f32 0.0, %v1426
        %v1428 = vpop.f32.mrf.mxu0
        %v1429 = vadd.f32 0.0, %v1428
        %1430 = vmatmul.bf16.gmra.mxu0 %v1110
        %v1431 = vpop.f32.mrf.mxu0
        %v1432 = vadd.f32 0.0, %v1431
        %v1433 = vpop.f32.mrf.mxu0
        %v1434 = vadd.f32 0.0, %v1433
        %1435 = vmatmul.bf16.gmra.mxu0 %v1113
        %v1436 = vpop.f32.mrf.mxu0
        %v1437 = vadd.f32 0.0, %v1436
        %v1438 = vpop.f32.mrf.mxu0
        %v1439 = vadd.f32 0.0, %v1438
        %1440 = vmatmul.bf16.gmra.mxu0 %v1116
        %v1441 = vpop.f32.mrf.mxu0
        %v1442 = vadd.f32 0.0, %v1441
        %v1443 = vpop.f32.mrf.mxu0
        %v1444 = vadd.f32 0.0, %v1443
        %1445 = vmatmul.bf16.gmra.mxu0 %v1119
        %v1446 = vpop.f32.mrf.mxu0
        %v1447 = vadd.f32 0.0, %v1446
        %v1448 = vpop.f32.mrf.mxu0
        %v1449 = vadd.f32 0.0, %v1448
        %1450 = vmatmul.bf16.gmra.mxu0 %v1122
        %v1451 = vpop.f32.mrf.mxu0
        %v1452 = vadd.f32 0.0, %v1451
        %v1453 = vpop.f32.mrf.mxu0
        %v1454 = vadd.f32 0.0, %v1453
        %1455 = vmatmul.bf16.gmra.mxu0 %v1125
        %v1456 = vpop.f32.mrf.mxu0
        %v1457 = vadd.f32 0.0, %v1456
        %v1458 = vpop.f32.mrf.mxu0
        %v1459 = vadd.f32 0.0, %v1458
        %1460 = vmatmul.bf16.gmra.mxu0 %v1128
        %v1461 = vpop.f32.mrf.mxu0
        %v1462 = vadd.f32 0.0, %v1461
        %v1463 = vpop.f32.mrf.mxu0
        %v1464 = vadd.f32 0.0, %v1463
        %1465 = vmatmul.bf16.gmra.mxu0 %v1131
        %v1466 = vpop.f32.mrf.mxu0
        %v1467 = vadd.f32 0.0, %v1466
        %v1468 = vpop.f32.mrf.mxu0
        %v1469 = vadd.f32 0.0, %v1468
        %1470 = vdwg.mxu0
        %1471 = vmatpush.bf16.msra.mxu0 %v1294
        %1472 = vmatpush.bf16.msra.mxu0 %v1293
        %1473 = vmatpush.bf16.msra.mxu0 %v1292
        %1474 = vmatpush.bf16.msra.mxu0 %v1291
        %1475 = vmatpush.bf16.msra.mxu0 %v1290
        %1476 = vmatpush.bf16.msra.mxu0 %v1289
        %1477 = vmatpush.bf16.msra.mxu0 %v1288
        %1478 = vmatpush.bf16.msra.mxu0 %v1287
        %1479 = vmatmul.bf16.gmra.mxu0 %v1054
        %v1480 = vpop.f32.mrf.mxu0
        %v1481 = vadd.f32 %v1337, %v1480
        %v1482 = vpop.f32.mrf.mxu0
        %v1483 = vadd.f32 %v1339, %v1482
        %1484 = vmatmul.bf16.gmra.mxu0 %v1057
        %v1485 = vpop.f32.mrf.mxu0
        %v1486 = vadd.f32 %v1342, %v1485
        %v1487 = vpop.f32.mrf.mxu0
        %v1488 = vadd.f32 %v1344, %v1487
        %1489 = vmatmul.bf16.gmra.mxu0 %v1060
        %v1490 = vpop.f32.mrf.mxu0
        %v1491 = vadd.f32 %v1347, %v1490
        %v1492 = vpop.f32.mrf.mxu0
        %v1493 = vadd.f32 %v1349, %v1492
        %1494 = vmatmul.bf16.gmra.mxu0 %v1063
        %v1495 = vpop.f32.mrf.mxu0
        %v1496 = vadd.f32 %v1352, %v1495
        %v1497 = vpop.f32.mrf.mxu0
        %v1498 = vadd.f32 %v1354, %v1497
        %1499 = vmatmul.bf16.gmra.mxu0 %v1066
        %v1500 = vpop.f32.mrf.mxu0
        %v1501 = vadd.f32 %v1357, %v1500
        %v1502 = vpop.f32.mrf.mxu0
        %v1503 = vadd.f32 %v1359, %v1502
        %1504 = vmatmul.bf16.gmra.mxu0 %v1069
        %v1505 = vpop.f32.mrf.mxu0
        %v1506 = vadd.f32 %v1362, %v1505
        %v1507 = vpop.f32.mrf.mxu0
        %v1508 = vadd.f32 %v1364, %v1507
        %1509 = vmatmul.bf16.gmra.mxu0 %v1072
        %v1510 = vpop.f32.mrf.mxu0
        %v1511 = vadd.f32 %v1367, %v1510
        %v1512 = vpop.f32.mrf.mxu0
        %v1513 = vadd.f32 %v1369, %v1512
        %1514 = vmatmul.bf16.gmra.mxu0 %v1075
        %v1515 = vpop.f32.mrf.mxu0
        %v1516 = vadd.f32 %v1372, %v1515
        %v1517 = vpop.f32.mrf.mxu0
        %v1518 = vadd.f32 %v1374, %v1517
        %1519 = vmatmul.bf16.gmra.mxu0 %v1078
        %v1520 = vpop.f32.mrf.mxu0
        %v1521 = vadd.f32 %v1377, %v1520
        %v1522 = vpop.f32.mrf.mxu0
        %v1523 = vadd.f32 %v1379, %v1522
        %1524 = vmatmul.bf16.gmra.mxu0 %v1081
        %v1525 = vpop.f32.mrf.mxu0
        %v1526 = vadd.f32 %v1382, %v1525
        %v1527 = vpop.f32.mrf.mxu0
        %v1528 = vadd.f32 %v1384, %v1527
        %1529 = vmatmul.bf16.gmra.mxu0 %v1084
        %v1530 = vpop.f32.mrf.mxu0
        %v1531 = vadd.f32 %v1387, %v1530
        %v1532 = vpop.f32.mrf.mxu0
        %v1533 = vadd.f32 %v1389, %v1532
        %1534 = vmatmul.bf16.gmra.mxu0 %v1087
        %v1535 = vpop.f32.mrf.mxu0
        %v1536 = vadd.f32 %v1392, %v1535
        %v1537 = vpop.f32.mrf.mxu0
        %v1538 = vadd.f32 %v1394, %v1537
        %1539 = vmatmul.bf16.gmra.mxu0 %v1090
        %v1540 = vpop.f32.mrf.mxu0
        %v1541 = vadd.f32 %v1397, %v1540
        %v1542 = vpop.f32.mrf.mxu0
        %v1543 = vadd.f32 %v1399, %v1542
        %1544 = vmatmul.bf16.gmra.mxu0 %v1093
        %v1545 = vpop.f32.mrf.mxu0
        %v1546 = vadd.f32 %v1402, %v1545
        %v1547 = vpop.f32.mrf.mxu0
        %v1548 = vadd.f32 %v1404, %v1547
        %1549 = vmatmul.bf16.gmra.mxu0 %v1096
        %v1550 = vpop.f32.mrf.mxu0
        %v1551 = vadd.f32 %v1407, %v1550
        %v1552 = vpop.f32.mrf.mxu0
        %v1553 = vadd.f32 %v1409, %v1552
        %1554 = vmatmul.bf16.gmra.mxu0 %v1099
        %v1555 = vpop.f32.mrf.mxu0
        %v1556 = vadd.f32 %v1412, %v1555
        %v1557 = vpop.f32.mrf.mxu0
        %v1558 = vadd.f32 %v1414, %v1557
        %1559 = vmatmul.bf16.gmra.mxu0 %v1102
        %v1560 = vpop.f32.mrf.mxu0
        %v1561 = vadd.f32 %v1417, %v1560
        %v1562 = vpop.f32.mrf.mxu0
        %v1563 = vadd.f32 %v1419, %v1562
        %1564 = vmatmul.bf16.gmra.mxu0 %v1105
        %v1565 = vpop.f32.mrf.mxu0
        %v1566 = vadd.f32 %v1422, %v1565
        %v1567 = vpop.f32.mrf.mxu0
        %v1568 = vadd.f32 %v1424, %v1567
        %1569 = vmatmul.bf16.gmra.mxu0 %v1108
        %v1570 = vpop.f32.mrf.mxu0
        %v1571 = vadd.f32 %v1427, %v1570
        %v1572 = vpop.f32.mrf.mxu0
        %v1573 = vadd.f32 %v1429, %v1572
        %1574 = vmatmul.bf16.gmra.mxu0 %v1111
        %v1575 = vpop.f32.mrf.mxu0
        %v1576 = vadd.f32 %v1432, %v1575
        %v1577 = vpop.f32.mrf.mxu0
        %v1578 = vadd.f32 %v1434, %v1577
        %1579 = vmatmul.bf16.gmra.mxu0 %v1114
        %v1580 = vpop.f32.mrf.mxu0
        %v1581 = vadd.f32 %v1437, %v1580
        %v1582 = vpop.f32.mrf.mxu0
        %v1583 = vadd.f32 %v1439, %v1582
        %1584 = vmatmul.bf16.gmra.mxu0 %v1117
        %v1585 = vpop.f32.mrf.mxu0
        %v1586 = vadd.f32 %v1442, %v1585
        %v1587 = vpop.f32.mrf.mxu0
        %v1588 = vadd.f32 %v1444, %v1587
        %1589 = vmatmul.bf16.gmra.mxu0 %v1120
        %v1590 = vpop.f32.mrf.mxu0
        %v1591 = vadd.f32 %v1447, %v1590
        %v1592 = vpop.f32.mrf.mxu0
        %v1593 = vadd.f32 %v1449, %v1592
        %1594 = vmatmul.bf16.gmra.mxu0 %v1123
        %v1595 = vpop.f32.mrf.mxu0
        %v1596 = vadd.f32 %v1452, %v1595
        %v1597 = vpop.f32.mrf.mxu0
        %v1598 = vadd.f32 %v1454, %v1597
        %1599 = vmatmul.bf16.gmra.mxu0 %v1126
        %v1600 = vpop.f32.mrf.mxu0
        %v1601 = vadd.f32 %v1457, %v1600
        %v1602 = vpop.f32.mrf.mxu0
        %v1603 = vadd.f32 %v1459, %v1602
        %1604 = vmatmul.bf16.gmra.mxu0 %v1129
        %v1605 = vpop.f32.mrf.mxu0
        %v1606 = vadd.f32 %v1462, %v1605
        %v1607 = vpop.f32.mrf.mxu0
        %v1608 = vadd.f32 %v1464, %v1607
        %1609 = vmatmul.bf16.gmra.mxu0 %v1132
        %v1610 = vpop.f32.mrf.mxu0
        %v1611 = vadd.f32 %v1467, %v1610
        %v1612 = vpop.f32.mrf.mxu0
        %v1613 = vadd.f32 %v1469, %v1612
        %1614 = vdwg.mxu0
        %1615 = vmatpush.bf16.msra.mxu0 %v1302
        %1616 = vmatpush.bf16.msra.mxu0 %v1301
        %1617 = vmatpush.bf16.msra.mxu0 %v1300
        %1618 = vmatpush.bf16.msra.mxu0 %v1299
        %1619 = vmatpush.bf16.msra.mxu0 %v1298
        %1620 = vmatpush.bf16.msra.mxu0 %v1297
        %1621 = vmatpush.bf16.msra.mxu0 %v1296
        %1622 = vmatpush.bf16.msra.mxu0 %v1295
        %1623 = vmatmul.bf16.gmra.mxu0 %v1055
        %v1624 = vpop.f32.mrf.mxu0
        %v1625 = vadd.f32 %v1481, %v1624
        %v1626 = vpop.f32.mrf.mxu0
        %v1627 = vadd.f32 %v1483, %v1626
        %1628 = vmatmul.bf16.gmra.mxu0 %v1058
        %v1629 = vpop.f32.mrf.mxu0
        %v1630 = vadd.f32 %v1486, %v1629
        %v1631 = vpop.f32.mrf.mxu0
        %v1632 = vadd.f32 %v1488, %v1631
        %1633 = vmatmul.bf16.gmra.mxu0 %v1061
        %v1634 = vpop.f32.mrf.mxu0
        %v1635 = vadd.f32 %v1491, %v1634
        %v1636 = vpop.f32.mrf.mxu0
        %v1637 = vadd.f32 %v1493, %v1636
        %1638 = vmatmul.bf16.gmra.mxu0 %v1064
        %v1639 = vpop.f32.mrf.mxu0
        %v1640 = vadd.f32 %v1496, %v1639
        %v1641 = vpop.f32.mrf.mxu0
        %v1642 = vadd.f32 %v1498, %v1641
        %1643 = vmatmul.bf16.gmra.mxu0 %v1067
        %v1644 = vpop.f32.mrf.mxu0
        %v1645 = vadd.f32 %v1501, %v1644
        %v1646 = vpop.f32.mrf.mxu0
        %v1647 = vadd.f32 %v1503, %v1646
        %1648 = vmatmul.bf16.gmra.mxu0 %v1070
        %v1649 = vpop.f32.mrf.mxu0
        %v1650 = vadd.f32 %v1506, %v1649
        %v1651 = vpop.f32.mrf.mxu0
        %v1652 = vadd.f32 %v1508, %v1651
        %1653 = vmatmul.bf16.gmra.mxu0 %v1073
        %v1654 = vpop.f32.mrf.mxu0
        %v1655 = vadd.f32 %v1511, %v1654
        %v1656 = vpop.f32.mrf.mxu0
        %v1657 = vadd.f32 %v1513, %v1656
        %1658 = vmatmul.bf16.gmra.mxu0 %v1076
        %v1659 = vpop.f32.mrf.mxu0
        %v1660 = vadd.f32 %v1516, %v1659
        %v1661 = vpop.f32.mrf.mxu0
        %v1662 = vadd.f32 %v1518, %v1661
        %1663 = vmatmul.bf16.gmra.mxu0 %v1079
        %v1664 = vpop.f32.mrf.mxu0
        %v1665 = vadd.f32 %v1521, %v1664
        %v1666 = vpop.f32.mrf.mxu0
        %v1667 = vadd.f32 %v1523, %v1666
        %1668 = vmatmul.bf16.gmra.mxu0 %v1082
        %v1669 = vpop.f32.mrf.mxu0
        %v1670 = vadd.f32 %v1526, %v1669
        %v1671 = vpop.f32.mrf.mxu0
        %v1672 = vadd.f32 %v1528, %v1671
        %1673 = vmatmul.bf16.gmra.mxu0 %v1085
        %v1674 = vpop.f32.mrf.mxu0
        %v1675 = vadd.f32 %v1531, %v1674
        %v1676 = vpop.f32.mrf.mxu0
        %v1677 = vadd.f32 %v1533, %v1676
        %1678 = vmatmul.bf16.gmra.mxu0 %v1088
        %v1679 = vpop.f32.mrf.mxu0
        %v1680 = vadd.f32 %v1536, %v1679
        %v1681 = vpop.f32.mrf.mxu0
        %v1682 = vadd.f32 %v1538, %v1681
        %1683 = vmatmul.bf16.gmra.mxu0 %v1091
        %v1684 = vpop.f32.mrf.mxu0
        %v1685 = vadd.f32 %v1541, %v1684
        %v1686 = vpop.f32.mrf.mxu0
        %v1687 = vadd.f32 %v1543, %v1686
        %1688 = vmatmul.bf16.gmra.mxu0 %v1094
        %v1689 = vpop.f32.mrf.mxu0
        %v1690 = vadd.f32 %v1546, %v1689
        %v1691 = vpop.f32.mrf.mxu0
        %v1692 = vadd.f32 %v1548, %v1691
        %1693 = vmatmul.bf16.gmra.mxu0 %v1097
        %v1694 = vpop.f32.mrf.mxu0
        %v1695 = vadd.f32 %v1551, %v1694
        %v1696 = vpop.f32.mrf.mxu0
        %v1697 = vadd.f32 %v1553, %v1696
        %1698 = vmatmul.bf16.gmra.mxu0 %v1100
        %v1699 = vpop.f32.mrf.mxu0
        %v1700 = vadd.f32 %v1556, %v1699
        %v1701 = vpop.f32.mrf.mxu0
        %v1702 = vadd.f32 %v1558, %v1701
        %1703 = vmatmul.bf16.gmra.mxu0 %v1103
        %v1704 = vpop.f32.mrf.mxu0
        %v1705 = vadd.f32 %v1561, %v1704
        %v1706 = vpop.f32.mrf.mxu0
        %v1707 = vadd.f32 %v1563, %v1706
        %1708 = vmatmul.bf16.gmra.mxu0 %v1106
        %v1709 = vpop.f32.mrf.mxu0
        %v1710 = vadd.f32 %v1566, %v1709
        %v1711 = vpop.f32.mrf.mxu0
        %v1712 = vadd.f32 %v1568, %v1711
        %1713 = vmatmul.bf16.gmra.mxu0 %v1109
        %v1714 = vpop.f32.mrf.mxu0
        %v1715 = vadd.f32 %v1571, %v1714
        %v1716 = vpop.f32.mrf.mxu0
        %v1717 = vadd.f32 %v1573, %v1716
        %1718 = vmatmul.bf16.gmra.mxu0 %v1112
        %v1719 = vpop.f32.mrf.mxu0
        %v1720 = vadd.f32 %v1576, %v1719
        %v1721 = vpop.f32.mrf.mxu0
        %v1722 = vadd.f32 %v1578, %v1721
        %1723 = vmatmul.bf16.gmra.mxu0 %v1115
        %v1724 = vpop.f32.mrf.mxu0
        %v1725 = vadd.f32 %v1581, %v1724
        %v1726 = vpop.f32.mrf.mxu0
        %v1727 = vadd.f32 %v1583, %v1726
        %1728 = vmatmul.bf16.gmra.mxu0 %v1118
        %v1729 = vpop.f32.mrf.mxu0
        %v1730 = vadd.f32 %v1586, %v1729
        %v1731 = vpop.f32.mrf.mxu0
        %v1732 = vadd.f32 %v1588, %v1731
        %1733 = vmatmul.bf16.gmra.mxu0 %v1121
        %v1734 = vpop.f32.mrf.mxu0
        %v1735 = vadd.f32 %v1591, %v1734
        %v1736 = vpop.f32.mrf.mxu0
        %v1737 = vadd.f32 %v1593, %v1736
        %1738 = vmatmul.bf16.gmra.mxu0 %v1124
        %v1739 = vpop.f32.mrf.mxu0
        %v1740 = vadd.f32 %v1596, %v1739
        %v1741 = vpop.f32.mrf.mxu0
        %v1742 = vadd.f32 %v1598, %v1741
        %1743 = vmatmul.bf16.gmra.mxu0 %v1127
        %v1744 = vpop.f32.mrf.mxu0
        %v1745 = vadd.f32 %v1601, %v1744
        %v1746 = vpop.f32.mrf.mxu0
        %v1747 = vadd.f32 %v1603, %v1746
        %1748 = vmatmul.bf16.gmra.mxu0 %v1130
        %v1749 = vpop.f32.mrf.mxu0
        %v1750 = vadd.f32 %v1606, %v1749
        %v1751 = vpop.f32.mrf.mxu0
        %v1752 = vadd.f32 %v1608, %v1751
        %1753 = vmatmul.bf16.gmra.mxu0 %v1133
        %v1754 = vpop.f32.mrf.mxu0
        %v1755 = vadd.f32 %v1611, %v1754
        %v1756 = vpop.f32.mrf.mxu0
        %v1757 = vadd.f32 %v1613, %v1756
        %1758 = vdwg.mxu0
        %v1807 = vunpack.c.l.b16 %v1005
        %v1808 = vunpack.c.l.b16 %v1006
        %v1809 = vunpack.c.l.b16 %v1007
        %v1810 = vunpack.c.l.b16 %v1008
        %v1811 = vunpack.c.l.b16 %v1009
        %v1812 = vunpack.c.l.b16 %v1010
        %v1813 = vunpack.c.l.b16 %v1011
        %v1814 = vunpack.c.l.b16 %v1012
        %v1815 = vunpack.c.l.b16 %v1013
        %v1816 = vunpack.c.l.b16 %v1014
        %v1817 = vunpack.c.l.b16 %v1015
        %v1818 = vunpack.c.l.b16 %v1016
        %v1819 = vunpack.c.l.b16 %v1017
        %v1820 = vunpack.c.l.b16 %v1018
        %v1821 = vunpack.c.l.b16 %v1019
        %v1822 = vunpack.c.l.b16 %v1020
        %v1823 = vunpack.c.l.b16 %v1021
        %v1824 = vunpack.c.l.b16 %v1022
        %v1825 = vunpack.c.l.b16 %v1023
        %v1826 = vunpack.c.l.b16 %v1024
        %v1827 = vunpack.c.l.b16 %v1025
        %v1828 = vunpack.c.l.b16 %v1026
        %v1829 = vunpack.c.l.b16 %v1027
        %v1830 = vunpack.c.l.b16 %v1028
        %v1831 = vunpack.c.l.b16 %v1029
        %v1832 = vunpack.c.l.b16 %v1030
        %v1833 = vunpack.c.l.b16 %v1031
        %v1834 = vunpack.c.l.b16 %v1032
        %v1835 = vunpack.c.l.b16 %v1033
        %v1836 = vunpack.c.l.b16 %v1034
        %v1837 = vunpack.c.l.b16 %v1035
        %v1838 = vunpack.c.l.b16 %v1036
        %v1839 = vunpack.c.l.b16 %v1037
        %v1840 = vunpack.c.l.b16 %v1038
        %v1841 = vunpack.c.l.b16 %v1039
        %v1842 = vunpack.c.l.b16 %v1040
        %v1843 = vunpack.c.l.b16 %v1041
        %v1844 = vunpack.c.l.b16 %v1042
        %v1845 = vunpack.c.l.b16 %v1043
        %v1846 = vunpack.c.l.b16 %v1044
        %v1847 = vunpack.c.l.b16 %v1045
        %v1848 = vunpack.c.l.b16 %v1046
        %v1849 = vunpack.c.l.b16 %v1047
        %v1850 = vunpack.c.l.b16 %v1048
        %v1851 = vunpack.c.l.b16 %v1049
        %v1852 = vunpack.c.l.b16 %v1050
        %v1853 = vunpack.c.l.b16 %v1051
        %v1854 = vunpack.c.l.b16 %v1052
        %v1855 = vpack.c.b16 %v1808, %v1807
        %v1856 = vpack.c.b16 %v1810, %v1809
        %v1857 = vpack.c.b16 %v1812, %v1811
        %v1858 = vpack.c.b16 %v1814, %v1813
        %v1859 = vpack.c.b16 %v1816, %v1815
        %v1860 = vpack.c.b16 %v1818, %v1817
        %v1861 = vpack.c.b16 %v1820, %v1819
        %v1862 = vpack.c.b16 %v1822, %v1821
        %v1863 = vpack.c.b16 %v1824, %v1823
        %v1864 = vpack.c.b16 %v1826, %v1825
        %v1865 = vpack.c.b16 %v1828, %v1827
        %v1866 = vpack.c.b16 %v1830, %v1829
        %v1867 = vpack.c.b16 %v1832, %v1831
        %v1868 = vpack.c.b16 %v1834, %v1833
        %v1869 = vpack.c.b16 %v1836, %v1835
        %v1870 = vpack.c.b16 %v1838, %v1837
        %v1871 = vpack.c.b16 %v1840, %v1839
        %v1872 = vpack.c.b16 %v1842, %v1841
        %v1873 = vpack.c.b16 %v1844, %v1843
        %v1874 = vpack.c.b16 %v1846, %v1845
        %v1875 = vpack.c.b16 %v1848, %v1847
        %v1876 = vpack.c.b16 %v1850, %v1849
        %v1877 = vpack.c.b16 %v1852, %v1851
        %v1878 = vpack.c.b16 %v1854, %v1853
        %1903 = vmatpush.bf16.msra.mxu0 %v1862
        %1904 = vmatpush.bf16.msra.mxu0 %v1861
        %1905 = vmatpush.bf16.msra.mxu0 %v1860
        %1906 = vmatpush.bf16.msra.mxu0 %v1859
        %1907 = vmatpush.bf16.msra.mxu0 %v1858
        %1908 = vmatpush.bf16.msra.mxu0 %v1857
        %1909 = vmatpush.bf16.msra.mxu0 %v1856
        %1910 = vmatpush.bf16.msra.mxu0 %v1855
        %1911 = vmatmul.bf16.gmra.mxu0 %v924
        %v1912 = vpop.f32.mrf.mxu0
        %v1913 = vadd.f32 %v1625, %v1912
        %v1914 = vpop.f32.mrf.mxu0
        %v1915 = vadd.f32 %v1627, %v1914
        %1916 = vmatmul.bf16.gmra.mxu0 %v927
        %v1917 = vpop.f32.mrf.mxu0
        %v1918 = vadd.f32 %v1630, %v1917
        %v1919 = vpop.f32.mrf.mxu0
        %v1920 = vadd.f32 %v1632, %v1919
        %1921 = vmatmul.bf16.gmra.mxu0 %v930
        %v1922 = vpop.f32.mrf.mxu0
        %v1923 = vadd.f32 %v1635, %v1922
        %v1924 = vpop.f32.mrf.mxu0
        %v1925 = vadd.f32 %v1637, %v1924
        %1926 = vmatmul.bf16.gmra.mxu0 %v933
        %v1927 = vpop.f32.mrf.mxu0
        %v1928 = vadd.f32 %v1640, %v1927
        %v1929 = vpop.f32.mrf.mxu0
        %v1930 = vadd.f32 %v1642, %v1929
        %1931 = vmatmul.bf16.gmra.mxu0 %v936
        %v1932 = vpop.f32.mrf.mxu0
        %v1933 = vadd.f32 %v1645, %v1932
        %v1934 = vpop.f32.mrf.mxu0
        %v1935 = vadd.f32 %v1647, %v1934
        %1936 = vmatmul.bf16.gmra.mxu0 %v939
        %v1937 = vpop.f32.mrf.mxu0
        %v1938 = vadd.f32 %v1650, %v1937
        %v1939 = vpop.f32.mrf.mxu0
        %v1940 = vadd.f32 %v1652, %v1939
        %1941 = vmatmul.bf16.gmra.mxu0 %v942
        %v1942 = vpop.f32.mrf.mxu0
        %v1943 = vadd.f32 %v1655, %v1942
        %v1944 = vpop.f32.mrf.mxu0
        %v1945 = vadd.f32 %v1657, %v1944
        %1946 = vmatmul.bf16.gmra.mxu0 %v945
        %v1947 = vpop.f32.mrf.mxu0
        %v1948 = vadd.f32 %v1660, %v1947
        %v1949 = vpop.f32.mrf.mxu0
        %v1950 = vadd.f32 %v1662, %v1949
        %1951 = vmatmul.bf16.gmra.mxu0 %v948
        %v1952 = vpop.f32.mrf.mxu0
        %v1953 = vadd.f32 %v1665, %v1952
        %v1954 = vpop.f32.mrf.mxu0
        %v1955 = vadd.f32 %v1667, %v1954
        %1956 = vmatmul.bf16.gmra.mxu0 %v951
        %v1957 = vpop.f32.mrf.mxu0
        %v1958 = vadd.f32 %v1670, %v1957
        %v1959 = vpop.f32.mrf.mxu0
        %v1960 = vadd.f32 %v1672, %v1959
        %1961 = vmatmul.bf16.gmra.mxu0 %v954
        %v1962 = vpop.f32.mrf.mxu0
        %v1963 = vadd.f32 %v1675, %v1962
        %v1964 = vpop.f32.mrf.mxu0
        %v1965 = vadd.f32 %v1677, %v1964
        %1966 = vmatmul.bf16.gmra.mxu0 %v957
        %v1967 = vpop.f32.mrf.mxu0
        %v1968 = vadd.f32 %v1680, %v1967
        %v1969 = vpop.f32.mrf.mxu0
        %v1970 = vadd.f32 %v1682, %v1969
        %1971 = vmatmul.bf16.gmra.mxu0 %v960
        %v1972 = vpop.f32.mrf.mxu0
        %v1973 = vadd.f32 %v1685, %v1972
        %v1974 = vpop.f32.mrf.mxu0
        %v1975 = vadd.f32 %v1687, %v1974
        %1976 = vmatmul.bf16.gmra.mxu0 %v963
        %v1977 = vpop.f32.mrf.mxu0
        %v1978 = vadd.f32 %v1690, %v1977
        %v1979 = vpop.f32.mrf.mxu0
        %v1980 = vadd.f32 %v1692, %v1979
        %1981 = vmatmul.bf16.gmra.mxu0 %v966
        %v1982 = vpop.f32.mrf.mxu0
        %v1983 = vadd.f32 %v1695, %v1982
        %v1984 = vpop.f32.mrf.mxu0
        %v1985 = vadd.f32 %v1697, %v1984
        %1986 = vmatmul.bf16.gmra.mxu0 %v969
        %v1987 = vpop.f32.mrf.mxu0
        %v1988 = vadd.f32 %v1700, %v1987
        %v1989 = vpop.f32.mrf.mxu0
        %v1990 = vadd.f32 %v1702, %v1989
        %1991 = vmatmul.bf16.gmra.mxu0 %v972
        %v1992 = vpop.f32.mrf.mxu0
        %v1993 = vadd.f32 %v1705, %v1992
        %v1994 = vpop.f32.mrf.mxu0
        %v1995 = vadd.f32 %v1707, %v1994
        %1996 = vmatmul.bf16.gmra.mxu0 %v975
        %v1997 = vpop.f32.mrf.mxu0
        %v1998 = vadd.f32 %v1710, %v1997
        %v1999 = vpop.f32.mrf.mxu0
        %v2000 = vadd.f32 %v1712, %v1999
        %2001 = vmatmul.bf16.gmra.mxu0 %v978
        %v2002 = vpop.f32.mrf.mxu0
        %v2003 = vadd.f32 %v1715, %v2002
        %v2004 = vpop.f32.mrf.mxu0
        %v2005 = vadd.f32 %v1717, %v2004
        %2006 = vmatmul.bf16.gmra.mxu0 %v981
        %v2007 = vpop.f32.mrf.mxu0
        %v2008 = vadd.f32 %v1720, %v2007
        %v2009 = vpop.f32.mrf.mxu0
        %v2010 = vadd.f32 %v1722, %v2009
        %2011 = vmatmul.bf16.gmra.mxu0 %v984
        %v2012 = vpop.f32.mrf.mxu0
        %v2013 = vadd.f32 %v1725, %v2012
        %v2014 = vpop.f32.mrf.mxu0
        %v2015 = vadd.f32 %v1727, %v2014
        %2016 = vmatmul.bf16.gmra.mxu0 %v987
        %v2017 = vpop.f32.mrf.mxu0
        %v2018 = vadd.f32 %v1730, %v2017
        %v2019 = vpop.f32.mrf.mxu0
        %v2020 = vadd.f32 %v1732, %v2019
        %2021 = vmatmul.bf16.gmra.mxu0 %v990
        %v2022 = vpop.f32.mrf.mxu0
        %v2023 = vadd.f32 %v1735, %v2022
        %v2024 = vpop.f32.mrf.mxu0
        %v2025 = vadd.f32 %v1737, %v2024
        %2026 = vmatmul.bf16.gmra.mxu0 %v993
        %v2027 = vpop.f32.mrf.mxu0
        %v2028 = vadd.f32 %v1740, %v2027
        %v2029 = vpop.f32.mrf.mxu0
        %v2030 = vadd.f32 %v1742, %v2029
        %2031 = vmatmul.bf16.gmra.mxu0 %v996
        %v2032 = vpop.f32.mrf.mxu0
        %v2033 = vadd.f32 %v1745, %v2032
        %v2034 = vpop.f32.mrf.mxu0
        %v2035 = vadd.f32 %v1747, %v2034
        %2036 = vmatmul.bf16.gmra.mxu0 %v999
        %v2037 = vpop.f32.mrf.mxu0
        %v2038 = vadd.f32 %v1750, %v2037
        %v2039 = vpop.f32.mrf.mxu0
        %v2040 = vadd.f32 %v1752, %v2039
        %2041 = vmatmul.bf16.gmra.mxu0 %v1002
        %v2042 = vpop.f32.mrf.mxu0
        %v2043 = vadd.f32 %v1755, %v2042
        %v2044 = vpop.f32.mrf.mxu0
        %v2045 = vadd.f32 %v1757, %v2044
        %2046 = vdwg.mxu0
        %2047 = vmatpush.bf16.msra.mxu0 %v1870
        %2048 = vmatpush.bf16.msra.mxu0 %v1869
        %2049 = vmatpush.bf16.msra.mxu0 %v1868
        %2050 = vmatpush.bf16.msra.mxu0 %v1867
        %2051 = vmatpush.bf16.msra.mxu0 %v1866
        %2052 = vmatpush.bf16.msra.mxu0 %v1865
        %2053 = vmatpush.bf16.msra.mxu0 %v1864
        %2054 = vmatpush.bf16.msra.mxu0 %v1863
        %2055 = vmatmul.bf16.gmra.mxu0 %v925
        %v2056 = vpop.f32.mrf.mxu0
        %v2057 = vadd.f32 %v1913, %v2056
        %v2058 = vpop.f32.mrf.mxu0
        %v2059 = vadd.f32 %v1915, %v2058
        %2060 = vmatmul.bf16.gmra.mxu0 %v928
        %v2061 = vpop.f32.mrf.mxu0
        %v2062 = vadd.f32 %v1918, %v2061
        %v2063 = vpop.f32.mrf.mxu0
        %v2064 = vadd.f32 %v1920, %v2063
        %2065 = vmatmul.bf16.gmra.mxu0 %v931
        %v2066 = vpop.f32.mrf.mxu0
        %v2067 = vadd.f32 %v1923, %v2066
        %v2068 = vpop.f32.mrf.mxu0
        %v2069 = vadd.f32 %v1925, %v2068
        %2070 = vmatmul.bf16.gmra.mxu0 %v934
        %v2071 = vpop.f32.mrf.mxu0
        %v2072 = vadd.f32 %v1928, %v2071
        %v2073 = vpop.f32.mrf.mxu0
        %v2074 = vadd.f32 %v1930, %v2073
        %2075 = vmatmul.bf16.gmra.mxu0 %v937
        %v2076 = vpop.f32.mrf.mxu0
        %v2077 = vadd.f32 %v1933, %v2076
        %v2078 = vpop.f32.mrf.mxu0
        %v2079 = vadd.f32 %v1935, %v2078
        %2080 = vmatmul.bf16.gmra.mxu0 %v940
        %v2081 = vpop.f32.mrf.mxu0
        %v2082 = vadd.f32 %v1938, %v2081
        %v2083 = vpop.f32.mrf.mxu0
        %v2084 = vadd.f32 %v1940, %v2083
        %2085 = vmatmul.bf16.gmra.mxu0 %v943
        %v2086 = vpop.f32.mrf.mxu0
        %v2087 = vadd.f32 %v1943, %v2086
        %v2088 = vpop.f32.mrf.mxu0
        %v2089 = vadd.f32 %v1945, %v2088
        %2090 = vmatmul.bf16.gmra.mxu0 %v946
        %v2091 = vpop.f32.mrf.mxu0
        %v2092 = vadd.f32 %v1948, %v2091
        %v2093 = vpop.f32.mrf.mxu0
        %v2094 = vadd.f32 %v1950, %v2093
        %2095 = vmatmul.bf16.gmra.mxu0 %v949
        %v2096 = vpop.f32.mrf.mxu0
        %v2097 = vadd.f32 %v1953, %v2096
        %v2098 = vpop.f32.mrf.mxu0
        %v2099 = vadd.f32 %v1955, %v2098
        %2100 = vmatmul.bf16.gmra.mxu0 %v952
        %v2101 = vpop.f32.mrf.mxu0
        %v2102 = vadd.f32 %v1958, %v2101
        %v2103 = vpop.f32.mrf.mxu0
        %v2104 = vadd.f32 %v1960, %v2103
        %2105 = vmatmul.bf16.gmra.mxu0 %v955
        %v2106 = vpop.f32.mrf.mxu0
        %v2107 = vadd.f32 %v1963, %v2106
        %v2108 = vpop.f32.mrf.mxu0
        %v2109 = vadd.f32 %v1965, %v2108
        %2110 = vmatmul.bf16.gmra.mxu0 %v958
        %v2111 = vpop.f32.mrf.mxu0
        %v2112 = vadd.f32 %v1968, %v2111
        %v2113 = vpop.f32.mrf.mxu0
        %v2114 = vadd.f32 %v1970, %v2113
        %2115 = vmatmul.bf16.gmra.mxu0 %v961
        %v2116 = vpop.f32.mrf.mxu0
        %v2117 = vadd.f32 %v1973, %v2116
        %v2118 = vpop.f32.mrf.mxu0
        %v2119 = vadd.f32 %v1975, %v2118
        %2120 = vmatmul.bf16.gmra.mxu0 %v964
        %v2121 = vpop.f32.mrf.mxu0
        %v2122 = vadd.f32 %v1978, %v2121
        %v2123 = vpop.f32.mrf.mxu0
        %v2124 = vadd.f32 %v1980, %v2123
        %2125 = vmatmul.bf16.gmra.mxu0 %v967
        %v2126 = vpop.f32.mrf.mxu0
        %v2127 = vadd.f32 %v1983, %v2126
        %v2128 = vpop.f32.mrf.mxu0
        %v2129 = vadd.f32 %v1985, %v2128
        %2130 = vmatmul.bf16.gmra.mxu0 %v970
        %v2131 = vpop.f32.mrf.mxu0
        %v2132 = vadd.f32 %v1988, %v2131
        %v2133 = vpop.f32.mrf.mxu0
        %v2134 = vadd.f32 %v1990, %v2133
        %2135 = vmatmul.bf16.gmra.mxu0 %v973
        %v2136 = vpop.f32.mrf.mxu0
        %v2137 = vadd.f32 %v1993, %v2136
        %v2138 = vpop.f32.mrf.mxu0
        %v2139 = vadd.f32 %v1995, %v2138
        %2140 = vmatmul.bf16.gmra.mxu0 %v976
        %v2141 = vpop.f32.mrf.mxu0
        %v2142 = vadd.f32 %v1998, %v2141
        %v2143 = vpop.f32.mrf.mxu0
        %v2144 = vadd.f32 %v2000, %v2143
        %2145 = vmatmul.bf16.gmra.mxu0 %v979
        %v2146 = vpop.f32.mrf.mxu0
        %v2147 = vadd.f32 %v2003, %v2146
        %v2148 = vpop.f32.mrf.mxu0
        %v2149 = vadd.f32 %v2005, %v2148
        %2150 = vmatmul.bf16.gmra.mxu0 %v982
        %v2151 = vpop.f32.mrf.mxu0
        %v2152 = vadd.f32 %v2008, %v2151
        %v2153 = vpop.f32.mrf.mxu0
        %v2154 = vadd.f32 %v2010, %v2153
        %2155 = vmatmul.bf16.gmra.mxu0 %v985
        %v2156 = vpop.f32.mrf.mxu0
        %v2157 = vadd.f32 %v2013, %v2156
        %v2158 = vpop.f32.mrf.mxu0
        %v2159 = vadd.f32 %v2015, %v2158
        %2160 = vmatmul.bf16.gmra.mxu0 %v988
        %v2161 = vpop.f32.mrf.mxu0
        %v2162 = vadd.f32 %v2018, %v2161
        %v2163 = vpop.f32.mrf.mxu0
        %v2164 = vadd.f32 %v2020, %v2163
        %2165 = vmatmul.bf16.gmra.mxu0 %v991
        %v2166 = vpop.f32.mrf.mxu0
        %v2167 = vadd.f32 %v2023, %v2166
        %v2168 = vpop.f32.mrf.mxu0
        %v2169 = vadd.f32 %v2025, %v2168
        %2170 = vmatmul.bf16.gmra.mxu0 %v994
        %v2171 = vpop.f32.mrf.mxu0
        %v2172 = vadd.f32 %v2028, %v2171
        %v2173 = vpop.f32.mrf.mxu0
        %v2174 = vadd.f32 %v2030, %v2173
        %2175 = vmatmul.bf16.gmra.mxu0 %v997
        %v2176 = vpop.f32.mrf.mxu0
        %v2177 = vadd.f32 %v2033, %v2176
        %v2178 = vpop.f32.mrf.mxu0
        %v2179 = vadd.f32 %v2035, %v2178
        %2180 = vmatmul.bf16.gmra.mxu0 %v1000
        %v2181 = vpop.f32.mrf.mxu0
        %v2182 = vadd.f32 %v2038, %v2181
        %v2183 = vpop.f32.mrf.mxu0
        %v2184 = vadd.f32 %v2040, %v2183
        %2185 = vmatmul.bf16.gmra.mxu0 %v1003
        %v2186 = vpop.f32.mrf.mxu0
        %v2187 = vadd.f32 %v2043, %v2186
        %v2188 = vpop.f32.mrf.mxu0
        %v2189 = vadd.f32 %v2045, %v2188
        %2190 = vdwg.mxu0
        %2191 = vmatpush.bf16.msra.mxu0 %v1878
        %2192 = vmatpush.bf16.msra.mxu0 %v1877
        %2193 = vmatpush.bf16.msra.mxu0 %v1876
        %2194 = vmatpush.bf16.msra.mxu0 %v1875
        %2195 = vmatpush.bf16.msra.mxu0 %v1874
        %2196 = vmatpush.bf16.msra.mxu0 %v1873
        %2197 = vmatpush.bf16.msra.mxu0 %v1872
        %2198 = vmatpush.bf16.msra.mxu0 %v1871
        %2199 = vmatmul.bf16.gmra.mxu0 %v926
        %v2200 = vpop.f32.mrf.mxu0
        %v2201 = vadd.f32 %v2057, %v2200
        %v2202 = vpop.f32.mrf.mxu0
        %v2203 = vadd.f32 %v2059, %v2202
        %2204 = vmatmul.bf16.gmra.mxu0 %v929
        %v2205 = vpop.f32.mrf.mxu0
        %v2206 = vadd.f32 %v2062, %v2205
        %v2207 = vpop.f32.mrf.mxu0
        %v2208 = vadd.f32 %v2064, %v2207
        %2209 = vmatmul.bf16.gmra.mxu0 %v932
        %v2210 = vpop.f32.mrf.mxu0
        %v2211 = vadd.f32 %v2067, %v2210
        %v2212 = vpop.f32.mrf.mxu0
        %v2213 = vadd.f32 %v2069, %v2212
        %2214 = vmatmul.bf16.gmra.mxu0 %v935
        %v2215 = vpop.f32.mrf.mxu0
        %v2216 = vadd.f32 %v2072, %v2215
        %v2217 = vpop.f32.mrf.mxu0
        %v2218 = vadd.f32 %v2074, %v2217
        %2219 = vmatmul.bf16.gmra.mxu0 %v938
        %v2220 = vpop.f32.mrf.mxu0
        %v2221 = vadd.f32 %v2077, %v2220
        %v2222 = vpop.f32.mrf.mxu0
        %v2223 = vadd.f32 %v2079, %v2222
        %2224 = vmatmul.bf16.gmra.mxu0 %v941
        %v2225 = vpop.f32.mrf.mxu0
        %v2226 = vadd.f32 %v2082, %v2225
        %v2227 = vpop.f32.mrf.mxu0
        %v2228 = vadd.f32 %v2084, %v2227
        %2229 = vmatmul.bf16.gmra.mxu0 %v944
        %v2230 = vpop.f32.mrf.mxu0
        %v2231 = vadd.f32 %v2087, %v2230
        %v2232 = vpop.f32.mrf.mxu0
        %v2233 = vadd.f32 %v2089, %v2232
        %2234 = vmatmul.bf16.gmra.mxu0 %v947
        %v2235 = vpop.f32.mrf.mxu0
        %v2236 = vadd.f32 %v2092, %v2235
        %v2237 = vpop.f32.mrf.mxu0
        %v2238 = vadd.f32 %v2094, %v2237
        %2239 = vmatmul.bf16.gmra.mxu0 %v950
        %v2240 = vpop.f32.mrf.mxu0
        %v2241 = vadd.f32 %v2097, %v2240
        %v2242 = vpop.f32.mrf.mxu0
        %v2243 = vadd.f32 %v2099, %v2242
        %2244 = vmatmul.bf16.gmra.mxu0 %v953
        %v2245 = vpop.f32.mrf.mxu0
        %v2246 = vadd.f32 %v2102, %v2245
        %v2247 = vpop.f32.mrf.mxu0
        %v2248 = vadd.f32 %v2104, %v2247
        %2249 = vmatmul.bf16.gmra.mxu0 %v956
        %v2250 = vpop.f32.mrf.mxu0
        %v2251 = vadd.f32 %v2107, %v2250
        %v2252 = vpop.f32.mrf.mxu0
        %v2253 = vadd.f32 %v2109, %v2252
        %2254 = vmatmul.bf16.gmra.mxu0 %v959
        %v2255 = vpop.f32.mrf.mxu0
        %v2256 = vadd.f32 %v2112, %v2255
        %v2257 = vpop.f32.mrf.mxu0
        %v2258 = vadd.f32 %v2114, %v2257
        %2259 = vmatmul.bf16.gmra.mxu0 %v962
        %v2260 = vpop.f32.mrf.mxu0
        %v2261 = vadd.f32 %v2117, %v2260
        %v2262 = vpop.f32.mrf.mxu0
        %v2263 = vadd.f32 %v2119, %v2262
        %2264 = vmatmul.bf16.gmra.mxu0 %v965
        %v2265 = vpop.f32.mrf.mxu0
        %v2266 = vadd.f32 %v2122, %v2265
        %v2267 = vpop.f32.mrf.mxu0
        %v2268 = vadd.f32 %v2124, %v2267
        %2269 = vmatmul.bf16.gmra.mxu0 %v968
        %v2270 = vpop.f32.mrf.mxu0
        %v2271 = vadd.f32 %v2127, %v2270
        %v2272 = vpop.f32.mrf.mxu0
        %v2273 = vadd.f32 %v2129, %v2272
        %2274 = vmatmul.bf16.gmra.mxu0 %v971
        %v2275 = vpop.f32.mrf.mxu0
        %v2276 = vadd.f32 %v2132, %v2275
        %v2277 = vpop.f32.mrf.mxu0
        %v2278 = vadd.f32 %v2134, %v2277
        %2279 = vmatmul.bf16.gmra.mxu0 %v974
        %v2280 = vpop.f32.mrf.mxu0
        %v2281 = vadd.f32 %v2137, %v2280
        %v2282 = vpop.f32.mrf.mxu0
        %v2283 = vadd.f32 %v2139, %v2282
        %2284 = vmatmul.bf16.gmra.mxu0 %v977
        %v2285 = vpop.f32.mrf.mxu0
        %v2286 = vadd.f32 %v2142, %v2285
        %v2287 = vpop.f32.mrf.mxu0
        %v2288 = vadd.f32 %v2144, %v2287
        %2289 = vmatmul.bf16.gmra.mxu0 %v980
        %v2290 = vpop.f32.mrf.mxu0
        %v2291 = vadd.f32 %v2147, %v2290
        %v2292 = vpop.f32.mrf.mxu0
        %v2293 = vadd.f32 %v2149, %v2292
        %2294 = vmatmul.bf16.gmra.mxu0 %v983
        %v2295 = vpop.f32.mrf.mxu0
        %v2296 = vadd.f32 %v2152, %v2295
        %v2297 = vpop.f32.mrf.mxu0
        %v2298 = vadd.f32 %v2154, %v2297
        %2299 = vmatmul.bf16.gmra.mxu0 %v986
        %v2300 = vpop.f32.mrf.mxu0
        %v2301 = vadd.f32 %v2157, %v2300
        %v2302 = vpop.f32.mrf.mxu0
        %v2303 = vadd.f32 %v2159, %v2302
        %2304 = vmatmul.bf16.gmra.mxu0 %v989
        %v2305 = vpop.f32.mrf.mxu0
        %v2306 = vadd.f32 %v2162, %v2305
        %v2307 = vpop.f32.mrf.mxu0
        %v2308 = vadd.f32 %v2164, %v2307
        %2309 = vmatmul.bf16.gmra.mxu0 %v992
        %v2310 = vpop.f32.mrf.mxu0
        %v2311 = vadd.f32 %v2167, %v2310
        %v2312 = vpop.f32.mrf.mxu0
        %v2313 = vadd.f32 %v2169, %v2312
        %2314 = vmatmul.bf16.gmra.mxu0 %v995
        %v2315 = vpop.f32.mrf.mxu0
        %v2316 = vadd.f32 %v2172, %v2315
        %v2317 = vpop.f32.mrf.mxu0
        %v2318 = vadd.f32 %v2174, %v2317
        %2319 = vmatmul.bf16.gmra.mxu0 %v998
        %v2320 = vpop.f32.mrf.mxu0
        %v2321 = vadd.f32 %v2177, %v2320
        %v2322 = vpop.f32.mrf.mxu0
        %v2323 = vadd.f32 %v2179, %v2322
        %2324 = vmatmul.bf16.gmra.mxu0 %v1001
        %v2325 = vpop.f32.mrf.mxu0
        %v2326 = vadd.f32 %v2182, %v2325
        %v2327 = vpop.f32.mrf.mxu0
        %v2328 = vadd.f32 %v2184, %v2327
        %2329 = vmatmul.bf16.gmra.mxu0 %v1004
        %v2330 = vpop.f32.mrf.mxu0
        %v2331 = vadd.f32 %v2187, %v2330
        %v2332 = vpop.f32.mrf.mxu0
        %v2333 = vadd.f32 %v2189, %v2332
        %2334 = vdwg.mxu0
        %v2335 = vpack.c.bf16 %v435, %v434
        %v2336 = vpack.c.bf16 %v653, %v651
        %v2337 = vpack.c.bf16 %v854, %v852
        %v2338 = vpack.c.bf16 %v438, %v436
        %v2339 = vpack.c.bf16 %v658, %v655
        %v2340 = vpack.c.bf16 %v859, %v856
        %v2341 = vpack.c.bf16 %v440, %v439
        %v2342 = vpack.c.bf16 %v662, %v660
        %v2343 = vpack.c.bf16 %v863, %v861
        %s2344 = scalar_lea.vmem [#allocation5], 384
        %v2345 = vld [vmem:[%s2344] sm:$0xf]
        %v2346 = vld [vmem:[%s2344 + $0x4] sm:$0xf]
        %v2347 = vld [vmem:[%s2344 + $0x8] sm:$0xf]
        %v2348 = vld [vmem:[%s2344 + $0xc] sm:$0xf]
        %v2349 = vld [vmem:[%s2344 + $0x10] sm:$0xf]
        %v2350 = vld [vmem:[%s2344 + $0x14] sm:$0xf]
        %v2351 = vld [vmem:[%s2344 + $0x18] sm:$0xf]
        %v2352 = vld [vmem:[%s2344 + $0x1c] sm:$0xf]
        %v2353 = vld [vmem:[%s2344 + $0x20] sm:$0xf]
        %v2354 = vld [vmem:[%s2344 + $0x24] sm:$0xf]
        %v2355 = vld [vmem:[%s2344 + $0x28] sm:$0xf]
        %v2356 = vld [vmem:[%s2344 + $0x2c] sm:$0xf]
        %v2357 = vld [vmem:[%s2344 + $0x30] sm:$0xf]
        %v2358 = vld [vmem:[%s2344 + $0x34] sm:$0xf]
        %v2359 = vld [vmem:[%s2344 + $0x38] sm:$0xf]
        %v2360 = vld [vmem:[%s2344 + $0x3c] sm:$0xf]
        %v2361 = vld [vmem:[%s2344 + $0x40] sm:$0xf]
        %v2362 = vld [vmem:[%s2344 + $0x44] sm:$0xf]
        %v2363 = vld [vmem:[%s2344 + $0x48] sm:$0xf]
        %v2364 = vld [vmem:[%s2344 + $0x4c] sm:$0xf]
        %v2365 = vld [vmem:[%s2344 + $0x50] sm:$0xf]
        %v2366 = vld [vmem:[%s2344 + $0x54] sm:$0xf]
        %v2367 = vld [vmem:[%s2344 + $0x58] sm:$0xf]
        %v2368 = vld [vmem:[%s2344 + $0x5c] sm:$0xf]
        %v2369 = vld [vmem:[%s2344 + $0x60] sm:$0xf]
        %v2370 = vld [vmem:[%s2344 + $0x64] sm:$0xf]
        %v2371 = vld [vmem:[%s2344 + $0x68] sm:$0xf]
        %v2372 = vld [vmem:[%s2344 + $0x6c] sm:$0xf]
        %v2373 = vld [vmem:[%s2344 + $0x70] sm:$0xf]
        %v2374 = vld [vmem:[%s2344 + $0x74] sm:$0xf]
        %v2375 = vld [vmem:[%s2344 + $0x78] sm:$0xf]
        %v2376 = vld [vmem:[%s2344 + $0x7c] sm:$0xf]
        %v2377 = vld [vmem:[%s2344 + $0x80] sm:$0xf]
        %v2378 = vld [vmem:[%s2344 + $0x84] sm:$0xf]
        %v2379 = vld [vmem:[%s2344 + $0x88] sm:$0xf]
        %v2380 = vld [vmem:[%s2344 + $0x8c] sm:$0xf]
        %v2381 = vld [vmem:[%s2344 + $0x90] sm:$0xf]
        %v2382 = vld [vmem:[%s2344 + $0x94] sm:$0xf]
        %v2383 = vld [vmem:[%s2344 + $0x98] sm:$0xf]
        %v2384 = vld [vmem:[%s2344 + $0x9c] sm:$0xf]
        %v2385 = vld [vmem:[%s2344 + $0xa0] sm:$0xf]
        %v2386 = vld [vmem:[%s2344 + $0xa4] sm:$0xf]
        %v2387 = vld [vmem:[%s2344 + $0xa8] sm:$0xf]
        %v2388 = vld [vmem:[%s2344 + $0xac] sm:$0xf]
        %v2389 = vld [vmem:[%s2344 + $0xb0] sm:$0xf]
        %v2390 = vld [vmem:[%s2344 + $0xb4] sm:$0xf]
        %v2391 = vld [vmem:[%s2344 + $0xb8] sm:$0xf]
        %v2392 = vld [vmem:[%s2344 + $0xbc] sm:$0xf]
        %v2441 = vunpack.c.l.b16 %v2345
        %v2442 = vunpack.c.l.b16 %v2346
        %v2443 = vunpack.c.l.b16 %v2347
        %v2444 = vunpack.c.l.b16 %v2348
        %v2445 = vunpack.c.l.b16 %v2349
        %v2446 = vunpack.c.l.b16 %v2350
        %v2447 = vunpack.c.l.b16 %v2351
        %v2448 = vunpack.c.l.b16 %v2352
        %v2449 = vunpack.c.l.b16 %v2353
        %v2450 = vunpack.c.l.b16 %v2354
        %v2451 = vunpack.c.l.b16 %v2355
        %v2452 = vunpack.c.l.b16 %v2356
        %v2453 = vunpack.c.l.b16 %v2357
        %v2454 = vunpack.c.l.b16 %v2358
        %v2455 = vunpack.c.l.b16 %v2359
        %v2456 = vunpack.c.l.b16 %v2360
        %v2457 = vunpack.c.l.b16 %v2361
        %v2458 = vunpack.c.l.b16 %v2362
        %v2459 = vunpack.c.l.b16 %v2363
        %v2460 = vunpack.c.l.b16 %v2364
        %v2461 = vunpack.c.l.b16 %v2365
        %v2462 = vunpack.c.l.b16 %v2366
        %v2463 = vunpack.c.l.b16 %v2367
        %v2464 = vunpack.c.l.b16 %v2368
        %v2465 = vunpack.c.l.b16 %v2369
        %v2466 = vunpack.c.l.b16 %v2370
        %v2467 = vunpack.c.l.b16 %v2371
        %v2468 = vunpack.c.l.b16 %v2372
        %v2469 = vunpack.c.l.b16 %v2373
        %v2470 = vunpack.c.l.b16 %v2374
        %v2471 = vunpack.c.l.b16 %v2375
        %v2472 = vunpack.c.l.b16 %v2376
        %v2473 = vunpack.c.l.b16 %v2377
        %v2474 = vunpack.c.l.b16 %v2378
        %v2475 = vunpack.c.l.b16 %v2379
        %v2476 = vunpack.c.l.b16 %v2380
        %v2477 = vunpack.c.l.b16 %v2381
        %v2478 = vunpack.c.l.b16 %v2382
        %v2479 = vunpack.c.l.b16 %v2383
        %v2480 = vunpack.c.l.b16 %v2384
        %v2481 = vunpack.c.l.b16 %v2385
        %v2482 = vunpack.c.l.b16 %v2386
        %v2483 = vunpack.c.l.b16 %v2387
        %v2484 = vunpack.c.l.b16 %v2388
        %v2485 = vunpack.c.l.b16 %v2389
        %v2486 = vunpack.c.l.b16 %v2390
        %v2487 = vunpack.c.l.b16 %v2391
        %v2488 = vunpack.c.l.b16 %v2392
        %v2489 = vpack.c.b16 %v2442, %v2441
        %v2490 = vpack.c.b16 %v2444, %v2443
        %v2491 = vpack.c.b16 %v2446, %v2445
        %v2492 = vpack.c.b16 %v2448, %v2447
        %v2493 = vpack.c.b16 %v2450, %v2449
        %v2494 = vpack.c.b16 %v2452, %v2451
        %v2495 = vpack.c.b16 %v2454, %v2453
        %v2496 = vpack.c.b16 %v2456, %v2455
        %v2497 = vpack.c.b16 %v2458, %v2457
        %v2498 = vpack.c.b16 %v2460, %v2459
        %v2499 = vpack.c.b16 %v2462, %v2461
        %v2500 = vpack.c.b16 %v2464, %v2463
        %v2501 = vpack.c.b16 %v2466, %v2465
        %v2502 = vpack.c.b16 %v2468, %v2467
        %v2503 = vpack.c.b16 %v2470, %v2469
        %v2504 = vpack.c.b16 %v2472, %v2471
        %v2505 = vpack.c.b16 %v2474, %v2473
        %v2506 = vpack.c.b16 %v2476, %v2475
        %v2507 = vpack.c.b16 %v2478, %v2477
        %v2508 = vpack.c.b16 %v2480, %v2479
        %v2509 = vpack.c.b16 %v2482, %v2481
        %v2510 = vpack.c.b16 %v2484, %v2483
        %v2511 = vpack.c.b16 %v2486, %v2485
        %v2512 = vpack.c.b16 %v2488, %v2487
        %2537 = vmatpush.bf16.msra.mxu0 %v2496
        %2538 = vmatpush.bf16.msra.mxu0 %v2495
        %2539 = vmatpush.bf16.msra.mxu0 %v2494
        %2540 = vmatpush.bf16.msra.mxu0 %v2493
        %2541 = vmatpush.bf16.msra.mxu0 %v2492
        %2542 = vmatpush.bf16.msra.mxu0 %v2491
        %2543 = vmatpush.bf16.msra.mxu0 %v2490
        %2544 = vmatpush.bf16.msra.mxu0 %v2489
        %2545 = vmatmul.bf16.gmra.mxu0 %v933
        %v2546 = vpop.f32.mrf.mxu0
        %v2547 = vadd.f32 0.0, %v2546
        %v2548 = vpop.f32.mrf.mxu0
        %v2549 = vadd.f32 0.0, %v2548
        %2550 = vmatmul.bf16.gmra.mxu0 %v936
        %v2551 = vpop.f32.mrf.mxu0
        %v2552 = vadd.f32 0.0, %v2551
        %v2553 = vpop.f32.mrf.mxu0
        %v2554 = vadd.f32 0.0, %v2553
        %2555 = vmatmul.bf16.gmra.mxu0 %v939
        %v2556 = vpop.f32.mrf.mxu0
        %v2557 = vadd.f32 0.0, %v2556
        %v2558 = vpop.f32.mrf.mxu0
        %v2559 = vadd.f32 0.0, %v2558
        %2560 = vmatmul.bf16.gmra.mxu0 %v942
        %v2561 = vpop.f32.mrf.mxu0
        %v2562 = vadd.f32 0.0, %v2561
        %v2563 = vpop.f32.mrf.mxu0
        %v2564 = vadd.f32 0.0, %v2563
        %2565 = vmatmul.bf16.gmra.mxu0 %v945
        %v2566 = vpop.f32.mrf.mxu0
        %v2567 = vadd.f32 0.0, %v2566
        %v2568 = vpop.f32.mrf.mxu0
        %v2569 = vadd.f32 0.0, %v2568
        %2570 = vmatmul.bf16.gmra.mxu0 %v948
        %v2571 = vpop.f32.mrf.mxu0
        %v2572 = vadd.f32 0.0, %v2571
        %v2573 = vpop.f32.mrf.mxu0
        %v2574 = vadd.f32 0.0, %v2573
        %2575 = vmatmul.bf16.gmra.mxu0 %v951
        %v2576 = vpop.f32.mrf.mxu0
        %v2577 = vadd.f32 0.0, %v2576
        %v2578 = vpop.f32.mrf.mxu0
        %v2579 = vadd.f32 0.0, %v2578
        %2580 = vmatmul.bf16.gmra.mxu0 %v954
        %v2581 = vpop.f32.mrf.mxu0
        %v2582 = vadd.f32 0.0, %v2581
        %v2583 = vpop.f32.mrf.mxu0
        %v2584 = vadd.f32 0.0, %v2583
        %2585 = vmatmul.bf16.gmra.mxu0 %v957
        %v2586 = vpop.f32.mrf.mxu0
        %v2587 = vadd.f32 0.0, %v2586
        %v2588 = vpop.f32.mrf.mxu0
        %v2589 = vadd.f32 0.0, %v2588
        %2590 = vmatmul.bf16.gmra.mxu0 %v960
        %v2591 = vpop.f32.mrf.mxu0
        %v2592 = vadd.f32 0.0, %v2591
        %v2593 = vpop.f32.mrf.mxu0
        %v2594 = vadd.f32 0.0, %v2593
        %2595 = vmatmul.bf16.gmra.mxu0 %v963
        %v2596 = vpop.f32.mrf.mxu0
        %v2597 = vadd.f32 0.0, %v2596
        %v2598 = vpop.f32.mrf.mxu0
        %v2599 = vadd.f32 0.0, %v2598
        %2600 = vmatmul.bf16.gmra.mxu0 %v966
        %v2601 = vpop.f32.mrf.mxu0
        %v2602 = vadd.f32 0.0, %v2601
        %v2603 = vpop.f32.mrf.mxu0
        %v2604 = vadd.f32 0.0, %v2603
        %2605 = vmatmul.bf16.gmra.mxu0 %v969
        %v2606 = vpop.f32.mrf.mxu0
        %v2607 = vadd.f32 0.0, %v2606
        %v2608 = vpop.f32.mrf.mxu0
        %v2609 = vadd.f32 0.0, %v2608
        %2610 = vmatmul.bf16.gmra.mxu0 %v972
        %v2611 = vpop.f32.mrf.mxu0
        %v2612 = vadd.f32 0.0, %v2611
        %v2613 = vpop.f32.mrf.mxu0
        %v2614 = vadd.f32 0.0, %v2613
        %2615 = vmatmul.bf16.gmra.mxu0 %v975
        %v2616 = vpop.f32.mrf.mxu0
        %v2617 = vadd.f32 0.0, %v2616
        %v2618 = vpop.f32.mrf.mxu0
        %v2619 = vadd.f32 0.0, %v2618
        %2620 = vmatmul.bf16.gmra.mxu0 %v978
        %v2621 = vpop.f32.mrf.mxu0
        %v2622 = vadd.f32 0.0, %v2621
        %v2623 = vpop.f32.mrf.mxu0
        %v2624 = vadd.f32 0.0, %v2623
        %2625 = vmatmul.bf16.gmra.mxu0 %v981
        %v2626 = vpop.f32.mrf.mxu0
        %v2627 = vadd.f32 0.0, %v2626
        %v2628 = vpop.f32.mrf.mxu0
        %v2629 = vadd.f32 0.0, %v2628
        %2630 = vmatmul.bf16.gmra.mxu0 %v984
        %v2631 = vpop.f32.mrf.mxu0
        %v2632 = vadd.f32 0.0, %v2631
        %v2633 = vpop.f32.mrf.mxu0
        %v2634 = vadd.f32 0.0, %v2633
        %2635 = vmatmul.bf16.gmra.mxu0 %v987
        %v2636 = vpop.f32.mrf.mxu0
        %v2637 = vadd.f32 0.0, %v2636
        %v2638 = vpop.f32.mrf.mxu0
        %v2639 = vadd.f32 0.0, %v2638
        %2640 = vmatmul.bf16.gmra.mxu0 %v990
        %v2641 = vpop.f32.mrf.mxu0
        %v2642 = vadd.f32 0.0, %v2641
        %v2643 = vpop.f32.mrf.mxu0
        %v2644 = vadd.f32 0.0, %v2643
        %2645 = vmatmul.bf16.gmra.mxu0 %v993
        %v2646 = vpop.f32.mrf.mxu0
        %v2647 = vadd.f32 0.0, %v2646
        %v2648 = vpop.f32.mrf.mxu0
        %v2649 = vadd.f32 0.0, %v2648
        %2650 = vmatmul.bf16.gmra.mxu0 %v996
        %v2651 = vpop.f32.mrf.mxu0
        %v2652 = vadd.f32 0.0, %v2651
        %v2653 = vpop.f32.mrf.mxu0
        %v2654 = vadd.f32 0.0, %v2653
        %2655 = vmatmul.bf16.gmra.mxu0 %v999
        %v2656 = vpop.f32.mrf.mxu0
        %v2657 = vadd.f32 0.0, %v2656
        %v2658 = vpop.f32.mrf.mxu0
        %v2659 = vadd.f32 0.0, %v2658
        %2660 = vmatmul.bf16.gmra.mxu0 %v1002
        %v2661 = vpop.f32.mrf.mxu0
        %v2662 = vadd.f32 0.0, %v2661
        %v2663 = vpop.f32.mrf.mxu0
        %v2664 = vadd.f32 0.0, %v2663
        %2665 = vmatmul.bf16.gmra.mxu0 %v2335
        %v2666 = vpop.f32.mrf.mxu0
        %v2667 = vadd.f32 0.0, %v2666
        %v2668 = vpop.f32.mrf.mxu0
        %v2669 = vadd.f32 0.0, %v2668
        %2670 = vmatmul.bf16.gmra.mxu0 %v2338
        %v2671 = vpop.f32.mrf.mxu0
        %v2672 = vadd.f32 0.0, %v2671
        %v2673 = vpop.f32.mrf.mxu0
        %v2674 = vadd.f32 0.0, %v2673
        %2675 = vmatmul.bf16.gmra.mxu0 %v2341
        %v2676 = vpop.f32.mrf.mxu0
        %v2677 = vadd.f32 0.0, %v2676
        %v2678 = vpop.f32.mrf.mxu0
        %v2679 = vadd.f32 0.0, %v2678
        %2680 = vdwg.mxu0
        %2681 = vmatpush.bf16.msra.mxu0 %v2504
        %2682 = vmatpush.bf16.msra.mxu0 %v2503
        %2683 = vmatpush.bf16.msra.mxu0 %v2502
        %2684 = vmatpush.bf16.msra.mxu0 %v2501
        %2685 = vmatpush.bf16.msra.mxu0 %v2500
        %2686 = vmatpush.bf16.msra.mxu0 %v2499
        %2687 = vmatpush.bf16.msra.mxu0 %v2498
        %2688 = vmatpush.bf16.msra.mxu0 %v2497
        %2689 = vmatmul.bf16.gmra.mxu0 %v934
        %v2690 = vpop.f32.mrf.mxu0
        %v2691 = vadd.f32 %v2547, %v2690
        %v2692 = vpop.f32.mrf.mxu0
        %v2693 = vadd.f32 %v2549, %v2692
        %2694 = vmatmul.bf16.gmra.mxu0 %v937
        %v2695 = vpop.f32.mrf.mxu0
        %v2696 = vadd.f32 %v2552, %v2695
        %v2697 = vpop.f32.mrf.mxu0
        %v2698 = vadd.f32 %v2554, %v2697
        %2699 = vmatmul.bf16.gmra.mxu0 %v940
        %v2700 = vpop.f32.mrf.mxu0
        %v2701 = vadd.f32 %v2557, %v2700
        %v2702 = vpop.f32.mrf.mxu0
        %v2703 = vadd.f32 %v2559, %v2702
        %2704 = vmatmul.bf16.gmra.mxu0 %v943
        %v2705 = vpop.f32.mrf.mxu0
        %v2706 = vadd.f32 %v2562, %v2705
        %v2707 = vpop.f32.mrf.mxu0
        %v2708 = vadd.f32 %v2564, %v2707
        %2709 = vmatmul.bf16.gmra.mxu0 %v946
        %v2710 = vpop.f32.mrf.mxu0
        %v2711 = vadd.f32 %v2567, %v2710
        %v2712 = vpop.f32.mrf.mxu0
        %v2713 = vadd.f32 %v2569, %v2712
        %2714 = vmatmul.bf16.gmra.mxu0 %v949
        %v2715 = vpop.f32.mrf.mxu0
        %v2716 = vadd.f32 %v2572, %v2715
        %v2717 = vpop.f32.mrf.mxu0
        %v2718 = vadd.f32 %v2574, %v2717
        %2719 = vmatmul.bf16.gmra.mxu0 %v952
        %v2720 = vpop.f32.mrf.mxu0
        %v2721 = vadd.f32 %v2577, %v2720
        %v2722 = vpop.f32.mrf.mxu0
        %v2723 = vadd.f32 %v2579, %v2722
        %2724 = vmatmul.bf16.gmra.mxu0 %v955
        %v2725 = vpop.f32.mrf.mxu0
        %v2726 = vadd.f32 %v2582, %v2725
        %v2727 = vpop.f32.mrf.mxu0
        %v2728 = vadd.f32 %v2584, %v2727
        %2729 = vmatmul.bf16.gmra.mxu0 %v958
        %v2730 = vpop.f32.mrf.mxu0
        %v2731 = vadd.f32 %v2587, %v2730
        %v2732 = vpop.f32.mrf.mxu0
        %v2733 = vadd.f32 %v2589, %v2732
        %2734 = vmatmul.bf16.gmra.mxu0 %v961
        %v2735 = vpop.f32.mrf.mxu0
        %v2736 = vadd.f32 %v2592, %v2735
        %v2737 = vpop.f32.mrf.mxu0
        %v2738 = vadd.f32 %v2594, %v2737
        %2739 = vmatmul.bf16.gmra.mxu0 %v964
        %v2740 = vpop.f32.mrf.mxu0
        %v2741 = vadd.f32 %v2597, %v2740
        %v2742 = vpop.f32.mrf.mxu0
        %v2743 = vadd.f32 %v2599, %v2742
        %2744 = vmatmul.bf16.gmra.mxu0 %v967
        %v2745 = vpop.f32.mrf.mxu0
        %v2746 = vadd.f32 %v2602, %v2745
        %v2747 = vpop.f32.mrf.mxu0
        %v2748 = vadd.f32 %v2604, %v2747
        %2749 = vmatmul.bf16.gmra.mxu0 %v970
        %v2750 = vpop.f32.mrf.mxu0
        %v2751 = vadd.f32 %v2607, %v2750
        %v2752 = vpop.f32.mrf.mxu0
        %v2753 = vadd.f32 %v2609, %v2752
        %2754 = vmatmul.bf16.gmra.mxu0 %v973
        %v2755 = vpop.f32.mrf.mxu0
        %v2756 = vadd.f32 %v2612, %v2755
        %v2757 = vpop.f32.mrf.mxu0
        %v2758 = vadd.f32 %v2614, %v2757
        %2759 = vmatmul.bf16.gmra.mxu0 %v976
        %v2760 = vpop.f32.mrf.mxu0
        %v2761 = vadd.f32 %v2617, %v2760
        %v2762 = vpop.f32.mrf.mxu0
        %v2763 = vadd.f32 %v2619, %v2762
        %2764 = vmatmul.bf16.gmra.mxu0 %v979
        %v2765 = vpop.f32.mrf.mxu0
        %v2766 = vadd.f32 %v2622, %v2765
        %v2767 = vpop.f32.mrf.mxu0
        %v2768 = vadd.f32 %v2624, %v2767
        %2769 = vmatmul.bf16.gmra.mxu0 %v982
        %v2770 = vpop.f32.mrf.mxu0
        %v2771 = vadd.f32 %v2627, %v2770
        %v2772 = vpop.f32.mrf.mxu0
        %v2773 = vadd.f32 %v2629, %v2772
        %2774 = vmatmul.bf16.gmra.mxu0 %v985
        %v2775 = vpop.f32.mrf.mxu0
        %v2776 = vadd.f32 %v2632, %v2775
        %v2777 = vpop.f32.mrf.mxu0
        %v2778 = vadd.f32 %v2634, %v2777
        %2779 = vmatmul.bf16.gmra.mxu0 %v988
        %v2780 = vpop.f32.mrf.mxu0
        %v2781 = vadd.f32 %v2637, %v2780
        %v2782 = vpop.f32.mrf.mxu0
        %v2783 = vadd.f32 %v2639, %v2782
        %2784 = vmatmul.bf16.gmra.mxu0 %v991
        %v2785 = vpop.f32.mrf.mxu0
        %v2786 = vadd.f32 %v2642, %v2785
        %v2787 = vpop.f32.mrf.mxu0
        %v2788 = vadd.f32 %v2644, %v2787
        %2789 = vmatmul.bf16.gmra.mxu0 %v994
        %v2790 = vpop.f32.mrf.mxu0
        %v2791 = vadd.f32 %v2647, %v2790
        %v2792 = vpop.f32.mrf.mxu0
        %v2793 = vadd.f32 %v2649, %v2792
        %2794 = vmatmul.bf16.gmra.mxu0 %v997
        %v2795 = vpop.f32.mrf.mxu0
        %v2796 = vadd.f32 %v2652, %v2795
        %v2797 = vpop.f32.mrf.mxu0
        %v2798 = vadd.f32 %v2654, %v2797
        %2799 = vmatmul.bf16.gmra.mxu0 %v1000
        %v2800 = vpop.f32.mrf.mxu0
        %v2801 = vadd.f32 %v2657, %v2800
        %v2802 = vpop.f32.mrf.mxu0
        %v2803 = vadd.f32 %v2659, %v2802
        %2804 = vmatmul.bf16.gmra.mxu0 %v1003
        %v2805 = vpop.f32.mrf.mxu0
        %v2806 = vadd.f32 %v2662, %v2805
        %v2807 = vpop.f32.mrf.mxu0
        %v2808 = vadd.f32 %v2664, %v2807
        %2809 = vmatmul.bf16.gmra.mxu0 %v2336
        %v2810 = vpop.f32.mrf.mxu0
        %v2811 = vadd.f32 %v2667, %v2810
        %v2812 = vpop.f32.mrf.mxu0
        %v2813 = vadd.f32 %v2669, %v2812
        %2814 = vmatmul.bf16.gmra.mxu0 %v2339
        %v2815 = vpop.f32.mrf.mxu0
        %v2816 = vadd.f32 %v2672, %v2815
        %v2817 = vpop.f32.mrf.mxu0
        %v2818 = vadd.f32 %v2674, %v2817
        %2819 = vmatmul.bf16.gmra.mxu0 %v2342
        %v2820 = vpop.f32.mrf.mxu0
        %v2821 = vadd.f32 %v2677, %v2820
        %v2822 = vpop.f32.mrf.mxu0
        %v2823 = vadd.f32 %v2679, %v2822
        %2824 = vdwg.mxu0
        %2825 = vmatpush.bf16.msra.mxu0 %v2512
        %2826 = vmatpush.bf16.msra.mxu0 %v2511
        %2827 = vmatpush.bf16.msra.mxu0 %v2510
        %2828 = vmatpush.bf16.msra.mxu0 %v2509
        %2829 = vmatpush.bf16.msra.mxu0 %v2508
        %2830 = vmatpush.bf16.msra.mxu0 %v2507
        %2831 = vmatpush.bf16.msra.mxu0 %v2506
        %2832 = vmatpush.bf16.msra.mxu0 %v2505
        %2833 = vmatmul.bf16.gmra.mxu0 %v935
        %v2834 = vpop.f32.mrf.mxu0
        %v2835 = vadd.f32 %v2691, %v2834
        %v2836 = vpop.f32.mrf.mxu0
        %v2837 = vadd.f32 %v2693, %v2836
        %2838 = vmatmul.bf16.gmra.mxu0 %v938
        %v2839 = vpop.f32.mrf.mxu0
        %v2840 = vadd.f32 %v2696, %v2839
        %v2841 = vpop.f32.mrf.mxu0
        %v2842 = vadd.f32 %v2698, %v2841
        %2843 = vmatmul.bf16.gmra.mxu0 %v941
        %v2844 = vpop.f32.mrf.mxu0
        %v2845 = vadd.f32 %v2701, %v2844
        %v2846 = vpop.f32.mrf.mxu0
        %v2847 = vadd.f32 %v2703, %v2846
        %2848 = vmatmul.bf16.gmra.mxu0 %v944
        %v2849 = vpop.f32.mrf.mxu0
        %v2850 = vadd.f32 %v2706, %v2849
        %v2851 = vpop.f32.mrf.mxu0
        %v2852 = vadd.f32 %v2708, %v2851
        %2853 = vmatmul.bf16.gmra.mxu0 %v947
        %v2854 = vpop.f32.mrf.mxu0
        %v2855 = vadd.f32 %v2711, %v2854
        %v2856 = vpop.f32.mrf.mxu0
        %v2857 = vadd.f32 %v2713, %v2856
        %2858 = vmatmul.bf16.gmra.mxu0 %v950
        %v2859 = vpop.f32.mrf.mxu0
        %v2860 = vadd.f32 %v2716, %v2859
        %v2861 = vpop.f32.mrf.mxu0
        %v2862 = vadd.f32 %v2718, %v2861
        %2863 = vmatmul.bf16.gmra.mxu0 %v953
        %v2864 = vpop.f32.mrf.mxu0
        %v2865 = vadd.f32 %v2721, %v2864
        %v2866 = vpop.f32.mrf.mxu0
        %v2867 = vadd.f32 %v2723, %v2866
        %2868 = vmatmul.bf16.gmra.mxu0 %v956
        %v2869 = vpop.f32.mrf.mxu0
        %v2870 = vadd.f32 %v2726, %v2869
        %v2871 = vpop.f32.mrf.mxu0
        %v2872 = vadd.f32 %v2728, %v2871
        %2873 = vmatmul.bf16.gmra.mxu0 %v959
        %v2874 = vpop.f32.mrf.mxu0
        %v2875 = vadd.f32 %v2731, %v2874
        %v2876 = vpop.f32.mrf.mxu0
        %v2877 = vadd.f32 %v2733, %v2876
        %2878 = vmatmul.bf16.gmra.mxu0 %v962
        %v2879 = vpop.f32.mrf.mxu0
        %v2880 = vadd.f32 %v2736, %v2879
        %v2881 = vpop.f32.mrf.mxu0
        %v2882 = vadd.f32 %v2738, %v2881
        %2883 = vmatmul.bf16.gmra.mxu0 %v965
        %v2884 = vpop.f32.mrf.mxu0
        %v2885 = vadd.f32 %v2741, %v2884
        %v2886 = vpop.f32.mrf.mxu0
        %v2887 = vadd.f32 %v2743, %v2886
        %2888 = vmatmul.bf16.gmra.mxu0 %v968
        %v2889 = vpop.f32.mrf.mxu0
        %v2890 = vadd.f32 %v2746, %v2889
        %v2891 = vpop.f32.mrf.mxu0
        %v2892 = vadd.f32 %v2748, %v2891
        %2893 = vmatmul.bf16.gmra.mxu0 %v971
        %v2894 = vpop.f32.mrf.mxu0
        %v2895 = vadd.f32 %v2751, %v2894
        %v2896 = vpop.f32.mrf.mxu0
        %v2897 = vadd.f32 %v2753, %v2896
        %2898 = vmatmul.bf16.gmra.mxu0 %v974
        %v2899 = vpop.f32.mrf.mxu0
        %v2900 = vadd.f32 %v2756, %v2899
        %v2901 = vpop.f32.mrf.mxu0
        %v2902 = vadd.f32 %v2758, %v2901
        %2903 = vmatmul.bf16.gmra.mxu0 %v977
        %v2904 = vpop.f32.mrf.mxu0
        %v2905 = vadd.f32 %v2761, %v2904
        %v2906 = vpop.f32.mrf.mxu0
        %v2907 = vadd.f32 %v2763, %v2906
        %2908 = vmatmul.bf16.gmra.mxu0 %v980
        %v2909 = vpop.f32.mrf.mxu0
        %v2910 = vadd.f32 %v2766, %v2909
        %v2911 = vpop.f32.mrf.mxu0
        %v2912 = vadd.f32 %v2768, %v2911
        %2913 = vmatmul.bf16.gmra.mxu0 %v983
        %v2914 = vpop.f32.mrf.mxu0
        %v2915 = vadd.f32 %v2771, %v2914
        %v2916 = vpop.f32.mrf.mxu0
        %v2917 = vadd.f32 %v2773, %v2916
        %2918 = vmatmul.bf16.gmra.mxu0 %v986
        %v2919 = vpop.f32.mrf.mxu0
        %v2920 = vadd.f32 %v2776, %v2919
        %v2921 = vpop.f32.mrf.mxu0
        %v2922 = vadd.f32 %v2778, %v2921
        %2923 = vmatmul.bf16.gmra.mxu0 %v989
        %v2924 = vpop.f32.mrf.mxu0
        %v2925 = vadd.f32 %v2781, %v2924
        %v2926 = vpop.f32.mrf.mxu0
        %v2927 = vadd.f32 %v2783, %v2926
        %2928 = vmatmul.bf16.gmra.mxu0 %v992
        %v2929 = vpop.f32.mrf.mxu0
        %v2930 = vadd.f32 %v2786, %v2929
        %v2931 = vpop.f32.mrf.mxu0
        %v2932 = vadd.f32 %v2788, %v2931
        %2933 = vmatmul.bf16.gmra.mxu0 %v995
        %v2934 = vpop.f32.mrf.mxu0
        %v2935 = vadd.f32 %v2791, %v2934
        %v2936 = vpop.f32.mrf.mxu0
        %v2937 = vadd.f32 %v2793, %v2936
        %2938 = vmatmul.bf16.gmra.mxu0 %v998
        %v2939 = vpop.f32.mrf.mxu0
        %v2940 = vadd.f32 %v2796, %v2939
        %v2941 = vpop.f32.mrf.mxu0
        %v2942 = vadd.f32 %v2798, %v2941
        %2943 = vmatmul.bf16.gmra.mxu0 %v1001
        %v2944 = vpop.f32.mrf.mxu0
        %v2945 = vadd.f32 %v2801, %v2944
        %v2946 = vpop.f32.mrf.mxu0
        %v2947 = vadd.f32 %v2803, %v2946
        %2948 = vmatmul.bf16.gmra.mxu0 %v1004
        %v2949 = vpop.f32.mrf.mxu0
        %v2950 = vadd.f32 %v2806, %v2949
        %v2951 = vpop.f32.mrf.mxu0
        %v2952 = vadd.f32 %v2808, %v2951
        %2953 = vmatmul.bf16.gmra.mxu0 %v2337
        %v2954 = vpop.f32.mrf.mxu0
        %v2955 = vadd.f32 %v2811, %v2954
        %v2956 = vpop.f32.mrf.mxu0
        %v2957 = vadd.f32 %v2813, %v2956
        %2958 = vmatmul.bf16.gmra.mxu0 %v2340
        %v2959 = vpop.f32.mrf.mxu0
        %v2960 = vadd.f32 %v2816, %v2959
        %v2961 = vpop.f32.mrf.mxu0
        %v2962 = vadd.f32 %v2818, %v2961
        %2963 = vmatmul.bf16.gmra.mxu0 %v2343
        %v2964 = vpop.f32.mrf.mxu0
        %v2965 = vadd.f32 %v2821, %v2964
        %v2966 = vpop.f32.mrf.mxu0
        %v2967 = vadd.f32 %v2823, %v2966
        %2968 = vdwg.mxu0
        %v2969 = vadd.f32 %v2201, %v2835
        %v2970 = vadd.f32 %v2203, %v2837
        %v2971 = vadd.f32 %v2206, %v2840
        %v2972 = vadd.f32 %v2208, %v2842
        %v2973 = vadd.f32 %v2211, %v2845
        %v2974 = vadd.f32 %v2213, %v2847
        %v2975 = vadd.f32 %v2216, %v2850
        %v2976 = vadd.f32 %v2218, %v2852
        %v2977 = vadd.f32 %v2221, %v2855
        %v2978 = vadd.f32 %v2223, %v2857
        %v2979 = vadd.f32 %v2226, %v2860
        %v2980 = vadd.f32 %v2228, %v2862
        %v2981 = vadd.f32 %v2231, %v2865
        %v2982 = vadd.f32 %v2233, %v2867
        %v2983 = vadd.f32 %v2236, %v2870
        %v2984 = vadd.f32 %v2238, %v2872
        %v2985 = vadd.f32 %v2241, %v2875
        %v2986 = vadd.f32 %v2243, %v2877
        %v2987 = vadd.f32 %v2246, %v2880
        %v2988 = vadd.f32 %v2248, %v2882
        %v2989 = vadd.f32 %v2251, %v2885
        %v2990 = vadd.f32 %v2253, %v2887
        %v2991 = vadd.f32 %v2256, %v2890
        %v2992 = vadd.f32 %v2258, %v2892
        %v2993 = vadd.f32 %v2261, %v2895
        %v2994 = vadd.f32 %v2263, %v2897
        %v2995 = vadd.f32 %v2266, %v2900
        %v2996 = vadd.f32 %v2268, %v2902
        %v2997 = vadd.f32 %v2271, %v2905
        %v2998 = vadd.f32 %v2273, %v2907
        %v2999 = vadd.f32 %v2276, %v2910
        %v3000 = vadd.f32 %v2278, %v2912
        %v3001 = vadd.f32 %v2281, %v2915
        %v3002 = vadd.f32 %v2283, %v2917
        %v3003 = vadd.f32 %v2286, %v2920
        %v3004 = vadd.f32 %v2288, %v2922
        %v3005 = vadd.f32 %v2291, %v2925
        %v3006 = vadd.f32 %v2293, %v2927
        %v3007 = vadd.f32 %v2296, %v2930
        %v3008 = vadd.f32 %v2298, %v2932
        %v3009 = vadd.f32 %v2301, %v2935
        %v3010 = vadd.f32 %v2303, %v2937
        %v3011 = vadd.f32 %v2306, %v2940
        %v3012 = vadd.f32 %v2308, %v2942
        %v3013 = vadd.f32 %v2311, %v2945
        %v3014 = vadd.f32 %v2313, %v2947
        %v3015 = vadd.f32 %v2316, %v2950
        %v3016 = vadd.f32 %v2318, %v2952
        %v3017 = vadd.f32 %v2321, %v2955
        %v3018 = vadd.f32 %v2323, %v2957
        %v3019 = vadd.f32 %v2326, %v2960
        %v3020 = vadd.f32 %v2328, %v2962
        %v3021 = vadd.f32 %v2331, %v2965
        %v3022 = vadd.f32 %v2333, %v2967
        %v3023 = vld [vmem:[%s2] sm:$0x1]
        %v3025 = vperm.slane %v3023, 0
        %v3027 = vmul.f32 %v2969, %v3025
        %v3028 = vmul.f32 %v2970, %v3025
        %v3029 = vmul.f32 %v2971, %v3025
        %v3030 = vmul.f32 %v2972, %v3025
        %v3031 = vmul.f32 %v2973, %v3025
        %v3032 = vmul.f32 %v2974, %v3025
        %v3033 = vmul.f32 %v2975, %v3025
        %v3034 = vmul.f32 %v2976, %v3025
        %v3035 = vmul.f32 %v2977, %v3025
        %v3036 = vmul.f32 %v2978, %v3025
        %v3037 = vmul.f32 %v2979, %v3025
        %v3038 = vmul.f32 %v2980, %v3025
        %v3039 = vmul.f32 %v2981, %v3025
        %v3040 = vmul.f32 %v2982, %v3025
        %v3041 = vmul.f32 %v2983, %v3025
        %v3042 = vmul.f32 %v2984, %v3025
        %v3043 = vmul.f32 %v2985, %v3025
        %v3044 = vmul.f32 %v2986, %v3025
        %v3045 = vmul.f32 %v2987, %v3025
        %v3046 = vmul.f32 %v2988, %v3025
        %v3047 = vmul.f32 %v2989, %v3025
        %v3048 = vmul.f32 %v2990, %v3025
        %v3049 = vmul.f32 %v2991, %v3025
        %v3050 = vmul.f32 %v2992, %v3025
        %v3051 = vmul.f32 %v2993, %v3025
        %v3052 = vmul.f32 %v2994, %v3025
        %v3053 = vmul.f32 %v2995, %v3025
        %v3054 = vmul.f32 %v2996, %v3025
        %v3055 = vmul.f32 %v2997, %v3025
        %v3056 = vmul.f32 %v2998, %v3025
        %v3057 = vmul.f32 %v2999, %v3025
        %v3058 = vmul.f32 %v3000, %v3025
        %v3059 = vmul.f32 %v3001, %v3025
        %v3060 = vmul.f32 %v3002, %v3025
        %v3061 = vmul.f32 %v3003, %v3025
        %v3062 = vmul.f32 %v3004, %v3025
        %v3063 = vmul.f32 %v3005, %v3025
        %v3064 = vmul.f32 %v3006, %v3025
        %v3065 = vmul.f32 %v3007, %v3025
        %v3066 = vmul.f32 %v3008, %v3025
        %v3067 = vmul.f32 %v3009, %v3025
        %v3068 = vmul.f32 %v3010, %v3025
        %v3069 = vmul.f32 %v3011, %v3025
        %v3070 = vmul.f32 %v3012, %v3025
        %v3071 = vmul.f32 %v3013, %v3025
        %v3072 = vmul.f32 %v3014, %v3025
        %v3073 = vmul.f32 %v3015, %v3025
        %v3074 = vmul.f32 %v3016, %v3025
        %v3075 = vmul.f32 %v3017, %v3025
        %v3076 = vmul.f32 %v3018, %v3025
        %v3077 = vmul.f32 %v3019, %v3025
        %v3078 = vmul.f32 %v3020, %v3025
        %v3079 = vmul.f32 %v3021, %v3025
        %v3080 = vmul.f32 %v3022, %v3025
        %v3081 = vld [vmem:[%s3] sm:$0x1]
        %v3083 = vperm.slane %v3081, 0
        %v3085 = vadd.f32 %v3027, %v3083
        %v3086 = vadd.f32 %v3028, %v3083
        %v3087 = vadd.f32 %v3029, %v3083
        %v3088 = vadd.f32 %v3030, %v3083
        %v3089 = vadd.f32 %v3031, %v3083
        %v3090 = vadd.f32 %v3032, %v3083
        %v3091 = vadd.f32 %v3033, %v3083
        %v3092 = vadd.f32 %v3034, %v3083
        %v3093 = vadd.f32 %v3035, %v3083
        %v3094 = vadd.f32 %v3036, %v3083
        %v3095 = vadd.f32 %v3037, %v3083
        %v3096 = vadd.f32 %v3038, %v3083
        %v3097 = vadd.f32 %v3039, %v3083
        %v3098 = vadd.f32 %v3040, %v3083
        %v3099 = vadd.f32 %v3041, %v3083
        %v3100 = vadd.f32 %v3042, %v3083
        %v3101 = vadd.f32 %v3043, %v3083
        %v3102 = vadd.f32 %v3044, %v3083
        %v3103 = vadd.f32 %v3045, %v3083
        %v3104 = vadd.f32 %v3046, %v3083
        %v3105 = vadd.f32 %v3047, %v3083
        %v3106 = vadd.f32 %v3048, %v3083
        %v3107 = vadd.f32 %v3049, %v3083
        %v3108 = vadd.f32 %v3050, %v3083
        %v3109 = vadd.f32 %v3051, %v3083
        %v3110 = vadd.f32 %v3052, %v3083
        %v3111 = vadd.f32 %v3053, %v3083
        %v3112 = vadd.f32 %v3054, %v3083
        %v3113 = vadd.f32 %v3055, %v3083
        %v3114 = vadd.f32 %v3056, %v3083
        %v3115 = vadd.f32 %v3057, %v3083
        %v3116 = vadd.f32 %v3058, %v3083
        %v3117 = vadd.f32 %v3059, %v3083
        %v3118 = vadd.f32 %v3060, %v3083
        %v3119 = vadd.f32 %v3061, %v3083
        %v3120 = vadd.f32 %v3062, %v3083
        %v3121 = vadd.f32 %v3063, %v3083
        %v3122 = vadd.f32 %v3064, %v3083
        %v3123 = vadd.f32 %v3065, %v3083
        %v3124 = vadd.f32 %v3066, %v3083
        %v3125 = vadd.f32 %v3067, %v3083
        %v3126 = vadd.f32 %v3068, %v3083
        %v3127 = vadd.f32 %v3069, %v3083
        %v3128 = vadd.f32 %v3070, %v3083
        %v3129 = vadd.f32 %v3071, %v3083
        %v3130 = vadd.f32 %v3072, %v3083
        %v3131 = vadd.f32 %v3073, %v3083
        %v3132 = vadd.f32 %v3074, %v3083
        %v3133 = vadd.f32 %v3075, %v3083
        %v3134 = vadd.f32 %v3076, %v3083
        %v3135 = vadd.f32 %v3077, %v3083
        %v3136 = vadd.f32 %v3078, %v3083
        %v3137 = vadd.f32 %v3079, %v3083
        %v3138 = vadd.f32 %v3080, %v3083
        %v3139 = vmax.f32 %v3085, 0.0
        %v3140 = vmax.f32 %v3086, 0.0
        %v3141 = vmax.f32 %v3087, 0.0
        %v3142 = vmax.f32 %v3088, 0.0
        %v3143 = vmax.f32 %v3089, 0.0
        %v3144 = vmax.f32 %v3090, 0.0
        %v3145 = vmax.f32 %v3091, 0.0
        %v3146 = vmax.f32 %v3092, 0.0
        %v3147 = vmax.f32 %v3093, 0.0
        %v3148 = vmax.f32 %v3094, 0.0
        %v3149 = vmax.f32 %v3095, 0.0
        %v3150 = vmax.f32 %v3096, 0.0
        %v3151 = vmax.f32 %v3097, 0.0
        %v3152 = vmax.f32 %v3098, 0.0
        %v3153 = vmax.f32 %v3099, 0.0
        %v3154 = vmax.f32 %v3100, 0.0
        %v3155 = vmax.f32 %v3101, 0.0
        %v3156 = vmax.f32 %v3102, 0.0
        %v3157 = vmax.f32 %v3103, 0.0
        %v3158 = vmax.f32 %v3104, 0.0
        %v3159 = vmax.f32 %v3105, 0.0
        %v3160 = vmax.f32 %v3106, 0.0
        %v3161 = vmax.f32 %v3107, 0.0
        %v3162 = vmax.f32 %v3108, 0.0
        %v3163 = vmax.f32 %v3109, 0.0
        %v3164 = vmax.f32 %v3110, 0.0
        %v3165 = vmax.f32 %v3111, 0.0
        %v3166 = vmax.f32 %v3112, 0.0
        %v3167 = vmax.f32 %v3113, 0.0
        %v3168 = vmax.f32 %v3114, 0.0
        %v3169 = vmax.f32 %v3115, 0.0
        %v3170 = vmax.f32 %v3116, 0.0
        %v3171 = vmax.f32 %v3117, 0.0
        %v3172 = vmax.f32 %v3118, 0.0
        %v3173 = vmax.f32 %v3119, 0.0
        %v3174 = vmax.f32 %v3120, 0.0
        %v3175 = vmax.f32 %v3121, 0.0
        %v3176 = vmax.f32 %v3122, 0.0
        %v3177 = vmax.f32 %v3123, 0.0
        %v3178 = vmax.f32 %v3124, 0.0
        %v3179 = vmax.f32 %v3125, 0.0
        %v3180 = vmax.f32 %v3126, 0.0
        %v3181 = vmax.f32 %v3127, 0.0
        %v3182 = vmax.f32 %v3128, 0.0
        %v3183 = vmax.f32 %v3129, 0.0
        %v3184 = vmax.f32 %v3130, 0.0
        %v3185 = vmax.f32 %v3131, 0.0
        %v3186 = vmax.f32 %v3132, 0.0
        %v3187 = vmax.f32 %v3133, 0.0
        %v3188 = vmax.f32 %v3134, 0.0
        %v3189 = vmax.f32 %v3135, 0.0
        %v3190 = vmax.f32 %v3136, 0.0
        %v3191 = vmax.f32 %v3137, 0.0
        %v3192 = vmax.f32 %v3138, 0.0
        %s3193 = ssub.s32 %s359, 1
        %v3194 = vstv %s3193
        %v3195 = vadd.s32 %v3194, 1
        %v3196 = vadd.s32 %v3194, 2
        %v3197 = vadd.s32 %v3194, 3
        %v3198 = vadd.s32 %v3194, 4
        %v3199 = vadd.s32 %v3194, 5
        %v3200 = vadd.s32 %v3194, 6
        %v3201 = vadd.s32 %v3194, 7
        %v3202 = vadd.s32 %v3194, 8
        %v3203 = vadd.s32 %v3194, 9
        %v3204 = vadd.s32 %v3194, 10
        %v3205 = vadd.s32 %v3194, 11
        %v3206 = vadd.s32 %v3194, 12
        %v3207 = vadd.s32 %v3194, 13
        %v3208 = vadd.s32 %v3194, 14
        %v3209 = vadd.s32 %v3194, 15
        %v3210 = vadd.s32 %v3194, 16
        %v3211 = vadd.s32 %v3194, 17
        %v3212 = vlaneseq
        %v3213 = vshrl.u32 %v3212, 7
        %v3214 = vadd.s32 %v3213, 8
        %v3215 = vadd.s32 %v3213, 16
        %v3216 = vsub.s32 %v3213, 1
        %v3217 = vsub.s32 %v3214, 1
        %v3218 = vsub.s32 %v3215, 1
        %vm3219 = vcmp.ge.s32.totalorder %v3194, 0
        %vm3220 = vcmp.ge.s32.totalorder %v3195, 0
        %vm3221 = vcmp.ge.s32.totalorder %v3196, 0
        %vm3222 = vcmp.ge.s32.totalorder %v3197, 0
        %vm3223 = vcmp.ge.s32.totalorder %v3198, 0
        %vm3224 = vcmp.ge.s32.totalorder %v3199, 0
        %vm3225 = vcmp.ge.s32.totalorder %v3200, 0
        %vm3226 = vcmp.ge.s32.totalorder %v3201, 0
        %vm3227 = vcmp.ge.s32.totalorder %v3202, 0
        %vm3228 = vcmp.ge.s32.totalorder %v3203, 0
        %vm3229 = vcmp.ge.s32.totalorder %v3204, 0
        %vm3230 = vcmp.ge.s32.totalorder %v3205, 0
        %vm3231 = vcmp.ge.s32.totalorder %v3206, 0
        %vm3232 = vcmp.ge.s32.totalorder %v3207, 0
        %vm3233 = vcmp.ge.s32.totalorder %v3208, 0
        %vm3234 = vcmp.ge.s32.totalorder %v3209, 0
        %vm3235 = vcmp.ge.s32.totalorder %v3210, 0
        %vm3236 = vcmp.ge.s32.totalorder %v3211, 0
        %vm3237 = vcmp.lt.s32.totalorder %v3194, 16
        %vm3238 = vcmp.lt.s32.totalorder %v3195, 16
        %vm3239 = vcmp.lt.s32.totalorder %v3196, 16
        %vm3240 = vcmp.lt.s32.totalorder %v3197, 16
        %vm3241 = vcmp.lt.s32.totalorder %v3198, 16
        %vm3242 = vcmp.lt.s32.totalorder %v3199, 16
        %vm3243 = vcmp.lt.s32.totalorder %v3200, 16
        %vm3244 = vcmp.lt.s32.totalorder %v3201, 16
        %vm3245 = vcmp.lt.s32.totalorder %v3202, 16
        %vm3246 = vcmp.lt.s32.totalorder %v3203, 16
        %vm3247 = vcmp.lt.s32.totalorder %v3204, 16
        %vm3248 = vcmp.lt.s32.totalorder %v3205, 16
        %vm3249 = vcmp.lt.s32.totalorder %v3206, 16
        %vm3250 = vcmp.lt.s32.totalorder %v3207, 16
        %vm3251 = vcmp.lt.s32.totalorder %v3208, 16
        %vm3252 = vcmp.lt.s32.totalorder %v3209, 16
        %vm3253 = vcmp.lt.s32.totalorder %v3210, 16
        %vm3254 = vcmp.lt.s32.totalorder %v3211, 16
        %vm3255 = vmand %vm3219, %vm3237
        %vm3256 = vmand %vm3220, %vm3238
        %vm3257 = vmand %vm3221, %vm3239
        %vm3258 = vmand %vm3222, %vm3240
        %vm3259 = vmand %vm3223, %vm3241
        %vm3260 = vmand %vm3224, %vm3242
        %vm3261 = vmand %vm3225, %vm3243
        %vm3262 = vmand %vm3226, %vm3244
        %vm3263 = vmand %vm3227, %vm3245
        %vm3264 = vmand %vm3228, %vm3246
        %vm3265 = vmand %vm3229, %vm3247
        %vm3266 = vmand %vm3230, %vm3248
        %vm3267 = vmand %vm3231, %vm3249
        %vm3268 = vmand %vm3232, %vm3250
        %vm3269 = vmand %vm3233, %vm3251
        %vm3270 = vmand %vm3234, %vm3252
        %vm3271 = vmand %vm3235, %vm3253
        %vm3272 = vmand %vm3236, %vm3254
        %vm3273 = vcmp.ge.s32.totalorder %v3216, 0
        %vm3274 = vcmp.ge.s32.totalorder %v3217, 0
        %vm3275 = vcmp.ge.s32.totalorder %v3218, 0
        %v3276 = vsel %vm3255, 1, 0
        %v3277 = vsel %vm3256, 1, 0
        %v3278 = vsel %vm3257, 1, 0
        %v3279 = vsel %vm3258, 1, 0
        %v3280 = vsel %vm3259, 1, 0
        %v3281 = vsel %vm3260, 1, 0
        %v3282 = vsel %vm3261, 1, 0
        %v3283 = vsel %vm3262, 1, 0
        %v3284 = vsel %vm3263, 1, 0
        %v3285 = vsel %vm3264, 1, 0
        %v3286 = vsel %vm3265, 1, 0
        %v3287 = vsel %vm3266, 1, 0
        %v3288 = vsel %vm3267, 1, 0
        %v3289 = vsel %vm3268, 1, 0
        %v3290 = vsel %vm3269, 1, 0
        %v3291 = vsel %vm3270, 1, 0
        %v3292 = vsel %vm3271, 1, 0
        %v3293 = vsel %vm3272, 1, 0
        %vm3294 = vcmp.eq.s32.totalorder %v3276, 1
        %vm3295 = vcmp.eq.s32.totalorder %v3277, 1
        %vm3296 = vcmp.eq.s32.totalorder %v3278, 1
        %vm3297 = vcmp.eq.s32.totalorder %v3279, 1
        %vm3298 = vcmp.eq.s32.totalorder %v3280, 1
        %vm3299 = vcmp.eq.s32.totalorder %v3281, 1
        %vm3300 = vcmp.eq.s32.totalorder %v3282, 1
        %vm3301 = vcmp.eq.s32.totalorder %v3283, 1
        %vm3302 = vcmp.eq.s32.totalorder %v3284, 1
        %vm3303 = vcmp.eq.s32.totalorder %v3285, 1
        %vm3304 = vcmp.eq.s32.totalorder %v3286, 1
        %vm3305 = vcmp.eq.s32.totalorder %v3287, 1
        %vm3306 = vcmp.eq.s32.totalorder %v3288, 1
        %vm3307 = vcmp.eq.s32.totalorder %v3289, 1
        %vm3308 = vcmp.eq.s32.totalorder %v3290, 1
        %vm3309 = vcmp.eq.s32.totalorder %v3291, 1
        %vm3310 = vcmp.eq.s32.totalorder %v3292, 1
        %vm3311 = vcmp.eq.s32.totalorder %v3293, 1
        %v3312 = vsel %vm3273, 1, 0
        %v3313 = vsel %vm3274, 1, 0
        %v3314 = vsel %vm3275, 1, 0
        %vm3315 = vcmp.eq.s32.totalorder %v3312, 1
        %vm3316 = vcmp.eq.s32.totalorder %v3313, 1
        %vm3317 = vcmp.eq.s32.totalorder %v3314, 1
        %vm3318 = vmand %vm3294, %vm3315
        %vm3319 = vmand %vm3294, %vm3316
        %vm3320 = vmand %vm3294, %vm3317
        %vm3321 = vmand %vm3295, %vm3315
        %vm3322 = vmand %vm3295, %vm3316
        %vm3323 = vmand %vm3295, %vm3317
        %vm3324 = vmand %vm3296, %vm3315
        %vm3325 = vmand %vm3296, %vm3316
        %vm3326 = vmand %vm3296, %vm3317
        %vm3327 = vmand %vm3297, %vm3315
        %vm3328 = vmand %vm3297, %vm3316
        %vm3329 = vmand %vm3297, %vm3317
        %vm3330 = vmand %vm3298, %vm3315
        %vm3331 = vmand %vm3298, %vm3316
        %vm3332 = vmand %vm3298, %vm3317
        %vm3333 = vmand %vm3299, %vm3315
        %vm3334 = vmand %vm3299, %vm3316
        %vm3335 = vmand %vm3299, %vm3317
        %vm3336 = vmand %vm3300, %vm3315
        %vm3337 = vmand %vm3300, %vm3316
        %vm3338 = vmand %vm3300, %vm3317
        %vm3339 = vmand %vm3301, %vm3315
        %vm3340 = vmand %vm3301, %vm3316
        %vm3341 = vmand %vm3301, %vm3317
        %vm3342 = vmand %vm3302, %vm3315
        %vm3343 = vmand %vm3302, %vm3316
        %vm3344 = vmand %vm3302, %vm3317
        %vm3345 = vmand %vm3303, %vm3315
        %vm3346 = vmand %vm3303, %vm3316
        %vm3347 = vmand %vm3303, %vm3317
        %vm3348 = vmand %vm3304, %vm3315
        %vm3349 = vmand %vm3304, %vm3316
        %vm3350 = vmand %vm3304, %vm3317
        %vm3351 = vmand %vm3305, %vm3315
        %vm3352 = vmand %vm3305, %vm3316
        %vm3353 = vmand %vm3305, %vm3317
        %vm3354 = vmand %vm3306, %vm3315
        %vm3355 = vmand %vm3306, %vm3316
        %vm3356 = vmand %vm3306, %vm3317
        %vm3357 = vmand %vm3307, %vm3315
        %vm3358 = vmand %vm3307, %vm3316
        %vm3359 = vmand %vm3307, %vm3317
        %vm3360 = vmand %vm3308, %vm3315
        %vm3361 = vmand %vm3308, %vm3316
        %vm3362 = vmand %vm3308, %vm3317
        %vm3363 = vmand %vm3309, %vm3315
        %vm3364 = vmand %vm3309, %vm3316
        %vm3365 = vmand %vm3309, %vm3317
        %vm3366 = vmand %vm3310, %vm3315
        %vm3367 = vmand %vm3310, %vm3316
        %vm3368 = vmand %vm3310, %vm3317
        %vm3369 = vmand %vm3311, %vm3315
        %vm3370 = vmand %vm3311, %vm3316
        %vm3371 = vmand %vm3311, %vm3317
        %vm3372 = vcmp.lt.s32.totalorder %v3216, 16
        %vm3373 = vcmp.lt.s32.totalorder %v3217, 16
        %vm3374 = vcmp.lt.s32.totalorder %v3218, 16
        %v3375 = vsel %vm3372, 1, 0
        %v3376 = vsel %vm3373, 1, 0
        %v3377 = vsel %vm3374, 1, 0
        %vm3378 = vcmp.eq.s32.totalorder %v3375, 1
        %vm3379 = vcmp.eq.s32.totalorder %v3376, 1
        %vm3380 = vcmp.eq.s32.totalorder %v3377, 1
        %vm3381 = vmand %vm3318, %vm3378
        %vm3382 = vmand %vm3319, %vm3379
        %vm3383 = vmand %vm3320, %vm3380
        %vm3384 = vmand %vm3321, %vm3378
        %vm3385 = vmand %vm3322, %vm3379
        %vm3386 = vmand %vm3323, %vm3380
        %vm3387 = vmand %vm3324, %vm3378
        %vm3388 = vmand %vm3325, %vm3379
        %vm3389 = vmand %vm3326, %vm3380
        %vm3390 = vmand %vm3327, %vm3378
        %vm3391 = vmand %vm3328, %vm3379
        %vm3392 = vmand %vm3329, %vm3380
        %vm3393 = vmand %vm3330, %vm3378
        %vm3394 = vmand %vm3331, %vm3379
        %vm3395 = vmand %vm3332, %vm3380
        %vm3396 = vmand %vm3333, %vm3378
        %vm3397 = vmand %vm3334, %vm3379
        %vm3398 = vmand %vm3335, %vm3380
        %vm3399 = vmand %vm3336, %vm3378
        %vm3400 = vmand %vm3337, %vm3379
        %vm3401 = vmand %vm3338, %vm3380
        %vm3402 = vmand %vm3339, %vm3378
        %vm3403 = vmand %vm3340, %vm3379
        %vm3404 = vmand %vm3341, %vm3380
        %vm3405 = vmand %vm3342, %vm3378
        %vm3406 = vmand %vm3343, %vm3379
        %vm3407 = vmand %vm3344, %vm3380
        %vm3408 = vmand %vm3345, %vm3378
        %vm3409 = vmand %vm3346, %vm3379
        %vm3410 = vmand %vm3347, %vm3380
        %vm3411 = vmand %vm3348, %vm3378
        %vm3412 = vmand %vm3349, %vm3379
        %vm3413 = vmand %vm3350, %vm3380
        %vm3414 = vmand %vm3351, %vm3378
        %vm3415 = vmand %vm3352, %vm3379
        %vm3416 = vmand %vm3353, %vm3380
        %vm3417 = vmand %vm3354, %vm3378
        %vm3418 = vmand %vm3355, %vm3379
        %vm3419 = vmand %vm3356, %vm3380
        %vm3420 = vmand %vm3357, %vm3378
        %vm3421 = vmand %vm3358, %vm3379
        %vm3422 = vmand %vm3359, %vm3380
        %vm3423 = vmand %vm3360, %vm3378
        %vm3424 = vmand %vm3361, %vm3379
        %vm3425 = vmand %vm3362, %vm3380
        %vm3426 = vmand %vm3363, %vm3378
        %vm3427 = vmand %vm3364, %vm3379
        %vm3428 = vmand %vm3365, %vm3380
        %vm3429 = vmand %vm3366, %vm3378
        %vm3430 = vmand %vm3367, %vm3379
        %vm3431 = vmand %vm3368, %vm3380
        %vm3432 = vmand %vm3369, %vm3378
        %vm3433 = vmand %vm3370, %vm3379
        %vm3434 = vmand %vm3371, %vm3380
        %v3435 = vsel %vm3381, 1, 0
        %v3436 = vsel %vm3382, 1, 0
        %v3437 = vsel %vm3383, 1, 0
        %v3438 = vsel %vm3384, 1, 0
        %v3439 = vsel %vm3385, 1, 0
        %v3440 = vsel %vm3386, 1, 0
        %v3441 = vsel %vm3387, 1, 0
        %v3442 = vsel %vm3388, 1, 0
        %v3443 = vsel %vm3389, 1, 0
        %v3444 = vsel %vm3390, 1, 0
        %v3445 = vsel %vm3391, 1, 0
        %v3446 = vsel %vm3392, 1, 0
        %v3447 = vsel %vm3393, 1, 0
        %v3448 = vsel %vm3394, 1, 0
        %v3449 = vsel %vm3395, 1, 0
        %v3450 = vsel %vm3396, 1, 0
        %v3451 = vsel %vm3397, 1, 0
        %v3452 = vsel %vm3398, 1, 0
        %v3453 = vsel %vm3399, 1, 0
        %v3454 = vsel %vm3400, 1, 0
        %v3455 = vsel %vm3401, 1, 0
        %v3456 = vsel %vm3402, 1, 0
        %v3457 = vsel %vm3403, 1, 0
        %v3458 = vsel %vm3404, 1, 0
        %v3459 = vsel %vm3405, 1, 0
        %v3460 = vsel %vm3406, 1, 0
        %v3461 = vsel %vm3407, 1, 0
        %v3462 = vsel %vm3408, 1, 0
        %v3463 = vsel %vm3409, 1, 0
        %v3464 = vsel %vm3410, 1, 0
        %v3465 = vsel %vm3411, 1, 0
        %v3466 = vsel %vm3412, 1, 0
        %v3467 = vsel %vm3413, 1, 0
        %v3468 = vsel %vm3414, 1, 0
        %v3469 = vsel %vm3415, 1, 0
        %v3470 = vsel %vm3416, 1, 0
        %v3471 = vsel %vm3417, 1, 0
        %v3472 = vsel %vm3418, 1, 0
        %v3473 = vsel %vm3419, 1, 0
        %v3474 = vsel %vm3420, 1, 0
        %v3475 = vsel %vm3421, 1, 0
        %v3476 = vsel %vm3422, 1, 0
        %v3477 = vsel %vm3423, 1, 0
        %v3478 = vsel %vm3424, 1, 0
        %v3479 = vsel %vm3425, 1, 0
        %v3480 = vsel %vm3426, 1, 0
        %v3481 = vsel %vm3427, 1, 0
        %v3482 = vsel %vm3428, 1, 0
        %v3483 = vsel %vm3429, 1, 0
        %v3484 = vsel %vm3430, 1, 0
        %v3485 = vsel %vm3431, 1, 0
        %v3486 = vsel %vm3432, 1, 0
        %v3487 = vsel %vm3433, 1, 0
        %v3488 = vsel %vm3434, 1, 0
        %vm3489 = vcmp.eq.s32.totalorder %v3435, 1
        %vm3490 = vcmp.eq.s32.totalorder %v3436, 1
        %vm3491 = vcmp.eq.s32.totalorder %v3437, 1
        %vm3492 = vcmp.eq.s32.totalorder %v3438, 1
        %vm3493 = vcmp.eq.s32.totalorder %v3439, 1
        %vm3494 = vcmp.eq.s32.totalorder %v3440, 1
        %vm3495 = vcmp.eq.s32.totalorder %v3441, 1
        %vm3496 = vcmp.eq.s32.totalorder %v3442, 1
        %vm3497 = vcmp.eq.s32.totalorder %v3443, 1
        %vm3498 = vcmp.eq.s32.totalorder %v3444, 1
        %vm3499 = vcmp.eq.s32.totalorder %v3445, 1
        %vm3500 = vcmp.eq.s32.totalorder %v3446, 1
        %vm3501 = vcmp.eq.s32.totalorder %v3447, 1
        %vm3502 = vcmp.eq.s32.totalorder %v3448, 1
        %vm3503 = vcmp.eq.s32.totalorder %v3449, 1
        %vm3504 = vcmp.eq.s32.totalorder %v3450, 1
        %vm3505 = vcmp.eq.s32.totalorder %v3451, 1
        %vm3506 = vcmp.eq.s32.totalorder %v3452, 1
        %vm3507 = vcmp.eq.s32.totalorder %v3453, 1
        %vm3508 = vcmp.eq.s32.totalorder %v3454, 1
        %vm3509 = vcmp.eq.s32.totalorder %v3455, 1
        %vm3510 = vcmp.eq.s32.totalorder %v3456, 1
        %vm3511 = vcmp.eq.s32.totalorder %v3457, 1
        %vm3512 = vcmp.eq.s32.totalorder %v3458, 1
        %vm3513 = vcmp.eq.s32.totalorder %v3459, 1
        %vm3514 = vcmp.eq.s32.totalorder %v3460, 1
        %vm3515 = vcmp.eq.s32.totalorder %v3461, 1
        %vm3516 = vcmp.eq.s32.totalorder %v3462, 1
        %vm3517 = vcmp.eq.s32.totalorder %v3463, 1
        %vm3518 = vcmp.eq.s32.totalorder %v3464, 1
        %vm3519 = vcmp.eq.s32.totalorder %v3465, 1
        %vm3520 = vcmp.eq.s32.totalorder %v3466, 1
        %vm3521 = vcmp.eq.s32.totalorder %v3467, 1
        %vm3522 = vcmp.eq.s32.totalorder %v3468, 1
        %vm3523 = vcmp.eq.s32.totalorder %v3469, 1
        %vm3524 = vcmp.eq.s32.totalorder %v3470, 1
        %vm3525 = vcmp.eq.s32.totalorder %v3471, 1
        %vm3526 = vcmp.eq.s32.totalorder %v3472, 1
        %vm3527 = vcmp.eq.s32.totalorder %v3473, 1
        %vm3528 = vcmp.eq.s32.totalorder %v3474, 1
        %vm3529 = vcmp.eq.s32.totalorder %v3475, 1
        %vm3530 = vcmp.eq.s32.totalorder %v3476, 1
        %vm3531 = vcmp.eq.s32.totalorder %v3477, 1
        %vm3532 = vcmp.eq.s32.totalorder %v3478, 1
        %vm3533 = vcmp.eq.s32.totalorder %v3479, 1
        %vm3534 = vcmp.eq.s32.totalorder %v3480, 1
        %vm3535 = vcmp.eq.s32.totalorder %v3481, 1
        %vm3536 = vcmp.eq.s32.totalorder %v3482, 1
        %vm3537 = vcmp.eq.s32.totalorder %v3483, 1
        %vm3538 = vcmp.eq.s32.totalorder %v3484, 1
        %vm3539 = vcmp.eq.s32.totalorder %v3485, 1
        %vm3540 = vcmp.eq.s32.totalorder %v3486, 1
        %vm3541 = vcmp.eq.s32.totalorder %v3487, 1
        %vm3542 = vcmp.eq.s32.totalorder %v3488, 1
        %v3543 = vsel %vm3489, %v3139, 0.0
        %v3544 = vsel %vm3490, %v3140, 0.0
        %v3545 = vsel %vm3491, %v3141, 0.0
        %v3546 = vsel %vm3492, %v3142, 0.0
        %v3547 = vsel %vm3493, %v3143, 0.0
        %v3548 = vsel %vm3494, %v3144, 0.0
        %v3549 = vsel %vm3495, %v3145, 0.0
        %v3550 = vsel %vm3496, %v3146, 0.0
        %v3551 = vsel %vm3497, %v3147, 0.0
        %v3552 = vsel %vm3498, %v3148, 0.0
        %v3553 = vsel %vm3499, %v3149, 0.0
        %v3554 = vsel %vm3500, %v3150, 0.0
        %v3555 = vsel %vm3501, %v3151, 0.0
        %v3556 = vsel %vm3502, %v3152, 0.0
        %v3557 = vsel %vm3503, %v3153, 0.0
        %v3558 = vsel %vm3504, %v3154, 0.0
        %v3559 = vsel %vm3505, %v3155, 0.0
        %v3560 = vsel %vm3506, %v3156, 0.0
        %v3561 = vsel %vm3507, %v3157, 0.0
        %v3562 = vsel %vm3508, %v3158, 0.0
        %v3563 = vsel %vm3509, %v3159, 0.0
        %v3564 = vsel %vm3510, %v3160, 0.0
        %v3565 = vsel %vm3511, %v3161, 0.0
        %v3566 = vsel %vm3512, %v3162, 0.0
        %v3567 = vsel %vm3513, %v3163, 0.0
        %v3568 = vsel %vm3514, %v3164, 0.0
        %v3569 = vsel %vm3515, %v3165, 0.0
        %v3570 = vsel %vm3516, %v3166, 0.0
        %v3571 = vsel %vm3517, %v3167, 0.0
        %v3572 = vsel %vm3518, %v3168, 0.0
        %v3573 = vsel %vm3519, %v3169, 0.0
        %v3574 = vsel %vm3520, %v3170, 0.0
        %v3575 = vsel %vm3521, %v3171, 0.0
        %v3576 = vsel %vm3522, %v3172, 0.0
        %v3577 = vsel %vm3523, %v3173, 0.0
        %v3578 = vsel %vm3524, %v3174, 0.0
        %v3579 = vsel %vm3525, %v3175, 0.0
        %v3580 = vsel %vm3526, %v3176, 0.0
        %v3581 = vsel %vm3527, %v3177, 0.0
        %v3582 = vsel %vm3528, %v3178, 0.0
        %v3583 = vsel %vm3529, %v3179, 0.0
        %v3584 = vsel %vm3530, %v3180, 0.0
        %v3585 = vsel %vm3531, %v3181, 0.0
        %v3586 = vsel %vm3532, %v3182, 0.0
        %v3587 = vsel %vm3533, %v3183, 0.0
        %v3588 = vsel %vm3534, %v3184, 0.0
        %v3589 = vsel %vm3535, %v3185, 0.0
        %v3590 = vsel %vm3536, %v3186, 0.0
        %v3591 = vsel %vm3537, %v3187, 0.0
        %v3592 = vsel %vm3538, %v3188, 0.0
        %v3593 = vsel %vm3539, %v3189, 0.0
        %v3594 = vsel %vm3540, %v3190, 0.0
        %v3595 = vsel %vm3541, %v3191, 0.0
        %v3596 = vsel %vm3542, %v3192, 0.0
        %3597 = vst [vmem:[#allocation2] sm:$0xff] %v3543
        %3598 = vst [vmem:[#allocation2 + $0x8] sm:$0xff] %v3544
        %3599 = vst [vmem:[#allocation2 + $0x10] sm:$0xff] %v3545
        %3600 = vst [vmem:[#allocation2 + $0x18] sm:$0xff] %v3546
        %3601 = vst [vmem:[#allocation2 + $0x20] sm:$0xff] %v3547
        %3602 = vst [vmem:[#allocation2 + $0x28] sm:$0xff] %v3548
        %3603 = vst [vmem:[#allocation2 + $0x30] sm:$0xff] %v3549
        %3604 = vst [vmem:[#allocation2 + $0x38] sm:$0xff] %v3550
        %3605 = vst [vmem:[#allocation2 + $0x40] sm:$0xff] %v3551
        %3606 = vst [vmem:[#allocation2 + $0x48] sm:$0xff] %v3552
        %3607 = vst [vmem:[#allocation2 + $0x50] sm:$0xff] %v3553
        %3608 = vst [vmem:[#allocation2 + $0x58] sm:$0xff] %v3554
        %3609 = vst [vmem:[#allocation2 + $0x60] sm:$0xff] %v3555
        %3610 = vst [vmem:[#allocation2 + $0x68] sm:$0xff] %v3556
        %3611 = vst [vmem:[#allocation2 + $0x70] sm:$0xff] %v3557
        %3612 = vst [vmem:[#allocation2 + $0x78] sm:$0xff] %v3558
        %3613 = vst [vmem:[#allocation2 + $0x80] sm:$0xff] %v3559
        %3614 = vst [vmem:[#allocation2 + $0x88] sm:$0xff] %v3560
        %3615 = vst [vmem:[#allocation2 + $0x90] sm:$0xff] %v3561
        %3616 = vst [vmem:[#allocation2 + $0x98] sm:$0xff] %v3562
        %3617 = vst [vmem:[#allocation2 + $0xa0] sm:$0xff] %v3563
        %3618 = vst [vmem:[#allocation2 + $0xa8] sm:$0xff] %v3564
        %3619 = vst [vmem:[#allocation2 + $0xb0] sm:$0xff] %v3565
        %3620 = vst [vmem:[#allocation2 + $0xb8] sm:$0xff] %v3566
        %3621 = vst [vmem:[#allocation2 + $0xc0] sm:$0xff] %v3567
        %3622 = vst [vmem:[#allocation2 + $0xc8] sm:$0xff] %v3568
        %3623 = vst [vmem:[#allocation2 + $0xd0] sm:$0xff] %v3569
        %3624 = vst [vmem:[#allocation2 + $0xd8] sm:$0xff] %v3570
        %3625 = vst [vmem:[#allocation2 + $0xe0] sm:$0xff] %v3571
        %3626 = vst [vmem:[#allocation2 + $0xe8] sm:$0xff] %v3572
        %3627 = vst [vmem:[#allocation2 + $0xf0] sm:$0xff] %v3573
        %3628 = vst [vmem:[#allocation2 + $0xf8] sm:$0xff] %v3574
        %3629 = vst [vmem:[#allocation2 + $0x100] sm:$0xff] %v3575
        %3630 = vst [vmem:[#allocation2 + $0x108] sm:$0xff] %v3576
        %3631 = vst [vmem:[#allocation2 + $0x110] sm:$0xff] %v3577
        %3632 = vst [vmem:[#allocation2 + $0x118] sm:$0xff] %v3578
        %3633 = vst [vmem:[#allocation2 + $0x120] sm:$0xff] %v3579
        %3634 = vst [vmem:[#allocation2 + $0x128] sm:$0xff] %v3580
        %3635 = vst [vmem:[#allocation2 + $0x130] sm:$0xff] %v3581
        %3636 = vst [vmem:[#allocation2 + $0x138] sm:$0xff] %v3582
        %3637 = vst [vmem:[#allocation2 + $0x140] sm:$0xff] %v3583
        %3638 = vst [vmem:[#allocation2 + $0x148] sm:$0xff] %v3584
        %3639 = vst [vmem:[#allocation2 + $0x150] sm:$0xff] %v3585
        %3640 = vst [vmem:[#allocation2 + $0x158] sm:$0xff] %v3586
        %3641 = vst [vmem:[#allocation2 + $0x160] sm:$0xff] %v3587
        %3642 = vst [vmem:[#allocation2 + $0x168] sm:$0xff] %v3588
        %3643 = vst [vmem:[#allocation2 + $0x170] sm:$0xff] %v3589
        %3644 = vst [vmem:[#allocation2 + $0x178] sm:$0xff] %v3590
        %3645 = vst [vmem:[#allocation2 + $0x180] sm:$0xff] %v3591
        %3646 = vst [vmem:[#allocation2 + $0x188] sm:$0xff] %v3592
        %3647 = vst [vmem:[#allocation2 + $0x190] sm:$0xff] %v3593
        %3648 = vst [vmem:[#allocation2 + $0x198] sm:$0xff] %v3594
        %3649 = vst [vmem:[#allocation2 + $0x1a0] sm:$0xff] %v3595
        %3650 = vst [vmem:[#allocation2 + $0x1a8] sm:$0xff] %v3596
        %v3651 = vld [vmem:[#allocation2] sm:$0xff]
        %v3652 = vld [vmem:[#allocation2 + $0x8] sm:$0xff]
        %v3653 = vld [vmem:[#allocation2 + $0x18] sm:$0xff]
        %v3654 = vld [vmem:[#allocation2 + $0x20] sm:$0xff]
        %v3655 = vld [vmem:[#allocation2 + $0x30] sm:$0xff]
        %v3656 = vld [vmem:[#allocation2 + $0x38] sm:$0xff]
        %v3657 = vld [vmem:[#allocation2 + $0x48] sm:$0xff]
        %v3658 = vld [vmem:[#allocation2 + $0x50] sm:$0xff]
        %v3659 = vld [vmem:[#allocation2 + $0x60] sm:$0xff]
        %v3660 = vld [vmem:[#allocation2 + $0x68] sm:$0xff]
        %v3661 = vld [vmem:[#allocation2 + $0x78] sm:$0xff]
        %v3662 = vld [vmem:[#allocation2 + $0x80] sm:$0xff]
        %v3663 = vld [vmem:[#allocation2 + $0x90] sm:$0xff]
        %v3664 = vld [vmem:[#allocation2 + $0x98] sm:$0xff]
        %v3665 = vld [vmem:[#allocation2 + $0xa8] sm:$0xff]
        %v3666 = vld [vmem:[#allocation2 + $0xb0] sm:$0xff]
        %v3667 = vld [vmem:[#allocation2 + $0xc0] sm:$0xff]
        %v3668 = vld [vmem:[#allocation2 + $0xc8] sm:$0xff]
        %v3669 = vld [vmem:[#allocation2 + $0xd8] sm:$0xff]
        %v3670 = vld [vmem:[#allocation2 + $0xe0] sm:$0xff]
        %v3671 = vld [vmem:[#allocation2 + $0xf0] sm:$0xff]
        %v3672 = vld [vmem:[#allocation2 + $0xf8] sm:$0xff]
        %v3673 = vld [vmem:[#allocation2 + $0x108] sm:$0xff]
        %v3674 = vld [vmem:[#allocation2 + $0x110] sm:$0xff]
        %v3675 = vld [vmem:[#allocation2 + $0x120] sm:$0xff]
        %v3676 = vld [vmem:[#allocation2 + $0x128] sm:$0xff]
        %v3677 = vld [vmem:[#allocation2 + $0x138] sm:$0xff]
        %v3678 = vld [vmem:[#allocation2 + $0x140] sm:$0xff]
        %v3679 = vld [vmem:[#allocation2 + $0x150] sm:$0xff]
        %v3680 = vld [vmem:[#allocation2 + $0x158] sm:$0xff]
        %v3681 = vld [vmem:[#allocation2 + $0x168] sm:$0xff]
        %v3682 = vld [vmem:[#allocation2 + $0x170] sm:$0xff]
        %v3683 = vld [vmem:[#allocation2 + $0x180] sm:$0xff]
        %v3684 = vld [vmem:[#allocation2 + $0x188] sm:$0xff]
        %v3685 = vld [vmem:[#allocation2 + $0x198] sm:$0xff]
        %v3686 = vld [vmem:[#allocation2 + $0x1a0] sm:$0xff]
        %v3687 = vld [vmem:[#allocation2 + $0x1] sm:$0xff]
        %v3688 = vld [vmem:[#allocation2 + $0x9] sm:$0xff]
        %v3689 = vld [vmem:[#allocation2 + $0x19] sm:$0xff]
        %v3690 = vld [vmem:[#allocation2 + $0x21] sm:$0xff]
        %v3691 = vld [vmem:[#allocation2 + $0x31] sm:$0xff]
        %v3692 = vld [vmem:[#allocation2 + $0x39] sm:$0xff]
        %v3693 = vld [vmem:[#allocation2 + $0x49] sm:$0xff]
        %v3694 = vld [vmem:[#allocation2 + $0x51] sm:$0xff]
        %v3695 = vld [vmem:[#allocation2 + $0x61] sm:$0xff]
        %v3696 = vld [vmem:[#allocation2 + $0x69] sm:$0xff]
        %v3697 = vld [vmem:[#allocation2 + $0x79] sm:$0xff]
        %v3698 = vld [vmem:[#allocation2 + $0x81] sm:$0xff]
        %v3699 = vld [vmem:[#allocation2 + $0x91] sm:$0xff]
        %v3700 = vld [vmem:[#allocation2 + $0x99] sm:$0xff]
        %v3701 = vld [vmem:[#allocation2 + $0xa9] sm:$0xff]
        %v3702 = vld [vmem:[#allocation2 + $0xb1] sm:$0xff]
        %v3703 = vld [vmem:[#allocation2 + $0xc1] sm:$0xff]
        %v3704 = vld [vmem:[#allocation2 + $0xc9] sm:$0xff]
        %v3705 = vld [vmem:[#allocation2 + $0xd9] sm:$0xff]
        %v3706 = vld [vmem:[#allocation2 + $0xe1] sm:$0xff]
        %v3707 = vld [vmem:[#allocation2 + $0xf1] sm:$0xff]
        %v3708 = vld [vmem:[#allocation2 + $0xf9] sm:$0xff]
        %v3709 = vld [vmem:[#allocation2 + $0x109] sm:$0xff]
        %v3710 = vld [vmem:[#allocation2 + $0x111] sm:$0xff]
        %v3711 = vld [vmem:[#allocation2 + $0x121] sm:$0xff]
        %v3712 = vld [vmem:[#allocation2 + $0x129] sm:$0xff]
        %v3713 = vld [vmem:[#allocation2 + $0x139] sm:$0xff]
        %v3714 = vld [vmem:[#allocation2 + $0x141] sm:$0xff]
        %v3715 = vld [vmem:[#allocation2 + $0x151] sm:$0xff]
        %v3716 = vld [vmem:[#allocation2 + $0x159] sm:$0xff]
        %v3717 = vld [vmem:[#allocation2 + $0x169] sm:$0xff]
        %v3718 = vld [vmem:[#allocation2 + $0x171] sm:$0xff]
        %v3719 = vld [vmem:[#allocation2 + $0x181] sm:$0xff]
        %v3720 = vld [vmem:[#allocation2 + $0x189] sm:$0xff]
        %v3721 = vld [vmem:[#allocation2 + $0x199] sm:$0xff]
        %v3722 = vld [vmem:[#allocation2 + $0x1a1] sm:$0xff]
        %v3723 = vld [vmem:[#allocation2 + $0x2] sm:$0xff]
        %v3724 = vld [vmem:[#allocation2 + $0xa] sm:$0xff]
        %v3725 = vld [vmem:[#allocation2 + $0x1a] sm:$0xff]
        %v3726 = vld [vmem:[#allocation2 + $0x22] sm:$0xff]
        %v3727 = vld [vmem:[#allocation2 + $0x32] sm:$0xff]
        %v3728 = vld [vmem:[#allocation2 + $0x3a] sm:$0xff]
        %v3729 = vld [vmem:[#allocation2 + $0x4a] sm:$0xff]
        %v3730 = vld [vmem:[#allocation2 + $0x52] sm:$0xff]
        %v3731 = vld [vmem:[#allocation2 + $0x62] sm:$0xff]
        %v3732 = vld [vmem:[#allocation2 + $0x6a] sm:$0xff]
        %v3733 = vld [vmem:[#allocation2 + $0x7a] sm:$0xff]
        %v3734 = vld [vmem:[#allocation2 + $0x82] sm:$0xff]
        %v3735 = vld [vmem:[#allocation2 + $0x92] sm:$0xff]
        %v3736 = vld [vmem:[#allocation2 + $0x9a] sm:$0xff]
        %v3737 = vld [vmem:[#allocation2 + $0xaa] sm:$0xff]
        %v3738 = vld [vmem:[#allocation2 + $0xb2] sm:$0xff]
        %v3739 = vld [vmem:[#allocation2 + $0xc2] sm:$0xff]
        %v3740 = vld [vmem:[#allocation2 + $0xca] sm:$0xff]
        %v3741 = vld [vmem:[#allocation2 + $0xda] sm:$0xff]
        %v3742 = vld [vmem:[#allocation2 + $0xe2] sm:$0xff]
        %v3743 = vld [vmem:[#allocation2 + $0xf2] sm:$0xff]
        %v3744 = vld [vmem:[#allocation2 + $0xfa] sm:$0xff]
        %v3745 = vld [vmem:[#allocation2 + $0x10a] sm:$0xff]
        %v3746 = vld [vmem:[#allocation2 + $0x112] sm:$0xff]
        %v3747 = vld [vmem:[#allocation2 + $0x122] sm:$0xff]
        %v3748 = vld [vmem:[#allocation2 + $0x12a] sm:$0xff]
        %v3749 = vld [vmem:[#allocation2 + $0x13a] sm:$0xff]
        %v3750 = vld [vmem:[#allocation2 + $0x142] sm:$0xff]
        %v3751 = vld [vmem:[#allocation2 + $0x152] sm:$0xff]
        %v3752 = vld [vmem:[#allocation2 + $0x15a] sm:$0xff]
        %v3753 = vld [vmem:[#allocation2 + $0x16a] sm:$0xff]
        %v3754 = vld [vmem:[#allocation2 + $0x172] sm:$0xff]
        %v3755 = vld [vmem:[#allocation2 + $0x182] sm:$0xff]
        %v3756 = vld [vmem:[#allocation2 + $0x18a] sm:$0xff]
        %v3757 = vld [vmem:[#allocation2 + $0x19a] sm:$0xff]
        %v3758 = vld [vmem:[#allocation2 + $0x1a2] sm:$0xff]
        %v3759 = vpack.c.bf16 %v3652, %v3651
        %v3760 = vpack.c.bf16 %v3688, %v3687
        %v3761 = vpack.c.bf16 %v3724, %v3723
        %v3762 = vpack.c.bf16 %v3654, %v3653
        %v3763 = vpack.c.bf16 %v3690, %v3689
        %v3764 = vpack.c.bf16 %v3726, %v3725
        %v3765 = vpack.c.bf16 %v3656, %v3655
        %v3766 = vpack.c.bf16 %v3692, %v3691
        %v3767 = vpack.c.bf16 %v3728, %v3727
        %v3768 = vpack.c.bf16 %v3658, %v3657
        %v3769 = vpack.c.bf16 %v3694, %v3693
        %v3770 = vpack.c.bf16 %v3730, %v3729
        %v3771 = vpack.c.bf16 %v3660, %v3659
        %v3772 = vpack.c.bf16 %v3696, %v3695
        %v3773 = vpack.c.bf16 %v3732, %v3731
        %v3774 = vpack.c.bf16 %v3662, %v3661
        %v3775 = vpack.c.bf16 %v3698, %v3697
        %v3776 = vpack.c.bf16 %v3734, %v3733
        %v3777 = vpack.c.bf16 %v3664, %v3663
        %v3778 = vpack.c.bf16 %v3700, %v3699
        %v3779 = vpack.c.bf16 %v3736, %v3735
        %v3780 = vpack.c.bf16 %v3666, %v3665
        %v3781 = vpack.c.bf16 %v3702, %v3701
        %v3782 = vpack.c.bf16 %v3738, %v3737
        %v3783 = vpack.c.bf16 %v3668, %v3667
        %v3784 = vpack.c.bf16 %v3704, %v3703
        %v3785 = vpack.c.bf16 %v3740, %v3739
        %v3786 = vpack.c.bf16 %v3670, %v3669
        %v3787 = vpack.c.bf16 %v3706, %v3705
        %v3788 = vpack.c.bf16 %v3742, %v3741
        %v3789 = vpack.c.bf16 %v3672, %v3671
        %v3790 = vpack.c.bf16 %v3708, %v3707
        %v3791 = vpack.c.bf16 %v3744, %v3743
        %v3792 = vpack.c.bf16 %v3674, %v3673
        %v3793 = vpack.c.bf16 %v3710, %v3709
        %v3794 = vpack.c.bf16 %v3746, %v3745
        %v3795 = vpack.c.bf16 %v3676, %v3675
        %v3796 = vpack.c.bf16 %v3712, %v3711
        %v3797 = vpack.c.bf16 %v3748, %v3747
        %v3798 = vpack.c.bf16 %v3678, %v3677
        %v3799 = vpack.c.bf16 %v3714, %v3713
        %v3800 = vpack.c.bf16 %v3750, %v3749
        %v3801 = vpack.c.bf16 %v3680, %v3679
        %v3802 = vpack.c.bf16 %v3716, %v3715
        %v3803 = vpack.c.bf16 %v3752, %v3751
        %v3804 = vpack.c.bf16 %v3682, %v3681
        %v3805 = vpack.c.bf16 %v3718, %v3717
        %v3806 = vpack.c.bf16 %v3754, %v3753
        %v3807 = vld [vmem:[#allocation7] sm:$0xf]
        %v3808 = vld [vmem:[#allocation7 + $0x4] sm:$0xf]
        %v3809 = vld [vmem:[#allocation7 + $0x8] sm:$0xf]
        %v3810 = vld [vmem:[#allocation7 + $0xc] sm:$0xf]
        %v3811 = vld [vmem:[#allocation7 + $0x10] sm:$0xf]
        %v3812 = vld [vmem:[#allocation7 + $0x14] sm:$0xf]
        %v3813 = vld [vmem:[#allocation7 + $0x18] sm:$0xf]
        %v3814 = vld [vmem:[#allocation7 + $0x1c] sm:$0xf]
        %v3815 = vld [vmem:[#allocation7 + $0x20] sm:$0xf]
        %v3816 = vld [vmem:[#allocation7 + $0x24] sm:$0xf]
        %v3817 = vld [vmem:[#allocation7 + $0x28] sm:$0xf]
        %v3818 = vld [vmem:[#allocation7 + $0x2c] sm:$0xf]
        %v3819 = vld [vmem:[#allocation7 + $0x30] sm:$0xf]
        %v3820 = vld [vmem:[#allocation7 + $0x34] sm:$0xf]
        %v3821 = vld [vmem:[#allocation7 + $0x38] sm:$0xf]
        %v3822 = vld [vmem:[#allocation7 + $0x3c] sm:$0xf]
        %v3823 = vld [vmem:[#allocation7 + $0x40] sm:$0xf]
        %v3824 = vld [vmem:[#allocation7 + $0x44] sm:$0xf]
        %v3825 = vld [vmem:[#allocation7 + $0x48] sm:$0xf]
        %v3826 = vld [vmem:[#allocation7 + $0x4c] sm:$0xf]
        %v3827 = vld [vmem:[#allocation7 + $0x50] sm:$0xf]
        %v3828 = vld [vmem:[#allocation7 + $0x54] sm:$0xf]
        %v3829 = vld [vmem:[#allocation7 + $0x58] sm:$0xf]
        %v3830 = vld [vmem:[#allocation7 + $0x5c] sm:$0xf]
        %v3831 = vld [vmem:[#allocation7 + $0x60] sm:$0xf]
        %v3832 = vld [vmem:[#allocation7 + $0x64] sm:$0xf]
        %v3833 = vld [vmem:[#allocation7 + $0x68] sm:$0xf]
        %v3834 = vld [vmem:[#allocation7 + $0x6c] sm:$0xf]
        %v3835 = vld [vmem:[#allocation7 + $0x70] sm:$0xf]
        %v3836 = vld [vmem:[#allocation7 + $0x74] sm:$0xf]
        %v3837 = vld [vmem:[#allocation7 + $0x78] sm:$0xf]
        %v3838 = vld [vmem:[#allocation7 + $0x7c] sm:$0xf]
        %v3839 = vld [vmem:[#allocation7 + $0x80] sm:$0xf]
        %v3840 = vld [vmem:[#allocation7 + $0x84] sm:$0xf]
        %v3841 = vld [vmem:[#allocation7 + $0x88] sm:$0xf]
        %v3842 = vld [vmem:[#allocation7 + $0x8c] sm:$0xf]
        %v3843 = vld [vmem:[#allocation7 + $0x90] sm:$0xf]
        %v3844 = vld [vmem:[#allocation7 + $0x94] sm:$0xf]
        %v3845 = vld [vmem:[#allocation7 + $0x98] sm:$0xf]
        %v3846 = vld [vmem:[#allocation7 + $0x9c] sm:$0xf]
        %v3847 = vld [vmem:[#allocation7 + $0xa0] sm:$0xf]
        %v3848 = vld [vmem:[#allocation7 + $0xa4] sm:$0xf]
        %v3849 = vld [vmem:[#allocation7 + $0xa8] sm:$0xf]
        %v3850 = vld [vmem:[#allocation7 + $0xac] sm:$0xf]
        %v3851 = vld [vmem:[#allocation7 + $0xb0] sm:$0xf]
        %v3852 = vld [vmem:[#allocation7 + $0xb4] sm:$0xf]
        %v3853 = vld [vmem:[#allocation7 + $0xb8] sm:$0xf]
        %v3854 = vld [vmem:[#allocation7 + $0xbc] sm:$0xf]
        %v3855 = vpack.c.bf16 %v3684, %v3683
        %v3856 = vpack.c.bf16 %v3720, %v3719
        %v3857 = vpack.c.bf16 %v3756, %v3755
        %s3858 = scalar_lea.vmem [#allocation7], 192
        %v3859 = vld [vmem:[%s3858] sm:$0xf]
        %v3860 = vld [vmem:[%s3858 + $0x4] sm:$0xf]
        %v3861 = vld [vmem:[%s3858 + $0x8] sm:$0xf]
        %v3862 = vld [vmem:[%s3858 + $0xc] sm:$0xf]
        %v3863 = vld [vmem:[%s3858 + $0x10] sm:$0xf]
        %v3864 = vld [vmem:[%s3858 + $0x14] sm:$0xf]
        %v3865 = vld [vmem:[%s3858 + $0x18] sm:$0xf]
        %v3866 = vld [vmem:[%s3858 + $0x1c] sm:$0xf]
        %v3867 = vld [vmem:[%s3858 + $0x20] sm:$0xf]
        %v3868 = vld [vmem:[%s3858 + $0x24] sm:$0xf]
        %v3869 = vld [vmem:[%s3858 + $0x28] sm:$0xf]
        %v3870 = vld [vmem:[%s3858 + $0x2c] sm:$0xf]
        %v3871 = vld [vmem:[%s3858 + $0x30] sm:$0xf]
        %v3872 = vld [vmem:[%s3858 + $0x34] sm:$0xf]
        %v3873 = vld [vmem:[%s3858 + $0x38] sm:$0xf]
        %v3874 = vld [vmem:[%s3858 + $0x3c] sm:$0xf]
        %v3875 = vld [vmem:[%s3858 + $0x40] sm:$0xf]
        %v3876 = vld [vmem:[%s3858 + $0x44] sm:$0xf]
        %v3877 = vld [vmem:[%s3858 + $0x48] sm:$0xf]
        %v3878 = vld [vmem:[%s3858 + $0x4c] sm:$0xf]
        %v3879 = vld [vmem:[%s3858 + $0x50] sm:$0xf]
        %v3880 = vld [vmem:[%s3858 + $0x54] sm:$0xf]
        %v3881 = vld [vmem:[%s3858 + $0x58] sm:$0xf]
        %v3882 = vld [vmem:[%s3858 + $0x5c] sm:$0xf]
        %v3883 = vld [vmem:[%s3858 + $0x60] sm:$0xf]
        %v3884 = vld [vmem:[%s3858 + $0x64] sm:$0xf]
        %v3885 = vld [vmem:[%s3858 + $0x68] sm:$0xf]
        %v3886 = vld [vmem:[%s3858 + $0x6c] sm:$0xf]
        %v3887 = vld [vmem:[%s3858 + $0x70] sm:$0xf]
        %v3888 = vld [vmem:[%s3858 + $0x74] sm:$0xf]
        %v3889 = vld [vmem:[%s3858 + $0x78] sm:$0xf]
        %v3890 = vld [vmem:[%s3858 + $0x7c] sm:$0xf]
        %v3891 = vld [vmem:[%s3858 + $0x80] sm:$0xf]
        %v3892 = vld [vmem:[%s3858 + $0x84] sm:$0xf]
        %v3893 = vld [vmem:[%s3858 + $0x88] sm:$0xf]
        %v3894 = vld [vmem:[%s3858 + $0x8c] sm:$0xf]
        %v3895 = vld [vmem:[%s3858 + $0x90] sm:$0xf]
        %v3896 = vld [vmem:[%s3858 + $0x94] sm:$0xf]
        %v3897 = vld [vmem:[%s3858 + $0x98] sm:$0xf]
        %v3898 = vld [vmem:[%s3858 + $0x9c] sm:$0xf]
        %v3899 = vld [vmem:[%s3858 + $0xa0] sm:$0xf]
        %v3900 = vld [vmem:[%s3858 + $0xa4] sm:$0xf]
        %v3901 = vld [vmem:[%s3858 + $0xa8] sm:$0xf]
        %v3902 = vld [vmem:[%s3858 + $0xac] sm:$0xf]
        %v3903 = vld [vmem:[%s3858 + $0xb0] sm:$0xf]
        %v3904 = vld [vmem:[%s3858 + $0xb4] sm:$0xf]
        %v3905 = vld [vmem:[%s3858 + $0xb8] sm:$0xf]
        %v3906 = vld [vmem:[%s3858 + $0xbc] sm:$0xf]
        %v3955 = vunpack.c.l.b16 %v3859
        %v3956 = vunpack.c.l.b16 %v3860
        %v3957 = vunpack.c.l.b16 %v3861
        %v3958 = vunpack.c.l.b16 %v3862
        %v3959 = vunpack.c.l.b16 %v3863
        %v3960 = vunpack.c.l.b16 %v3864
        %v3961 = vunpack.c.l.b16 %v3865
        %v3962 = vunpack.c.l.b16 %v3866
        %v3963 = vunpack.c.l.b16 %v3867
        %v3964 = vunpack.c.l.b16 %v3868
        %v3965 = vunpack.c.l.b16 %v3869
        %v3966 = vunpack.c.l.b16 %v3870
        %v3967 = vunpack.c.l.b16 %v3871
        %v3968 = vunpack.c.l.b16 %v3872
        %v3969 = vunpack.c.l.b16 %v3873
        %v3970 = vunpack.c.l.b16 %v3874
        %v3971 = vunpack.c.l.b16 %v3875
        %v3972 = vunpack.c.l.b16 %v3876
        %v3973 = vunpack.c.l.b16 %v3877
        %v3974 = vunpack.c.l.b16 %v3878
        %v3975 = vunpack.c.l.b16 %v3879
        %v3976 = vunpack.c.l.b16 %v3880
        %v3977 = vunpack.c.l.b16 %v3881
        %v3978 = vunpack.c.l.b16 %v3882
        %v3979 = vunpack.c.l.b16 %v3883
        %v3980 = vunpack.c.l.b16 %v3884
        %v3981 = vunpack.c.l.b16 %v3885
        %v3982 = vunpack.c.l.b16 %v3886
        %v3983 = vunpack.c.l.b16 %v3887
        %v3984 = vunpack.c.l.b16 %v3888
        %v3985 = vunpack.c.l.b16 %v3889
        %v3986 = vunpack.c.l.b16 %v3890
        %v3987 = vunpack.c.l.b16 %v3891
        %v3988 = vunpack.c.l.b16 %v3892
        %v3989 = vunpack.c.l.b16 %v3893
        %v3990 = vunpack.c.l.b16 %v3894
        %v3991 = vunpack.c.l.b16 %v3895
        %v3992 = vunpack.c.l.b16 %v3896
        %v3993 = vunpack.c.l.b16 %v3897
        %v3994 = vunpack.c.l.b16 %v3898
        %v3995 = vunpack.c.l.b16 %v3899
        %v3996 = vunpack.c.l.b16 %v3900
        %v3997 = vunpack.c.l.b16 %v3901
        %v3998 = vunpack.c.l.b16 %v3902
        %v3999 = vunpack.c.l.b16 %v3903
        %v4000 = vunpack.c.l.b16 %v3904
        %v4001 = vunpack.c.l.b16 %v3905
        %v4002 = vunpack.c.l.b16 %v3906
        %v4003 = vpack.c.b16 %v3956, %v3955
        %v4004 = vpack.c.b16 %v3958, %v3957
        %v4005 = vpack.c.b16 %v3960, %v3959
        %v4006 = vpack.c.b16 %v3962, %v3961
        %v4007 = vpack.c.b16 %v3964, %v3963
        %v4008 = vpack.c.b16 %v3966, %v3965
        %v4009 = vpack.c.b16 %v3968, %v3967
        %v4010 = vpack.c.b16 %v3970, %v3969
        %v4011 = vpack.c.b16 %v3972, %v3971
        %v4012 = vpack.c.b16 %v3974, %v3973
        %v4013 = vpack.c.b16 %v3976, %v3975
        %v4014 = vpack.c.b16 %v3978, %v3977
        %v4015 = vpack.c.b16 %v3980, %v3979
        %v4016 = vpack.c.b16 %v3982, %v3981
        %v4017 = vpack.c.b16 %v3984, %v3983
        %v4018 = vpack.c.b16 %v3986, %v3985
        %v4019 = vpack.c.b16 %v3988, %v3987
        %v4020 = vpack.c.b16 %v3990, %v3989
        %v4021 = vpack.c.b16 %v3992, %v3991
        %v4022 = vpack.c.b16 %v3994, %v3993
        %v4023 = vpack.c.b16 %v3996, %v3995
        %v4024 = vpack.c.b16 %v3998, %v3997
        %v4025 = vpack.c.b16 %v4000, %v3999
        %v4026 = vpack.c.b16 %v4002, %v4001
        %4051 = vmatpush.bf16.msra.mxu0 %v4010
        %4052 = vmatpush.bf16.msra.mxu0 %v4009
        %4053 = vmatpush.bf16.msra.mxu0 %v4008
        %4054 = vmatpush.bf16.msra.mxu0 %v4007
        %4055 = vmatpush.bf16.msra.mxu0 %v4006
        %4056 = vmatpush.bf16.msra.mxu0 %v4005
        %4057 = vmatpush.bf16.msra.mxu0 %v4004
        %4058 = vmatpush.bf16.msra.mxu0 %v4003
        %4059 = vmatmul.bf16.gmra.mxu0 %v3762
        %v4060 = vpop.f32.mrf.mxu0
        %v4061 = vadd.f32 0.0, %v4060
        %v4062 = vpop.f32.mrf.mxu0
        %v4063 = vadd.f32 0.0, %v4062
        %4064 = vmatmul.bf16.gmra.mxu0 %v3765
        %v4065 = vpop.f32.mrf.mxu0
        %v4066 = vadd.f32 0.0, %v4065
        %v4067 = vpop.f32.mrf.mxu0
        %v4068 = vadd.f32 0.0, %v4067
        %4069 = vmatmul.bf16.gmra.mxu0 %v3768
        %v4070 = vpop.f32.mrf.mxu0
        %v4071 = vadd.f32 0.0, %v4070
        %v4072 = vpop.f32.mrf.mxu0
        %v4073 = vadd.f32 0.0, %v4072
        %4074 = vmatmul.bf16.gmra.mxu0 %v3771
        %v4075 = vpop.f32.mrf.mxu0
        %v4076 = vadd.f32 0.0, %v4075
        %v4077 = vpop.f32.mrf.mxu0
        %v4078 = vadd.f32 0.0, %v4077
        %4079 = vmatmul.bf16.gmra.mxu0 %v3774
        %v4080 = vpop.f32.mrf.mxu0
        %v4081 = vadd.f32 0.0, %v4080
        %v4082 = vpop.f32.mrf.mxu0
        %v4083 = vadd.f32 0.0, %v4082
        %4084 = vmatmul.bf16.gmra.mxu0 %v3777
        %v4085 = vpop.f32.mrf.mxu0
        %v4086 = vadd.f32 0.0, %v4085
        %v4087 = vpop.f32.mrf.mxu0
        %v4088 = vadd.f32 0.0, %v4087
        %4089 = vmatmul.bf16.gmra.mxu0 %v3780
        %v4090 = vpop.f32.mrf.mxu0
        %v4091 = vadd.f32 0.0, %v4090
        %v4092 = vpop.f32.mrf.mxu0
        %v4093 = vadd.f32 0.0, %v4092
        %4094 = vmatmul.bf16.gmra.mxu0 %v3783
        %v4095 = vpop.f32.mrf.mxu0
        %v4096 = vadd.f32 0.0, %v4095
        %v4097 = vpop.f32.mrf.mxu0
        %v4098 = vadd.f32 0.0, %v4097
        %4099 = vmatmul.bf16.gmra.mxu0 %v3786
        %v4100 = vpop.f32.mrf.mxu0
        %v4101 = vadd.f32 0.0, %v4100
        %v4102 = vpop.f32.mrf.mxu0
        %v4103 = vadd.f32 0.0, %v4102
        %4104 = vmatmul.bf16.gmra.mxu0 %v3789
        %v4105 = vpop.f32.mrf.mxu0
        %v4106 = vadd.f32 0.0, %v4105
        %v4107 = vpop.f32.mrf.mxu0
        %v4108 = vadd.f32 0.0, %v4107
        %4109 = vmatmul.bf16.gmra.mxu0 %v3792
        %v4110 = vpop.f32.mrf.mxu0
        %v4111 = vadd.f32 0.0, %v4110
        %v4112 = vpop.f32.mrf.mxu0
        %v4113 = vadd.f32 0.0, %v4112
        %4114 = vmatmul.bf16.gmra.mxu0 %v3795
        %v4115 = vpop.f32.mrf.mxu0
        %v4116 = vadd.f32 0.0, %v4115
        %v4117 = vpop.f32.mrf.mxu0
        %v4118 = vadd.f32 0.0, %v4117
        %4119 = vmatmul.bf16.gmra.mxu0 %v3798
        %v4120 = vpop.f32.mrf.mxu0
        %v4121 = vadd.f32 0.0, %v4120
        %v4122 = vpop.f32.mrf.mxu0
        %v4123 = vadd.f32 0.0, %v4122
        %4124 = vmatmul.bf16.gmra.mxu0 %v3801
        %v4125 = vpop.f32.mrf.mxu0
        %v4126 = vadd.f32 0.0, %v4125
        %v4127 = vpop.f32.mrf.mxu0
        %v4128 = vadd.f32 0.0, %v4127
        %4129 = vmatmul.bf16.gmra.mxu0 %v3804
        %v4130 = vpop.f32.mrf.mxu0
        %v4131 = vadd.f32 0.0, %v4130
        %v4132 = vpop.f32.mrf.mxu0
        %v4133 = vadd.f32 0.0, %v4132
        %4134 = vmatmul.bf16.gmra.mxu0 %v3855
        %v4135 = vpop.f32.mrf.mxu0
        %v4136 = vadd.f32 0.0, %v4135
        %v4137 = vpop.f32.mrf.mxu0
        %v4138 = vadd.f32 0.0, %v4137
        %4139 = vdwg.mxu0
        %4140 = vmatpush.bf16.msra.mxu0 %v4018
        %4141 = vmatpush.bf16.msra.mxu0 %v4017
        %4142 = vmatpush.bf16.msra.mxu0 %v4016
        %4143 = vmatpush.bf16.msra.mxu0 %v4015
        %4144 = vmatpush.bf16.msra.mxu0 %v4014
        %4145 = vmatpush.bf16.msra.mxu0 %v4013
        %4146 = vmatpush.bf16.msra.mxu0 %v4012
        %4147 = vmatpush.bf16.msra.mxu0 %v4011
        %4148 = vmatmul.bf16.gmra.mxu0 %v3763
        %v4149 = vpop.f32.mrf.mxu0
        %v4150 = vadd.f32 %v4061, %v4149
        %v4151 = vpop.f32.mrf.mxu0
        %v4152 = vadd.f32 %v4063, %v4151
        %4153 = vmatmul.bf16.gmra.mxu0 %v3766
        %v4154 = vpop.f32.mrf.mxu0
        %v4155 = vadd.f32 %v4066, %v4154
        %v4156 = vpop.f32.mrf.mxu0
        %v4157 = vadd.f32 %v4068, %v4156
        %4158 = vmatmul.bf16.gmra.mxu0 %v3769
        %v4159 = vpop.f32.mrf.mxu0
        %v4160 = vadd.f32 %v4071, %v4159
        %v4161 = vpop.f32.mrf.mxu0
        %v4162 = vadd.f32 %v4073, %v4161
        %4163 = vmatmul.bf16.gmra.mxu0 %v3772
        %v4164 = vpop.f32.mrf.mxu0
        %v4165 = vadd.f32 %v4076, %v4164
        %v4166 = vpop.f32.mrf.mxu0
        %v4167 = vadd.f32 %v4078, %v4166
        %4168 = vmatmul.bf16.gmra.mxu0 %v3775
        %v4169 = vpop.f32.mrf.mxu0
        %v4170 = vadd.f32 %v4081, %v4169
        %v4171 = vpop.f32.mrf.mxu0
        %v4172 = vadd.f32 %v4083, %v4171
        %4173 = vmatmul.bf16.gmra.mxu0 %v3778
        %v4174 = vpop.f32.mrf.mxu0
        %v4175 = vadd.f32 %v4086, %v4174
        %v4176 = vpop.f32.mrf.mxu0
        %v4177 = vadd.f32 %v4088, %v4176
        %4178 = vmatmul.bf16.gmra.mxu0 %v3781
        %v4179 = vpop.f32.mrf.mxu0
        %v4180 = vadd.f32 %v4091, %v4179
        %v4181 = vpop.f32.mrf.mxu0
        %v4182 = vadd.f32 %v4093, %v4181
        %4183 = vmatmul.bf16.gmra.mxu0 %v3784
        %v4184 = vpop.f32.mrf.mxu0
        %v4185 = vadd.f32 %v4096, %v4184
        %v4186 = vpop.f32.mrf.mxu0
        %v4187 = vadd.f32 %v4098, %v4186
        %4188 = vmatmul.bf16.gmra.mxu0 %v3787
        %v4189 = vpop.f32.mrf.mxu0
        %v4190 = vadd.f32 %v4101, %v4189
        %v4191 = vpop.f32.mrf.mxu0
        %v4192 = vadd.f32 %v4103, %v4191
        %4193 = vmatmul.bf16.gmra.mxu0 %v3790
        %v4194 = vpop.f32.mrf.mxu0
        %v4195 = vadd.f32 %v4106, %v4194
        %v4196 = vpop.f32.mrf.mxu0
        %v4197 = vadd.f32 %v4108, %v4196
        %4198 = vmatmul.bf16.gmra.mxu0 %v3793
        %v4199 = vpop.f32.mrf.mxu0
        %v4200 = vadd.f32 %v4111, %v4199
        %v4201 = vpop.f32.mrf.mxu0
        %v4202 = vadd.f32 %v4113, %v4201
        %4203 = vmatmul.bf16.gmra.mxu0 %v3796
        %v4204 = vpop.f32.mrf.mxu0
        %v4205 = vadd.f32 %v4116, %v4204
        %v4206 = vpop.f32.mrf.mxu0
        %v4207 = vadd.f32 %v4118, %v4206
        %4208 = vmatmul.bf16.gmra.mxu0 %v3799
        %v4209 = vpop.f32.mrf.mxu0
        %v4210 = vadd.f32 %v4121, %v4209
        %v4211 = vpop.f32.mrf.mxu0
        %v4212 = vadd.f32 %v4123, %v4211
        %4213 = vmatmul.bf16.gmra.mxu0 %v3802
        %v4214 = vpop.f32.mrf.mxu0
        %v4215 = vadd.f32 %v4126, %v4214
        %v4216 = vpop.f32.mrf.mxu0
        %v4217 = vadd.f32 %v4128, %v4216
        %4218 = vmatmul.bf16.gmra.mxu0 %v3805
        %v4219 = vpop.f32.mrf.mxu0
        %v4220 = vadd.f32 %v4131, %v4219
        %v4221 = vpop.f32.mrf.mxu0
        %v4222 = vadd.f32 %v4133, %v4221
        %4223 = vmatmul.bf16.gmra.mxu0 %v3856
        %v4224 = vpop.f32.mrf.mxu0
        %v4225 = vadd.f32 %v4136, %v4224
        %v4226 = vpop.f32.mrf.mxu0
        %v4227 = vadd.f32 %v4138, %v4226
        %4228 = vdwg.mxu0
        %4229 = vmatpush.bf16.msra.mxu0 %v4026
        %4230 = vmatpush.bf16.msra.mxu0 %v4025
        %4231 = vmatpush.bf16.msra.mxu0 %v4024
        %4232 = vmatpush.bf16.msra.mxu0 %v4023
        %4233 = vmatpush.bf16.msra.mxu0 %v4022
        %4234 = vmatpush.bf16.msra.mxu0 %v4021
        %4235 = vmatpush.bf16.msra.mxu0 %v4020
        %4236 = vmatpush.bf16.msra.mxu0 %v4019
        %4237 = vmatmul.bf16.gmra.mxu0 %v3764
        %v4238 = vpop.f32.mrf.mxu0
        %v4239 = vadd.f32 %v4150, %v4238
        %v4240 = vpop.f32.mrf.mxu0
        %v4241 = vadd.f32 %v4152, %v4240
        %4242 = vmatmul.bf16.gmra.mxu0 %v3767
        %v4243 = vpop.f32.mrf.mxu0
        %v4244 = vadd.f32 %v4155, %v4243
        %v4245 = vpop.f32.mrf.mxu0
        %v4246 = vadd.f32 %v4157, %v4245
        %4247 = vmatmul.bf16.gmra.mxu0 %v3770
        %v4248 = vpop.f32.mrf.mxu0
        %v4249 = vadd.f32 %v4160, %v4248
        %v4250 = vpop.f32.mrf.mxu0
        %v4251 = vadd.f32 %v4162, %v4250
        %4252 = vmatmul.bf16.gmra.mxu0 %v3773
        %v4253 = vpop.f32.mrf.mxu0
        %v4254 = vadd.f32 %v4165, %v4253
        %v4255 = vpop.f32.mrf.mxu0
        %v4256 = vadd.f32 %v4167, %v4255
        %4257 = vmatmul.bf16.gmra.mxu0 %v3776
        %v4258 = vpop.f32.mrf.mxu0
        %v4259 = vadd.f32 %v4170, %v4258
        %v4260 = vpop.f32.mrf.mxu0
        %v4261 = vadd.f32 %v4172, %v4260
        %4262 = vmatmul.bf16.gmra.mxu0 %v3779
        %v4263 = vpop.f32.mrf.mxu0
        %v4264 = vadd.f32 %v4175, %v4263
        %v4265 = vpop.f32.mrf.mxu0
        %v4266 = vadd.f32 %v4177, %v4265
        %4267 = vmatmul.bf16.gmra.mxu0 %v3782
        %v4268 = vpop.f32.mrf.mxu0
        %v4269 = vadd.f32 %v4180, %v4268
        %v4270 = vpop.f32.mrf.mxu0
        %v4271 = vadd.f32 %v4182, %v4270
        %4272 = vmatmul.bf16.gmra.mxu0 %v3785
        %v4273 = vpop.f32.mrf.mxu0
        %v4274 = vadd.f32 %v4185, %v4273
        %v4275 = vpop.f32.mrf.mxu0
        %v4276 = vadd.f32 %v4187, %v4275
        %4277 = vmatmul.bf16.gmra.mxu0 %v3788
        %v4278 = vpop.f32.mrf.mxu0
        %v4279 = vadd.f32 %v4190, %v4278
        %v4280 = vpop.f32.mrf.mxu0
        %v4281 = vadd.f32 %v4192, %v4280
        %4282 = vmatmul.bf16.gmra.mxu0 %v3791
        %v4283 = vpop.f32.mrf.mxu0
        %v4284 = vadd.f32 %v4195, %v4283
        %v4285 = vpop.f32.mrf.mxu0
        %v4286 = vadd.f32 %v4197, %v4285
        %4287 = vmatmul.bf16.gmra.mxu0 %v3794
        %v4288 = vpop.f32.mrf.mxu0
        %v4289 = vadd.f32 %v4200, %v4288
        %v4290 = vpop.f32.mrf.mxu0
        %v4291 = vadd.f32 %v4202, %v4290
        %4292 = vmatmul.bf16.gmra.mxu0 %v3797
        %v4293 = vpop.f32.mrf.mxu0
        %v4294 = vadd.f32 %v4205, %v4293
        %v4295 = vpop.f32.mrf.mxu0
        %v4296 = vadd.f32 %v4207, %v4295
        %4297 = vmatmul.bf16.gmra.mxu0 %v3800
        %v4298 = vpop.f32.mrf.mxu0
        %v4299 = vadd.f32 %v4210, %v4298
        %v4300 = vpop.f32.mrf.mxu0
        %v4301 = vadd.f32 %v4212, %v4300
        %4302 = vmatmul.bf16.gmra.mxu0 %v3803
        %v4303 = vpop.f32.mrf.mxu0
        %v4304 = vadd.f32 %v4215, %v4303
        %v4305 = vpop.f32.mrf.mxu0
        %v4306 = vadd.f32 %v4217, %v4305
        %4307 = vmatmul.bf16.gmra.mxu0 %v3806
        %v4308 = vpop.f32.mrf.mxu0
        %v4309 = vadd.f32 %v4220, %v4308
        %v4310 = vpop.f32.mrf.mxu0
        %v4311 = vadd.f32 %v4222, %v4310
        %4312 = vmatmul.bf16.gmra.mxu0 %v3857
        %v4313 = vpop.f32.mrf.mxu0
        %v4314 = vadd.f32 %v4225, %v4313
        %v4315 = vpop.f32.mrf.mxu0
        %v4316 = vadd.f32 %v4227, %v4315
        %4317 = vdwg.mxu0
        %v4366 = vunpack.c.l.b16 %v3807
        %v4367 = vunpack.c.l.b16 %v3808
        %v4368 = vunpack.c.l.b16 %v3809
        %v4369 = vunpack.c.l.b16 %v3810
        %v4370 = vunpack.c.l.b16 %v3811
        %v4371 = vunpack.c.l.b16 %v3812
        %v4372 = vunpack.c.l.b16 %v3813
        %v4373 = vunpack.c.l.b16 %v3814
        %v4374 = vunpack.c.l.b16 %v3815
        %v4375 = vunpack.c.l.b16 %v3816
        %v4376 = vunpack.c.l.b16 %v3817
        %v4377 = vunpack.c.l.b16 %v3818
        %v4378 = vunpack.c.l.b16 %v3819
        %v4379 = vunpack.c.l.b16 %v3820
        %v4380 = vunpack.c.l.b16 %v3821
        %v4381 = vunpack.c.l.b16 %v3822
        %v4382 = vunpack.c.l.b16 %v3823
        %v4383 = vunpack.c.l.b16 %v3824
        %v4384 = vunpack.c.l.b16 %v3825
        %v4385 = vunpack.c.l.b16 %v3826
        %v4386 = vunpack.c.l.b16 %v3827
        %v4387 = vunpack.c.l.b16 %v3828
        %v4388 = vunpack.c.l.b16 %v3829
        %v4389 = vunpack.c.l.b16 %v3830
        %v4390 = vunpack.c.l.b16 %v3831
        %v4391 = vunpack.c.l.b16 %v3832
        %v4392 = vunpack.c.l.b16 %v3833
        %v4393 = vunpack.c.l.b16 %v3834
        %v4394 = vunpack.c.l.b16 %v3835
        %v4395 = vunpack.c.l.b16 %v3836
        %v4396 = vunpack.c.l.b16 %v3837
        %v4397 = vunpack.c.l.b16 %v3838
        %v4398 = vunpack.c.l.b16 %v3839
        %v4399 = vunpack.c.l.b16 %v3840
        %v4400 = vunpack.c.l.b16 %v3841
        %v4401 = vunpack.c.l.b16 %v3842
        %v4402 = vunpack.c.l.b16 %v3843
        %v4403 = vunpack.c.l.b16 %v3844
        %v4404 = vunpack.c.l.b16 %v3845
        %v4405 = vunpack.c.l.b16 %v3846
        %v4406 = vunpack.c.l.b16 %v3847
        %v4407 = vunpack.c.l.b16 %v3848
        %v4408 = vunpack.c.l.b16 %v3849
        %v4409 = vunpack.c.l.b16 %v3850
        %v4410 = vunpack.c.l.b16 %v3851
        %v4411 = vunpack.c.l.b16 %v3852
        %v4412 = vunpack.c.l.b16 %v3853
        %v4413 = vunpack.c.l.b16 %v3854
        %v4414 = vpack.c.b16 %v4367, %v4366
        %v4415 = vpack.c.b16 %v4369, %v4368
        %v4416 = vpack.c.b16 %v4371, %v4370
        %v4417 = vpack.c.b16 %v4373, %v4372
        %v4418 = vpack.c.b16 %v4375, %v4374
        %v4419 = vpack.c.b16 %v4377, %v4376
        %v4420 = vpack.c.b16 %v4379, %v4378
        %v4421 = vpack.c.b16 %v4381, %v4380
        %v4422 = vpack.c.b16 %v4383, %v4382
        %v4423 = vpack.c.b16 %v4385, %v4384
        %v4424 = vpack.c.b16 %v4387, %v4386
        %v4425 = vpack.c.b16 %v4389, %v4388
        %v4426 = vpack.c.b16 %v4391, %v4390
        %v4427 = vpack.c.b16 %v4393, %v4392
        %v4428 = vpack.c.b16 %v4395, %v4394
        %v4429 = vpack.c.b16 %v4397, %v4396
        %v4430 = vpack.c.b16 %v4399, %v4398
        %v4431 = vpack.c.b16 %v4401, %v4400
        %v4432 = vpack.c.b16 %v4403, %v4402
        %v4433 = vpack.c.b16 %v4405, %v4404
        %v4434 = vpack.c.b16 %v4407, %v4406
        %v4435 = vpack.c.b16 %v4409, %v4408
        %v4436 = vpack.c.b16 %v4411, %v4410
        %v4437 = vpack.c.b16 %v4413, %v4412
        %4462 = vmatpush.bf16.msra.mxu0 %v4421
        %4463 = vmatpush.bf16.msra.mxu0 %v4420
        %4464 = vmatpush.bf16.msra.mxu0 %v4419
        %4465 = vmatpush.bf16.msra.mxu0 %v4418
        %4466 = vmatpush.bf16.msra.mxu0 %v4417
        %4467 = vmatpush.bf16.msra.mxu0 %v4416
        %4468 = vmatpush.bf16.msra.mxu0 %v4415
        %4469 = vmatpush.bf16.msra.mxu0 %v4414
        %4470 = vmatmul.bf16.gmra.mxu0 %v3759
        %v4471 = vpop.f32.mrf.mxu0
        %v4472 = vadd.f32 %v4239, %v4471
        %v4473 = vpop.f32.mrf.mxu0
        %v4474 = vadd.f32 %v4241, %v4473
        %4475 = vmatmul.bf16.gmra.mxu0 %v3762
        %v4476 = vpop.f32.mrf.mxu0
        %v4477 = vadd.f32 %v4244, %v4476
        %v4478 = vpop.f32.mrf.mxu0
        %v4479 = vadd.f32 %v4246, %v4478
        %4480 = vmatmul.bf16.gmra.mxu0 %v3765
        %v4481 = vpop.f32.mrf.mxu0
        %v4482 = vadd.f32 %v4249, %v4481
        %v4483 = vpop.f32.mrf.mxu0
        %v4484 = vadd.f32 %v4251, %v4483
        %4485 = vmatmul.bf16.gmra.mxu0 %v3768
        %v4486 = vpop.f32.mrf.mxu0
        %v4487 = vadd.f32 %v4254, %v4486
        %v4488 = vpop.f32.mrf.mxu0
        %v4489 = vadd.f32 %v4256, %v4488
        %4490 = vmatmul.bf16.gmra.mxu0 %v3771
        %v4491 = vpop.f32.mrf.mxu0
        %v4492 = vadd.f32 %v4259, %v4491
        %v4493 = vpop.f32.mrf.mxu0
        %v4494 = vadd.f32 %v4261, %v4493
        %4495 = vmatmul.bf16.gmra.mxu0 %v3774
        %v4496 = vpop.f32.mrf.mxu0
        %v4497 = vadd.f32 %v4264, %v4496
        %v4498 = vpop.f32.mrf.mxu0
        %v4499 = vadd.f32 %v4266, %v4498
        %4500 = vmatmul.bf16.gmra.mxu0 %v3777
        %v4501 = vpop.f32.mrf.mxu0
        %v4502 = vadd.f32 %v4269, %v4501
        %v4503 = vpop.f32.mrf.mxu0
        %v4504 = vadd.f32 %v4271, %v4503
        %4505 = vmatmul.bf16.gmra.mxu0 %v3780
        %v4506 = vpop.f32.mrf.mxu0
        %v4507 = vadd.f32 %v4274, %v4506
        %v4508 = vpop.f32.mrf.mxu0
        %v4509 = vadd.f32 %v4276, %v4508
        %4510 = vmatmul.bf16.gmra.mxu0 %v3783
        %v4511 = vpop.f32.mrf.mxu0
        %v4512 = vadd.f32 %v4279, %v4511
        %v4513 = vpop.f32.mrf.mxu0
        %v4514 = vadd.f32 %v4281, %v4513
        %4515 = vmatmul.bf16.gmra.mxu0 %v3786
        %v4516 = vpop.f32.mrf.mxu0
        %v4517 = vadd.f32 %v4284, %v4516
        %v4518 = vpop.f32.mrf.mxu0
        %v4519 = vadd.f32 %v4286, %v4518
        %4520 = vmatmul.bf16.gmra.mxu0 %v3789
        %v4521 = vpop.f32.mrf.mxu0
        %v4522 = vadd.f32 %v4289, %v4521
        %v4523 = vpop.f32.mrf.mxu0
        %v4524 = vadd.f32 %v4291, %v4523
        %4525 = vmatmul.bf16.gmra.mxu0 %v3792
        %v4526 = vpop.f32.mrf.mxu0
        %v4527 = vadd.f32 %v4294, %v4526
        %v4528 = vpop.f32.mrf.mxu0
        %v4529 = vadd.f32 %v4296, %v4528
        %4530 = vmatmul.bf16.gmra.mxu0 %v3795
        %v4531 = vpop.f32.mrf.mxu0
        %v4532 = vadd.f32 %v4299, %v4531
        %v4533 = vpop.f32.mrf.mxu0
        %v4534 = vadd.f32 %v4301, %v4533
        %4535 = vmatmul.bf16.gmra.mxu0 %v3798
        %v4536 = vpop.f32.mrf.mxu0
        %v4537 = vadd.f32 %v4304, %v4536
        %v4538 = vpop.f32.mrf.mxu0
        %v4539 = vadd.f32 %v4306, %v4538
        %4540 = vmatmul.bf16.gmra.mxu0 %v3801
        %v4541 = vpop.f32.mrf.mxu0
        %v4542 = vadd.f32 %v4309, %v4541
        %v4543 = vpop.f32.mrf.mxu0
        %v4544 = vadd.f32 %v4311, %v4543
        %4545 = vmatmul.bf16.gmra.mxu0 %v3804
        %v4546 = vpop.f32.mrf.mxu0
        %v4547 = vadd.f32 %v4314, %v4546
        %v4548 = vpop.f32.mrf.mxu0
        %v4549 = vadd.f32 %v4316, %v4548
        %4550 = vdwg.mxu0
        %4551 = vmatpush.bf16.msra.mxu0 %v4429
        %4552 = vmatpush.bf16.msra.mxu0 %v4428
        %4553 = vmatpush.bf16.msra.mxu0 %v4427
        %4554 = vmatpush.bf16.msra.mxu0 %v4426
        %4555 = vmatpush.bf16.msra.mxu0 %v4425
        %4556 = vmatpush.bf16.msra.mxu0 %v4424
        %4557 = vmatpush.bf16.msra.mxu0 %v4423
        %4558 = vmatpush.bf16.msra.mxu0 %v4422
        %4559 = vmatmul.bf16.gmra.mxu0 %v3760
        %v4560 = vpop.f32.mrf.mxu0
        %v4561 = vadd.f32 %v4472, %v4560
        %v4562 = vpop.f32.mrf.mxu0
        %v4563 = vadd.f32 %v4474, %v4562
        %4564 = vmatmul.bf16.gmra.mxu0 %v3763
        %v4565 = vpop.f32.mrf.mxu0
        %v4566 = vadd.f32 %v4477, %v4565
        %v4567 = vpop.f32.mrf.mxu0
        %v4568 = vadd.f32 %v4479, %v4567
        %4569 = vmatmul.bf16.gmra.mxu0 %v3766
        %v4570 = vpop.f32.mrf.mxu0
        %v4571 = vadd.f32 %v4482, %v4570
        %v4572 = vpop.f32.mrf.mxu0
        %v4573 = vadd.f32 %v4484, %v4572
        %4574 = vmatmul.bf16.gmra.mxu0 %v3769
        %v4575 = vpop.f32.mrf.mxu0
        %v4576 = vadd.f32 %v4487, %v4575
        %v4577 = vpop.f32.mrf.mxu0
        %v4578 = vadd.f32 %v4489, %v4577
        %4579 = vmatmul.bf16.gmra.mxu0 %v3772
        %v4580 = vpop.f32.mrf.mxu0
        %v4581 = vadd.f32 %v4492, %v4580
        %v4582 = vpop.f32.mrf.mxu0
        %v4583 = vadd.f32 %v4494, %v4582
        %4584 = vmatmul.bf16.gmra.mxu0 %v3775
        %v4585 = vpop.f32.mrf.mxu0
        %v4586 = vadd.f32 %v4497, %v4585
        %v4587 = vpop.f32.mrf.mxu0
        %v4588 = vadd.f32 %v4499, %v4587
        %4589 = vmatmul.bf16.gmra.mxu0 %v3778
        %v4590 = vpop.f32.mrf.mxu0
        %v4591 = vadd.f32 %v4502, %v4590
        %v4592 = vpop.f32.mrf.mxu0
        %v4593 = vadd.f32 %v4504, %v4592
        %4594 = vmatmul.bf16.gmra.mxu0 %v3781
        %v4595 = vpop.f32.mrf.mxu0
        %v4596 = vadd.f32 %v4507, %v4595
        %v4597 = vpop.f32.mrf.mxu0
        %v4598 = vadd.f32 %v4509, %v4597
        %4599 = vmatmul.bf16.gmra.mxu0 %v3784
        %v4600 = vpop.f32.mrf.mxu0
        %v4601 = vadd.f32 %v4512, %v4600
        %v4602 = vpop.f32.mrf.mxu0
        %v4603 = vadd.f32 %v4514, %v4602
        %4604 = vmatmul.bf16.gmra.mxu0 %v3787
        %v4605 = vpop.f32.mrf.mxu0
        %v4606 = vadd.f32 %v4517, %v4605
        %v4607 = vpop.f32.mrf.mxu0
        %v4608 = vadd.f32 %v4519, %v4607
        %4609 = vmatmul.bf16.gmra.mxu0 %v3790
        %v4610 = vpop.f32.mrf.mxu0
        %v4611 = vadd.f32 %v4522, %v4610
        %v4612 = vpop.f32.mrf.mxu0
        %v4613 = vadd.f32 %v4524, %v4612
        %4614 = vmatmul.bf16.gmra.mxu0 %v3793
        %v4615 = vpop.f32.mrf.mxu0
        %v4616 = vadd.f32 %v4527, %v4615
        %v4617 = vpop.f32.mrf.mxu0
        %v4618 = vadd.f32 %v4529, %v4617
        %4619 = vmatmul.bf16.gmra.mxu0 %v3796
        %v4620 = vpop.f32.mrf.mxu0
        %v4621 = vadd.f32 %v4532, %v4620
        %v4622 = vpop.f32.mrf.mxu0
        %v4623 = vadd.f32 %v4534, %v4622
        %4624 = vmatmul.bf16.gmra.mxu0 %v3799
        %v4625 = vpop.f32.mrf.mxu0
        %v4626 = vadd.f32 %v4537, %v4625
        %v4627 = vpop.f32.mrf.mxu0
        %v4628 = vadd.f32 %v4539, %v4627
        %4629 = vmatmul.bf16.gmra.mxu0 %v3802
        %v4630 = vpop.f32.mrf.mxu0
        %v4631 = vadd.f32 %v4542, %v4630
        %v4632 = vpop.f32.mrf.mxu0
        %v4633 = vadd.f32 %v4544, %v4632
        %4634 = vmatmul.bf16.gmra.mxu0 %v3805
        %v4635 = vpop.f32.mrf.mxu0
        %v4636 = vadd.f32 %v4547, %v4635
        %v4637 = vpop.f32.mrf.mxu0
        %v4638 = vadd.f32 %v4549, %v4637
        %4639 = vdwg.mxu0
        %4640 = vmatpush.bf16.msra.mxu0 %v4437
        %4641 = vmatpush.bf16.msra.mxu0 %v4436
        %4642 = vmatpush.bf16.msra.mxu0 %v4435
        %4643 = vmatpush.bf16.msra.mxu0 %v4434
        %4644 = vmatpush.bf16.msra.mxu0 %v4433
        %4645 = vmatpush.bf16.msra.mxu0 %v4432
        %4646 = vmatpush.bf16.msra.mxu0 %v4431
        %4647 = vmatpush.bf16.msra.mxu0 %v4430
        %4648 = vmatmul.bf16.gmra.mxu0 %v3761
        %v4649 = vpop.f32.mrf.mxu0
        %v4650 = vadd.f32 %v4561, %v4649
        %v4651 = vpop.f32.mrf.mxu0
        %v4652 = vadd.f32 %v4563, %v4651
        %4653 = vmatmul.bf16.gmra.mxu0 %v3764
        %v4654 = vpop.f32.mrf.mxu0
        %v4655 = vadd.f32 %v4566, %v4654
        %v4656 = vpop.f32.mrf.mxu0
        %v4657 = vadd.f32 %v4568, %v4656
        %4658 = vmatmul.bf16.gmra.mxu0 %v3767
        %v4659 = vpop.f32.mrf.mxu0
        %v4660 = vadd.f32 %v4571, %v4659
        %v4661 = vpop.f32.mrf.mxu0
        %v4662 = vadd.f32 %v4573, %v4661
        %4663 = vmatmul.bf16.gmra.mxu0 %v3770
        %v4664 = vpop.f32.mrf.mxu0
        %v4665 = vadd.f32 %v4576, %v4664
        %v4666 = vpop.f32.mrf.mxu0
        %v4667 = vadd.f32 %v4578, %v4666
        %4668 = vmatmul.bf16.gmra.mxu0 %v3773
        %v4669 = vpop.f32.mrf.mxu0
        %v4670 = vadd.f32 %v4581, %v4669
        %v4671 = vpop.f32.mrf.mxu0
        %v4672 = vadd.f32 %v4583, %v4671
        %4673 = vmatmul.bf16.gmra.mxu0 %v3776
        %v4674 = vpop.f32.mrf.mxu0
        %v4675 = vadd.f32 %v4586, %v4674
        %v4676 = vpop.f32.mrf.mxu0
        %v4677 = vadd.f32 %v4588, %v4676
        %4678 = vmatmul.bf16.gmra.mxu0 %v3779
        %v4679 = vpop.f32.mrf.mxu0
        %v4680 = vadd.f32 %v4591, %v4679
        %v4681 = vpop.f32.mrf.mxu0
        %v4682 = vadd.f32 %v4593, %v4681
        %4683 = vmatmul.bf16.gmra.mxu0 %v3782
        %v4684 = vpop.f32.mrf.mxu0
        %v4685 = vadd.f32 %v4596, %v4684
        %v4686 = vpop.f32.mrf.mxu0
        %v4687 = vadd.f32 %v4598, %v4686
        %4688 = vmatmul.bf16.gmra.mxu0 %v3785
        %v4689 = vpop.f32.mrf.mxu0
        %v4690 = vadd.f32 %v4601, %v4689
        %v4691 = vpop.f32.mrf.mxu0
        %v4692 = vadd.f32 %v4603, %v4691
        %4693 = vmatmul.bf16.gmra.mxu0 %v3788
        %v4694 = vpop.f32.mrf.mxu0
        %v4695 = vadd.f32 %v4606, %v4694
        %v4696 = vpop.f32.mrf.mxu0
        %v4697 = vadd.f32 %v4608, %v4696
        %4698 = vmatmul.bf16.gmra.mxu0 %v3791
        %v4699 = vpop.f32.mrf.mxu0
        %v4700 = vadd.f32 %v4611, %v4699
        %v4701 = vpop.f32.mrf.mxu0
        %v4702 = vadd.f32 %v4613, %v4701
        %4703 = vmatmul.bf16.gmra.mxu0 %v3794
        %v4704 = vpop.f32.mrf.mxu0
        %v4705 = vadd.f32 %v4616, %v4704
        %v4706 = vpop.f32.mrf.mxu0
        %v4707 = vadd.f32 %v4618, %v4706
        %4708 = vmatmul.bf16.gmra.mxu0 %v3797
        %v4709 = vpop.f32.mrf.mxu0
        %v4710 = vadd.f32 %v4621, %v4709
        %v4711 = vpop.f32.mrf.mxu0
        %v4712 = vadd.f32 %v4623, %v4711
        %4713 = vmatmul.bf16.gmra.mxu0 %v3800
        %v4714 = vpop.f32.mrf.mxu0
        %v4715 = vadd.f32 %v4626, %v4714
        %v4716 = vpop.f32.mrf.mxu0
        %v4717 = vadd.f32 %v4628, %v4716
        %4718 = vmatmul.bf16.gmra.mxu0 %v3803
        %v4719 = vpop.f32.mrf.mxu0
        %v4720 = vadd.f32 %v4631, %v4719
        %v4721 = vpop.f32.mrf.mxu0
        %v4722 = vadd.f32 %v4633, %v4721
        %4723 = vmatmul.bf16.gmra.mxu0 %v3806
        %v4724 = vpop.f32.mrf.mxu0
        %v4725 = vadd.f32 %v4636, %v4724
        %v4726 = vpop.f32.mrf.mxu0
        %v4727 = vadd.f32 %v4638, %v4726
        %4728 = vdwg.mxu0
        %v4729 = vpack.c.bf16 %v3686, %v3685
        %v4730 = vpack.c.bf16 %v3722, %v3721
        %v4731 = vpack.c.bf16 %v3758, %v3757
        %s4732 = scalar_lea.vmem [#allocation7], 384
        %v4733 = vld [vmem:[%s4732] sm:$0xf]
        %v4734 = vld [vmem:[%s4732 + $0x4] sm:$0xf]
        %v4735 = vld [vmem:[%s4732 + $0x8] sm:$0xf]
        %v4736 = vld [vmem:[%s4732 + $0xc] sm:$0xf]
        %v4737 = vld [vmem:[%s4732 + $0x10] sm:$0xf]
        %v4738 = vld [vmem:[%s4732 + $0x14] sm:$0xf]
        %v4739 = vld [vmem:[%s4732 + $0x18] sm:$0xf]
        %v4740 = vld [vmem:[%s4732 + $0x1c] sm:$0xf]
        %v4741 = vld [vmem:[%s4732 + $0x20] sm:$0xf]
        %v4742 = vld [vmem:[%s4732 + $0x24] sm:$0xf]
        %v4743 = vld [vmem:[%s4732 + $0x28] sm:$0xf]
        %v4744 = vld [vmem:[%s4732 + $0x2c] sm:$0xf]
        %v4745 = vld [vmem:[%s4732 + $0x30] sm:$0xf]
        %v4746 = vld [vmem:[%s4732 + $0x34] sm:$0xf]
        %v4747 = vld [vmem:[%s4732 + $0x38] sm:$0xf]
        %v4748 = vld [vmem:[%s4732 + $0x3c] sm:$0xf]
        %v4749 = vld [vmem:[%s4732 + $0x40] sm:$0xf]
        %v4750 = vld [vmem:[%s4732 + $0x44] sm:$0xf]
        %v4751 = vld [vmem:[%s4732 + $0x48] sm:$0xf]
        %v4752 = vld [vmem:[%s4732 + $0x4c] sm:$0xf]
        %v4753 = vld [vmem:[%s4732 + $0x50] sm:$0xf]
        %v4754 = vld [vmem:[%s4732 + $0x54] sm:$0xf]
        %v4755 = vld [vmem:[%s4732 + $0x58] sm:$0xf]
        %v4756 = vld [vmem:[%s4732 + $0x5c] sm:$0xf]
        %v4757 = vld [vmem:[%s4732 + $0x60] sm:$0xf]
        %v4758 = vld [vmem:[%s4732 + $0x64] sm:$0xf]
        %v4759 = vld [vmem:[%s4732 + $0x68] sm:$0xf]
        %v4760 = vld [vmem:[%s4732 + $0x6c] sm:$0xf]
        %v4761 = vld [vmem:[%s4732 + $0x70] sm:$0xf]
        %v4762 = vld [vmem:[%s4732 + $0x74] sm:$0xf]
        %v4763 = vld [vmem:[%s4732 + $0x78] sm:$0xf]
        %v4764 = vld [vmem:[%s4732 + $0x7c] sm:$0xf]
        %v4765 = vld [vmem:[%s4732 + $0x80] sm:$0xf]
        %v4766 = vld [vmem:[%s4732 + $0x84] sm:$0xf]
        %v4767 = vld [vmem:[%s4732 + $0x88] sm:$0xf]
        %v4768 = vld [vmem:[%s4732 + $0x8c] sm:$0xf]
        %v4769 = vld [vmem:[%s4732 + $0x90] sm:$0xf]
        %v4770 = vld [vmem:[%s4732 + $0x94] sm:$0xf]
        %v4771 = vld [vmem:[%s4732 + $0x98] sm:$0xf]
        %v4772 = vld [vmem:[%s4732 + $0x9c] sm:$0xf]
        %v4773 = vld [vmem:[%s4732 + $0xa0] sm:$0xf]
        %v4774 = vld [vmem:[%s4732 + $0xa4] sm:$0xf]
        %v4775 = vld [vmem:[%s4732 + $0xa8] sm:$0xf]
        %v4776 = vld [vmem:[%s4732 + $0xac] sm:$0xf]
        %v4777 = vld [vmem:[%s4732 + $0xb0] sm:$0xf]
        %v4778 = vld [vmem:[%s4732 + $0xb4] sm:$0xf]
        %v4779 = vld [vmem:[%s4732 + $0xb8] sm:$0xf]
        %v4780 = vld [vmem:[%s4732 + $0xbc] sm:$0xf]
        %v4829 = vunpack.c.l.b16 %v4733
        %v4830 = vunpack.c.l.b16 %v4734
        %v4831 = vunpack.c.l.b16 %v4735
        %v4832 = vunpack.c.l.b16 %v4736
        %v4833 = vunpack.c.l.b16 %v4737
        %v4834 = vunpack.c.l.b16 %v4738
        %v4835 = vunpack.c.l.b16 %v4739
        %v4836 = vunpack.c.l.b16 %v4740
        %v4837 = vunpack.c.l.b16 %v4741
        %v4838 = vunpack.c.l.b16 %v4742
        %v4839 = vunpack.c.l.b16 %v4743
        %v4840 = vunpack.c.l.b16 %v4744
        %v4841 = vunpack.c.l.b16 %v4745
        %v4842 = vunpack.c.l.b16 %v4746
        %v4843 = vunpack.c.l.b16 %v4747
        %v4844 = vunpack.c.l.b16 %v4748
        %v4845 = vunpack.c.l.b16 %v4749
        %v4846 = vunpack.c.l.b16 %v4750
        %v4847 = vunpack.c.l.b16 %v4751
        %v4848 = vunpack.c.l.b16 %v4752
        %v4849 = vunpack.c.l.b16 %v4753
        %v4850 = vunpack.c.l.b16 %v4754
        %v4851 = vunpack.c.l.b16 %v4755
        %v4852 = vunpack.c.l.b16 %v4756
        %v4853 = vunpack.c.l.b16 %v4757
        %v4854 = vunpack.c.l.b16 %v4758
        %v4855 = vunpack.c.l.b16 %v4759
        %v4856 = vunpack.c.l.b16 %v4760
        %v4857 = vunpack.c.l.b16 %v4761
        %v4858 = vunpack.c.l.b16 %v4762
        %v4859 = vunpack.c.l.b16 %v4763
        %v4860 = vunpack.c.l.b16 %v4764
        %v4861 = vunpack.c.l.b16 %v4765
        %v4862 = vunpack.c.l.b16 %v4766
        %v4863 = vunpack.c.l.b16 %v4767
        %v4864 = vunpack.c.l.b16 %v4768
        %v4865 = vunpack.c.l.b16 %v4769
        %v4866 = vunpack.c.l.b16 %v4770
        %v4867 = vunpack.c.l.b16 %v4771
        %v4868 = vunpack.c.l.b16 %v4772
        %v4869 = vunpack.c.l.b16 %v4773
        %v4870 = vunpack.c.l.b16 %v4774
        %v4871 = vunpack.c.l.b16 %v4775
        %v4872 = vunpack.c.l.b16 %v4776
        %v4873 = vunpack.c.l.b16 %v4777
        %v4874 = vunpack.c.l.b16 %v4778
        %v4875 = vunpack.c.l.b16 %v4779
        %v4876 = vunpack.c.l.b16 %v4780
        %v4877 = vpack.c.b16 %v4830, %v4829
        %v4878 = vpack.c.b16 %v4832, %v4831
        %v4879 = vpack.c.b16 %v4834, %v4833
        %v4880 = vpack.c.b16 %v4836, %v4835
        %v4881 = vpack.c.b16 %v4838, %v4837
        %v4882 = vpack.c.b16 %v4840, %v4839
        %v4883 = vpack.c.b16 %v4842, %v4841
        %v4884 = vpack.c.b16 %v4844, %v4843
        %v4885 = vpack.c.b16 %v4846, %v4845
        %v4886 = vpack.c.b16 %v4848, %v4847
        %v4887 = vpack.c.b16 %v4850, %v4849
        %v4888 = vpack.c.b16 %v4852, %v4851
        %v4889 = vpack.c.b16 %v4854, %v4853
        %v4890 = vpack.c.b16 %v4856, %v4855
        %v4891 = vpack.c.b16 %v4858, %v4857
        %v4892 = vpack.c.b16 %v4860, %v4859
        %v4893 = vpack.c.b16 %v4862, %v4861
        %v4894 = vpack.c.b16 %v4864, %v4863
        %v4895 = vpack.c.b16 %v4866, %v4865
        %v4896 = vpack.c.b16 %v4868, %v4867
        %v4897 = vpack.c.b16 %v4870, %v4869
        %v4898 = vpack.c.b16 %v4872, %v4871
        %v4899 = vpack.c.b16 %v4874, %v4873
        %v4900 = vpack.c.b16 %v4876, %v4875
        %4925 = vmatpush.bf16.msra.mxu0 %v4884
        %4926 = vmatpush.bf16.msra.mxu0 %v4883
        %4927 = vmatpush.bf16.msra.mxu0 %v4882
        %4928 = vmatpush.bf16.msra.mxu0 %v4881
        %4929 = vmatpush.bf16.msra.mxu0 %v4880
        %4930 = vmatpush.bf16.msra.mxu0 %v4879
        %4931 = vmatpush.bf16.msra.mxu0 %v4878
        %4932 = vmatpush.bf16.msra.mxu0 %v4877
        %4933 = vmatmul.bf16.gmra.mxu0 %v3765
        %v4934 = vpop.f32.mrf.mxu0
        %v4935 = vadd.f32 0.0, %v4934
        %v4936 = vpop.f32.mrf.mxu0
        %v4937 = vadd.f32 0.0, %v4936
        %4938 = vmatmul.bf16.gmra.mxu0 %v3768
        %v4939 = vpop.f32.mrf.mxu0
        %v4940 = vadd.f32 0.0, %v4939
        %v4941 = vpop.f32.mrf.mxu0
        %v4942 = vadd.f32 0.0, %v4941
        %4943 = vmatmul.bf16.gmra.mxu0 %v3771
        %v4944 = vpop.f32.mrf.mxu0
        %v4945 = vadd.f32 0.0, %v4944
        %v4946 = vpop.f32.mrf.mxu0
        %v4947 = vadd.f32 0.0, %v4946
        %4948 = vmatmul.bf16.gmra.mxu0 %v3774
        %v4949 = vpop.f32.mrf.mxu0
        %v4950 = vadd.f32 0.0, %v4949
        %v4951 = vpop.f32.mrf.mxu0
        %v4952 = vadd.f32 0.0, %v4951
        %4953 = vmatmul.bf16.gmra.mxu0 %v3777
        %v4954 = vpop.f32.mrf.mxu0
        %v4955 = vadd.f32 0.0, %v4954
        %v4956 = vpop.f32.mrf.mxu0
        %v4957 = vadd.f32 0.0, %v4956
        %4958 = vmatmul.bf16.gmra.mxu0 %v3780
        %v4959 = vpop.f32.mrf.mxu0
        %v4960 = vadd.f32 0.0, %v4959
        %v4961 = vpop.f32.mrf.mxu0
        %v4962 = vadd.f32 0.0, %v4961
        %4963 = vmatmul.bf16.gmra.mxu0 %v3783
        %v4964 = vpop.f32.mrf.mxu0
        %v4965 = vadd.f32 0.0, %v4964
        %v4966 = vpop.f32.mrf.mxu0
        %v4967 = vadd.f32 0.0, %v4966
        %4968 = vmatmul.bf16.gmra.mxu0 %v3786
        %v4969 = vpop.f32.mrf.mxu0
        %v4970 = vadd.f32 0.0, %v4969
        %v4971 = vpop.f32.mrf.mxu0
        %v4972 = vadd.f32 0.0, %v4971
        %4973 = vmatmul.bf16.gmra.mxu0 %v3789
        %v4974 = vpop.f32.mrf.mxu0
        %v4975 = vadd.f32 0.0, %v4974
        %v4976 = vpop.f32.mrf.mxu0
        %v4977 = vadd.f32 0.0, %v4976
        %4978 = vmatmul.bf16.gmra.mxu0 %v3792
        %v4979 = vpop.f32.mrf.mxu0
        %v4980 = vadd.f32 0.0, %v4979
        %v4981 = vpop.f32.mrf.mxu0
        %v4982 = vadd.f32 0.0, %v4981
        %4983 = vmatmul.bf16.gmra.mxu0 %v3795
        %v4984 = vpop.f32.mrf.mxu0
        %v4985 = vadd.f32 0.0, %v4984
        %v4986 = vpop.f32.mrf.mxu0
        %v4987 = vadd.f32 0.0, %v4986
        %4988 = vmatmul.bf16.gmra.mxu0 %v3798
        %v4989 = vpop.f32.mrf.mxu0
        %v4990 = vadd.f32 0.0, %v4989
        %v4991 = vpop.f32.mrf.mxu0
        %v4992 = vadd.f32 0.0, %v4991
        %4993 = vmatmul.bf16.gmra.mxu0 %v3801
        %v4994 = vpop.f32.mrf.mxu0
        %v4995 = vadd.f32 0.0, %v4994
        %v4996 = vpop.f32.mrf.mxu0
        %v4997 = vadd.f32 0.0, %v4996
        %4998 = vmatmul.bf16.gmra.mxu0 %v3804
        %v4999 = vpop.f32.mrf.mxu0
        %v5000 = vadd.f32 0.0, %v4999
        %v5001 = vpop.f32.mrf.mxu0
        %v5002 = vadd.f32 0.0, %v5001
        %5003 = vmatmul.bf16.gmra.mxu0 %v3855
        %v5004 = vpop.f32.mrf.mxu0
        %v5005 = vadd.f32 0.0, %v5004
        %v5006 = vpop.f32.mrf.mxu0
        %v5007 = vadd.f32 0.0, %v5006
        %5008 = vmatmul.bf16.gmra.mxu0 %v4729
        %v5009 = vpop.f32.mrf.mxu0
        %v5010 = vadd.f32 0.0, %v5009
        %v5011 = vpop.f32.mrf.mxu0
        %v5012 = vadd.f32 0.0, %v5011
        %5013 = vdwg.mxu0
        %5014 = vmatpush.bf16.msra.mxu0 %v4892
        %5015 = vmatpush.bf16.msra.mxu0 %v4891
        %5016 = vmatpush.bf16.msra.mxu0 %v4890
        %5017 = vmatpush.bf16.msra.mxu0 %v4889
        %5018 = vmatpush.bf16.msra.mxu0 %v4888
        %5019 = vmatpush.bf16.msra.mxu0 %v4887
        %5020 = vmatpush.bf16.msra.mxu0 %v4886
        %5021 = vmatpush.bf16.msra.mxu0 %v4885
        %5022 = vmatmul.bf16.gmra.mxu0 %v3766
        %v5023 = vpop.f32.mrf.mxu0
        %v5024 = vadd.f32 %v4935, %v5023
        %v5025 = vpop.f32.mrf.mxu0
        %v5026 = vadd.f32 %v4937, %v5025
        %5027 = vmatmul.bf16.gmra.mxu0 %v3769
        %v5028 = vpop.f32.mrf.mxu0
        %v5029 = vadd.f32 %v4940, %v5028
        %v5030 = vpop.f32.mrf.mxu0
        %v5031 = vadd.f32 %v4942, %v5030
        %5032 = vmatmul.bf16.gmra.mxu0 %v3772
        %v5033 = vpop.f32.mrf.mxu0
        %v5034 = vadd.f32 %v4945, %v5033
        %v5035 = vpop.f32.mrf.mxu0
        %v5036 = vadd.f32 %v4947, %v5035
        %5037 = vmatmul.bf16.gmra.mxu0 %v3775
        %v5038 = vpop.f32.mrf.mxu0
        %v5039 = vadd.f32 %v4950, %v5038
        %v5040 = vpop.f32.mrf.mxu0
        %v5041 = vadd.f32 %v4952, %v5040
        %5042 = vmatmul.bf16.gmra.mxu0 %v3778
        %v5043 = vpop.f32.mrf.mxu0
        %v5044 = vadd.f32 %v4955, %v5043
        %v5045 = vpop.f32.mrf.mxu0
        %v5046 = vadd.f32 %v4957, %v5045
        %5047 = vmatmul.bf16.gmra.mxu0 %v3781
        %v5048 = vpop.f32.mrf.mxu0
        %v5049 = vadd.f32 %v4960, %v5048
        %v5050 = vpop.f32.mrf.mxu0
        %v5051 = vadd.f32 %v4962, %v5050
        %5052 = vmatmul.bf16.gmra.mxu0 %v3784
        %v5053 = vpop.f32.mrf.mxu0
        %v5054 = vadd.f32 %v4965, %v5053
        %v5055 = vpop.f32.mrf.mxu0
        %v5056 = vadd.f32 %v4967, %v5055
        %5057 = vmatmul.bf16.gmra.mxu0 %v3787
        %v5058 = vpop.f32.mrf.mxu0
        %v5059 = vadd.f32 %v4970, %v5058
        %v5060 = vpop.f32.mrf.mxu0
        %v5061 = vadd.f32 %v4972, %v5060
        %5062 = vmatmul.bf16.gmra.mxu0 %v3790
        %v5063 = vpop.f32.mrf.mxu0
        %v5064 = vadd.f32 %v4975, %v5063
        %v5065 = vpop.f32.mrf.mxu0
        %v5066 = vadd.f32 %v4977, %v5065
        %5067 = vmatmul.bf16.gmra.mxu0 %v3793
        %v5068 = vpop.f32.mrf.mxu0
        %v5069 = vadd.f32 %v4980, %v5068
        %v5070 = vpop.f32.mrf.mxu0
        %v5071 = vadd.f32 %v4982, %v5070
        %5072 = vmatmul.bf16.gmra.mxu0 %v3796
        %v5073 = vpop.f32.mrf.mxu0
        %v5074 = vadd.f32 %v4985, %v5073
        %v5075 = vpop.f32.mrf.mxu0
        %v5076 = vadd.f32 %v4987, %v5075
        %5077 = vmatmul.bf16.gmra.mxu0 %v3799
        %v5078 = vpop.f32.mrf.mxu0
        %v5079 = vadd.f32 %v4990, %v5078
        %v5080 = vpop.f32.mrf.mxu0
        %v5081 = vadd.f32 %v4992, %v5080
        %5082 = vmatmul.bf16.gmra.mxu0 %v3802
        %v5083 = vpop.f32.mrf.mxu0
        %v5084 = vadd.f32 %v4995, %v5083
        %v5085 = vpop.f32.mrf.mxu0
        %v5086 = vadd.f32 %v4997, %v5085
        %5087 = vmatmul.bf16.gmra.mxu0 %v3805
        %v5088 = vpop.f32.mrf.mxu0
        %v5089 = vadd.f32 %v5000, %v5088
        %v5090 = vpop.f32.mrf.mxu0
        %v5091 = vadd.f32 %v5002, %v5090
        %5092 = vmatmul.bf16.gmra.mxu0 %v3856
        %v5093 = vpop.f32.mrf.mxu0
        %v5094 = vadd.f32 %v5005, %v5093
        %v5095 = vpop.f32.mrf.mxu0
        %v5096 = vadd.f32 %v5007, %v5095
        %5097 = vmatmul.bf16.gmra.mxu0 %v4730
        %v5098 = vpop.f32.mrf.mxu0
        %v5099 = vadd.f32 %v5010, %v5098
        %v5100 = vpop.f32.mrf.mxu0
        %v5101 = vadd.f32 %v5012, %v5100
        %5102 = vdwg.mxu0
        %5103 = vmatpush.bf16.msra.mxu0 %v4900
        %5104 = vmatpush.bf16.msra.mxu0 %v4899
        %5105 = vmatpush.bf16.msra.mxu0 %v4898
        %5106 = vmatpush.bf16.msra.mxu0 %v4897
        %5107 = vmatpush.bf16.msra.mxu0 %v4896
        %5108 = vmatpush.bf16.msra.mxu0 %v4895
        %5109 = vmatpush.bf16.msra.mxu0 %v4894
        %5110 = vmatpush.bf16.msra.mxu0 %v4893
        %5111 = vmatmul.bf16.gmra.mxu0 %v3767
        %v5112 = vpop.f32.mrf.mxu0
        %v5113 = vadd.f32 %v5024, %v5112
        %v5114 = vpop.f32.mrf.mxu0
        %v5115 = vadd.f32 %v5026, %v5114
        %5116 = vmatmul.bf16.gmra.mxu0 %v3770
        %v5117 = vpop.f32.mrf.mxu0
        %v5118 = vadd.f32 %v5029, %v5117
        %v5119 = vpop.f32.mrf.mxu0
        %v5120 = vadd.f32 %v5031, %v5119
        %5121 = vmatmul.bf16.gmra.mxu0 %v3773
        %v5122 = vpop.f32.mrf.mxu0
        %v5123 = vadd.f32 %v5034, %v5122
        %v5124 = vpop.f32.mrf.mxu0
        %v5125 = vadd.f32 %v5036, %v5124
        %5126 = vmatmul.bf16.gmra.mxu0 %v3776
        %v5127 = vpop.f32.mrf.mxu0
        %v5128 = vadd.f32 %v5039, %v5127
        %v5129 = vpop.f32.mrf.mxu0
        %v5130 = vadd.f32 %v5041, %v5129
        %5131 = vmatmul.bf16.gmra.mxu0 %v3779
        %v5132 = vpop.f32.mrf.mxu0
        %v5133 = vadd.f32 %v5044, %v5132
        %v5134 = vpop.f32.mrf.mxu0
        %v5135 = vadd.f32 %v5046, %v5134
        %5136 = vmatmul.bf16.gmra.mxu0 %v3782
        %v5137 = vpop.f32.mrf.mxu0
        %v5138 = vadd.f32 %v5049, %v5137
        %v5139 = vpop.f32.mrf.mxu0
        %v5140 = vadd.f32 %v5051, %v5139
        %5141 = vmatmul.bf16.gmra.mxu0 %v3785
        %v5142 = vpop.f32.mrf.mxu0
        %v5143 = vadd.f32 %v5054, %v5142
        %v5144 = vpop.f32.mrf.mxu0
        %v5145 = vadd.f32 %v5056, %v5144
        %5146 = vmatmul.bf16.gmra.mxu0 %v3788
        %v5147 = vpop.f32.mrf.mxu0
        %v5148 = vadd.f32 %v5059, %v5147
        %v5149 = vpop.f32.mrf.mxu0
        %v5150 = vadd.f32 %v5061, %v5149
        %5151 = vmatmul.bf16.gmra.mxu0 %v3791
        %v5152 = vpop.f32.mrf.mxu0
        %v5153 = vadd.f32 %v5064, %v5152
        %v5154 = vpop.f32.mrf.mxu0
        %v5155 = vadd.f32 %v5066, %v5154
        %5156 = vmatmul.bf16.gmra.mxu0 %v3794
        %v5157 = vpop.f32.mrf.mxu0
        %v5158 = vadd.f32 %v5069, %v5157
        %v5159 = vpop.f32.mrf.mxu0
        %v5160 = vadd.f32 %v5071, %v5159
        %5161 = vmatmul.bf16.gmra.mxu0 %v3797
        %v5162 = vpop.f32.mrf.mxu0
        %v5163 = vadd.f32 %v5074, %v5162
        %v5164 = vpop.f32.mrf.mxu0
        %v5165 = vadd.f32 %v5076, %v5164
        %5166 = vmatmul.bf16.gmra.mxu0 %v3800
        %v5167 = vpop.f32.mrf.mxu0
        %v5168 = vadd.f32 %v5079, %v5167
        %v5169 = vpop.f32.mrf.mxu0
        %v5170 = vadd.f32 %v5081, %v5169
        %5171 = vmatmul.bf16.gmra.mxu0 %v3803
        %v5172 = vpop.f32.mrf.mxu0
        %v5173 = vadd.f32 %v5084, %v5172
        %v5174 = vpop.f32.mrf.mxu0
        %v5175 = vadd.f32 %v5086, %v5174
        %5176 = vmatmul.bf16.gmra.mxu0 %v3806
        %v5177 = vpop.f32.mrf.mxu0
        %v5178 = vadd.f32 %v5089, %v5177
        %v5179 = vpop.f32.mrf.mxu0
        %v5180 = vadd.f32 %v5091, %v5179
        %5181 = vmatmul.bf16.gmra.mxu0 %v3857
        %v5182 = vpop.f32.mrf.mxu0
        %v5183 = vadd.f32 %v5094, %v5182
        %v5184 = vpop.f32.mrf.mxu0
        %v5185 = vadd.f32 %v5096, %v5184
        %5186 = vmatmul.bf16.gmra.mxu0 %v4731
        %v5187 = vpop.f32.mrf.mxu0
        %v5188 = vadd.f32 %v5099, %v5187
        %v5189 = vpop.f32.mrf.mxu0
        %v5190 = vadd.f32 %v5101, %v5189
        %5191 = vdwg.mxu0
        %v5192 = vadd.f32 %v4650, %v5113
        %v5193 = vadd.f32 %v4652, %v5115
        %v5194 = vadd.f32 %v4655, %v5118
        %v5195 = vadd.f32 %v4657, %v5120
        %v5196 = vadd.f32 %v4660, %v5123
        %v5197 = vadd.f32 %v4662, %v5125
        %v5198 = vadd.f32 %v4665, %v5128
        %v5199 = vadd.f32 %v4667, %v5130
        %v5200 = vadd.f32 %v4670, %v5133
        %v5201 = vadd.f32 %v4672, %v5135
        %v5202 = vadd.f32 %v4675, %v5138
        %v5203 = vadd.f32 %v4677, %v5140
        %v5204 = vadd.f32 %v4680, %v5143
        %v5205 = vadd.f32 %v4682, %v5145
        %v5206 = vadd.f32 %v4685, %v5148
        %v5207 = vadd.f32 %v4687, %v5150
        %v5208 = vadd.f32 %v4690, %v5153
        %v5209 = vadd.f32 %v4692, %v5155
        %v5210 = vadd.f32 %v4695, %v5158
        %v5211 = vadd.f32 %v4697, %v5160
        %v5212 = vadd.f32 %v4700, %v5163
        %v5213 = vadd.f32 %v4702, %v5165
        %v5214 = vadd.f32 %v4705, %v5168
        %v5215 = vadd.f32 %v4707, %v5170
        %v5216 = vadd.f32 %v4710, %v5173
        %v5217 = vadd.f32 %v4712, %v5175
        %v5218 = vadd.f32 %v4715, %v5178
        %v5219 = vadd.f32 %v4717, %v5180
        %v5220 = vadd.f32 %v4720, %v5183
        %v5221 = vadd.f32 %v4722, %v5185
        %v5222 = vadd.f32 %v4725, %v5188
        %v5223 = vadd.f32 %v4727, %v5190
        %v5224 = vld [vmem:[%s5] sm:$0x1]
        %v5226 = vperm.slane %v5224, 0
        %v5228 = vmul.f32 %v5192, %v5226
        %v5229 = vmul.f32 %v5193, %v5226
        %v5230 = vmul.f32 %v5194, %v5226
        %v5231 = vmul.f32 %v5195, %v5226
        %v5232 = vmul.f32 %v5196, %v5226
        %v5233 = vmul.f32 %v5197, %v5226
        %v5234 = vmul.f32 %v5198, %v5226
        %v5235 = vmul.f32 %v5199, %v5226
        %v5236 = vmul.f32 %v5200, %v5226
        %v5237 = vmul.f32 %v5201, %v5226
        %v5238 = vmul.f32 %v5202, %v5226
        %v5239 = vmul.f32 %v5203, %v5226
        %v5240 = vmul.f32 %v5204, %v5226
        %v5241 = vmul.f32 %v5205, %v5226
        %v5242 = vmul.f32 %v5206, %v5226
        %v5243 = vmul.f32 %v5207, %v5226
        %v5244 = vmul.f32 %v5208, %v5226
        %v5245 = vmul.f32 %v5209, %v5226
        %v5246 = vmul.f32 %v5210, %v5226
        %v5247 = vmul.f32 %v5211, %v5226
        %v5248 = vmul.f32 %v5212, %v5226
        %v5249 = vmul.f32 %v5213, %v5226
        %v5250 = vmul.f32 %v5214, %v5226
        %v5251 = vmul.f32 %v5215, %v5226
        %v5252 = vmul.f32 %v5216, %v5226
        %v5253 = vmul.f32 %v5217, %v5226
        %v5254 = vmul.f32 %v5218, %v5226
        %v5255 = vmul.f32 %v5219, %v5226
        %v5256 = vmul.f32 %v5220, %v5226
        %v5257 = vmul.f32 %v5221, %v5226
        %v5258 = vmul.f32 %v5222, %v5226
        %v5259 = vmul.f32 %v5223, %v5226
        %v5260 = vld [vmem:[%s6] sm:$0x1]
        %v5262 = vperm.slane %v5260, 0
        %v5264 = vadd.f32 %v5228, %v5262
        %v5265 = vadd.f32 %v5229, %v5262
        %v5266 = vadd.f32 %v5230, %v5262
        %v5267 = vadd.f32 %v5231, %v5262
        %v5268 = vadd.f32 %v5232, %v5262
        %v5269 = vadd.f32 %v5233, %v5262
        %v5270 = vadd.f32 %v5234, %v5262
        %v5271 = vadd.f32 %v5235, %v5262
        %v5272 = vadd.f32 %v5236, %v5262
        %v5273 = vadd.f32 %v5237, %v5262
        %v5274 = vadd.f32 %v5238, %v5262
        %v5275 = vadd.f32 %v5239, %v5262
        %v5276 = vadd.f32 %v5240, %v5262
        %v5277 = vadd.f32 %v5241, %v5262
        %v5278 = vadd.f32 %v5242, %v5262
        %v5279 = vadd.f32 %v5243, %v5262
        %v5280 = vadd.f32 %v5244, %v5262
        %v5281 = vadd.f32 %v5245, %v5262
        %v5282 = vadd.f32 %v5246, %v5262
        %v5283 = vadd.f32 %v5247, %v5262
        %v5284 = vadd.f32 %v5248, %v5262
        %v5285 = vadd.f32 %v5249, %v5262
        %v5286 = vadd.f32 %v5250, %v5262
        %v5287 = vadd.f32 %v5251, %v5262
        %v5288 = vadd.f32 %v5252, %v5262
        %v5289 = vadd.f32 %v5253, %v5262
        %v5290 = vadd.f32 %v5254, %v5262
        %v5291 = vadd.f32 %v5255, %v5262
        %v5292 = vadd.f32 %v5256, %v5262
        %v5293 = vadd.f32 %v5257, %v5262
        %v5294 = vadd.f32 %v5258, %v5262
        %v5295 = vadd.f32 %v5259, %v5262
        %v5296 = vadd.f32 %v5264, %v740
        %v5297 = vadd.f32 %v5265, %v742
        %v5298 = vadd.f32 %v5266, %v747
        %v5299 = vadd.f32 %v5267, %v749
        %v5300 = vadd.f32 %v5268, %v754
        %v5301 = vadd.f32 %v5269, %v756
        %v5302 = vadd.f32 %v5270, %v761
        %v5303 = vadd.f32 %v5271, %v763
        %v5304 = vadd.f32 %v5272, %v768
        %v5305 = vadd.f32 %v5273, %v770
        %v5306 = vadd.f32 %v5274, %v775
        %v5307 = vadd.f32 %v5275, %v777
        %v5308 = vadd.f32 %v5276, %v782
        %v5309 = vadd.f32 %v5277, %v784
        %v5310 = vadd.f32 %v5278, %v789
        %v5311 = vadd.f32 %v5279, %v791
        %v5312 = vadd.f32 %v5280, %v796
        %v5313 = vadd.f32 %v5281, %v798
        %v5314 = vadd.f32 %v5282, %v803
        %v5315 = vadd.f32 %v5283, %v805
        %v5316 = vadd.f32 %v5284, %v810
        %v5317 = vadd.f32 %v5285, %v812
        %v5318 = vadd.f32 %v5286, %v817
        %v5319 = vadd.f32 %v5287, %v819
        %v5320 = vadd.f32 %v5288, %v824
        %v5321 = vadd.f32 %v5289, %v826
        %v5322 = vadd.f32 %v5290, %v831
        %v5323 = vadd.f32 %v5291, %v833
        %v5324 = vadd.f32 %v5292, %v838
        %v5325 = vadd.f32 %v5293, %v840
        %v5326 = vadd.f32 %v5294, %v845
        %v5327 = vadd.f32 %v5295, %v847
        %v5328 = vmax.f32 %v5296, 0.0
        %v5329 = vmax.f32 %v5297, 0.0
        %v5330 = vmax.f32 %v5298, 0.0
        %v5331 = vmax.f32 %v5299, 0.0
        %v5332 = vmax.f32 %v5300, 0.0
        %v5333 = vmax.f32 %v5301, 0.0
        %v5334 = vmax.f32 %v5302, 0.0
        %v5335 = vmax.f32 %v5303, 0.0
        %v5336 = vmax.f32 %v5304, 0.0
        %v5337 = vmax.f32 %v5305, 0.0
        %v5338 = vmax.f32 %v5306, 0.0
        %v5339 = vmax.f32 %v5307, 0.0
        %v5340 = vmax.f32 %v5308, 0.0
        %v5341 = vmax.f32 %v5309, 0.0
        %v5342 = vmax.f32 %v5310, 0.0
        %v5343 = vmax.f32 %v5311, 0.0
        %v5344 = vmax.f32 %v5312, 0.0
        %v5345 = vmax.f32 %v5313, 0.0
        %v5346 = vmax.f32 %v5314, 0.0
        %v5347 = vmax.f32 %v5315, 0.0
        %v5348 = vmax.f32 %v5316, 0.0
        %v5349 = vmax.f32 %v5317, 0.0
        %v5350 = vmax.f32 %v5318, 0.0
        %v5351 = vmax.f32 %v5319, 0.0
        %v5352 = vmax.f32 %v5320, 0.0
        %v5353 = vmax.f32 %v5321, 0.0
        %v5354 = vmax.f32 %v5322, 0.0
        %v5355 = vmax.f32 %v5323, 0.0
        %v5356 = vmax.f32 %v5324, 0.0
        %v5357 = vmax.f32 %v5325, 0.0
        %v5358 = vmax.f32 %v5326, 0.0
        %v5359 = vmax.f32 %v5327, 0.0
        %vm5360 = vcmask 64512
        %5361 = vst.msk [vmem:[%s357] sm:$0xff] %vm5360, %v5328
        %5362 = vst.msk [vmem:[%s357 + $0x8] sm:$0xff] %vm5360, %v5329
        %5363 = vst.msk [vmem:[%s357 + $0x10] sm:$0xff] %vm5360, %v5330
        %5364 = vst.msk [vmem:[%s357 + $0x18] sm:$0xff] %vm5360, %v5331
        %5365 = vst.msk [vmem:[%s357 + $0x20] sm:$0xff] %vm5360, %v5332
        %5366 = vst.msk [vmem:[%s357 + $0x28] sm:$0xff] %vm5360, %v5333
        %5367 = vst.msk [vmem:[%s357 + $0x30] sm:$0xff] %vm5360, %v5334
        %5368 = vst.msk [vmem:[%s357 + $0x38] sm:$0xff] %vm5360, %v5335
        %5369 = vst.msk [vmem:[%s357 + $0x40] sm:$0xff] %vm5360, %v5336
        %5370 = vst.msk [vmem:[%s357 + $0x48] sm:$0xff] %vm5360, %v5337
        %5371 = vst.msk [vmem:[%s357 + $0x50] sm:$0xff] %vm5360, %v5338
        %5372 = vst.msk [vmem:[%s357 + $0x58] sm:$0xff] %vm5360, %v5339
        %5373 = vst.msk [vmem:[%s357 + $0x60] sm:$0xff] %vm5360, %v5340
        %5374 = vst.msk [vmem:[%s357 + $0x68] sm:$0xff] %vm5360, %v5341
        %5375 = vst.msk [vmem:[%s357 + $0x70] sm:$0xff] %vm5360, %v5342
        %5376 = vst.msk [vmem:[%s357 + $0x78] sm:$0xff] %vm5360, %v5343
        %5377 = vst.msk [vmem:[%s357 + $0x80] sm:$0xff] %vm5360, %v5344
        %5378 = vst.msk [vmem:[%s357 + $0x88] sm:$0xff] %vm5360, %v5345
        %5379 = vst.msk [vmem:[%s357 + $0x90] sm:$0xff] %vm5360, %v5346
        %5380 = vst.msk [vmem:[%s357 + $0x98] sm:$0xff] %vm5360, %v5347
        %5381 = vst.msk [vmem:[%s357 + $0xa0] sm:$0xff] %vm5360, %v5348
        %5382 = vst.msk [vmem:[%s357 + $0xa8] sm:$0xff] %vm5360, %v5349
        %5383 = vst.msk [vmem:[%s357 + $0xb0] sm:$0xff] %vm5360, %v5350
        %5384 = vst.msk [vmem:[%s357 + $0xb8] sm:$0xff] %vm5360, %v5351
        %5385 = vst.msk [vmem:[%s357 + $0xc0] sm:$0xff] %vm5360, %v5352
        %5386 = vst.msk [vmem:[%s357 + $0xc8] sm:$0xff] %vm5360, %v5353
        %5387 = vst.msk [vmem:[%s357 + $0xd0] sm:$0xff] %vm5360, %v5354
        %5388 = vst.msk [vmem:[%s357 + $0xd8] sm:$0xff] %vm5360, %v5355
        %5389 = vst.msk [vmem:[%s357 + $0xe0] sm:$0xff] %vm5360, %v5356
        %5390 = vst.msk [vmem:[%s357 + $0xe8] sm:$0xff] %vm5360, %v5357
        %5391 = vst.msk [vmem:[%s357 + $0xf0] sm:$0xff] %vm5360, %v5358
        %5392 = vst.msk [vmem:[%s357 + $0xf8] sm:$0xff] %vm5360, %v5359
        %s5393 = smul.u32 16, %s27
        %p5394 = scmp.lt.s32.totalorder %s26, 1
        %s5395 = scalar_select %p5394, %s26, 1
        %p5396 = scmp.lt.s32.totalorder %s5393, 15
        %s5397 = scalar_select %p5396, %s5393, 15
        %s5398 = smul.addr %s5397, 2
        %s5399 = smul.addr %s5395, 32
        %s5400 = sadd.s32 %s5398, %s5399
        %s5401 = smul.addr %s5400, 8
        %s5402 = scalar_lea.vmem %s7, %s5401
        // Predicated region
        $region61: #{tpu_custom_call.1} parent=47 // pred_check
          %p5403 = pneg %p206
        $region62: #{tpu_custom_call.1} parent=47 // pred_check_branch
          %5405 = sbr.rel (%p5403) target = $region64
        $region63: #{tpu_custom_call.1} parent=47 // pred_region
          %s5406 = smul.u32 16, %s27
        $region64: #{tpu_custom_call.1} parent=47 // pred_fallthru
          _
      $region48: #{tpu_custom_call.1} parent=5 // pred_fallthru
        _
      %p5407 = scmp.le.s32.totalorder 2, %s17
      // Predicated region
      $region65: #{tpu_custom_call.1} parent=5 // pred_check
        %p5408 = pneg %p5407
      $region66: #{tpu_custom_call.1} parent=5 // pred_check_branch
        %5410 = sbr.rel (%p5408) target = $region68
      $region67: #{tpu_custom_call.1} parent=5 // pred_region
        %s5411 = ssub.s32 %s17, 2
        // Predicated region
        $region69: #{tpu_custom_call.1} parent=67 // pred_check
          %p5412 = pneg %p212
        $region70: #{tpu_custom_call.1} parent=67 // pred_check_branch
          %5414 = sbr.rel (%p5412) target = $region72
        $region71: #{tpu_custom_call.1} parent=67 // pred_region
          %s5415 = smul.u32 16, %s29
          %p5416 = scmp.lt.s32.totalorder %s28, 1
          %s5417 = scalar_select %p5416, %s28, 1
          %p5418 = scmp.lt.s32.totalorder %s5415, 15
          %s5419 = scalar_select %p5418, %s5415, 15
          %s5420 = smul.addr %s5419, 2
          %s5421 = smul.addr %s5417, 32
          %s5422 = sadd.s32 %s5420, %s5421
          %s5423 = smul.addr %s5422, 8
          %s5424 = scalar_lea.vmem %s7, %s5423
        $region72: #{tpu_custom_call.1} parent=67 // pred_fallthru
          _
      $region68: #{tpu_custom_call.1} parent=5 // pred_fallthru
        _
    $region6: #{tpu_custom_call.1} parent=1 // loop_footer
      %s21 = sadd.s32 1, %s17
    $region7: #{tpu_custom_call.1} parent=1 // loop_footer_branch
      %16 = sbr.rel target = $region3
    $region8: #{tpu_custom_call.1} parent=1 // loop_exit
      _
    %5425 = vsyncpa [#allocation4], 1
    %s5426 = scalar_lea.sflag [#allocation4], 1
    %5427 = vsyncpa %s5426, 1
    %5428 = vsyncpa [#allocation6], 1

</llo_original>
